<compile_context>
chip_gen: v7x
topology: tpu7x:2x2x1
jax: 0.10.0
libtpu: 0.0.40
codegen_flags: <defaults>
</compile_context>

<pallas_src>
import functools

import jax
import jax.numpy as jnp
from jax.experimental import pallas as pl
from jax.experimental.pallas import tpu as pltpu


def _layer_norm(x, gamma, beta, eps=1e-5):
    mean = jnp.mean(x, axis=-1, keepdims=True)
    var = jnp.mean((x - mean) ** 2, axis=-1, keepdims=True)
    return (x - mean) * jax.lax.rsqrt(var + eps) * gamma + beta


def encoder_stack_kernel(n_heads, n_layers,
                         x_ref,
                         wq_ref, wk_ref, wv_ref,
                         bq_ref, bk_ref, bv_ref,
                         wo_ref, bo_ref,
                         g1_ref, be1_ref,
                         w1_ref, b1_ref, w2_ref, b2_ref,
                         g2_ref, be2_ref,
                         out_ref):
    # x_ref block: (Tb, S, E) -- Tb independent MHA-batch columns, S attention positions.
    Tb, S, E = x_ref.shape
    dh = E // n_heads
    M = Tb * S

    # Flatten positions for all position-independent ops (projections, FFN, LayerNorm).
    x = x_ref[...].reshape(M, E)                      # (M, E) float32, rows ordered (t, b)

    for l in range(n_layers):                         # static loop: all layers fused in VMEM
        # --- self attention (PyTorch MultiheadAttention semantics) ---
        wq = wq_ref[l]                                # (E, E), already transposed + scaled
        wk = wk_ref[l]
        wv = wv_ref[l]
        xc = x.astype(wq.dtype)
        q = jnp.dot(xc, wq, preferred_element_type=jnp.float32) + bq_ref[l]
        k = jnp.dot(xc, wk, preferred_element_type=jnp.float32) + bk_ref[l]
        v = jnp.dot(xc, wv, preferred_element_type=jnp.float32) + bv_ref[l]
        q3 = q.reshape(Tb, S, E)
        k3 = k.reshape(Tb, S, E)
        v3 = v.reshape(Tb, S, E)

        wo_l = wo_ref[l]                              # (E, E) = (H*dh, E), pre-transposed
        attn = jnp.zeros((M, E), jnp.float32)
        for h in range(n_heads):                      # small static loop; matmuls are
            sl = slice(h * dh, (h + 1) * dh)          # column-batched over all Tb columns
            qh = q3[:, :, sl]                         # (Tb, S, dh)  (scale already folded in)
            kh = k3[:, :, sl]
            vh = v3[:, :, sl]
            s = jnp.einsum('tqd,tkd->tqk', qh, kh,
                           preferred_element_type=jnp.float32)        # (Tb, S, S)
            s = s - jnp.max(s, axis=-1, keepdims=True)
            p = jnp.exp(s)
            p = p * pl.reciprocal(jnp.sum(p, axis=-1, keepdims=True), approx=True)
            oh = jnp.einsum('tqk,tkd->tqd', p, vh,
                            preferred_element_type=jnp.float32)       # (Tb, S, dh)
            # Accumulate per-head out-projection instead of concatenating heads.
            attn = attn + jnp.dot(oh.reshape(M, dh).astype(wo_l.dtype), wo_l[sl, :],
                                  preferred_element_type=jnp.float32)
        attn = attn + bo_ref[l]

        # TODO(synk): dropout (attention / FFN / residual) runs as identity (eval mode).
        # post-norm residual 1
        x = _layer_norm(x + attn, g1_ref[l], be1_ref[l])

        # --- feed-forward (ReLU) ---
        w1 = w1_ref[l]
        w2 = w2_ref[l]
        h1 = jnp.dot(x.astype(w1.dtype), w1, preferred_element_type=jnp.float32) + b1_ref[l]
        h1 = jnp.maximum(h1, 0.0)
        ff = jnp.dot(h1.astype(w2.dtype), w2, preferred_element_type=jnp.float32) + b2_ref[l]

        # post-norm residual 2
        x = _layer_norm(x + ff, g2_ref[l], be2_ref[l])

    out_ref[...] = x.reshape(Tb, S, E)


def _prep_weights(layers, emb_dim, n_heads, matmul_dtype=jnp.float32):
    """Host-side weight prep: split QKV, transpose, fold 1/sqrt(dh) into Q, stack per layer."""
    E = emb_dim
    dh = E // n_heads
    scale = 1.0 / (dh ** 0.5)
    cols = {name: [] for name in
            ("wq", "wk", "wv", "bq", "bk", "bv", "wo", "bo",
             "g1", "be1", "w1", "b1", "w2", "b2", "g2", "be2")}
    for p in layers:
        Wq, Wk, Wv = p["wqkv"][:E], p["wqkv"][E:2 * E], p["wqkv"][2 * E:]
        Bq, Bk, Bv = p["bqkv"][:E], p["bqkv"][E:2 * E], p["bqkv"][2 * E:]
        cols["wq"].append((Wq.T * scale).astype(matmul_dtype))      # (E, E), scale folded
        cols["wk"].append(Wk.T.astype(matmul_dtype))
        cols["wv"].append(Wv.T.astype(matmul_dtype))
        cols["bq"].append((Bq * scale).reshape(1, E).astype(jnp.float32))
        cols["bk"].append(Bk.reshape(1, E).astype(jnp.float32))
        cols["bv"].append(Bv.reshape(1, E).astype(jnp.float32))
        cols["wo"].append(p["wo"].T.astype(matmul_dtype))           # (E, E)
        cols["bo"].append(p["bo"].reshape(1, E).astype(jnp.float32))
        cols["g1"].append(p["g1"].reshape(1, E).astype(jnp.float32))
        cols["be1"].append(p["be1"].reshape(1, E).astype(jnp.float32))
        cols["w1"].append(p["w1"].T.astype(matmul_dtype))           # (E, PF)
        cols["b1"].append(p["b1"].reshape(1, -1).astype(jnp.float32))
        cols["w2"].append(p["w2"].T.astype(matmul_dtype))           # (PF, E)
        cols["b2"].append(p["b2"].reshape(1, E).astype(jnp.float32))
        cols["g2"].append(p["g2"].reshape(1, E).astype(jnp.float32))
        cols["be2"].append(p["be2"].reshape(1, E).astype(jnp.float32))
    order = ("wq", "wk", "wv", "bq", "bk", "bv", "wo", "bo",
             "g1", "be1", "w1", "b1", "w2", "b2", "g2", "be2")
    return [jnp.stack(cols[name]) for name in order]


def transformer_encoder_stack(x_tbe, weight_stacks, n_heads, n_layers, t_block=None):
    """x_tbe: (T, S, E) float32 -> (T, S, E) float32 (all layers applied)."""
    T, S, E = x_tbe.shape
    if t_block is None:
        # Keep >=2 parallel grid steps so v7x's two TensorCores both get work;
        # on v5e/v6e the extra step is ~0.35 us and otherwise harmless.
        t_block = T // 2 if (T % 2 == 0 and T >= 2) else T
    assert T % t_block == 0, (T, t_block)
    grid = (T // t_block,)

    w_specs = [pl.BlockSpec(w.shape, lambda i, nd=w.ndim: (0,) * nd)
               for w in weight_stacks]

    return pl.pallas_call(
        functools.partial(encoder_stack_kernel, n_heads, n_layers),
        out_shape=jax.ShapeDtypeStruct((T, S, E), jnp.float32),
        grid=grid,
        in_specs=[pl.BlockSpec((t_block, S, E), lambda i: (i, 0, 0))] + w_specs,
        out_specs=pl.BlockSpec((t_block, S, E), lambda i: (i, 0, 0)),
        compiler_params=pltpu.CompilerParams(dimension_semantics=("parallel",)),
    )(x_tbe, *weight_stacks)


def transformer_encoder_forward(src_tokens, params, n_heads, n_layers,
                                matmul_dtype=jnp.float32):
    """src_tokens: (B, T) int32 -> (B, T, E) float32."""
    B, T = src_tokens.shape
    E = params["embedding"].shape[1]

    # Embedding gather + positional encoding: plain-JAX glue, produced directly in the
    # kernel's (T, B, E) layout (dim0 = MHA batch columns, dim1 = attention axis), so
    # there is no per-layer relayout and only one tiny transpose on the way out.
    emb = jnp.take(params["embedding"], src_tokens.T, axis=0)       # (T, B, E)
    x = emb + params["pos"][0, :T][:, None, :]                      # (T, B, E)
    # self.dropout -> identity (eval mode)

    stacks = _prep_weights(params["layers"], E, n_heads, matmul_dtype)
    y = transformer_encoder_stack(x, stacks, n_heads, n_layers)     # (T, B, E)
    return jnp.transpose(y, (1, 0, 2))                              # back to (B, T, E)


def init_params(key, input_dim, emb_dim, pf_dim, n_layers):
    n_per_layer = 8
    keys = jax.random.split(key, 2 + n_per_layer * n_layers)
    params = {
        "embedding": jax.random.normal(keys[0], (input_dim, emb_dim), jnp.float32),
        "pos": jax.random.normal(keys[1], (1, 1000, emb_dim), jnp.float32),
        "layers": [],
    }
    idx = 2
    for _ in range(n_layers):
        k = keys[idx:idx + n_per_layer]
        idx += n_per_layer
        layer = {
            "wqkv": 0.1 * jax.random.normal(k[0], (3 * emb_dim, emb_dim), jnp.float32),
            "bqkv": 0.1 * jax.random.normal(k[1], (3 * emb_dim,), jnp.float32),
            "wo": 0.1 * jax.random.normal(k[2], (emb_dim, emb_dim), jnp.float32),
            "bo": 0.1 * jax.random.normal(k[3], (emb_dim,), jnp.float32),
            "g1": jnp.ones((emb_dim,), jnp.float32),
            "be1": jnp.zeros((emb_dim,), jnp.float32),
            "w1": 0.1 * jax.random.normal(k[4], (pf_dim, emb_dim), jnp.float32),
            "b1": 0.1 * jax.random.normal(k[5], (pf_dim,), jnp.float32),
            "w2": 0.1 * jax.random.normal(k[6], (emb_dim, pf_dim), jnp.float32),
            "b2": 0.1 * jax.random.normal(k[7], (emb_dim,), jnp.float32),
            "g2": jnp.ones((emb_dim,), jnp.float32),
            "be2": jnp.zeros((emb_dim,), jnp.float32),
        }
        params["layers"].append(layer)
    return params


if __name__ == "__main__":
    input_dim, emb_dim, n_heads, n_layers, pf_dim = 50, 32, 4, 2, 64
    B, T = 2, 8

    root = jax.random.PRNGKey(0)
    pkey, skey = jax.random.split(root)
    params = init_params(pkey, input_dim, emb_dim, pf_dim, n_layers)
    src = jax.random.randint(skey, (B, T), 0, input_dim, dtype=jnp.int32)

    # Default keeps float32 matmuls (closest to PyTorch numerics).
    # On v6e/v7x, pass matmul_dtype=jnp.bfloat16 to use the bf16 MXU path.
    out = transformer_encoder_forward(src, params, n_heads, n_layers)
    out = jax.block_until_ready(out)
    assert out.shape == (B, T, emb_dim), out.shape
    assert bool(jnp.all(jnp.isfinite(out)))
    print("KERNEL_OK")
</pallas_src>

<mosaic_0001>
module attributes {stable_mosaic.version = 11 : i64} {
  func.func @encoder_stack_kernel(%arg0: i32, %arg1: memref<4x2x32xf32, #tpu.memory_space<vmem>>, %arg2: memref<2x32x32xf32, #tpu.memory_space<vmem>>, %arg3: memref<2x32x32xf32, #tpu.memory_space<vmem>>, %arg4: memref<2x32x32xf32, #tpu.memory_space<vmem>>, %arg5: memref<2x1x32xf32, #tpu.memory_space<vmem>>, %arg6: memref<2x1x32xf32, #tpu.memory_space<vmem>>, %arg7: memref<2x1x32xf32, #tpu.memory_space<vmem>>, %arg8: memref<2x32x32xf32, #tpu.memory_space<vmem>>, %arg9: memref<2x1x32xf32, #tpu.memory_space<vmem>>, %arg10: memref<2x1x32xf32, #tpu.memory_space<vmem>>, %arg11: memref<2x1x32xf32, #tpu.memory_space<vmem>>, %arg12: memref<2x32x64xf32, #tpu.memory_space<vmem>>, %arg13: memref<2x1x64xf32, #tpu.memory_space<vmem>>, %arg14: memref<2x64x32xf32, #tpu.memory_space<vmem>>, %arg15: memref<2x1x32xf32, #tpu.memory_space<vmem>>, %arg16: memref<2x1x32xf32, #tpu.memory_space<vmem>>, %arg17: memref<2x1x32xf32, #tpu.memory_space<vmem>>, %arg18: memref<4x2x32xf32, #tpu.memory_space<vmem>>) attributes {dimension_semantics = [#tpu.dimension_semantics<parallel>], iteration_bounds = array<i64: 2>, scalar_prefetch = 0 : i64, scratch_operands = 0 : i64, tpu.core_type = #tpu.core_type<tc>, window_params = [{transform_indices = @transform_0, window_bounds = array<i64: 4, 2, 32>}, {pipeline_mode = #tpu.pipeline_mode<synchronous>, transform_indices = @transform_1, window_bounds = array<i64: 2, 32, 32>}, {pipeline_mode = #tpu.pipeline_mode<synchronous>, transform_indices = @transform_2, window_bounds = array<i64: 2, 32, 32>}, {pipeline_mode = #tpu.pipeline_mode<synchronous>, transform_indices = @transform_3, window_bounds = array<i64: 2, 32, 32>}, {pipeline_mode = #tpu.pipeline_mode<synchronous>, transform_indices = @transform_4, window_bounds = array<i64: 2, 1, 32>}, {pipeline_mode = #tpu.pipeline_mode<synchronous>, transform_indices = @transform_5, window_bounds = array<i64: 2, 1, 32>}, {pipeline_mode = #tpu.pipeline_mode<synchronous>, transform_indices = @transform_6, window_bounds = array<i64: 2, 1, 32>}, {pipeline_mode = #tpu.pipeline_mode<synchronous>, transform_indices = @transform_7, window_bounds = array<i64: 2, 32, 32>}, {pipeline_mode = #tpu.pipeline_mode<synchronous>, transform_indices = @transform_8, window_bounds = array<i64: 2, 1, 32>}, {pipeline_mode = #tpu.pipeline_mode<synchronous>, transform_indices = @transform_9, window_bounds = array<i64: 2, 1, 32>}, {pipeline_mode = #tpu.pipeline_mode<synchronous>, transform_indices = @transform_10, window_bounds = array<i64: 2, 1, 32>}, {pipeline_mode = #tpu.pipeline_mode<synchronous>, transform_indices = @transform_11, window_bounds = array<i64: 2, 32, 64>}, {pipeline_mode = #tpu.pipeline_mode<synchronous>, transform_indices = @transform_12, window_bounds = array<i64: 2, 1, 64>}, {pipeline_mode = #tpu.pipeline_mode<synchronous>, transform_indices = @transform_13, window_bounds = array<i64: 2, 64, 32>}, {pipeline_mode = #tpu.pipeline_mode<synchronous>, transform_indices = @transform_14, window_bounds = array<i64: 2, 1, 32>}, {pipeline_mode = #tpu.pipeline_mode<synchronous>, transform_indices = @transform_15, window_bounds = array<i64: 2, 1, 32>}, {pipeline_mode = #tpu.pipeline_mode<synchronous>, transform_indices = @transform_16, window_bounds = array<i64: 2, 1, 32>}, {transform_indices = @transform_17, window_bounds = array<i64: 4, 2, 32>}]} {
    %c0 = arith.constant 0 : index
    %c0_0 = arith.constant 0 : index
    %c0_1 = arith.constant 0 : index
    %0 = vector.load %arg1[%c0, %c0_0, %c0_1] : memref<4x2x32xf32, #tpu.memory_space<vmem>>, vector<4x2x32xf32>
    %1 = vector.shape_cast %0 : vector<4x2x32xf32> to vector<8x32xf32>
    %c0_2 = arith.constant 0 : index
    %c0_3 = arith.constant 0 : index
    %c0_4 = arith.constant 0 : index
    %2 = vector.load %arg2[%c0_2, %c0_3, %c0_4] : memref<2x32x32xf32, #tpu.memory_space<vmem>>, vector<1x32x32xf32>
    %3 = vector.shape_cast %2 : vector<1x32x32xf32> to vector<32x32xf32>
    %c0_5 = arith.constant 0 : index
    %c0_6 = arith.constant 0 : index
    %c0_7 = arith.constant 0 : index
    %4 = vector.load %arg3[%c0_5, %c0_6, %c0_7] : memref<2x32x32xf32, #tpu.memory_space<vmem>>, vector<1x32x32xf32>
    %5 = vector.shape_cast %4 : vector<1x32x32xf32> to vector<32x32xf32>
    %c0_8 = arith.constant 0 : index
    %c0_9 = arith.constant 0 : index
    %c0_10 = arith.constant 0 : index
    %6 = vector.load %arg4[%c0_8, %c0_9, %c0_10] : memref<2x32x32xf32, #tpu.memory_space<vmem>>, vector<1x32x32xf32>
    %7 = vector.shape_cast %6 : vector<1x32x32xf32> to vector<32x32xf32>
    %cst = arith.constant dense<0.000000e+00> : vector<8x32xf32>
    %8 = tpu.matmul %1, %3, %cst {dimension_numbers = #tpu.dot_dimension_numbers<[1], [0], [0], [1], [0, 0, 1, 1], [], []>} : vector<8x32xf32>, vector<32x32xf32>, vector<8x32xf32> -> vector<8x32xf32>
    %c0_11 = arith.constant 0 : index
    %c0_12 = arith.constant 0 : index
    %c0_13 = arith.constant 0 : index
    %9 = vector.load %arg5[%c0_11, %c0_12, %c0_13] : memref<2x1x32xf32, #tpu.memory_space<vmem>>, vector<1x1x32xf32>
    %10 = vector.shape_cast %9 : vector<1x1x32xf32> to vector<1x32xf32>
    %11 = vector.broadcast %10 : vector<1x32xf32> to vector<8x32xf32>
    %12 = arith.addf %8, %11 : vector<8x32xf32>
    %cst_14 = arith.constant dense<0.000000e+00> : vector<8x32xf32>
    %13 = tpu.matmul %1, %5, %cst_14 {dimension_numbers = #tpu.dot_dimension_numbers<[1], [0], [0], [1], [0, 0, 1, 1], [], []>} : vector<8x32xf32>, vector<32x32xf32>, vector<8x32xf32> -> vector<8x32xf32>
    %c0_15 = arith.constant 0 : index
    %c0_16 = arith.constant 0 : index
    %c0_17 = arith.constant 0 : index
    %14 = vector.load %arg6[%c0_15, %c0_16, %c0_17] : memref<2x1x32xf32, #tpu.memory_space<vmem>>, vector<1x1x32xf32>
    %15 = vector.shape_cast %14 : vector<1x1x32xf32> to vector<1x32xf32>
    %16 = vector.broadcast %15 : vector<1x32xf32> to vector<8x32xf32>
    %17 = arith.addf %13, %16 : vector<8x32xf32>
    %cst_18 = arith.constant dense<0.000000e+00> : vector<8x32xf32>
    %18 = tpu.matmul %1, %7, %cst_18 {dimension_numbers = #tpu.dot_dimension_numbers<[1], [0], [0], [1], [0, 0, 1, 1], [], []>} : vector<8x32xf32>, vector<32x32xf32>, vector<8x32xf32> -> vector<8x32xf32>
    %c0_19 = arith.constant 0 : index
    %c0_20 = arith.constant 0 : index
    %c0_21 = arith.constant 0 : index
    %19 = vector.load %arg7[%c0_19, %c0_20, %c0_21] : memref<2x1x32xf32, #tpu.memory_space<vmem>>, vector<1x1x32xf32>
    %20 = vector.shape_cast %19 : vector<1x1x32xf32> to vector<1x32xf32>
    %21 = vector.broadcast %20 : vector<1x32xf32> to vector<8x32xf32>
    %22 = arith.addf %18, %21 : vector<8x32xf32>
    %23 = vector.shape_cast %12 : vector<8x32xf32> to vector<4x2x32xf32>
    %24 = vector.shape_cast %17 : vector<8x32xf32> to vector<4x2x32xf32>
    %25 = vector.shape_cast %22 : vector<8x32xf32> to vector<4x2x32xf32>
    %c0_22 = arith.constant 0 : index
    %c0_23 = arith.constant 0 : index
    %c0_24 = arith.constant 0 : index
    %26 = vector.load %arg8[%c0_22, %c0_23, %c0_24] : memref<2x32x32xf32, #tpu.memory_space<vmem>>, vector<1x32x32xf32>
    %27 = vector.shape_cast %26 : vector<1x32x32xf32> to vector<32x32xf32>
    %cst_25 = arith.constant 0.000000e+00 : f32
    %28 = vector.broadcast %cst_25 : f32 to vector<8x32xf32>
    %29 = vector.extract_strided_slice %23 {offsets = [0, 0, 0], sizes = [4, 2, 8], strides = [1, 1, 1]} : vector<4x2x32xf32> to vector<4x2x8xf32>
    %30 = vector.extract_strided_slice %24 {offsets = [0, 0, 0], sizes = [4, 2, 8], strides = [1, 1, 1]} : vector<4x2x32xf32> to vector<4x2x8xf32>
    %31 = vector.extract_strided_slice %25 {offsets = [0, 0, 0], sizes = [4, 2, 8], strides = [1, 1, 1]} : vector<4x2x32xf32> to vector<4x2x8xf32>
    "tpu.trace_start"() <{level = 10 : i32, message = "tqd,tkd->tqk"}> : () -> ()
    %cst_26 = arith.constant dense<0.000000e+00> : vector<4x2x2xf32>
    %32 = tpu.matmul %29, %30, %cst_26 {dimension_numbers = #tpu.dot_dimension_numbers<[2], [2], [1], [1], [0, 0, 0, 1, 1, 1], [0], [0]>} : vector<4x2x8xf32>, vector<4x2x8xf32>, vector<4x2x2xf32> -> vector<4x2x2xf32>
    "tpu.trace_stop"() : () -> ()
    %cst_27 = arith.constant dense<0xFF800000> : vector<4x2xf32>
    %33 = vector.multi_reduction <maximumf>, %32, %cst_27 [2] : vector<4x2x2xf32> to vector<4x2xf32>
    %34 = vector.shape_cast %33 : vector<4x2xf32> to vector<4x2x1xf32>
    %35 = vector.broadcast %34 : vector<4x2x1xf32> to vector<4x2x2xf32>
    %36 = arith.subf %32, %35 : vector<4x2x2xf32>
    %37 = math.exp %36 : vector<4x2x2xf32>
    %cst_28 = arith.constant dense<0.000000e+00> : vector<4x2xf32>
    %38 = vector.multi_reduction <add>, %37, %cst_28 [2] : vector<4x2x2xf32> to vector<4x2xf32>
    %39 = vector.shape_cast %38 : vector<4x2xf32> to vector<4x2x1xf32>
    %40 = tpu.reciprocal %39 {approx = true} : vector<4x2x1xf32> -> vector<4x2x1xf32>
    %41 = vector.broadcast %40 : vector<4x2x1xf32> to vector<4x2x2xf32>
    %42 = arith.mulf %37, %41 : vector<4x2x2xf32>
    "tpu.trace_start"() <{level = 10 : i32, message = "tqk,tkd->tqd"}> : () -> ()
    %cst_29 = arith.constant dense<0.000000e+00> : vector<4x2x8xf32>
    %43 = tpu.matmul %42, %31, %cst_29 {dimension_numbers = #tpu.dot_dimension_numbers<[2], [1], [1], [2], [0, 0, 0, 1, 1, 2], [0], [0]>} : vector<4x2x2xf32>, vector<4x2x8xf32>, vector<4x2x8xf32> -> vector<4x2x8xf32>
    "tpu.trace_stop"() : () -> ()
    %44 = vector.shape_cast %43 : vector<4x2x8xf32> to vector<8x8xf32>
    %45 = vector.extract_strided_slice %27 {offsets = [0, 0], sizes = [8, 32], strides = [1, 1]} : vector<32x32xf32> to vector<8x32xf32>
    %cst_30 = arith.constant dense<0.000000e+00> : vector<8x32xf32>
    %46 = tpu.matmul %44, %45, %cst_30 {dimension_numbers = #tpu.dot_dimension_numbers<[1], [0], [0], [1], [0, 0, 1, 1], [], []>} : vector<8x8xf32>, vector<8x32xf32>, vector<8x32xf32> -> vector<8x32xf32>
    %47 = arith.addf %28, %46 : vector<8x32xf32>
    %48 = vector.extract_strided_slice %23 {offsets = [0, 0, 8], sizes = [4, 2, 8], strides = [1, 1, 1]} : vector<4x2x32xf32> to vector<4x2x8xf32>
    %49 = vector.extract_strided_slice %24 {offsets = [0, 0, 8], sizes = [4, 2, 8], strides = [1, 1, 1]} : vector<4x2x32xf32> to vector<4x2x8xf32>
    %50 = vector.extract_strided_slice %25 {offsets = [0, 0, 8], sizes = [4, 2, 8], strides = [1, 1, 1]} : vector<4x2x32xf32> to vector<4x2x8xf32>
    "tpu.trace_start"() <{level = 10 : i32, message = "tqd,tkd->tqk"}> : () -> ()
    %cst_31 = arith.constant dense<0.000000e+00> : vector<4x2x2xf32>
    %51 = tpu.matmul %48, %49, %cst_31 {dimension_numbers = #tpu.dot_dimension_numbers<[2], [2], [1], [1], [0, 0, 0, 1, 1, 1], [0], [0]>} : vector<4x2x8xf32>, vector<4x2x8xf32>, vector<4x2x2xf32> -> vector<4x2x2xf32>
    "tpu.trace_stop"() : () -> ()
    %cst_32 = arith.constant dense<0xFF800000> : vector<4x2xf32>
    %52 = vector.multi_reduction <maximumf>, %51, %cst_32 [2] : vector<4x2x2xf32> to vector<4x2xf32>
    %53 = vector.shape_cast %52 : vector<4x2xf32> to vector<4x2x1xf32>
    %54 = vector.broadcast %53 : vector<4x2x1xf32> to vector<4x2x2xf32>
    %55 = arith.subf %51, %54 : vector<4x2x2xf32>
    %56 = math.exp %55 : vector<4x2x2xf32>
    %cst_33 = arith.constant dense<0.000000e+00> : vector<4x2xf32>
    %57 = vector.multi_reduction <add>, %56, %cst_33 [2] : vector<4x2x2xf32> to vector<4x2xf32>
    %58 = vector.shape_cast %57 : vector<4x2xf32> to vector<4x2x1xf32>
    %59 = tpu.reciprocal %58 {approx = true} : vector<4x2x1xf32> -> vector<4x2x1xf32>
    %60 = vector.broadcast %59 : vector<4x2x1xf32> to vector<4x2x2xf32>
    %61 = arith.mulf %56, %60 : vector<4x2x2xf32>
    "tpu.trace_start"() <{level = 10 : i32, message = "tqk,tkd->tqd"}> : () -> ()
    %cst_34 = arith.constant dense<0.000000e+00> : vector<4x2x8xf32>
    %62 = tpu.matmul %61, %50, %cst_34 {dimension_numbers = #tpu.dot_dimension_numbers<[2], [1], [1], [2], [0, 0, 0, 1, 1, 2], [0], [0]>} : vector<4x2x2xf32>, vector<4x2x8xf32>, vector<4x2x8xf32> -> vector<4x2x8xf32>
    "tpu.trace_stop"() : () -> ()
    %63 = vector.shape_cast %62 : vector<4x2x8xf32> to vector<8x8xf32>
    %64 = vector.extract_strided_slice %27 {offsets = [8, 0], sizes = [8, 32], strides = [1, 1]} : vector<32x32xf32> to vector<8x32xf32>
    %cst_35 = arith.constant dense<0.000000e+00> : vector<8x32xf32>
    %65 = tpu.matmul %63, %64, %cst_35 {dimension_numbers = #tpu.dot_dimension_numbers<[1], [0], [0], [1], [0, 0, 1, 1], [], []>} : vector<8x8xf32>, vector<8x32xf32>, vector<8x32xf32> -> vector<8x32xf32>
    %66 = arith.addf %47, %65 : vector<8x32xf32>
    %67 = vector.extract_strided_slice %23 {offsets = [0, 0, 16], sizes = [4, 2, 8], strides = [1, 1, 1]} : vector<4x2x32xf32> to vector<4x2x8xf32>
    %68 = vector.extract_strided_slice %24 {offsets = [0, 0, 16], sizes = [4, 2, 8], strides = [1, 1, 1]} : vector<4x2x32xf32> to vector<4x2x8xf32>
    %69 = vector.extract_strided_slice %25 {offsets = [0, 0, 16], sizes = [4, 2, 8], strides = [1, 1, 1]} : vector<4x2x32xf32> to vector<4x2x8xf32>
    "tpu.trace_start"() <{level = 10 : i32, message = "tqd,tkd->tqk"}> : () -> ()
    %cst_36 = arith.constant dense<0.000000e+00> : vector<4x2x2xf32>
    %70 = tpu.matmul %67, %68, %cst_36 {dimension_numbers = #tpu.dot_dimension_numbers<[2], [2], [1], [1], [0, 0, 0, 1, 1, 1], [0], [0]>} : vector<4x2x8xf32>, vector<4x2x8xf32>, vector<4x2x2xf32> -> vector<4x2x2xf32>
    "tpu.trace_stop"() : () -> ()
    %cst_37 = arith.constant dense<0xFF800000> : vector<4x2xf32>
    %71 = vector.multi_reduction <maximumf>, %70, %cst_37 [2] : vector<4x2x2xf32> to vector<4x2xf32>
    %72 = vector.shape_cast %71 : vector<4x2xf32> to vector<4x2x1xf32>
    %73 = vector.broadcast %72 : vector<4x2x1xf32> to vector<4x2x2xf32>
    %74 = arith.subf %70, %73 : vector<4x2x2xf32>
    %75 = math.exp %74 : vector<4x2x2xf32>
    %cst_38 = arith.constant dense<0.000000e+00> : vector<4x2xf32>
    %76 = vector.multi_reduction <add>, %75, %cst_38 [2] : vector<4x2x2xf32> to vector<4x2xf32>
    %77 = vector.shape_cast %76 : vector<4x2xf32> to vector<4x2x1xf32>
    %78 = tpu.reciprocal %77 {approx = true} : vector<4x2x1xf32> -> vector<4x2x1xf32>
    %79 = vector.broadcast %78 : vector<4x2x1xf32> to vector<4x2x2xf32>
    %80 = arith.mulf %75, %79 : vector<4x2x2xf32>
    "tpu.trace_start"() <{level = 10 : i32, message = "tqk,tkd->tqd"}> : () -> ()
    %cst_39 = arith.constant dense<0.000000e+00> : vector<4x2x8xf32>
    %81 = tpu.matmul %80, %69, %cst_39 {dimension_numbers = #tpu.dot_dimension_numbers<[2], [1], [1], [2], [0, 0, 0, 1, 1, 2], [0], [0]>} : vector<4x2x2xf32>, vector<4x2x8xf32>, vector<4x2x8xf32> -> vector<4x2x8xf32>
    "tpu.trace_stop"() : () -> ()
    %82 = vector.shape_cast %81 : vector<4x2x8xf32> to vector<8x8xf32>
    %83 = vector.extract_strided_slice %27 {offsets = [16, 0], sizes = [8, 32], strides = [1, 1]} : vector<32x32xf32> to vector<8x32xf32>
    %cst_40 = arith.constant dense<0.000000e+00> : vector<8x32xf32>
    %84 = tpu.matmul %82, %83, %cst_40 {dimension_numbers = #tpu.dot_dimension_numbers<[1], [0], [0], [1], [0, 0, 1, 1], [], []>} : vector<8x8xf32>, vector<8x32xf32>, vector<8x32xf32> -> vector<8x32xf32>
    %85 = arith.addf %66, %84 : vector<8x32xf32>
    %86 = vector.extract_strided_slice %23 {offsets = [0, 0, 24], sizes = [4, 2, 8], strides = [1, 1, 1]} : vector<4x2x32xf32> to vector<4x2x8xf32>
    %87 = vector.extract_strided_slice %24 {offsets = [0, 0, 24], sizes = [4, 2, 8], strides = [1, 1, 1]} : vector<4x2x32xf32> to vector<4x2x8xf32>
    %88 = vector.extract_strided_slice %25 {offsets = [0, 0, 24], sizes = [4, 2, 8], strides = [1, 1, 1]} : vector<4x2x32xf32> to vector<4x2x8xf32>
    "tpu.trace_start"() <{level = 10 : i32, message = "tqd,tkd->tqk"}> : () -> ()
    %cst_41 = arith.constant dense<0.000000e+00> : vector<4x2x2xf32>
    %89 = tpu.matmul %86, %87, %cst_41 {dimension_numbers = #tpu.dot_dimension_numbers<[2], [2], [1], [1], [0, 0, 0, 1, 1, 1], [0], [0]>} : vector<4x2x8xf32>, vector<4x2x8xf32>, vector<4x2x2xf32> -> vector<4x2x2xf32>
    "tpu.trace_stop"() : () -> ()
    %cst_42 = arith.constant dense<0xFF800000> : vector<4x2xf32>
    %90 = vector.multi_reduction <maximumf>, %89, %cst_42 [2] : vector<4x2x2xf32> to vector<4x2xf32>
    %91 = vector.shape_cast %90 : vector<4x2xf32> to vector<4x2x1xf32>
    %92 = vector.broadcast %91 : vector<4x2x1xf32> to vector<4x2x2xf32>
    %93 = arith.subf %89, %92 : vector<4x2x2xf32>
    %94 = math.exp %93 : vector<4x2x2xf32>
    %cst_43 = arith.constant dense<0.000000e+00> : vector<4x2xf32>
    %95 = vector.multi_reduction <add>, %94, %cst_43 [2] : vector<4x2x2xf32> to vector<4x2xf32>
    %96 = vector.shape_cast %95 : vector<4x2xf32> to vector<4x2x1xf32>
    %97 = tpu.reciprocal %96 {approx = true} : vector<4x2x1xf32> -> vector<4x2x1xf32>
    %98 = vector.broadcast %97 : vector<4x2x1xf32> to vector<4x2x2xf32>
    %99 = arith.mulf %94, %98 : vector<4x2x2xf32>
    "tpu.trace_start"() <{level = 10 : i32, message = "tqk,tkd->tqd"}> : () -> ()
    %cst_44 = arith.constant dense<0.000000e+00> : vector<4x2x8xf32>
    %100 = tpu.matmul %99, %88, %cst_44 {dimension_numbers = #tpu.dot_dimension_numbers<[2], [1], [1], [2], [0, 0, 0, 1, 1, 2], [0], [0]>} : vector<4x2x2xf32>, vector<4x2x8xf32>, vector<4x2x8xf32> -> vector<4x2x8xf32>
    "tpu.trace_stop"() : () -> ()
    %101 = vector.shape_cast %100 : vector<4x2x8xf32> to vector<8x8xf32>
    %102 = vector.extract_strided_slice %27 {offsets = [24, 0], sizes = [8, 32], strides = [1, 1]} : vector<32x32xf32> to vector<8x32xf32>
    %cst_45 = arith.constant dense<0.000000e+00> : vector<8x32xf32>
    %103 = tpu.matmul %101, %102, %cst_45 {dimension_numbers = #tpu.dot_dimension_numbers<[1], [0], [0], [1], [0, 0, 1, 1], [], []>} : vector<8x8xf32>, vector<8x32xf32>, vector<8x32xf32> -> vector<8x32xf32>
    %104 = arith.addf %85, %103 : vector<8x32xf32>
    %c0_46 = arith.constant 0 : index
    %c0_47 = arith.constant 0 : index
    %c0_48 = arith.constant 0 : index
    %105 = vector.load %arg9[%c0_46, %c0_47, %c0_48] : memref<2x1x32xf32, #tpu.memory_space<vmem>>, vector<1x1x32xf32>
    %106 = vector.shape_cast %105 : vector<1x1x32xf32> to vector<1x32xf32>
    %107 = vector.broadcast %106 : vector<1x32xf32> to vector<8x32xf32>
    %108 = arith.addf %104, %107 : vector<8x32xf32>
    %109 = arith.addf %1, %108 : vector<8x32xf32>
    %c0_49 = arith.constant 0 : index
    %c0_50 = arith.constant 0 : index
    %c0_51 = arith.constant 0 : index
    %110 = vector.load %arg10[%c0_49, %c0_50, %c0_51] : memref<2x1x32xf32, #tpu.memory_space<vmem>>, vector<1x1x32xf32>
    %111 = vector.shape_cast %110 : vector<1x1x32xf32> to vector<1x32xf32>
    %c0_52 = arith.constant 0 : index
    %c0_53 = arith.constant 0 : index
    %c0_54 = arith.constant 0 : index
    %112 = vector.load %arg11[%c0_52, %c0_53, %c0_54] : memref<2x1x32xf32, #tpu.memory_space<vmem>>, vector<1x1x32xf32>
    %113 = vector.shape_cast %112 : vector<1x1x32xf32> to vector<1x32xf32>
    %cst_55 = arith.constant dense<0.000000e+00> : vector<8xf32>
    %114 = vector.multi_reduction <add>, %109, %cst_55 [1] : vector<8x32xf32> to vector<8xf32>
    %115 = vector.shape_cast %114 : vector<8xf32> to vector<8x1xf32>
    %cst_56 = arith.constant 3.200000e+01 : f32
    %116 = vector.broadcast %cst_56 : f32 to vector<8x1xf32>
    %117 = arith.divf %115, %116 : vector<8x1xf32>
    %118 = vector.broadcast %117 : vector<8x1xf32> to vector<8x32xf32>
    %119 = arith.subf %109, %118 : vector<8x32xf32>
    %120 = arith.mulf %119, %119 : vector<8x32xf32>
    %cst_57 = arith.constant dense<0.000000e+00> : vector<8xf32>
    %121 = vector.multi_reduction <add>, %120, %cst_57 [1] : vector<8x32xf32> to vector<8xf32>
    %122 = vector.shape_cast %121 : vector<8xf32> to vector<8x1xf32>
    %cst_58 = arith.constant 3.200000e+01 : f32
    %123 = vector.broadcast %cst_58 : f32 to vector<8x1xf32>
    %124 = arith.divf %122, %123 : vector<8x1xf32>
    %125 = vector.broadcast %117 : vector<8x1xf32> to vector<8x32xf32>
    %126 = arith.subf %109, %125 : vector<8x32xf32>
    %cst_59 = arith.constant 9.99999974E-6 : f32
    %127 = vector.broadcast %cst_59 : f32 to vector<8x1xf32>
    %128 = arith.addf %124, %127 : vector<8x1xf32>
    %129 = math.rsqrt %128 : vector<8x1xf32>
    %130 = vector.broadcast %129 : vector<8x1xf32> to vector<8x32xf32>
    %131 = arith.mulf %126, %130 : vector<8x32xf32>
    %132 = vector.broadcast %111 : vector<1x32xf32> to vector<8x32xf32>
    %133 = arith.mulf %131, %132 : vector<8x32xf32>
    %134 = vector.broadcast %113 : vector<1x32xf32> to vector<8x32xf32>
    %135 = arith.addf %133, %134 : vector<8x32xf32>
    %c0_60 = arith.constant 0 : index
    %c0_61 = arith.constant 0 : index
    %c0_62 = arith.constant 0 : index
    %136 = vector.load %arg12[%c0_60, %c0_61, %c0_62] : memref<2x32x64xf32, #tpu.memory_space<vmem>>, vector<1x32x64xf32>
    %137 = vector.shape_cast %136 : vector<1x32x64xf32> to vector<32x64xf32>
    %c0_63 = arith.constant 0 : index
    %c0_64 = arith.constant 0 : index
    %c0_65 = arith.constant 0 : index
    %138 = vector.load %arg14[%c0_63, %c0_64, %c0_65] : memref<2x64x32xf32, #tpu.memory_space<vmem>>, vector<1x64x32xf32>
    %139 = vector.shape_cast %138 : vector<1x64x32xf32> to vector<64x32xf32>
    %cst_66 = arith.constant dense<0.000000e+00> : vector<8x64xf32>
    %140 = tpu.matmul %135, %137, %cst_66 {dimension_numbers = #tpu.dot_dimension_numbers<[1], [0], [0], [1], [0, 0, 1, 1], [], []>} : vector<8x32xf32>, vector<32x64xf32>, vector<8x64xf32> -> vector<8x64xf32>
    %c0_67 = arith.constant 0 : index
    %c0_68 = arith.constant 0 : index
    %c0_69 = arith.constant 0 : index
    %141 = vector.load %arg13[%c0_67, %c0_68, %c0_69] : memref<2x1x64xf32, #tpu.memory_space<vmem>>, vector<1x1x64xf32>
    %142 = vector.shape_cast %141 : vector<1x1x64xf32> to vector<1x64xf32>
    %143 = vector.broadcast %142 : vector<1x64xf32> to vector<8x64xf32>
    %144 = arith.addf %140, %143 : vector<8x64xf32>
    %cst_70 = arith.constant 0.000000e+00 : f32
    %145 = vector.broadcast %cst_70 : f32 to vector<8x64xf32>
    %146 = arith.maximumf %144, %145 : vector<8x64xf32>
    %cst_71 = arith.constant dense<0.000000e+00> : vector<8x32xf32>
    %147 = tpu.matmul %146, %139, %cst_71 {dimension_numbers = #tpu.dot_dimension_numbers<[1], [0], [0], [1], [0, 0, 1, 1], [], []>} : vector<8x64xf32>, vector<64x32xf32>, vector<8x32xf32> -> vector<8x32xf32>
    %c0_72 = arith.constant 0 : index
    %c0_73 = arith.constant 0 : index
    %c0_74 = arith.constant 0 : index
    %148 = vector.load %arg15[%c0_72, %c0_73, %c0_74] : memref<2x1x32xf32, #tpu.memory_space<vmem>>, vector<1x1x32xf32>
    %149 = vector.shape_cast %148 : vector<1x1x32xf32> to vector<1x32xf32>
    %150 = vector.broadcast %149 : vector<1x32xf32> to vector<8x32xf32>
    %151 = arith.addf %147, %150 : vector<8x32xf32>
    %152 = arith.addf %135, %151 : vector<8x32xf32>
    %c0_75 = arith.constant 0 : index
    %c0_76 = arith.constant 0 : index
    %c0_77 = arith.constant 0 : index
    %153 = vector.load %arg16[%c0_75, %c0_76, %c0_77] : memref<2x1x32xf32, #tpu.memory_space<vmem>>, vector<1x1x32xf32>
    %154 = vector.shape_cast %153 : vector<1x1x32xf32> to vector<1x32xf32>
    %c0_78 = arith.constant 0 : index
    %c0_79 = arith.constant 0 : index
    %c0_80 = arith.constant 0 : index
    %155 = vector.load %arg17[%c0_78, %c0_79, %c0_80] : memref<2x1x32xf32, #tpu.memory_space<vmem>>, vector<1x1x32xf32>
    %156 = vector.shape_cast %155 : vector<1x1x32xf32> to vector<1x32xf32>
    %cst_81 = arith.constant dense<0.000000e+00> : vector<8xf32>
    %157 = vector.multi_reduction <add>, %152, %cst_81 [1] : vector<8x32xf32> to vector<8xf32>
    %158 = vector.shape_cast %157 : vector<8xf32> to vector<8x1xf32>
    %cst_82 = arith.constant 3.200000e+01 : f32
    %159 = vector.broadcast %cst_82 : f32 to vector<8x1xf32>
    %160 = arith.divf %158, %159 : vector<8x1xf32>
    %161 = vector.broadcast %160 : vector<8x1xf32> to vector<8x32xf32>
    %162 = arith.subf %152, %161 : vector<8x32xf32>
    %163 = arith.mulf %162, %162 : vector<8x32xf32>
    %cst_83 = arith.constant dense<0.000000e+00> : vector<8xf32>
    %164 = vector.multi_reduction <add>, %163, %cst_83 [1] : vector<8x32xf32> to vector<8xf32>
    %165 = vector.shape_cast %164 : vector<8xf32> to vector<8x1xf32>
    %cst_84 = arith.constant 3.200000e+01 : f32
    %166 = vector.broadcast %cst_84 : f32 to vector<8x1xf32>
    %167 = arith.divf %165, %166 : vector<8x1xf32>
    %168 = vector.broadcast %160 : vector<8x1xf32> to vector<8x32xf32>
    %169 = arith.subf %152, %168 : vector<8x32xf32>
    %cst_85 = arith.constant 9.99999974E-6 : f32
    %170 = vector.broadcast %cst_85 : f32 to vector<8x1xf32>
    %171 = arith.addf %167, %170 : vector<8x1xf32>
    %172 = math.rsqrt %171 : vector<8x1xf32>
    %173 = vector.broadcast %172 : vector<8x1xf32> to vector<8x32xf32>
    %174 = arith.mulf %169, %173 : vector<8x32xf32>
    %175 = vector.broadcast %154 : vector<1x32xf32> to vector<8x32xf32>
    %176 = arith.mulf %174, %175 : vector<8x32xf32>
    %177 = vector.broadcast %156 : vector<1x32xf32> to vector<8x32xf32>
    %178 = arith.addf %176, %177 : vector<8x32xf32>
    %c1 = arith.constant 1 : index
    %c0_86 = arith.constant 0 : index
    %c0_87 = arith.constant 0 : index
    %179 = vector.load %arg2[%c1, %c0_86, %c0_87] : memref<2x32x32xf32, #tpu.memory_space<vmem>>, vector<1x32x32xf32>
    %180 = vector.shape_cast %179 : vector<1x32x32xf32> to vector<32x32xf32>
    %c1_88 = arith.constant 1 : index
    %c0_89 = arith.constant 0 : index
    %c0_90 = arith.constant 0 : index
    %181 = vector.load %arg3[%c1_88, %c0_89, %c0_90] : memref<2x32x32xf32, #tpu.memory_space<vmem>>, vector<1x32x32xf32>
    %182 = vector.shape_cast %181 : vector<1x32x32xf32> to vector<32x32xf32>
    %c1_91 = arith.constant 1 : index
    %c0_92 = arith.constant 0 : index
    %c0_93 = arith.constant 0 : index
    %183 = vector.load %arg4[%c1_91, %c0_92, %c0_93] : memref<2x32x32xf32, #tpu.memory_space<vmem>>, vector<1x32x32xf32>
    %184 = vector.shape_cast %183 : vector<1x32x32xf32> to vector<32x32xf32>
    %cst_94 = arith.constant dense<0.000000e+00> : vector<8x32xf32>
    %185 = tpu.matmul %178, %180, %cst_94 {dimension_numbers = #tpu.dot_dimension_numbers<[1], [0], [0], [1], [0, 0, 1, 1], [], []>} : vector<8x32xf32>, vector<32x32xf32>, vector<8x32xf32> -> vector<8x32xf32>
    %c1_95 = arith.constant 1 : index
    %c0_96 = arith.constant 0 : index
    %c0_97 = arith.constant 0 : index
    %186 = vector.load %arg5[%c1_95, %c0_96, %c0_97] : memref<2x1x32xf32, #tpu.memory_space<vmem>>, vector<1x1x32xf32>
    %187 = vector.shape_cast %186 : vector<1x1x32xf32> to vector<1x32xf32>
    %188 = vector.broadcast %187 : vector<1x32xf32> to vector<8x32xf32>
    %189 = arith.addf %185, %188 : vector<8x32xf32>
    %cst_98 = arith.constant dense<0.000000e+00> : vector<8x32xf32>
    %190 = tpu.matmul %178, %182, %cst_98 {dimension_numbers = #tpu.dot_dimension_numbers<[1], [0], [0], [1], [0, 0, 1, 1], [], []>} : vector<8x32xf32>, vector<32x32xf32>, vector<8x32xf32> -> vector<8x32xf32>
    %c1_99 = arith.constant 1 : index
    %c0_100 = arith.constant 0 : index
    %c0_101 = arith.constant 0 : index
    %191 = vector.load %arg6[%c1_99, %c0_100, %c0_101] : memref<2x1x32xf32, #tpu.memory_space<vmem>>, vector<1x1x32xf32>
    %192 = vector.shape_cast %191 : vector<1x1x32xf32> to vector<1x32xf32>
    %193 = vector.broadcast %192 : vector<1x32xf32> to vector<8x32xf32>
    %194 = arith.addf %190, %193 : vector<8x32xf32>
    %cst_102 = arith.constant dense<0.000000e+00> : vector<8x32xf32>
    %195 = tpu.matmul %178, %184, %cst_102 {dimension_numbers = #tpu.dot_dimension_numbers<[1], [0], [0], [1], [0, 0, 1, 1], [], []>} : vector<8x32xf32>, vector<32x32xf32>, vector<8x32xf32> -> vector<8x32xf32>
    %c1_103 = arith.constant 1 : index
    %c0_104 = arith.constant 0 : index
    %c0_105 = arith.constant 0 : index
    %196 = vector.load %arg7[%c1_103, %c0_104, %c0_105] : memref<2x1x32xf32, #tpu.memory_space<vmem>>, vector<1x1x32xf32>
    %197 = vector.shape_cast %196 : vector<1x1x32xf32> to vector<1x32xf32>
    %198 = vector.broadcast %197 : vector<1x32xf32> to vector<8x32xf32>
    %199 = arith.addf %195, %198 : vector<8x32xf32>
    %200 = vector.shape_cast %189 : vector<8x32xf32> to vector<4x2x32xf32>
    %201 = vector.shape_cast %194 : vector<8x32xf32> to vector<4x2x32xf32>
    %202 = vector.shape_cast %199 : vector<8x32xf32> to vector<4x2x32xf32>
    %c1_106 = arith.constant 1 : index
    %c0_107 = arith.constant 0 : index
    %c0_108 = arith.constant 0 : index
    %203 = vector.load %arg8[%c1_106, %c0_107, %c0_108] : memref<2x32x32xf32, #tpu.memory_space<vmem>>, vector<1x32x32xf32>
    %204 = vector.shape_cast %203 : vector<1x32x32xf32> to vector<32x32xf32>
    %cst_109 = arith.constant 0.000000e+00 : f32
    %205 = vector.broadcast %cst_109 : f32 to vector<8x32xf32>
    %206 = vector.extract_strided_slice %200 {offsets = [0, 0, 0], sizes = [4, 2, 8], strides = [1, 1, 1]} : vector<4x2x32xf32> to vector<4x2x8xf32>
    %207 = vector.extract_strided_slice %201 {offsets = [0, 0, 0], sizes = [4, 2, 8], strides = [1, 1, 1]} : vector<4x2x32xf32> to vector<4x2x8xf32>
    %208 = vector.extract_strided_slice %202 {offsets = [0, 0, 0], sizes = [4, 2, 8], strides = [1, 1, 1]} : vector<4x2x32xf32> to vector<4x2x8xf32>
    "tpu.trace_start"() <{level = 10 : i32, message = "tqd,tkd->tqk"}> : () -> ()
    %cst_110 = arith.constant dense<0.000000e+00> : vector<4x2x2xf32>
    %209 = tpu.matmul %206, %207, %cst_110 {dimension_numbers = #tpu.dot_dimension_numbers<[2], [2], [1], [1], [0, 0, 0, 1, 1, 1], [0], [0]>} : vector<4x2x8xf32>, vector<4x2x8xf32>, vector<4x2x2xf32> -> vector<4x2x2xf32>
    "tpu.trace_stop"() : () -> ()
    %cst_111 = arith.constant dense<0xFF800000> : vector<4x2xf32>
    %210 = vector.multi_reduction <maximumf>, %209, %cst_111 [2] : vector<4x2x2xf32> to vector<4x2xf32>
    %211 = vector.shape_cast %210 : vector<4x2xf32> to vector<4x2x1xf32>
    %212 = vector.broadcast %211 : vector<4x2x1xf32> to vector<4x2x2xf32>
    %213 = arith.subf %209, %212 : vector<4x2x2xf32>
    %214 = math.exp %213 : vector<4x2x2xf32>
    %cst_112 = arith.constant dense<0.000000e+00> : vector<4x2xf32>
    %215 = vector.multi_reduction <add>, %214, %cst_112 [2] : vector<4x2x2xf32> to vector<4x2xf32>
    %216 = vector.shape_cast %215 : vector<4x2xf32> to vector<4x2x1xf32>
    %217 = tpu.reciprocal %216 {approx = true} : vector<4x2x1xf32> -> vector<4x2x1xf32>
    %218 = vector.broadcast %217 : vector<4x2x1xf32> to vector<4x2x2xf32>
    %219 = arith.mulf %214, %218 : vector<4x2x2xf32>
    "tpu.trace_start"() <{level = 10 : i32, message = "tqk,tkd->tqd"}> : () -> ()
    %cst_113 = arith.constant dense<0.000000e+00> : vector<4x2x8xf32>
    %220 = tpu.matmul %219, %208, %cst_113 {dimension_numbers = #tpu.dot_dimension_numbers<[2], [1], [1], [2], [0, 0, 0, 1, 1, 2], [0], [0]>} : vector<4x2x2xf32>, vector<4x2x8xf32>, vector<4x2x8xf32> -> vector<4x2x8xf32>
    "tpu.trace_stop"() : () -> ()
    %221 = vector.shape_cast %220 : vector<4x2x8xf32> to vector<8x8xf32>
    %222 = vector.extract_strided_slice %204 {offsets = [0, 0], sizes = [8, 32], strides = [1, 1]} : vector<32x32xf32> to vector<8x32xf32>
    %cst_114 = arith.constant dense<0.000000e+00> : vector<8x32xf32>
    %223 = tpu.matmul %221, %222, %cst_114 {dimension_numbers = #tpu.dot_dimension_numbers<[1], [0], [0], [1], [0, 0, 1, 1], [], []>} : vector<8x8xf32>, vector<8x32xf32>, vector<8x32xf32> -> vector<8x32xf32>
    %224 = arith.addf %205, %223 : vector<8x32xf32>
    %225 = vector.extract_strided_slice %200 {offsets = [0, 0, 8], sizes = [4, 2, 8], strides = [1, 1, 1]} : vector<4x2x32xf32> to vector<4x2x8xf32>
    %226 = vector.extract_strided_slice %201 {offsets = [0, 0, 8], sizes = [4, 2, 8], strides = [1, 1, 1]} : vector<4x2x32xf32> to vector<4x2x8xf32>
    %227 = vector.extract_strided_slice %202 {offsets = [0, 0, 8], sizes = [4, 2, 8], strides = [1, 1, 1]} : vector<4x2x32xf32> to vector<4x2x8xf32>
    "tpu.trace_start"() <{level = 10 : i32, message = "tqd,tkd->tqk"}> : () -> ()
    %cst_115 = arith.constant dense<0.000000e+00> : vector<4x2x2xf32>
    %228 = tpu.matmul %225, %226, %cst_115 {dimension_numbers = #tpu.dot_dimension_numbers<[2], [2], [1], [1], [0, 0, 0, 1, 1, 1], [0], [0]>} : vector<4x2x8xf32>, vector<4x2x8xf32>, vector<4x2x2xf32> -> vector<4x2x2xf32>
    "tpu.trace_stop"() : () -> ()
    %cst_116 = arith.constant dense<0xFF800000> : vector<4x2xf32>
    %229 = vector.multi_reduction <maximumf>, %228, %cst_116 [2] : vector<4x2x2xf32> to vector<4x2xf32>
    %230 = vector.shape_cast %229 : vector<4x2xf32> to vector<4x2x1xf32>
    %231 = vector.broadcast %230 : vector<4x2x1xf32> to vector<4x2x2xf32>
    %232 = arith.subf %228, %231 : vector<4x2x2xf32>
    %233 = math.exp %232 : vector<4x2x2xf32>
    %cst_117 = arith.constant dense<0.000000e+00> : vector<4x2xf32>
    %234 = vector.multi_reduction <add>, %233, %cst_117 [2] : vector<4x2x2xf32> to vector<4x2xf32>
    %235 = vector.shape_cast %234 : vector<4x2xf32> to vector<4x2x1xf32>
    %236 = tpu.reciprocal %235 {approx = true} : vector<4x2x1xf32> -> vector<4x2x1xf32>
    %237 = vector.broadcast %236 : vector<4x2x1xf32> to vector<4x2x2xf32>
    %238 = arith.mulf %233, %237 : vector<4x2x2xf32>
    "tpu.trace_start"() <{level = 10 : i32, message = "tqk,tkd->tqd"}> : () -> ()
    %cst_118 = arith.constant dense<0.000000e+00> : vector<4x2x8xf32>
    %239 = tpu.matmul %238, %227, %cst_118 {dimension_numbers = #tpu.dot_dimension_numbers<[2], [1], [1], [2], [0, 0, 0, 1, 1, 2], [0], [0]>} : vector<4x2x2xf32>, vector<4x2x8xf32>, vector<4x2x8xf32> -> vector<4x2x8xf32>
    "tpu.trace_stop"() : () -> ()
    %240 = vector.shape_cast %239 : vector<4x2x8xf32> to vector<8x8xf32>
    %241 = vector.extract_strided_slice %204 {offsets = [8, 0], sizes = [8, 32], strides = [1, 1]} : vector<32x32xf32> to vector<8x32xf32>
    %cst_119 = arith.constant dense<0.000000e+00> : vector<8x32xf32>
    %242 = tpu.matmul %240, %241, %cst_119 {dimension_numbers = #tpu.dot_dimension_numbers<[1], [0], [0], [1], [0, 0, 1, 1], [], []>} : vector<8x8xf32>, vector<8x32xf32>, vector<8x32xf32> -> vector<8x32xf32>
    %243 = arith.addf %224, %242 : vector<8x32xf32>
    %244 = vector.extract_strided_slice %200 {offsets = [0, 0, 16], sizes = [4, 2, 8], strides = [1, 1, 1]} : vector<4x2x32xf32> to vector<4x2x8xf32>
    %245 = vector.extract_strided_slice %201 {offsets = [0, 0, 16], sizes = [4, 2, 8], strides = [1, 1, 1]} : vector<4x2x32xf32> to vector<4x2x8xf32>
    %246 = vector.extract_strided_slice %202 {offsets = [0, 0, 16], sizes = [4, 2, 8], strides = [1, 1, 1]} : vector<4x2x32xf32> to vector<4x2x8xf32>
    "tpu.trace_start"() <{level = 10 : i32, message = "tqd,tkd->tqk"}> : () -> ()
    %cst_120 = arith.constant dense<0.000000e+00> : vector<4x2x2xf32>
    %247 = tpu.matmul %244, %245, %cst_120 {dimension_numbers = #tpu.dot_dimension_numbers<[2], [2], [1], [1], [0, 0, 0, 1, 1, 1], [0], [0]>} : vector<4x2x8xf32>, vector<4x2x8xf32>, vector<4x2x2xf32> -> vector<4x2x2xf32>
    "tpu.trace_stop"() : () -> ()
    %cst_121 = arith.constant dense<0xFF800000> : vector<4x2xf32>
    %248 = vector.multi_reduction <maximumf>, %247, %cst_121 [2] : vector<4x2x2xf32> to vector<4x2xf32>
    %249 = vector.shape_cast %248 : vector<4x2xf32> to vector<4x2x1xf32>
    %250 = vector.broadcast %249 : vector<4x2x1xf32> to vector<4x2x2xf32>
    %251 = arith.subf %247, %250 : vector<4x2x2xf32>
    %252 = math.exp %251 : vector<4x2x2xf32>
    %cst_122 = arith.constant dense<0.000000e+00> : vector<4x2xf32>
    %253 = vector.multi_reduction <add>, %252, %cst_122 [2] : vector<4x2x2xf32> to vector<4x2xf32>
    %254 = vector.shape_cast %253 : vector<4x2xf32> to vector<4x2x1xf32>
    %255 = tpu.reciprocal %254 {approx = true} : vector<4x2x1xf32> -> vector<4x2x1xf32>
    %256 = vector.broadcast %255 : vector<4x2x1xf32> to vector<4x2x2xf32>
    %257 = arith.mulf %252, %256 : vector<4x2x2xf32>
    "tpu.trace_start"() <{level = 10 : i32, message = "tqk,tkd->tqd"}> : () -> ()
    %cst_123 = arith.constant dense<0.000000e+00> : vector<4x2x8xf32>
    %258 = tpu.matmul %257, %246, %cst_123 {dimension_numbers = #tpu.dot_dimension_numbers<[2], [1], [1], [2], [0, 0, 0, 1, 1, 2], [0], [0]>} : vector<4x2x2xf32>, vector<4x2x8xf32>, vector<4x2x8xf32> -> vector<4x2x8xf32>
    "tpu.trace_stop"() : () -> ()
    %259 = vector.shape_cast %258 : vector<4x2x8xf32> to vector<8x8xf32>
    %260 = vector.extract_strided_slice %204 {offsets = [16, 0], sizes = [8, 32], strides = [1, 1]} : vector<32x32xf32> to vector<8x32xf32>
    %cst_124 = arith.constant dense<0.000000e+00> : vector<8x32xf32>
    %261 = tpu.matmul %259, %260, %cst_124 {dimension_numbers = #tpu.dot_dimension_numbers<[1], [0], [0], [1], [0, 0, 1, 1], [], []>} : vector<8x8xf32>, vector<8x32xf32>, vector<8x32xf32> -> vector<8x32xf32>
    %262 = arith.addf %243, %261 : vector<8x32xf32>
    %263 = vector.extract_strided_slice %200 {offsets = [0, 0, 24], sizes = [4, 2, 8], strides = [1, 1, 1]} : vector<4x2x32xf32> to vector<4x2x8xf32>
    %264 = vector.extract_strided_slice %201 {offsets = [0, 0, 24], sizes = [4, 2, 8], strides = [1, 1, 1]} : vector<4x2x32xf32> to vector<4x2x8xf32>
    %265 = vector.extract_strided_slice %202 {offsets = [0, 0, 24], sizes = [4, 2, 8], strides = [1, 1, 1]} : vector<4x2x32xf32> to vector<4x2x8xf32>
    "tpu.trace_start"() <{level = 10 : i32, message = "tqd,tkd->tqk"}> : () -> ()
    %cst_125 = arith.constant dense<0.000000e+00> : vector<4x2x2xf32>
    %266 = tpu.matmul %263, %264, %cst_125 {dimension_numbers = #tpu.dot_dimension_numbers<[2], [2], [1], [1], [0, 0, 0, 1, 1, 1], [0], [0]>} : vector<4x2x8xf32>, vector<4x2x8xf32>, vector<4x2x2xf32> -> vector<4x2x2xf32>
    "tpu.trace_stop"() : () -> ()
    %cst_126 = arith.constant dense<0xFF800000> : vector<4x2xf32>
    %267 = vector.multi_reduction <maximumf>, %266, %cst_126 [2] : vector<4x2x2xf32> to vector<4x2xf32>
    %268 = vector.shape_cast %267 : vector<4x2xf32> to vector<4x2x1xf32>
    %269 = vector.broadcast %268 : vector<4x2x1xf32> to vector<4x2x2xf32>
    %270 = arith.subf %266, %269 : vector<4x2x2xf32>
    %271 = math.exp %270 : vector<4x2x2xf32>
    %cst_127 = arith.constant dense<0.000000e+00> : vector<4x2xf32>
    %272 = vector.multi_reduction <add>, %271, %cst_127 [2] : vector<4x2x2xf32> to vector<4x2xf32>
    %273 = vector.shape_cast %272 : vector<4x2xf32> to vector<4x2x1xf32>
    %274 = tpu.reciprocal %273 {approx = true} : vector<4x2x1xf32> -> vector<4x2x1xf32>
    %275 = vector.broadcast %274 : vector<4x2x1xf32> to vector<4x2x2xf32>
    %276 = arith.mulf %271, %275 : vector<4x2x2xf32>
    "tpu.trace_start"() <{level = 10 : i32, message = "tqk,tkd->tqd"}> : () -> ()
    %cst_128 = arith.constant dense<0.000000e+00> : vector<4x2x8xf32>
    %277 = tpu.matmul %276, %265, %cst_128 {dimension_numbers = #tpu.dot_dimension_numbers<[2], [1], [1], [2], [0, 0, 0, 1, 1, 2], [0], [0]>} : vector<4x2x2xf32>, vector<4x2x8xf32>, vector<4x2x8xf32> -> vector<4x2x8xf32>
    "tpu.trace_stop"() : () -> ()
    %278 = vector.shape_cast %277 : vector<4x2x8xf32> to vector<8x8xf32>
    %279 = vector.extract_strided_slice %204 {offsets = [24, 0], sizes = [8, 32], strides = [1, 1]} : vector<32x32xf32> to vector<8x32xf32>
    %cst_129 = arith.constant dense<0.000000e+00> : vector<8x32xf32>
    %280 = tpu.matmul %278, %279, %cst_129 {dimension_numbers = #tpu.dot_dimension_numbers<[1], [0], [0], [1], [0, 0, 1, 1], [], []>} : vector<8x8xf32>, vector<8x32xf32>, vector<8x32xf32> -> vector<8x32xf32>
    %281 = arith.addf %262, %280 : vector<8x32xf32>
    %c1_130 = arith.constant 1 : index
    %c0_131 = arith.constant 0 : index
    %c0_132 = arith.constant 0 : index
    %282 = vector.load %arg9[%c1_130, %c0_131, %c0_132] : memref<2x1x32xf32, #tpu.memory_space<vmem>>, vector<1x1x32xf32>
    %283 = vector.shape_cast %282 : vector<1x1x32xf32> to vector<1x32xf32>
    %284 = vector.broadcast %283 : vector<1x32xf32> to vector<8x32xf32>
    %285 = arith.addf %281, %284 : vector<8x32xf32>
    %286 = arith.addf %178, %285 : vector<8x32xf32>
    %c1_133 = arith.constant 1 : index
    %c0_134 = arith.constant 0 : index
    %c0_135 = arith.constant 0 : index
    %287 = vector.load %arg10[%c1_133, %c0_134, %c0_135] : memref<2x1x32xf32, #tpu.memory_space<vmem>>, vector<1x1x32xf32>
    %288 = vector.shape_cast %287 : vector<1x1x32xf32> to vector<1x32xf32>
    %c1_136 = arith.constant 1 : index
    %c0_137 = arith.constant 0 : index
    %c0_138 = arith.constant 0 : index
    %289 = vector.load %arg11[%c1_136, %c0_137, %c0_138] : memref<2x1x32xf32, #tpu.memory_space<vmem>>, vector<1x1x32xf32>
    %290 = vector.shape_cast %289 : vector<1x1x32xf32> to vector<1x32xf32>
    %cst_139 = arith.constant dense<0.000000e+00> : vector<8xf32>
    %291 = vector.multi_reduction <add>, %286, %cst_139 [1] : vector<8x32xf32> to vector<8xf32>
    %292 = vector.shape_cast %291 : vector<8xf32> to vector<8x1xf32>
    %cst_140 = arith.constant 3.200000e+01 : f32
    %293 = vector.broadcast %cst_140 : f32 to vector<8x1xf32>
    %294 = arith.divf %292, %293 : vector<8x1xf32>
    %295 = vector.broadcast %294 : vector<8x1xf32> to vector<8x32xf32>
    %296 = arith.subf %286, %295 : vector<8x32xf32>
    %297 = arith.mulf %296, %296 : vector<8x32xf32>
    %cst_141 = arith.constant dense<0.000000e+00> : vector<8xf32>
    %298 = vector.multi_reduction <add>, %297, %cst_141 [1] : vector<8x32xf32> to vector<8xf32>
    %299 = vector.shape_cast %298 : vector<8xf32> to vector<8x1xf32>
    %cst_142 = arith.constant 3.200000e+01 : f32
    %300 = vector.broadcast %cst_142 : f32 to vector<8x1xf32>
    %301 = arith.divf %299, %300 : vector<8x1xf32>
    %302 = vector.broadcast %294 : vector<8x1xf32> to vector<8x32xf32>
    %303 = arith.subf %286, %302 : vector<8x32xf32>
    %cst_143 = arith.constant 9.99999974E-6 : f32
    %304 = vector.broadcast %cst_143 : f32 to vector<8x1xf32>
    %305 = arith.addf %301, %304 : vector<8x1xf32>
    %306 = math.rsqrt %305 : vector<8x1xf32>
    %307 = vector.broadcast %306 : vector<8x1xf32> to vector<8x32xf32>
    %308 = arith.mulf %303, %307 : vector<8x32xf32>
    %309 = vector.broadcast %288 : vector<1x32xf32> to vector<8x32xf32>
    %310 = arith.mulf %308, %309 : vector<8x32xf32>
    %311 = vector.broadcast %290 : vector<1x32xf32> to vector<8x32xf32>
    %312 = arith.addf %310, %311 : vector<8x32xf32>
    %c1_144 = arith.constant 1 : index
    %c0_145 = arith.constant 0 : index
    %c0_146 = arith.constant 0 : index
    %313 = vector.load %arg12[%c1_144, %c0_145, %c0_146] : memref<2x32x64xf32, #tpu.memory_space<vmem>>, vector<1x32x64xf32>
    %314 = vector.shape_cast %313 : vector<1x32x64xf32> to vector<32x64xf32>
    %c1_147 = arith.constant 1 : index
    %c0_148 = arith.constant 0 : index
    %c0_149 = arith.constant 0 : index
    %315 = vector.load %arg14[%c1_147, %c0_148, %c0_149] : memref<2x64x32xf32, #tpu.memory_space<vmem>>, vector<1x64x32xf32>
    %316 = vector.shape_cast %315 : vector<1x64x32xf32> to vector<64x32xf32>
    %cst_150 = arith.constant dense<0.000000e+00> : vector<8x64xf32>
    %317 = tpu.matmul %312, %314, %cst_150 {dimension_numbers = #tpu.dot_dimension_numbers<[1], [0], [0], [1], [0, 0, 1, 1], [], []>} : vector<8x32xf32>, vector<32x64xf32>, vector<8x64xf32> -> vector<8x64xf32>
    %c1_151 = arith.constant 1 : index
    %c0_152 = arith.constant 0 : index
    %c0_153 = arith.constant 0 : index
    %318 = vector.load %arg13[%c1_151, %c0_152, %c0_153] : memref<2x1x64xf32, #tpu.memory_space<vmem>>, vector<1x1x64xf32>
    %319 = vector.shape_cast %318 : vector<1x1x64xf32> to vector<1x64xf32>
    %320 = vector.broadcast %319 : vector<1x64xf32> to vector<8x64xf32>
    %321 = arith.addf %317, %320 : vector<8x64xf32>
    %cst_154 = arith.constant 0.000000e+00 : f32
    %322 = vector.broadcast %cst_154 : f32 to vector<8x64xf32>
    %323 = arith.maximumf %321, %322 : vector<8x64xf32>
    %cst_155 = arith.constant dense<0.000000e+00> : vector<8x32xf32>
    %324 = tpu.matmul %323, %316, %cst_155 {dimension_numbers = #tpu.dot_dimension_numbers<[1], [0], [0], [1], [0, 0, 1, 1], [], []>} : vector<8x64xf32>, vector<64x32xf32>, vector<8x32xf32> -> vector<8x32xf32>
    %c1_156 = arith.constant 1 : index
    %c0_157 = arith.constant 0 : index
    %c0_158 = arith.constant 0 : index
    %325 = vector.load %arg15[%c1_156, %c0_157, %c0_158] : memref<2x1x32xf32, #tpu.memory_space<vmem>>, vector<1x1x32xf32>
    %326 = vector.shape_cast %325 : vector<1x1x32xf32> to vector<1x32xf32>
    %327 = vector.broadcast %326 : vector<1x32xf32> to vector<8x32xf32>
    %328 = arith.addf %324, %327 : vector<8x32xf32>
    %329 = arith.addf %312, %328 : vector<8x32xf32>
    %c1_159 = arith.constant 1 : index
    %c0_160 = arith.constant 0 : index
    %c0_161 = arith.constant 0 : index
    %330 = vector.load %arg16[%c1_159, %c0_160, %c0_161] : memref<2x1x32xf32, #tpu.memory_space<vmem>>, vector<1x1x32xf32>
    %331 = vector.shape_cast %330 : vector<1x1x32xf32> to vector<1x32xf32>
    %c1_162 = arith.constant 1 : index
    %c0_163 = arith.constant 0 : index
    %c0_164 = arith.constant 0 : index
    %332 = vector.load %arg17[%c1_162, %c0_163, %c0_164] : memref<2x1x32xf32, #tpu.memory_space<vmem>>, vector<1x1x32xf32>
    %333 = vector.shape_cast %332 : vector<1x1x32xf32> to vector<1x32xf32>
    %cst_165 = arith.constant dense<0.000000e+00> : vector<8xf32>
    %334 = vector.multi_reduction <add>, %329, %cst_165 [1] : vector<8x32xf32> to vector<8xf32>
    %335 = vector.shape_cast %334 : vector<8xf32> to vector<8x1xf32>
    %cst_166 = arith.constant 3.200000e+01 : f32
    %336 = vector.broadcast %cst_166 : f32 to vector<8x1xf32>
    %337 = arith.divf %335, %336 : vector<8x1xf32>
    %338 = vector.broadcast %337 : vector<8x1xf32> to vector<8x32xf32>
    %339 = arith.subf %329, %338 : vector<8x32xf32>
    %340 = arith.mulf %339, %339 : vector<8x32xf32>
    %cst_167 = arith.constant dense<0.000000e+00> : vector<8xf32>
    %341 = vector.multi_reduction <add>, %340, %cst_167 [1] : vector<8x32xf32> to vector<8xf32>
    %342 = vector.shape_cast %341 : vector<8xf32> to vector<8x1xf32>
    %cst_168 = arith.constant 3.200000e+01 : f32
    %343 = vector.broadcast %cst_168 : f32 to vector<8x1xf32>
    %344 = arith.divf %342, %343 : vector<8x1xf32>
    %345 = vector.broadcast %337 : vector<8x1xf32> to vector<8x32xf32>
    %346 = arith.subf %329, %345 : vector<8x32xf32>
    %cst_169 = arith.constant 9.99999974E-6 : f32
    %347 = vector.broadcast %cst_169 : f32 to vector<8x1xf32>
    %348 = arith.addf %344, %347 : vector<8x1xf32>
    %349 = math.rsqrt %348 : vector<8x1xf32>
    %350 = vector.broadcast %349 : vector<8x1xf32> to vector<8x32xf32>
    %351 = arith.mulf %346, %350 : vector<8x32xf32>
    %352 = vector.broadcast %331 : vector<1x32xf32> to vector<8x32xf32>
    %353 = arith.mulf %351, %352 : vector<8x32xf32>
    %354 = vector.broadcast %333 : vector<1x32xf32> to vector<8x32xf32>
    %355 = arith.addf %353, %354 : vector<8x32xf32>
    %356 = vector.shape_cast %355 : vector<8x32xf32> to vector<4x2x32xf32>
    %c0_170 = arith.constant 0 : index
    %c0_171 = arith.constant 0 : index
    %c0_172 = arith.constant 0 : index
    %357 = vector.load %arg18[%c0_170, %c0_171, %c0_172] : memref<4x2x32xf32, #tpu.memory_space<vmem>>, vector<4x2x32xf32>
    tpu.vector_store %arg18[%c0_170, %c0_171, %c0_172], %356 {strides = array<i32>} : memref<4x2x32xf32, #tpu.memory_space<vmem>>, vector<4x2x32xf32>,
    return
  }
  func.func @transform_0(%arg0: i32) -> (i32, i32, i32) {
    %c0_i32 = arith.constant 0 : i32
    %c0_i32_0 = arith.constant 0 : i32
    %c0_i32_1 = arith.constant 0 : i32
    return %arg0, %c0_i32, %c0_i32_0 : i32, i32, i32
  }
  func.func @transform_1(%arg0: i32) -> (i32, i32, i32) {
    %c0_i32 = arith.constant 0 : i32
    %c0_i32_0 = arith.constant 0 : i32
    %c0_i32_1 = arith.constant 0 : i32
    %c0_i32_2 = arith.constant 0 : i32
    return %c0_i32, %c0_i32_0, %c0_i32_1 : i32, i32, i32
  }
  func.func @transform_2(%arg0: i32) -> (i32, i32, i32) {
    %c0_i32 = arith.constant 0 : i32
    %c0_i32_0 = arith.constant 0 : i32
    %c0_i32_1 = arith.constant 0 : i32
    %c0_i32_2 = arith.constant 0 : i32
    return %c0_i32, %c0_i32_0, %c0_i32_1 : i32, i32, i32
  }
  func.func @transform_3(%arg0: i32) -> (i32, i32, i32) {
    %c0_i32 = arith.constant 0 : i32
    %c0_i32_0 = arith.constant 0 : i32
    %c0_i32_1 = arith.constant 0 : i32
    %c0_i32_2 = arith.constant 0 : i32
    return %c0_i32, %c0_i32_0, %c0_i32_1 : i32, i32, i32
  }
  func.func @transform_4(%arg0: i32) -> (i32, i32, i32) {
    %c0_i32 = arith.constant 0 : i32
    %c0_i32_0 = arith.constant 0 : i32
    %c0_i32_1 = arith.constant 0 : i32
    %c0_i32_2 = arith.constant 0 : i32
    return %c0_i32, %c0_i32_0, %c0_i32_1 : i32, i32, i32
  }
  func.func @transform_5(%arg0: i32) -> (i32, i32, i32) {
    %c0_i32 = arith.constant 0 : i32
    %c0_i32_0 = arith.constant 0 : i32
    %c0_i32_1 = arith.constant 0 : i32
    %c0_i32_2 = arith.constant 0 : i32
    return %c0_i32, %c0_i32_0, %c0_i32_1 : i32, i32, i32
  }
  func.func @transform_6(%arg0: i32) -> (i32, i32, i32) {
    %c0_i32 = arith.constant 0 : i32
    %c0_i32_0 = arith.constant 0 : i32
    %c0_i32_1 = arith.constant 0 : i32
    %c0_i32_2 = arith.constant 0 : i32
    return %c0_i32, %c0_i32_0, %c0_i32_1 : i32, i32, i32
  }
  func.func @transform_7(%arg0: i32) -> (i32, i32, i32) {
    %c0_i32 = arith.constant 0 : i32
    %c0_i32_0 = arith.constant 0 : i32
    %c0_i32_1 = arith.constant 0 : i32
    %c0_i32_2 = arith.constant 0 : i32
    return %c0_i32, %c0_i32_0, %c0_i32_1 : i32, i32, i32
  }
  func.func @transform_8(%arg0: i32) -> (i32, i32, i32) {
    %c0_i32 = arith.constant 0 : i32
    %c0_i32_0 = arith.constant 0 : i32
    %c0_i32_1 = arith.constant 0 : i32
    %c0_i32_2 = arith.constant 0 : i32
    return %c0_i32, %c0_i32_0, %c0_i32_1 : i32, i32, i32
  }
  func.func @transform_9(%arg0: i32) -> (i32, i32, i32) {
    %c0_i32 = arith.constant 0 : i32
    %c0_i32_0 = arith.constant 0 : i32
    %c0_i32_1 = arith.constant 0 : i32
    %c0_i32_2 = arith.constant 0 : i32
    return %c0_i32, %c0_i32_0, %c0_i32_1 : i32, i32, i32
  }
  func.func @transform_10(%arg0: i32) -> (i32, i32, i32) {
    %c0_i32 = arith.constant 0 : i32
    %c0_i32_0 = arith.constant 0 : i32
    %c0_i32_1 = arith.constant 0 : i32
    %c0_i32_2 = arith.constant 0 : i32
    return %c0_i32, %c0_i32_0, %c0_i32_1 : i32, i32, i32
  }
  func.func @transform_11(%arg0: i32) -> (i32, i32, i32) {
    %c0_i32 = arith.constant 0 : i32
    %c0_i32_0 = arith.constant 0 : i32
    %c0_i32_1 = arith.constant 0 : i32
    %c0_i32_2 = arith.constant 0 : i32
    return %c0_i32, %c0_i32_0, %c0_i32_1 : i32, i32, i32
  }
  func.func @transform_12(%arg0: i32) -> (i32, i32, i32) {
    %c0_i32 = arith.constant 0 : i32
    %c0_i32_0 = arith.constant 0 : i32
    %c0_i32_1 = arith.constant 0 : i32
    %c0_i32_2 = arith.constant 0 : i32
    return %c0_i32, %c0_i32_0, %c0_i32_1 : i32, i32, i32
  }
  func.func @transform_13(%arg0: i32) -> (i32, i32, i32) {
    %c0_i32 = arith.constant 0 : i32
    %c0_i32_0 = arith.constant 0 : i32
    %c0_i32_1 = arith.constant 0 : i32
    %c0_i32_2 = arith.constant 0 : i32
    return %c0_i32, %c0_i32_0, %c0_i32_1 : i32, i32, i32
  }
  func.func @transform_14(%arg0: i32) -> (i32, i32, i32) {
    %c0_i32 = arith.constant 0 : i32
    %c0_i32_0 = arith.constant 0 : i32
    %c0_i32_1 = arith.constant 0 : i32
    %c0_i32_2 = arith.constant 0 : i32
    return %c0_i32, %c0_i32_0, %c0_i32_1 : i32, i32, i32
  }
  func.func @transform_15(%arg0: i32) -> (i32, i32, i32) {
    %c0_i32 = arith.constant 0 : i32
    %c0_i32_0 = arith.constant 0 : i32
    %c0_i32_1 = arith.constant 0 : i32
    %c0_i32_2 = arith.constant 0 : i32
    return %c0_i32, %c0_i32_0, %c0_i32_1 : i32, i32, i32
  }
  func.func @transform_16(%arg0: i32) -> (i32, i32, i32) {
    %c0_i32 = arith.constant 0 : i32
    %c0_i32_0 = arith.constant 0 : i32
    %c0_i32_1 = arith.constant 0 : i32
    %c0_i32_2 = arith.constant 0 : i32
    return %c0_i32, %c0_i32_0, %c0_i32_1 : i32, i32, i32
  }
  func.func @transform_17(%arg0: i32) -> (i32, i32, i32) {
    %c0_i32 = arith.constant 0 : i32
    %c0_i32_0 = arith.constant 0 : i32
    %c0_i32_1 = arith.constant 0 : i32
    return %arg0, %c0_i32, %c0_i32_0 : i32, i32, i32
  }
}

</mosaic_0001>

<llo_original>
// kernel: tpu_custom_call.1
$region0: #{tpu_custom_call.1}
  #allocation0 [shape = 'u32[]', space=smem, size = 0x4, offset = 0x4, fixed_abs, tag = 'smem constant byte address 0x4 - core index']
  #allocation1 [shape = 'u32[144,128]{1,0:T(1,128)}', space=vmem, size = 0x12000, scoped, tag = 'internal scratch']
  %s0 = inlined_call_operand.hbm [shape: f32[8,2,32], index: 0, kind: input, shape index: {}]
  %s1 = inlined_call_operand.vmem [shape: f32[2,32,32], index: 1, kind: input, shape index: {}]
  %s2 = inlined_call_operand.vmem [shape: f32[2,32,32], index: 2, kind: input, shape index: {}]
  %s3 = inlined_call_operand.vmem [shape: f32[2,32,32], index: 3, kind: input, shape index: {}]
  %s4 = inlined_call_operand.vmem [shape: f32[2,1,32], index: 4, kind: input, shape index: {}]
  %s5 = inlined_call_operand.vmem [shape: f32[2,1,32], index: 5, kind: input, shape index: {}]
  %s6 = inlined_call_operand.vmem [shape: f32[2,1,32], index: 6, kind: input, shape index: {}]
  %s7 = inlined_call_operand.hbm [shape: f32[2,32,32], index: 7, kind: input, shape index: {}]
  %s8 = inlined_call_operand.vmem [shape: f32[2,1,32], index: 8, kind: input, shape index: {}]
  %s9 = inlined_call_operand.vmem [shape: f32[2,1,32], index: 9, kind: input, shape index: {}]
  %s10 = inlined_call_operand.vmem [shape: f32[2,1,32], index: 10, kind: input, shape index: {}]
  %s11 = inlined_call_operand.hbm [shape: f32[2,32,64], index: 11, kind: input, shape index: {}]
  %s12 = inlined_call_operand.vmem [shape: f32[2,1,64], index: 12, kind: input, shape index: {}]
  %s13 = inlined_call_operand.vmem [shape: f32[2,64,32], index: 13, kind: input, shape index: {}]
  %s14 = inlined_call_operand.vmem [shape: f32[2,1,32], index: 14, kind: input, shape index: {}]
  %s15 = inlined_call_operand.vmem [shape: f32[2,1,32], index: 15, kind: input, shape index: {}]
  %s16 = inlined_call_operand.vmem [shape: f32[2,1,32], index: 16, kind: input, shape index: {}]
  %s17 = inlined_call_operand.hbm [shape: f32[8,2,32], index: 17, kind: output, shape index: {}]
  %s18 = sld [smem:[#allocation0]]
  $region113: #{tpu_custom_call.1} parent=0
    _
  %s20 = ssub.s32 1, %s18
  %s21 = scalar_select 0, %s20, %s18
  $region1: #{tpu_custom_call.1} parent=0
    #allocation2 [shape = 'u8[8192]{0}', space=vmem, size = 0x2000, scoped, tag = 'input window, operand 0']
    #allocation3 [shape = 's32[2]{0}', space=sflag, size = 0x8, scoped, tag = 'scoped memory for tpu_custom_call.1']
    #allocation4 [shape = 's32[2]{0}', space=sflag, size = 0x8, scoped, tag = 'scoped memory for tpu_custom_call.1']
    #allocation5 [shape = 'u8[32768]{0}', space=vmem, size = 0x8000, scoped, tag = 'input window, operand 7, single buffered']
    #allocation6 [shape = 's32[1]{0}', space=sflag, size = 0x4, scoped, tag = 'scoped memory for tpu_custom_call.1']
    #allocation7 [shape = 'u8[32768]{0}', space=vmem, size = 0x8000, scoped, tag = 'input window, operand 11, single buffered']
    #allocation8 [shape = 'u8[8192]{0}', space=vmem, size = 0x2000, scoped, tag = 'output window, operand 0']
    %22 = vsyncpa [#allocation3], 0
    %s23 = scalar_lea.sflag [#allocation3], 1
    %24 = vsyncpa %s23, 0
    %25 = vsyncpa [#allocation6], 0
    %26 = vsyncpa [#allocation4], 0
    %s27 = scalar_lea.sflag [#allocation4], 1
    %28 = vsyncpa %s27, 0
    loop: start=0, step=1, limit=4
    $region2: #{tpu_custom_call.1} parent=1 // loop_pre_header
      _
    $region3: #{tpu_custom_call.1} parent=1 // loop_header
      %s30 = sphi 0, %s34
      %p31 = scmp.ge.s32.totalorder %s30, 4
      %s40 = sphi 0, %s42
      %s43 = sphi 0, %s40
      %s44 = sphi 0, %s43
      %s60 = sphi 0, %s44
      %s64 = sphi 0, %s64
      %s66 = sphi 0, %s64
      %s67 = sphi 0, %s66
      %s81 = sphi 0, %s67
      %s85 = sphi 0, %s85
      %s87 = sphi 0, %s85
      %s88 = sphi 0, %s87
      %s102 = sphi 0, %s88
      %s106 = sphi 0, %s106
      %s108 = sphi 0, %s106
      %s109 = sphi 0, %s108
      %s123 = sphi 0, %s109
      %s127 = sphi 0, %s127
      %s129 = sphi 0, %s127
      %s130 = sphi 0, %s129
      %s144 = sphi 0, %s130
      %s148 = sphi 0, %s148
      %s150 = sphi 0, %s148
      %s151 = sphi 0, %s150
      %s165 = sphi 0, %s151
      %s169 = sphi 0, %s169
      %s171 = sphi 0, %s169
      %s172 = sphi 0, %s171
      %s186 = sphi 0, %s172
      %s190 = sphi 0, %s190
      %s192 = sphi 0, %s190
      %s193 = sphi 0, %s192
      %s207 = sphi 0, %s193
      %s211 = sphi 0, %s211
      %s213 = sphi 0, %s211
      %s214 = sphi 0, %s213
      %s228 = sphi 0, %s214
      %s232 = sphi 0, %s232
      %s234 = sphi 0, %s232
      %s235 = sphi 0, %s234
      %s249 = sphi 0, %s235
      %s253 = sphi 0, %s253
      %s255 = sphi 0, %s253
      %s256 = sphi 0, %s255
      %s270 = sphi 0, %s256
      %s274 = sphi 0, %s274
      %s276 = sphi 0, %s274
      %s277 = sphi 0, %s276
      %s291 = sphi 0, %s277
      %s295 = sphi 0, %s295
      %s297 = sphi 0, %s295
      %s298 = sphi 0, %s297
      %s312 = sphi 0, %s298
      %s316 = sphi 0, %s316
      %s318 = sphi 0, %s316
      %s319 = sphi 0, %s318
      %s333 = sphi 0, %s319
      %s337 = sphi 0, %s337
      %s339 = sphi 0, %s337
      %s340 = sphi 0, %s339
      %s354 = sphi 0, %s340
      %s358 = sphi 0, %s358
      %s360 = sphi 0, %s358
      %s361 = sphi 0, %s360
      %s375 = sphi 0, %s361
      %s379 = sphi 0, %s379
      %s381 = sphi 0, %s379
      %s382 = sphi 0, %s381
      %s396 = sphi 0, %s382
      %s402 = sphi 0, %s404
      %s405 = sphi 0, %s402
      %s406 = sphi 0, %s405
      %s422 = sphi 0, %s406
    $region4: #{tpu_custom_call.1} parent=1 // loop_header_branch
      %33 = sbr.rel (%p31) target = $region8
    $region5: #{tpu_custom_call.1} parent=1 // loop_body
      %s35 = ssub.s32 %s30, 1
      %s36 = ssub.s32 %s30, 2
      %s37 = sadd.s32 %s30, 1
      %s38 = ssub.s32 %s30, %s37
      %p39 = scmp.eq.s32.totalorder %s38, 0
      %s41 = sadd.s32 %s40, 1
      %s42 = scalar_select %p39, %s40, %s41
      %p45 = pneg %p39
      %p46 = scmp.eq.s32.totalorder %s30, 1
      %p47 = por %p45, %p46
      %p48 = scmp.ne.s32.totalorder %s40, %s43
      %p49 = scmp.eq.s32.totalorder %s30, 0
      %p50 = por %p48, %p49
      %p51 = scmp.ne.s32.totalorder %s40, %s43
      %p52 = scmp.eq.s32.totalorder %s35, 1
      %p53 = por %p51, %p52
      %p54 = scmp.ne.s32.totalorder %s43, %s44
      %p55 = scmp.eq.s32.totalorder %s35, 0
      %p56 = por %p54, %p55
      %p57 = scmp.ne.s32.totalorder %s43, %s44
      %p58 = scmp.eq.s32.totalorder %s36, 1
      %p59 = por %p57, %p58
      %p61 = scmp.ne.s32.totalorder %s44, %s60
      %p62 = scmp.eq.s32.totalorder %s36, 0
      %p63 = por %p61, %p62
      %s65 = sadd.s32 %s64, 1
      %p68 = scmp.eq.s32.totalorder %s30, 1
      %p69 = scmp.ne.s32.totalorder %s64, %s66
      %p70 = scmp.eq.s32.totalorder %s30, 0
      %p71 = por %p69, %p70
      %p72 = scmp.ne.s32.totalorder %s64, %s66
      %p73 = scmp.eq.s32.totalorder %s35, 1
      %p74 = por %p72, %p73
      %p75 = scmp.ne.s32.totalorder %s66, %s67
      %p76 = scmp.eq.s32.totalorder %s35, 0
      %p77 = por %p75, %p76
      %p78 = scmp.ne.s32.totalorder %s66, %s67
      %p79 = scmp.eq.s32.totalorder %s36, 1
      %p80 = por %p78, %p79
      %p82 = scmp.ne.s32.totalorder %s67, %s81
      %p83 = scmp.eq.s32.totalorder %s36, 0
      %p84 = por %p82, %p83
      %s86 = sadd.s32 %s85, 1
      %p89 = scmp.eq.s32.totalorder %s30, 1
      %p90 = scmp.ne.s32.totalorder %s85, %s87
      %p91 = scmp.eq.s32.totalorder %s30, 0
      %p92 = por %p90, %p91
      %p93 = scmp.ne.s32.totalorder %s85, %s87
      %p94 = scmp.eq.s32.totalorder %s35, 1
      %p95 = por %p93, %p94
      %p96 = scmp.ne.s32.totalorder %s87, %s88
      %p97 = scmp.eq.s32.totalorder %s35, 0
      %p98 = por %p96, %p97
      %p99 = scmp.ne.s32.totalorder %s87, %s88
      %p100 = scmp.eq.s32.totalorder %s36, 1
      %p101 = por %p99, %p100
      %p103 = scmp.ne.s32.totalorder %s88, %s102
      %p104 = scmp.eq.s32.totalorder %s36, 0
      %p105 = por %p103, %p104
      %s107 = sadd.s32 %s106, 1
      %p110 = scmp.eq.s32.totalorder %s30, 1
      %p111 = scmp.ne.s32.totalorder %s106, %s108
      %p112 = scmp.eq.s32.totalorder %s30, 0
      %p113 = por %p111, %p112
      %p114 = scmp.ne.s32.totalorder %s106, %s108
      %p115 = scmp.eq.s32.totalorder %s35, 1
      %p116 = por %p114, %p115
      %p117 = scmp.ne.s32.totalorder %s108, %s109
      %p118 = scmp.eq.s32.totalorder %s35, 0
      %p119 = por %p117, %p118
      %p120 = scmp.ne.s32.totalorder %s108, %s109
      %p121 = scmp.eq.s32.totalorder %s36, 1
      %p122 = por %p120, %p121
      %p124 = scmp.ne.s32.totalorder %s109, %s123
      %p125 = scmp.eq.s32.totalorder %s36, 0
      %p126 = por %p124, %p125
      %s128 = sadd.s32 %s127, 1
      %p131 = scmp.eq.s32.totalorder %s30, 1
      %p132 = scmp.ne.s32.totalorder %s127, %s129
      %p133 = scmp.eq.s32.totalorder %s30, 0
      %p134 = por %p132, %p133
      %p135 = scmp.ne.s32.totalorder %s127, %s129
      %p136 = scmp.eq.s32.totalorder %s35, 1
      %p137 = por %p135, %p136
      %p138 = scmp.ne.s32.totalorder %s129, %s130
      %p139 = scmp.eq.s32.totalorder %s35, 0
      %p140 = por %p138, %p139
      %p141 = scmp.ne.s32.totalorder %s129, %s130
      %p142 = scmp.eq.s32.totalorder %s36, 1
      %p143 = por %p141, %p142
      %p145 = scmp.ne.s32.totalorder %s130, %s144
      %p146 = scmp.eq.s32.totalorder %s36, 0
      %p147 = por %p145, %p146
      %s149 = sadd.s32 %s148, 1
      %p152 = scmp.eq.s32.totalorder %s30, 1
      %p153 = scmp.ne.s32.totalorder %s148, %s150
      %p154 = scmp.eq.s32.totalorder %s30, 0
      %p155 = por %p153, %p154
      %p156 = scmp.ne.s32.totalorder %s148, %s150
      %p157 = scmp.eq.s32.totalorder %s35, 1
      %p158 = por %p156, %p157
      %p159 = scmp.ne.s32.totalorder %s150, %s151
      %p160 = scmp.eq.s32.totalorder %s35, 0
      %p161 = por %p159, %p160
      %p162 = scmp.ne.s32.totalorder %s150, %s151
      %p163 = scmp.eq.s32.totalorder %s36, 1
      %p164 = por %p162, %p163
      %p166 = scmp.ne.s32.totalorder %s151, %s165
      %p167 = scmp.eq.s32.totalorder %s36, 0
      %p168 = por %p166, %p167
      %s170 = sadd.s32 %s169, 1
      %p173 = scmp.eq.s32.totalorder %s30, 1
      %p174 = scmp.ne.s32.totalorder %s169, %s171
      %p175 = scmp.eq.s32.totalorder %s30, 0
      %p176 = por %p174, %p175
      %p177 = scmp.ne.s32.totalorder %s169, %s171
      %p178 = scmp.eq.s32.totalorder %s35, 1
      %p179 = por %p177, %p178
      %p180 = scmp.ne.s32.totalorder %s171, %s172
      %p181 = scmp.eq.s32.totalorder %s35, 0
      %p182 = por %p180, %p181
      %p183 = scmp.ne.s32.totalorder %s171, %s172
      %p184 = scmp.eq.s32.totalorder %s36, 1
      %p185 = por %p183, %p184
      %p187 = scmp.ne.s32.totalorder %s172, %s186
      %p188 = scmp.eq.s32.totalorder %s36, 0
      %p189 = por %p187, %p188
      %s191 = sadd.s32 %s190, 1
      %p194 = scmp.eq.s32.totalorder %s30, 1
      %p195 = scmp.ne.s32.totalorder %s190, %s192
      %p196 = scmp.eq.s32.totalorder %s30, 0
      %p197 = por %p195, %p196
      %p198 = scmp.ne.s32.totalorder %s190, %s192
      %p199 = scmp.eq.s32.totalorder %s35, 1
      %p200 = por %p198, %p199
      %p201 = scmp.ne.s32.totalorder %s192, %s193
      %p202 = scmp.eq.s32.totalorder %s35, 0
      %p203 = por %p201, %p202
      %p204 = scmp.ne.s32.totalorder %s192, %s193
      %p205 = scmp.eq.s32.totalorder %s36, 1
      %p206 = por %p204, %p205
      %p208 = scmp.ne.s32.totalorder %s193, %s207
      %p209 = scmp.eq.s32.totalorder %s36, 0
      %p210 = por %p208, %p209
      %s212 = sadd.s32 %s211, 1
      %p215 = scmp.eq.s32.totalorder %s30, 1
      %p216 = scmp.ne.s32.totalorder %s211, %s213
      %p217 = scmp.eq.s32.totalorder %s30, 0
      %p218 = por %p216, %p217
      %p219 = scmp.ne.s32.totalorder %s211, %s213
      %p220 = scmp.eq.s32.totalorder %s35, 1
      %p221 = por %p219, %p220
      %p222 = scmp.ne.s32.totalorder %s213, %s214
      %p223 = scmp.eq.s32.totalorder %s35, 0
      %p224 = por %p222, %p223
      %p225 = scmp.ne.s32.totalorder %s213, %s214
      %p226 = scmp.eq.s32.totalorder %s36, 1
      %p227 = por %p225, %p226
      %p229 = scmp.ne.s32.totalorder %s214, %s228
      %p230 = scmp.eq.s32.totalorder %s36, 0
      %p231 = por %p229, %p230
      %s233 = sadd.s32 %s232, 1
      %p236 = scmp.eq.s32.totalorder %s30, 1
      %p237 = scmp.ne.s32.totalorder %s232, %s234
      %p238 = scmp.eq.s32.totalorder %s30, 0
      %p239 = por %p237, %p238
      %p240 = scmp.ne.s32.totalorder %s232, %s234
      %p241 = scmp.eq.s32.totalorder %s35, 1
      %p242 = por %p240, %p241
      %p243 = scmp.ne.s32.totalorder %s234, %s235
      %p244 = scmp.eq.s32.totalorder %s35, 0
      %p245 = por %p243, %p244
      %p246 = scmp.ne.s32.totalorder %s234, %s235
      %p247 = scmp.eq.s32.totalorder %s36, 1
      %p248 = por %p246, %p247
      %p250 = scmp.ne.s32.totalorder %s235, %s249
      %p251 = scmp.eq.s32.totalorder %s36, 0
      %p252 = por %p250, %p251
      %s254 = sadd.s32 %s253, 1
      %p257 = scmp.eq.s32.totalorder %s30, 1
      %p258 = scmp.ne.s32.totalorder %s253, %s255
      %p259 = scmp.eq.s32.totalorder %s30, 0
      %p260 = por %p258, %p259
      %p261 = scmp.ne.s32.totalorder %s253, %s255
      %p262 = scmp.eq.s32.totalorder %s35, 1
      %p263 = por %p261, %p262
      %p264 = scmp.ne.s32.totalorder %s255, %s256
      %p265 = scmp.eq.s32.totalorder %s35, 0
      %p266 = por %p264, %p265
      %p267 = scmp.ne.s32.totalorder %s255, %s256
      %p268 = scmp.eq.s32.totalorder %s36, 1
      %p269 = por %p267, %p268
      %p271 = scmp.ne.s32.totalorder %s256, %s270
      %p272 = scmp.eq.s32.totalorder %s36, 0
      %p273 = por %p271, %p272
      %s275 = sadd.s32 %s274, 1
      %p278 = scmp.eq.s32.totalorder %s30, 1
      %p279 = scmp.ne.s32.totalorder %s274, %s276
      %p280 = scmp.eq.s32.totalorder %s30, 0
      %p281 = por %p279, %p280
      %p282 = scmp.ne.s32.totalorder %s274, %s276
      %p283 = scmp.eq.s32.totalorder %s35, 1
      %p284 = por %p282, %p283
      %p285 = scmp.ne.s32.totalorder %s276, %s277
      %p286 = scmp.eq.s32.totalorder %s35, 0
      %p287 = por %p285, %p286
      %p288 = scmp.ne.s32.totalorder %s276, %s277
      %p289 = scmp.eq.s32.totalorder %s36, 1
      %p290 = por %p288, %p289
      %p292 = scmp.ne.s32.totalorder %s277, %s291
      %p293 = scmp.eq.s32.totalorder %s36, 0
      %p294 = por %p292, %p293
      %s296 = sadd.s32 %s295, 1
      %p299 = scmp.eq.s32.totalorder %s30, 1
      %p300 = scmp.ne.s32.totalorder %s295, %s297
      %p301 = scmp.eq.s32.totalorder %s30, 0
      %p302 = por %p300, %p301
      %p303 = scmp.ne.s32.totalorder %s295, %s297
      %p304 = scmp.eq.s32.totalorder %s35, 1
      %p305 = por %p303, %p304
      %p306 = scmp.ne.s32.totalorder %s297, %s298
      %p307 = scmp.eq.s32.totalorder %s35, 0
      %p308 = por %p306, %p307
      %p309 = scmp.ne.s32.totalorder %s297, %s298
      %p310 = scmp.eq.s32.totalorder %s36, 1
      %p311 = por %p309, %p310
      %p313 = scmp.ne.s32.totalorder %s298, %s312
      %p314 = scmp.eq.s32.totalorder %s36, 0
      %p315 = por %p313, %p314
      %s317 = sadd.s32 %s316, 1
      %p320 = scmp.eq.s32.totalorder %s30, 1
      %p321 = scmp.ne.s32.totalorder %s316, %s318
      %p322 = scmp.eq.s32.totalorder %s30, 0
      %p323 = por %p321, %p322
      %p324 = scmp.ne.s32.totalorder %s316, %s318
      %p325 = scmp.eq.s32.totalorder %s35, 1
      %p326 = por %p324, %p325
      %p327 = scmp.ne.s32.totalorder %s318, %s319
      %p328 = scmp.eq.s32.totalorder %s35, 0
      %p329 = por %p327, %p328
      %p330 = scmp.ne.s32.totalorder %s318, %s319
      %p331 = scmp.eq.s32.totalorder %s36, 1
      %p332 = por %p330, %p331
      %p334 = scmp.ne.s32.totalorder %s319, %s333
      %p335 = scmp.eq.s32.totalorder %s36, 0
      %p336 = por %p334, %p335
      %s338 = sadd.s32 %s337, 1
      %p341 = scmp.eq.s32.totalorder %s30, 1
      %p342 = scmp.ne.s32.totalorder %s337, %s339
      %p343 = scmp.eq.s32.totalorder %s30, 0
      %p344 = por %p342, %p343
      %p345 = scmp.ne.s32.totalorder %s337, %s339
      %p346 = scmp.eq.s32.totalorder %s35, 1
      %p347 = por %p345, %p346
      %p348 = scmp.ne.s32.totalorder %s339, %s340
      %p349 = scmp.eq.s32.totalorder %s35, 0
      %p350 = por %p348, %p349
      %p351 = scmp.ne.s32.totalorder %s339, %s340
      %p352 = scmp.eq.s32.totalorder %s36, 1
      %p353 = por %p351, %p352
      %p355 = scmp.ne.s32.totalorder %s340, %s354
      %p356 = scmp.eq.s32.totalorder %s36, 0
      %p357 = por %p355, %p356
      %s359 = sadd.s32 %s358, 1
      %p362 = scmp.eq.s32.totalorder %s30, 1
      %p363 = scmp.ne.s32.totalorder %s358, %s360
      %p364 = scmp.eq.s32.totalorder %s30, 0
      %p365 = por %p363, %p364
      %p366 = scmp.ne.s32.totalorder %s358, %s360
      %p367 = scmp.eq.s32.totalorder %s35, 1
      %p368 = por %p366, %p367
      %p369 = scmp.ne.s32.totalorder %s360, %s361
      %p370 = scmp.eq.s32.totalorder %s35, 0
      %p371 = por %p369, %p370
      %p372 = scmp.ne.s32.totalorder %s360, %s361
      %p373 = scmp.eq.s32.totalorder %s36, 1
      %p374 = por %p372, %p373
      %p376 = scmp.ne.s32.totalorder %s361, %s375
      %p377 = scmp.eq.s32.totalorder %s36, 0
      %p378 = por %p376, %p377
      %s380 = sadd.s32 %s379, 1
      %p383 = scmp.eq.s32.totalorder %s30, 1
      %p384 = scmp.ne.s32.totalorder %s379, %s381
      %p385 = scmp.eq.s32.totalorder %s30, 0
      %p386 = por %p384, %p385
      %p387 = scmp.ne.s32.totalorder %s379, %s381
      %p388 = scmp.eq.s32.totalorder %s35, 1
      %p389 = por %p387, %p388
      %p390 = scmp.ne.s32.totalorder %s381, %s382
      %p391 = scmp.eq.s32.totalorder %s35, 0
      %p392 = por %p390, %p391
      %p393 = scmp.ne.s32.totalorder %s381, %s382
      %p394 = scmp.eq.s32.totalorder %s36, 1
      %p395 = por %p393, %p394
      %p397 = scmp.ne.s32.totalorder %s382, %s396
      %p398 = scmp.eq.s32.totalorder %s36, 0
      %p399 = por %p397, %p398
      %s400 = ssub.s32 %s30, %s37
      %p401 = scmp.eq.s32.totalorder %s400, 0
      %s403 = sadd.s32 %s402, 1
      %s404 = scalar_select %p401, %s402, %s403
      %p407 = pneg %p401
      %p408 = scmp.eq.s32.totalorder %s30, 1
      %p409 = por %p407, %p408
      %p410 = scmp.ne.s32.totalorder %s402, %s405
      %p411 = scmp.eq.s32.totalorder %s30, 0
      %p412 = por %p410, %p411
      %p413 = scmp.ne.s32.totalorder %s402, %s405
      %p414 = scmp.eq.s32.totalorder %s35, 1
      %p415 = por %p413, %p414
      %p416 = scmp.ne.s32.totalorder %s405, %s406
      %p417 = scmp.eq.s32.totalorder %s35, 0
      %p418 = por %p416, %p417
      %p419 = scmp.ne.s32.totalorder %s405, %s406
      %p420 = scmp.eq.s32.totalorder %s36, 1
      %p421 = por %p419, %p420
      %p423 = scmp.ne.s32.totalorder %s406, %s422
      %p424 = scmp.eq.s32.totalorder %s36, 0
      %p425 = por %p423, %p424
      %p426 = scmp.le.s32.totalorder 1, %s30
      %p427 = scmp.lt.s32.totalorder %s30, 3
      %p428 = pnand %p426, %p427
      %p429 = pneg %p428
      // Predicated region
      $region9: #{tpu_custom_call.1} parent=5 // pred_check
        _
      $region10: #{tpu_custom_call.1} parent=5 // pred_check_branch
        %431 = sbr.rel (%p428) target = $region12
      $region11: #{tpu_custom_call.1} parent=5 // pred_region
        %s432 = ssub.s32 %s30, 1
        // Predicated region
        $region13: #{tpu_custom_call.1} parent=11 // pred_check
          %p433 = pneg %p77
        $region14: #{tpu_custom_call.1} parent=11 // pred_check_branch
          %435 = sbr.rel (%p433) target = $region16
        $region15: #{tpu_custom_call.1} parent=11 // pred_region
          _
        $region16: #{tpu_custom_call.1} parent=11 // pred_fallthru
          _
        // Predicated region
        $region17: #{tpu_custom_call.1} parent=11 // pred_check
          %p436 = pneg %p98
        $region18: #{tpu_custom_call.1} parent=11 // pred_check_branch
          %438 = sbr.rel (%p436) target = $region20
        $region19: #{tpu_custom_call.1} parent=11 // pred_region
          _
        $region20: #{tpu_custom_call.1} parent=11 // pred_fallthru
          _
        // Predicated region
        $region21: #{tpu_custom_call.1} parent=11 // pred_check
          %p439 = pneg %p119
        $region22: #{tpu_custom_call.1} parent=11 // pred_check_branch
          %441 = sbr.rel (%p439) target = $region24
        $region23: #{tpu_custom_call.1} parent=11 // pred_region
          _
        $region24: #{tpu_custom_call.1} parent=11 // pred_fallthru
          _
        // Predicated region
        $region25: #{tpu_custom_call.1} parent=11 // pred_check
          %p442 = pneg %p140
        $region26: #{tpu_custom_call.1} parent=11 // pred_check_branch
          %444 = sbr.rel (%p442) target = $region28
        $region27: #{tpu_custom_call.1} parent=11 // pred_region
          _
        $region28: #{tpu_custom_call.1} parent=11 // pred_fallthru
          _
        // Predicated region
        $region29: #{tpu_custom_call.1} parent=11 // pred_check
          %p445 = pneg %p161
        $region30: #{tpu_custom_call.1} parent=11 // pred_check_branch
          %447 = sbr.rel (%p445) target = $region32
        $region31: #{tpu_custom_call.1} parent=11 // pred_region
          _
        $region32: #{tpu_custom_call.1} parent=11 // pred_fallthru
          _
        // Predicated region
        $region33: #{tpu_custom_call.1} parent=11 // pred_check
          %p448 = pneg %p182
        $region34: #{tpu_custom_call.1} parent=11 // pred_check_branch
          %450 = sbr.rel (%p448) target = $region36
        $region35: #{tpu_custom_call.1} parent=11 // pred_region
          _
        $region36: #{tpu_custom_call.1} parent=11 // pred_fallthru
          _
        // Predicated region
        $region37: #{tpu_custom_call.1} parent=11 // pred_check
          %p451 = pneg %p203
        $region38: #{tpu_custom_call.1} parent=11 // pred_check_branch
          %453 = sbr.rel (%p451) target = $region40
        $region39: #{tpu_custom_call.1} parent=11 // pred_region
          %s455 = ssub.s32 1024, 1024
          %456 = vsyncadd [#allocation6], %s455
          %s457 = sshll.u32 [#allocation5], 4
          %s458 = int_to_ptr.vmem [resolvable:$true] %s457
          %463 = dma.hbm_to_vmem [thread:$0]  %s7, 1024, %s458, [#allocation6], 128, 128, 8
        $region40: #{tpu_custom_call.1} parent=11 // pred_fallthru
          _
        // Predicated region
        $region41: #{tpu_custom_call.1} parent=11 // pred_check
          %p464 = pneg %p224
        $region42: #{tpu_custom_call.1} parent=11 // pred_check_branch
          %466 = sbr.rel (%p464) target = $region44
        $region43: #{tpu_custom_call.1} parent=11 // pred_region
          _
        $region44: #{tpu_custom_call.1} parent=11 // pred_fallthru
          _
        // Predicated region
        $region45: #{tpu_custom_call.1} parent=11 // pred_check
          %p467 = pneg %p245
        $region46: #{tpu_custom_call.1} parent=11 // pred_check_branch
          %469 = sbr.rel (%p467) target = $region48
        $region47: #{tpu_custom_call.1} parent=11 // pred_region
          _
        $region48: #{tpu_custom_call.1} parent=11 // pred_fallthru
          _
        // Predicated region
        $region49: #{tpu_custom_call.1} parent=11 // pred_check
          %p470 = pneg %p266
        $region50: #{tpu_custom_call.1} parent=11 // pred_check_branch
          %472 = sbr.rel (%p470) target = $region52
        $region51: #{tpu_custom_call.1} parent=11 // pred_region
          _
        $region52: #{tpu_custom_call.1} parent=11 // pred_fallthru
          _
        // Predicated region
        $region53: #{tpu_custom_call.1} parent=11 // pred_check
          %p473 = pneg %p287
        $region54: #{tpu_custom_call.1} parent=11 // pred_check_branch
          %475 = sbr.rel (%p473) target = $region56
        $region55: #{tpu_custom_call.1} parent=11 // pred_region
          %s477 = ssub.s32 1024, 1024
          %478 = vsyncadd [#allocation6], %s477
          %s479 = sshll.u32 [#allocation7], 4
          %s480 = int_to_ptr.vmem [resolvable:$true] %s479
          %485 = dma.hbm_to_vmem [thread:$0]  %s11, 1024, %s480, [#allocation6], 128, 128, 8
        $region56: #{tpu_custom_call.1} parent=11 // pred_fallthru
          _
        // Predicated region
        $region57: #{tpu_custom_call.1} parent=11 // pred_check
          %p486 = pneg %p308
        $region58: #{tpu_custom_call.1} parent=11 // pred_check_branch
          %488 = sbr.rel (%p486) target = $region60
        $region59: #{tpu_custom_call.1} parent=11 // pred_region
          _
        $region60: #{tpu_custom_call.1} parent=11 // pred_fallthru
          _
        // Predicated region
        $region61: #{tpu_custom_call.1} parent=11 // pred_check
          %p489 = pneg %p329
        $region62: #{tpu_custom_call.1} parent=11 // pred_check_branch
          %491 = sbr.rel (%p489) target = $region64
        $region63: #{tpu_custom_call.1} parent=11 // pred_region
          _
        $region64: #{tpu_custom_call.1} parent=11 // pred_fallthru
          _
        // Predicated region
        $region65: #{tpu_custom_call.1} parent=11 // pred_check
          %p492 = pneg %p350
        $region66: #{tpu_custom_call.1} parent=11 // pred_check_branch
          %494 = sbr.rel (%p492) target = $region68
        $region67: #{tpu_custom_call.1} parent=11 // pred_region
          _
        $region68: #{tpu_custom_call.1} parent=11 // pred_fallthru
          _
        // Predicated region
        $region69: #{tpu_custom_call.1} parent=11 // pred_check
          %p495 = pneg %p371
        $region70: #{tpu_custom_call.1} parent=11 // pred_check_branch
          %497 = sbr.rel (%p495) target = $region72
        $region71: #{tpu_custom_call.1} parent=11 // pred_region
          _
        $region72: #{tpu_custom_call.1} parent=11 // pred_fallthru
          _
        // Predicated region
        $region73: #{tpu_custom_call.1} parent=11 // pred_check
          %p498 = pneg %p392
        $region74: #{tpu_custom_call.1} parent=11 // pred_check_branch
          %500 = sbr.rel (%p498) target = $region76
        $region75: #{tpu_custom_call.1} parent=11 // pred_region
          _
        $region76: #{tpu_custom_call.1} parent=11 // pred_fallthru
          _
      $region12: #{tpu_custom_call.1} parent=5 // pred_fallthru
        _
      %p501 = scmp.lt.s32.totalorder %s30, 2
      // Predicated region
      $region77: #{tpu_custom_call.1} parent=5 // pred_check
        %p502 = pneg %p501
      $region78: #{tpu_custom_call.1} parent=5 // pred_check_branch
        %504 = sbr.rel (%p502) target = $region80
      $region79: #{tpu_custom_call.1} parent=5 // pred_region
        // Predicated region
        $region81: #{tpu_custom_call.1} parent=79 // pred_check
          %p505 = pneg %p50
        $region82: #{tpu_custom_call.1} parent=79 // pred_check_branch
          %507 = sbr.rel (%p505) target = $region84
        $region83: #{tpu_custom_call.1} parent=79 // pred_region
          %s508 = sand.u32 %s40, 1
          %s509 = scalar_lea.sflag [#allocation3], %s508
          %s510 = sand.u32 %s40, 1
          %s511 = smul.addr %s510, 8
          %s512 = scalar_lea.vmem [#allocation2], %s511
          %s513 = smul.u32 4, %s30
          %s515 = ssub.s32 128, 128
          %516 = vsyncadd %s509, %s515
          %s517 = smul.addr %s513, 32
          %s518 = scalar_lea.hbm %s0, %s517
          %s519 = sshll.u32 %s512, 4
          %s520 = int_to_ptr.vmem [resolvable:$true] %s519
          %525 = dma.hbm_to_vmem [thread:$0]  %s518, 128, %s520, %s509, 32, 32, 2
        $region84: #{tpu_custom_call.1} parent=79 // pred_fallthru
          _
      $region80: #{tpu_custom_call.1} parent=5 // pred_fallthru
        _
      %p526 = scmp.le.s32.totalorder 1, %s30
      %p527 = scmp.lt.s32.totalorder %s30, 3
      %p528 = pnand %p526, %p527
      %p529 = pneg %p528
      // Predicated region
      $region85: #{tpu_custom_call.1} parent=5 // pred_check
        _
      $region86: #{tpu_custom_call.1} parent=5 // pred_check_branch
        %531 = sbr.rel (%p528) target = $region88
      $region87: #{tpu_custom_call.1} parent=5 // pred_region
        %s532 = ssub.s32 %s30, 1
        %s533 = sand.u32 %s43, 1
        %s534 = scalar_lea.sflag [#allocation3], %s533
        %s535 = sand.u32 %s43, 1
        %s536 = smul.addr %s535, 8
        %s537 = scalar_lea.vmem [#allocation2], %s536
        // Predicated region
        $region89: #{tpu_custom_call.1} parent=87 // pred_check
          %p538 = pneg %p56
        $region90: #{tpu_custom_call.1} parent=87 // pred_check_branch
          %540 = sbr.rel (%p538) target = $region92
        $region91: #{tpu_custom_call.1} parent=87 // pred_region
          %541 = dma.done %s534, 128
        $region92: #{tpu_custom_call.1} parent=87 // pred_fallthru
          _
        // Predicated region
        $region93: #{tpu_custom_call.1} parent=87 // pred_check
          %p542 = pneg %p203
        $region94: #{tpu_custom_call.1} parent=87 // pred_check_branch
          %544 = sbr.rel (%p542) target = $region96
        $region95: #{tpu_custom_call.1} parent=87 // pred_region
          %545 = dma.done [#allocation6], 1024
        $region96: #{tpu_custom_call.1} parent=87 // pred_fallthru
          _
        // Predicated region
        $region97: #{tpu_custom_call.1} parent=87 // pred_check
          %p546 = pneg %p287
        $region98: #{tpu_custom_call.1} parent=87 // pred_check_branch
          %548 = sbr.rel (%p546) target = $region100
        $region99: #{tpu_custom_call.1} parent=87 // pred_region
          %549 = dma.done [#allocation6], 1024
        $region100: #{tpu_custom_call.1} parent=87 // pred_fallthru
          _
        %s550 = sand.u32 %s43, 1
        %s551 = scalar_lea.sflag [#allocation3], %s550
        %s552 = sand.u32 %s43, 1
        %s553 = smul.addr %s552, 8
        %s554 = scalar_lea.vmem [#allocation2], %s553
        %p555 = pneg %p56
        %p556 = pneg %p53
        %p557 = pneg %p77
        %p558 = pneg %p74
        %p559 = pneg %p98
        %p560 = pneg %p95
        %p561 = pneg %p119
        %p562 = pneg %p116
        %p563 = pneg %p140
        %p564 = pneg %p137
        %p565 = pneg %p161
        %p566 = pneg %p158
        %p567 = pneg %p182
        %p568 = pneg %p179
        %p569 = pneg %p203
        %p570 = pneg %p200
        %p571 = pneg %p224
        %p572 = pneg %p221
        %p573 = pneg %p245
        %p574 = pneg %p242
        %p575 = pneg %p266
        %p576 = pneg %p263
        %p577 = pneg %p287
        %p578 = pneg %p284
        %p579 = pneg %p308
        %p580 = pneg %p305
        %p581 = pneg %p329
        %p582 = pneg %p326
        %p583 = pneg %p350
        %p584 = pneg %p347
        %p585 = pneg %p371
        %p586 = pneg %p368
        %p587 = pneg %p392
        %p588 = pneg %p389
        %p589 = pneg %p418
        %p590 = pneg %p415
        %s591 = sand.u32 %s405, 1
        %s592 = scalar_lea.sflag [#allocation4], %s591
        %s593 = sand.u32 %s405, 1
        %s594 = smul.addr %s593, 8
        %s595 = scalar_lea.vmem [#allocation8], %s594
        %s596 = smul.u32 4, %s35
        %s597 = smul.u32 4, %s35
        %v598 = vld [vmem:[%s537] sm:$0x3]
        %v599 = vld [vmem:[%s537 + $0x2] sm:$0x3]
        %v600 = vld [vmem:[%s537 + $0x4] sm:$0x3]
        %v601 = vld [vmem:[%s537 + $0x6] sm:$0x3]
        %v602 = vld [vmem:[%s1] sm:$0xff]
        %v603 = vld [vmem:[%s1 + $0x8] sm:$0xff]
        %v604 = vld [vmem:[%s1 + $0x10] sm:$0xff]
        %v605 = vld [vmem:[%s1 + $0x18] sm:$0xff]
        %v606 = vld [vmem:[%s2] sm:$0xff]
        %v607 = vld [vmem:[%s2 + $0x8] sm:$0xff]
        %v608 = vld [vmem:[%s2 + $0x10] sm:$0xff]
        %v609 = vld [vmem:[%s2 + $0x18] sm:$0xff]
        %v610 = vld [vmem:[%s3] sm:$0xff]
        %v611 = vld [vmem:[%s3 + $0x8] sm:$0xff]
        %v612 = vld [vmem:[%s3 + $0x10] sm:$0xff]
        %v613 = vld [vmem:[%s3 + $0x18] sm:$0xff]
        %v614 = vld [vmem:[%s4] sm:$0x1]
        %v616 = vlaneseq
        %v617 = vshrl.u32 %v616, 7
        %v618 = vsub.s32 0, %v617
        %v619 = vrot.slane %v614, %v618
        %v625 = vcombine.low %v598, %v599
        %v626 = vcombine.low %v600, %v601
        %v628 = vunpack.c.l.s4 1983009808
        %v629 = vunpack.c.0.s8 %v628
        %v630 = vlaneseq
        %v631 = vshrl.u32 %v630, 7
        %v632 = vsub.s32 %v629, %v631
        %v633 = vrot.slane %v625, %v632
        %v635 = vunpack.c.l.s4 1983009808
        %v636 = vunpack.c.0.s8 %v635
        %v637 = vlaneseq
        %v638 = vshrl.u32 %v637, 7
        %v639 = vsub.s32 %v636, %v638
        %v640 = vrot.slane %v626, %v639
        %v641 = vcombine.low %v633, %v640
        %vm642 = vcmask 261120
        %v643 = vsel %vm642, %v641, 0
        %645 = vmatprep.subr.mxu0 0.0
        %646 = vmatpush1.msra.mxu0 %v602
        %647 = vmatprep.subr.mxu0 0.0
        %648 = vmatpush1.msra.mxu0 %v603
        %649 = vmatprep.subr.mxu0 0.0
        %650 = vmatpush1.msra.mxu0 %v604
        %651 = vmatprep.subr.mxu0 0.0
        %652 = vmatpush1.msra.mxu0 %v605
        %653 = vmatprep.subr.mxu0 0.0
        %654 = vmatpush1.msra.mxu0 0.0
        %655 = vmatprep.subr.mxu0 0.0
        %656 = vmatpush1.msra.mxu0 0.0
        %657 = vmatprep.subr.mxu0 0.0
        %658 = vmatpush1.msra.mxu0 0.0
        %659 = vmatprep.subr.mxu0 0.0
        %660 = vmatpush1.msra.mxu0 0.0
        %661 = vmatprep.subr.mxu0 0.0
        %662 = vmatpush1.msra.mxu0 0.0
        %663 = vmatprep.subr.mxu0 0.0
        %664 = vmatpush1.msra.mxu0 0.0
        %665 = vmatprep.subr.mxu0 0.0
        %666 = vmatpush1.msra.mxu0 0.0
        %667 = vmatprep.subr.mxu0 0.0
        %668 = vmatpush1.msra.mxu0 0.0
        %669 = vmatprep.subr.mxu0 0.0
        %670 = vmatpush1.msra.mxu0 0.0
        %671 = vmatprep.subr.mxu0 0.0
        %672 = vmatpush1.msra.mxu0 0.0
        %673 = vmatprep.subr.mxu0 0.0
        %674 = vmatpush1.msra.mxu0 0.0
        %675 = vmatprep.subr.mxu0 0.0
        %676 = vmatpush1.msra.mxu0 0.0
        %677 = vmatprep.subr.mxu0 0.0
        %678 = vmatpush1.msra.mxu0 0.0
        %679 = vmatprep.subr.mxu0 0.0
        %680 = vmatpush1.msra.mxu0 0.0
        %681 = vmatprep.subr.mxu0 0.0
        %682 = vmatpush1.msra.mxu0 0.0
        %683 = vmatprep.subr.mxu0 0.0
        %684 = vmatpush1.msra.mxu0 0.0
        %685 = vmatprep.subr.mxu0 0.0
        %686 = vmatpush1.msra.mxu0 0.0
        %687 = vmatprep.subr.mxu0 0.0
        %688 = vmatpush1.msra.mxu0 0.0
        %689 = vmatprep.subr.mxu0 0.0
        %690 = vmatpush1.msra.mxu0 0.0
        %691 = vmatprep.subr.mxu0 0.0
        %692 = vmatpush1.msra.mxu0 0.0
        %693 = vmatprep.subr.mxu0 0.0
        %694 = vmatpush1.msra.mxu0 0.0
        %695 = vmatprep.subr.mxu0 0.0
        %696 = vmatpush1.msra.mxu0 0.0
        %697 = vmatprep.subr.mxu0 0.0
        %698 = vmatpush1.msra.mxu0 0.0
        %699 = vmatprep.subr.mxu0 0.0
        %700 = vmatpush1.msra.mxu0 0.0
        %701 = vmatprep.subr.mxu0 0.0
        %702 = vmatpush1.msra.mxu0 0.0
        %703 = vmatprep.subr.mxu0 0.0
        %704 = vmatpush1.msra.mxu0 0.0
        %705 = vmatprep.subr.mxu0 0.0
        %706 = vmatpush1.msra.mxu0 0.0
        %707 = vmatprep.subr.mxu0 0.0
        %708 = vmatpush1.msra.mxu0 0.0
        %709 = vmatprep.mubr.f32.mxu0 0.0
        %710 = vmatmul.mubr.f32.gmra.mrb[0].mxu0 %v643
        %v711 = vpop.f32.mrb[0].mxu0
        %v712 = vadd.f32 %v619, %v711
        %v713 = vpop.f32.mrb[0].mxu0
        %714 = vdwg.mxu0
        %v715 = vld [vmem:[%s5] sm:$0x1]
        %v717 = vlaneseq
        %v718 = vshrl.u32 %v717, 7
        %v719 = vsub.s32 0, %v718
        %v720 = vrot.slane %v715, %v719
        %722 = vmatprep.subr.mxu0 0.0
        %723 = vmatpush1.msra.mxu0 %v606
        %724 = vmatprep.subr.mxu0 0.0
        %725 = vmatpush1.msra.mxu0 %v607
        %726 = vmatprep.subr.mxu0 0.0
        %727 = vmatpush1.msra.mxu0 %v608
        %728 = vmatprep.subr.mxu0 0.0
        %729 = vmatpush1.msra.mxu0 %v609
        %730 = vmatprep.subr.mxu0 0.0
        %731 = vmatpush1.msra.mxu0 0.0
        %732 = vmatprep.subr.mxu0 0.0
        %733 = vmatpush1.msra.mxu0 0.0
        %734 = vmatprep.subr.mxu0 0.0
        %735 = vmatpush1.msra.mxu0 0.0
        %736 = vmatprep.subr.mxu0 0.0
        %737 = vmatpush1.msra.mxu0 0.0
        %738 = vmatprep.subr.mxu0 0.0
        %739 = vmatpush1.msra.mxu0 0.0
        %740 = vmatprep.subr.mxu0 0.0
        %741 = vmatpush1.msra.mxu0 0.0
        %742 = vmatprep.subr.mxu0 0.0
        %743 = vmatpush1.msra.mxu0 0.0
        %744 = vmatprep.subr.mxu0 0.0
        %745 = vmatpush1.msra.mxu0 0.0
        %746 = vmatprep.subr.mxu0 0.0
        %747 = vmatpush1.msra.mxu0 0.0
        %748 = vmatprep.subr.mxu0 0.0
        %749 = vmatpush1.msra.mxu0 0.0
        %750 = vmatprep.subr.mxu0 0.0
        %751 = vmatpush1.msra.mxu0 0.0
        %752 = vmatprep.subr.mxu0 0.0
        %753 = vmatpush1.msra.mxu0 0.0
        %754 = vmatprep.subr.mxu0 0.0
        %755 = vmatpush1.msra.mxu0 0.0
        %756 = vmatprep.subr.mxu0 0.0
        %757 = vmatpush1.msra.mxu0 0.0
        %758 = vmatprep.subr.mxu0 0.0
        %759 = vmatpush1.msra.mxu0 0.0
        %760 = vmatprep.subr.mxu0 0.0
        %761 = vmatpush1.msra.mxu0 0.0
        %762 = vmatprep.subr.mxu0 0.0
        %763 = vmatpush1.msra.mxu0 0.0
        %764 = vmatprep.subr.mxu0 0.0
        %765 = vmatpush1.msra.mxu0 0.0
        %766 = vmatprep.subr.mxu0 0.0
        %767 = vmatpush1.msra.mxu0 0.0
        %768 = vmatprep.subr.mxu0 0.0
        %769 = vmatpush1.msra.mxu0 0.0
        %770 = vmatprep.subr.mxu0 0.0
        %771 = vmatpush1.msra.mxu0 0.0
        %772 = vmatprep.subr.mxu0 0.0
        %773 = vmatpush1.msra.mxu0 0.0
        %774 = vmatprep.subr.mxu0 0.0
        %775 = vmatpush1.msra.mxu0 0.0
        %776 = vmatprep.subr.mxu0 0.0
        %777 = vmatpush1.msra.mxu0 0.0
        %778 = vmatprep.subr.mxu0 0.0
        %779 = vmatpush1.msra.mxu0 0.0
        %780 = vmatprep.subr.mxu0 0.0
        %781 = vmatpush1.msra.mxu0 0.0
        %782 = vmatprep.subr.mxu0 0.0
        %783 = vmatpush1.msra.mxu0 0.0
        %784 = vmatprep.subr.mxu0 0.0
        %785 = vmatpush1.msra.mxu0 0.0
        %786 = vmatprep.mubr.f32.mxu0 0.0
        %787 = vmatmul.mubr.f32.gmra.mrb[0].mxu0 %v643
        %v788 = vpop.f32.mrb[0].mxu0
        %v789 = vadd.f32 %v720, %v788
        %v790 = vpop.f32.mrb[0].mxu0
        %791 = vdwg.mxu0
        %v792 = vld [vmem:[%s6] sm:$0x1]
        %v794 = vlaneseq
        %v795 = vshrl.u32 %v794, 7
        %v796 = vsub.s32 0, %v795
        %v797 = vrot.slane %v792, %v796
        %799 = vmatprep.subr.mxu0 0.0
        %800 = vmatpush1.msra.mxu0 %v610
        %801 = vmatprep.subr.mxu0 0.0
        %802 = vmatpush1.msra.mxu0 %v611
        %803 = vmatprep.subr.mxu0 0.0
        %804 = vmatpush1.msra.mxu0 %v612
        %805 = vmatprep.subr.mxu0 0.0
        %806 = vmatpush1.msra.mxu0 %v613
        %807 = vmatprep.subr.mxu0 0.0
        %808 = vmatpush1.msra.mxu0 0.0
        %809 = vmatprep.subr.mxu0 0.0
        %810 = vmatpush1.msra.mxu0 0.0
        %811 = vmatprep.subr.mxu0 0.0
        %812 = vmatpush1.msra.mxu0 0.0
        %813 = vmatprep.subr.mxu0 0.0
        %814 = vmatpush1.msra.mxu0 0.0
        %815 = vmatprep.subr.mxu0 0.0
        %816 = vmatpush1.msra.mxu0 0.0
        %817 = vmatprep.subr.mxu0 0.0
        %818 = vmatpush1.msra.mxu0 0.0
        %819 = vmatprep.subr.mxu0 0.0
        %820 = vmatpush1.msra.mxu0 0.0
        %821 = vmatprep.subr.mxu0 0.0
        %822 = vmatpush1.msra.mxu0 0.0
        %823 = vmatprep.subr.mxu0 0.0
        %824 = vmatpush1.msra.mxu0 0.0
        %825 = vmatprep.subr.mxu0 0.0
        %826 = vmatpush1.msra.mxu0 0.0
        %827 = vmatprep.subr.mxu0 0.0
        %828 = vmatpush1.msra.mxu0 0.0
        %829 = vmatprep.subr.mxu0 0.0
        %830 = vmatpush1.msra.mxu0 0.0
        %831 = vmatprep.subr.mxu0 0.0
        %832 = vmatpush1.msra.mxu0 0.0
        %833 = vmatprep.subr.mxu0 0.0
        %834 = vmatpush1.msra.mxu0 0.0
        %835 = vmatprep.subr.mxu0 0.0
        %836 = vmatpush1.msra.mxu0 0.0
        %837 = vmatprep.subr.mxu0 0.0
        %838 = vmatpush1.msra.mxu0 0.0
        %839 = vmatprep.subr.mxu0 0.0
        %840 = vmatpush1.msra.mxu0 0.0
        %841 = vmatprep.subr.mxu0 0.0
        %842 = vmatpush1.msra.mxu0 0.0
        %843 = vmatprep.subr.mxu0 0.0
        %844 = vmatpush1.msra.mxu0 0.0
        %845 = vmatprep.subr.mxu0 0.0
        %846 = vmatpush1.msra.mxu0 0.0
        %847 = vmatprep.subr.mxu0 0.0
        %848 = vmatpush1.msra.mxu0 0.0
        %849 = vmatprep.subr.mxu0 0.0
        %850 = vmatpush1.msra.mxu0 0.0
        %851 = vmatprep.subr.mxu0 0.0
        %852 = vmatpush1.msra.mxu0 0.0
        %853 = vmatprep.subr.mxu0 0.0
        %854 = vmatpush1.msra.mxu0 0.0
        %855 = vmatprep.subr.mxu0 0.0
        %856 = vmatpush1.msra.mxu0 0.0
        %857 = vmatprep.subr.mxu0 0.0
        %858 = vmatpush1.msra.mxu0 0.0
        %859 = vmatprep.subr.mxu0 0.0
        %860 = vmatpush1.msra.mxu0 0.0
        %861 = vmatprep.subr.mxu0 0.0
        %862 = vmatpush1.msra.mxu0 0.0
        %863 = vmatprep.mubr.f32.mxu0 0.0
        %864 = vmatmul.mubr.f32.gmra.mrb[0].mxu0 %v643
        %v865 = vpop.f32.mrb[0].mxu0
        %v866 = vadd.f32 %v797, %v865
        %v867 = vpop.f32.mrb[0].mxu0
        %868 = vdwg.mxu0
        %v870 = vcombine.high %v712, %v712
        %v872 = vunpack.c.l.s4 1983009808
        %v873 = vunpack.c.0.s8 %v872
        %v874 = vlaneseq
        %v875 = vshrl.u32 %v874, 7
        %v876 = vsub.s32 %v873, %v875
        %v877 = vrot.slane %v712, %v876
        %v879 = vunpack.c.l.s4 1983009808
        %v880 = vunpack.c.0.s8 %v879
        %v881 = vlaneseq
        %v882 = vshrl.u32 %v881, 7
        %v883 = vsub.s32 %v880, %v882
        %v884 = vrot.slane %v870, %v883
        %v885 = vcombine.high %v877, %v877
        %v886 = vcombine.high %v884, %v884
        %v888 = vcombine.high %v789, %v789
        %v890 = vunpack.c.l.s4 1983009808
        %v891 = vunpack.c.0.s8 %v890
        %v892 = vlaneseq
        %v893 = vshrl.u32 %v892, 7
        %v894 = vsub.s32 %v891, %v893
        %v895 = vrot.slane %v789, %v894
        %v897 = vunpack.c.l.s4 1983009808
        %v898 = vunpack.c.0.s8 %v897
        %v899 = vlaneseq
        %v900 = vshrl.u32 %v899, 7
        %v901 = vsub.s32 %v898, %v900
        %v902 = vrot.slane %v888, %v901
        %v903 = vcombine.high %v895, %v895
        %v904 = vcombine.high %v902, %v902
        %v906 = vcombine.high %v866, %v866
        %v908 = vunpack.c.l.s4 1983009808
        %v909 = vunpack.c.0.s8 %v908
        %v910 = vlaneseq
        %v911 = vshrl.u32 %v910, 7
        %v912 = vsub.s32 %v909, %v911
        %v913 = vrot.slane %v866, %v912
        %v915 = vunpack.c.l.s4 1983009808
        %v916 = vunpack.c.0.s8 %v915
        %v917 = vlaneseq
        %v918 = vshrl.u32 %v917, 7
        %v919 = vsub.s32 %v916, %v918
        %v920 = vrot.slane %v906, %v919
        %v921 = vcombine.high %v913, %v913
        %v922 = vcombine.high %v920, %v920
        %v923 = vld [vmem:[#allocation5] sm:$0xff]
        %v924 = vld [vmem:[#allocation5 + $0x8] sm:$0xff]
        %v925 = vld [vmem:[#allocation5 + $0x10] sm:$0xff]
        %v926 = vld [vmem:[#allocation5 + $0x18] sm:$0xff]
        %vm927 = vcmask 64512
        %v928 = vsel %vm927, %v877, 0
        %v930 = vsel %vm927, %v895, 0
        %932 = vmatprep.subr.mxu0 0.0
        %933 = vmatpush1.xpose.msra.mxu0 %v930
        %934 = vmatprep.subr.mxu0 0.0
        %935 = vmatpush1.xpose.msra.mxu0 0.0
        %936 = vmatprep.subr.mxu0 0.0
        %937 = vmatpush1.xpose.msra.mxu0 0.0
        %938 = vmatprep.subr.mxu0 0.0
        %939 = vmatpush1.xpose.msra.mxu0 0.0
        %940 = vmatprep.subr.mxu0 0.0
        %941 = vmatpush1.xpose.msra.mxu0 0.0
        %942 = vmatprep.subr.mxu0 0.0
        %943 = vmatpush1.xpose.msra.mxu0 0.0
        %944 = vmatprep.subr.mxu0 0.0
        %945 = vmatpush1.xpose.msra.mxu0 0.0
        %946 = vmatprep.subr.mxu0 0.0
        %947 = vmatpush1.xpose.msra.mxu0 0.0
        %948 = vmatprep.subr.mxu0 0.0
        %949 = vmatpush1.xpose.msra.mxu0 0.0
        %950 = vmatprep.subr.mxu0 0.0
        %951 = vmatpush1.xpose.msra.mxu0 0.0
        %952 = vmatprep.subr.mxu0 0.0
        %953 = vmatpush1.xpose.msra.mxu0 0.0
        %954 = vmatprep.subr.mxu0 0.0
        %955 = vmatpush1.xpose.msra.mxu0 0.0
        %956 = vmatprep.subr.mxu0 0.0
        %957 = vmatpush1.xpose.msra.mxu0 0.0
        %958 = vmatprep.subr.mxu0 0.0
        %959 = vmatpush1.xpose.msra.mxu0 0.0
        %960 = vmatprep.subr.mxu0 0.0
        %961 = vmatpush1.xpose.msra.mxu0 0.0
        %962 = vmatprep.subr.mxu0 0.0
        %963 = vmatpush1.xpose.msra.mxu0 0.0
        %964 = vmatprep.subr.mxu0 0.0
        %965 = vmatpush1.xpose.msra.mxu0 0.0
        %966 = vmatprep.subr.mxu0 0.0
        %967 = vmatpush1.xpose.msra.mxu0 0.0
        %968 = vmatprep.subr.mxu0 0.0
        %969 = vmatpush1.xpose.msra.mxu0 0.0
        %970 = vmatprep.subr.mxu0 0.0
        %971 = vmatpush1.xpose.msra.mxu0 0.0
        %972 = vmatprep.subr.mxu0 0.0
        %973 = vmatpush1.xpose.msra.mxu0 0.0
        %974 = vmatprep.subr.mxu0 0.0
        %975 = vmatpush1.xpose.msra.mxu0 0.0
        %976 = vmatprep.subr.mxu0 0.0
        %977 = vmatpush1.xpose.msra.mxu0 0.0
        %978 = vmatprep.subr.mxu0 0.0
        %979 = vmatpush1.xpose.msra.mxu0 0.0
        %980 = vmatprep.subr.mxu0 0.0
        %981 = vmatpush1.xpose.msra.mxu0 0.0
        %982 = vmatprep.subr.mxu0 0.0
        %983 = vmatpush1.xpose.msra.mxu0 0.0
        %984 = vmatprep.subr.mxu0 0.0
        %985 = vmatpush1.xpose.msra.mxu0 0.0
        %986 = vmatprep.subr.mxu0 0.0
        %987 = vmatpush1.xpose.msra.mxu0 0.0
        %988 = vmatprep.subr.mxu0 0.0
        %989 = vmatpush1.xpose.msra.mxu0 0.0
        %990 = vmatprep.subr.mxu0 0.0
        %991 = vmatpush1.xpose.msra.mxu0 0.0
        %992 = vmatprep.subr.mxu0 0.0
        %993 = vmatpush1.xpose.msra.mxu0 0.0
        %994 = vmatprep.subr.mxu0 0.0
        %995 = vmatpush1.xpose.msra.mxu0 0.0
        %996 = vmatprep.mubr.f32.mxu0 0.0
        %997 = vmatmul.mubr.f32.gmra.mrb[0].mxu0 %v928
        %v998 = vpop.f32.mrb[0].mxu0
        %v999 = vadd.f32 0.0, %v998
        %v1000 = vpop.f32.mrb[0].mxu0
        %1001 = vdwg.mxu0
        %v1002 = vsel %vm927, %v885, 0
        %v1004 = vsel %vm927, %v903, 0
        %1006 = vmatprep.subr.mxu0 0.0
        %1007 = vmatpush1.xpose.msra.mxu0 %v1004
        %1008 = vmatprep.subr.mxu0 0.0
        %1009 = vmatpush1.xpose.msra.mxu0 0.0
        %1010 = vmatprep.subr.mxu0 0.0
        %1011 = vmatpush1.xpose.msra.mxu0 0.0
        %1012 = vmatprep.subr.mxu0 0.0
        %1013 = vmatpush1.xpose.msra.mxu0 0.0
        %1014 = vmatprep.subr.mxu0 0.0
        %1015 = vmatpush1.xpose.msra.mxu0 0.0
        %1016 = vmatprep.subr.mxu0 0.0
        %1017 = vmatpush1.xpose.msra.mxu0 0.0
        %1018 = vmatprep.subr.mxu0 0.0
        %1019 = vmatpush1.xpose.msra.mxu0 0.0
        %1020 = vmatprep.subr.mxu0 0.0
        %1021 = vmatpush1.xpose.msra.mxu0 0.0
        %1022 = vmatprep.subr.mxu0 0.0
        %1023 = vmatpush1.xpose.msra.mxu0 0.0
        %1024 = vmatprep.subr.mxu0 0.0
        %1025 = vmatpush1.xpose.msra.mxu0 0.0
        %1026 = vmatprep.subr.mxu0 0.0
        %1027 = vmatpush1.xpose.msra.mxu0 0.0
        %1028 = vmatprep.subr.mxu0 0.0
        %1029 = vmatpush1.xpose.msra.mxu0 0.0
        %1030 = vmatprep.subr.mxu0 0.0
        %1031 = vmatpush1.xpose.msra.mxu0 0.0
        %1032 = vmatprep.subr.mxu0 0.0
        %1033 = vmatpush1.xpose.msra.mxu0 0.0
        %1034 = vmatprep.subr.mxu0 0.0
        %1035 = vmatpush1.xpose.msra.mxu0 0.0
        %1036 = vmatprep.subr.mxu0 0.0
        %1037 = vmatpush1.xpose.msra.mxu0 0.0
        %1038 = vmatprep.subr.mxu0 0.0
        %1039 = vmatpush1.xpose.msra.mxu0 0.0
        %1040 = vmatprep.subr.mxu0 0.0
        %1041 = vmatpush1.xpose.msra.mxu0 0.0
        %1042 = vmatprep.subr.mxu0 0.0
        %1043 = vmatpush1.xpose.msra.mxu0 0.0
        %1044 = vmatprep.subr.mxu0 0.0
        %1045 = vmatpush1.xpose.msra.mxu0 0.0
        %1046 = vmatprep.subr.mxu0 0.0
        %1047 = vmatpush1.xpose.msra.mxu0 0.0
        %1048 = vmatprep.subr.mxu0 0.0
        %1049 = vmatpush1.xpose.msra.mxu0 0.0
        %1050 = vmatprep.subr.mxu0 0.0
        %1051 = vmatpush1.xpose.msra.mxu0 0.0
        %1052 = vmatprep.subr.mxu0 0.0
        %1053 = vmatpush1.xpose.msra.mxu0 0.0
        %1054 = vmatprep.subr.mxu0 0.0
        %1055 = vmatpush1.xpose.msra.mxu0 0.0
        %1056 = vmatprep.subr.mxu0 0.0
        %1057 = vmatpush1.xpose.msra.mxu0 0.0
        %1058 = vmatprep.subr.mxu0 0.0
        %1059 = vmatpush1.xpose.msra.mxu0 0.0
        %1060 = vmatprep.subr.mxu0 0.0
        %1061 = vmatpush1.xpose.msra.mxu0 0.0
        %1062 = vmatprep.subr.mxu0 0.0
        %1063 = vmatpush1.xpose.msra.mxu0 0.0
        %1064 = vmatprep.subr.mxu0 0.0
        %1065 = vmatpush1.xpose.msra.mxu0 0.0
        %1066 = vmatprep.subr.mxu0 0.0
        %1067 = vmatpush1.xpose.msra.mxu0 0.0
        %1068 = vmatprep.subr.mxu0 0.0
        %1069 = vmatpush1.xpose.msra.mxu0 0.0
        %1070 = vmatprep.mubr.f32.mxu0 0.0
        %1071 = vmatmul.mubr.f32.gmra.mrb[0].mxu0 %v1002
        %v1072 = vpop.f32.mrb[0].mxu0
        %v1073 = vadd.f32 0.0, %v1072
        %v1074 = vpop.f32.mrb[0].mxu0
        %1075 = vdwg.mxu0
        %v1076 = vsel %vm927, %v884, 0
        %v1078 = vsel %vm927, %v902, 0
        %1080 = vmatprep.subr.mxu0 0.0
        %1081 = vmatpush1.xpose.msra.mxu0 %v1078
        %1082 = vmatprep.subr.mxu0 0.0
        %1083 = vmatpush1.xpose.msra.mxu0 0.0
        %1084 = vmatprep.subr.mxu0 0.0
        %1085 = vmatpush1.xpose.msra.mxu0 0.0
        %1086 = vmatprep.subr.mxu0 0.0
        %1087 = vmatpush1.xpose.msra.mxu0 0.0
        %1088 = vmatprep.subr.mxu0 0.0
        %1089 = vmatpush1.xpose.msra.mxu0 0.0
        %1090 = vmatprep.subr.mxu0 0.0
        %1091 = vmatpush1.xpose.msra.mxu0 0.0
        %1092 = vmatprep.subr.mxu0 0.0
        %1093 = vmatpush1.xpose.msra.mxu0 0.0
        %1094 = vmatprep.subr.mxu0 0.0
        %1095 = vmatpush1.xpose.msra.mxu0 0.0
        %1096 = vmatprep.subr.mxu0 0.0
        %1097 = vmatpush1.xpose.msra.mxu0 0.0
        %1098 = vmatprep.subr.mxu0 0.0
        %1099 = vmatpush1.xpose.msra.mxu0 0.0
        %1100 = vmatprep.subr.mxu0 0.0
        %1101 = vmatpush1.xpose.msra.mxu0 0.0
        %1102 = vmatprep.subr.mxu0 0.0
        %1103 = vmatpush1.xpose.msra.mxu0 0.0
        %1104 = vmatprep.subr.mxu0 0.0
        %1105 = vmatpush1.xpose.msra.mxu0 0.0
        %1106 = vmatprep.subr.mxu0 0.0
        %1107 = vmatpush1.xpose.msra.mxu0 0.0
        %1108 = vmatprep.subr.mxu0 0.0
        %1109 = vmatpush1.xpose.msra.mxu0 0.0
        %1110 = vmatprep.subr.mxu0 0.0
        %1111 = vmatpush1.xpose.msra.mxu0 0.0
        %1112 = vmatprep.subr.mxu0 0.0
        %1113 = vmatpush1.xpose.msra.mxu0 0.0
        %1114 = vmatprep.subr.mxu0 0.0
        %1115 = vmatpush1.xpose.msra.mxu0 0.0
        %1116 = vmatprep.subr.mxu0 0.0
        %1117 = vmatpush1.xpose.msra.mxu0 0.0
        %1118 = vmatprep.subr.mxu0 0.0
        %1119 = vmatpush1.xpose.msra.mxu0 0.0
        %1120 = vmatprep.subr.mxu0 0.0
        %1121 = vmatpush1.xpose.msra.mxu0 0.0
        %1122 = vmatprep.subr.mxu0 0.0
        %1123 = vmatpush1.xpose.msra.mxu0 0.0
        %1124 = vmatprep.subr.mxu0 0.0
        %1125 = vmatpush1.xpose.msra.mxu0 0.0
        %1126 = vmatprep.subr.mxu0 0.0
        %1127 = vmatpush1.xpose.msra.mxu0 0.0
        %1128 = vmatprep.subr.mxu0 0.0
        %1129 = vmatpush1.xpose.msra.mxu0 0.0
        %1130 = vmatprep.subr.mxu0 0.0
        %1131 = vmatpush1.xpose.msra.mxu0 0.0
        %1132 = vmatprep.subr.mxu0 0.0
        %1133 = vmatpush1.xpose.msra.mxu0 0.0
        %1134 = vmatprep.subr.mxu0 0.0
        %1135 = vmatpush1.xpose.msra.mxu0 0.0
        %1136 = vmatprep.subr.mxu0 0.0
        %1137 = vmatpush1.xpose.msra.mxu0 0.0
        %1138 = vmatprep.subr.mxu0 0.0
        %1139 = vmatpush1.xpose.msra.mxu0 0.0
        %1140 = vmatprep.subr.mxu0 0.0
        %1141 = vmatpush1.xpose.msra.mxu0 0.0
        %1142 = vmatprep.subr.mxu0 0.0
        %1143 = vmatpush1.xpose.msra.mxu0 0.0
        %1144 = vmatprep.mubr.f32.mxu0 0.0
        %1145 = vmatmul.mubr.f32.gmra.mrb[0].mxu0 %v1076
        %v1146 = vpop.f32.mrb[0].mxu0
        %v1147 = vadd.f32 0.0, %v1146
        %v1148 = vpop.f32.mrb[0].mxu0
        %1149 = vdwg.mxu0
        %v1150 = vsel %vm927, %v886, 0
        %v1152 = vsel %vm927, %v904, 0
        %1154 = vmatprep.subr.mxu0 0.0
        %1155 = vmatpush1.xpose.msra.mxu0 %v1152
        %1156 = vmatprep.subr.mxu0 0.0
        %1157 = vmatpush1.xpose.msra.mxu0 0.0
        %1158 = vmatprep.subr.mxu0 0.0
        %1159 = vmatpush1.xpose.msra.mxu0 0.0
        %1160 = vmatprep.subr.mxu0 0.0
        %1161 = vmatpush1.xpose.msra.mxu0 0.0
        %1162 = vmatprep.subr.mxu0 0.0
        %1163 = vmatpush1.xpose.msra.mxu0 0.0
        %1164 = vmatprep.subr.mxu0 0.0
        %1165 = vmatpush1.xpose.msra.mxu0 0.0
        %1166 = vmatprep.subr.mxu0 0.0
        %1167 = vmatpush1.xpose.msra.mxu0 0.0
        %1168 = vmatprep.subr.mxu0 0.0
        %1169 = vmatpush1.xpose.msra.mxu0 0.0
        %1170 = vmatprep.subr.mxu0 0.0
        %1171 = vmatpush1.xpose.msra.mxu0 0.0
        %1172 = vmatprep.subr.mxu0 0.0
        %1173 = vmatpush1.xpose.msra.mxu0 0.0
        %1174 = vmatprep.subr.mxu0 0.0
        %1175 = vmatpush1.xpose.msra.mxu0 0.0
        %1176 = vmatprep.subr.mxu0 0.0
        %1177 = vmatpush1.xpose.msra.mxu0 0.0
        %1178 = vmatprep.subr.mxu0 0.0
        %1179 = vmatpush1.xpose.msra.mxu0 0.0
        %1180 = vmatprep.subr.mxu0 0.0
        %1181 = vmatpush1.xpose.msra.mxu0 0.0
        %1182 = vmatprep.subr.mxu0 0.0
        %1183 = vmatpush1.xpose.msra.mxu0 0.0
        %1184 = vmatprep.subr.mxu0 0.0
        %1185 = vmatpush1.xpose.msra.mxu0 0.0
        %1186 = vmatprep.subr.mxu0 0.0
        %1187 = vmatpush1.xpose.msra.mxu0 0.0
        %1188 = vmatprep.subr.mxu0 0.0
        %1189 = vmatpush1.xpose.msra.mxu0 0.0
        %1190 = vmatprep.subr.mxu0 0.0
        %1191 = vmatpush1.xpose.msra.mxu0 0.0
        %1192 = vmatprep.subr.mxu0 0.0
        %1193 = vmatpush1.xpose.msra.mxu0 0.0
        %1194 = vmatprep.subr.mxu0 0.0
        %1195 = vmatpush1.xpose.msra.mxu0 0.0
        %1196 = vmatprep.subr.mxu0 0.0
        %1197 = vmatpush1.xpose.msra.mxu0 0.0
        %1198 = vmatprep.subr.mxu0 0.0
        %1199 = vmatpush1.xpose.msra.mxu0 0.0
        %1200 = vmatprep.subr.mxu0 0.0
        %1201 = vmatpush1.xpose.msra.mxu0 0.0
        %1202 = vmatprep.subr.mxu0 0.0
        %1203 = vmatpush1.xpose.msra.mxu0 0.0
        %1204 = vmatprep.subr.mxu0 0.0
        %1205 = vmatpush1.xpose.msra.mxu0 0.0
        %1206 = vmatprep.subr.mxu0 0.0
        %1207 = vmatpush1.xpose.msra.mxu0 0.0
        %1208 = vmatprep.subr.mxu0 0.0
        %1209 = vmatpush1.xpose.msra.mxu0 0.0
        %1210 = vmatprep.subr.mxu0 0.0
        %1211 = vmatpush1.xpose.msra.mxu0 0.0
        %1212 = vmatprep.subr.mxu0 0.0
        %1213 = vmatpush1.xpose.msra.mxu0 0.0
        %1214 = vmatprep.subr.mxu0 0.0
        %1215 = vmatpush1.xpose.msra.mxu0 0.0
        %1216 = vmatprep.subr.mxu0 0.0
        %1217 = vmatpush1.xpose.msra.mxu0 0.0
        %1218 = vmatprep.mubr.f32.mxu0 0.0
        %1219 = vmatmul.mubr.f32.gmra.mrb[0].mxu0 %v1150
        %v1220 = vpop.f32.mrb[0].mxu0
        %v1221 = vadd.f32 0.0, %v1220
        %v1222 = vpop.f32.mrb[0].mxu0
        %1223 = vdwg.mxu0
        %vm1224 = vcmask 9216
        %v1225 = vsel %vm1224, %v999, -inf
        %1226 = vmax.xlane.f32.xlu0 %v1225
        %v1227 = vpop.xlane.xlu0 %1226
        %v1228 = vsel %vm1224, %v1073, -inf
        %1229 = vmax.xlane.f32.xlu0 %v1228
        %v1230 = vpop.xlane.xlu0 %1229
        %v1231 = vsel %vm1224, %v1147, -inf
        %1232 = vmax.xlane.f32.xlu0 %v1231
        %v1233 = vpop.xlane.xlu0 %1232
        %v1234 = vsel %vm1224, %v1221, -inf
        %1235 = vmax.xlane.f32.xlu0 %v1234
        %v1236 = vpop.xlane.xlu0 %1235
        %v1237 = vsub.f32 %v999, %v1227
        %v1238 = vsub.f32 %v1073, %v1230
        %v1239 = vsub.f32 %v1147, %v1233
        %v1240 = vsub.f32 %v1221, %v1236
        %v1241 = vmul.f32 %v1237, 1.442695
        %v1242 = vpow.pop %v1241
        %v1243 = vmul.f32 %v1238, 1.442695
        %v1244 = vpow.pop %v1243
        %v1245 = vmul.f32 %v1239, 1.442695
        %v1246 = vpow.pop %v1245
        %v1247 = vmul.f32 %v1240, 1.442695
        %v1248 = vpow.pop %v1247
        %v1249 = vsel %vm1224, %v1242, 0.0
        %1250 = vadd.xlane.f32.xlu0 %v1249
        %v1251 = vpop.xlane.xlu0 %1250
        %v1252 = vsel %vm1224, %v1244, 0.0
        %1253 = vadd.xlane.f32.xlu0 %v1252
        %v1254 = vpop.xlane.xlu0 %1253
        %v1255 = vsel %vm1224, %v1246, 0.0
        %1256 = vadd.xlane.f32.xlu0 %v1255
        %v1257 = vpop.xlane.xlu0 %1256
        %v1258 = vsel %vm1224, %v1248, 0.0
        %1259 = vadd.xlane.f32.xlu0 %v1258
        %v1260 = vpop.xlane.xlu0 %1259
        %v1261 = vrcp.pop %v1251
        %v1262 = vrcp.pop %v1254
        %v1263 = vrcp.pop %v1257
        %v1264 = vrcp.pop %v1260
        %v1265 = vmul.f32 %v1242, %v1261
        %v1266 = vmul.f32 %v1244, %v1262
        %v1267 = vmul.f32 %v1246, %v1263
        %v1268 = vmul.f32 %v1248, %v1264
        %vm1269 = vcmask 15360
        %v1271 = vsel %vm1269, %v1265, 0
        %vm1273 = vcmask 1041408
        %v1274 = vsel %vm1273, %v913, 0
        %1276 = vmatprep.subr.mxu0 0.0
        %1277 = vmatpush1.msra.mxu0 %v1274
        %1278 = vmatprep.subr.mxu0 0.0
        %1279 = vmatpush1.msra.mxu0 0.0
        %1280 = vmatprep.subr.mxu0 0.0
        %1281 = vmatpush1.msra.mxu0 0.0
        %1282 = vmatprep.subr.mxu0 0.0
        %1283 = vmatpush1.msra.mxu0 0.0
        %1284 = vmatprep.subr.mxu0 0.0
        %1285 = vmatpush1.msra.mxu0 0.0
        %1286 = vmatprep.subr.mxu0 0.0
        %1287 = vmatpush1.msra.mxu0 0.0
        %1288 = vmatprep.subr.mxu0 0.0
        %1289 = vmatpush1.msra.mxu0 0.0
        %1290 = vmatprep.subr.mxu0 0.0
        %1291 = vmatpush1.msra.mxu0 0.0
        %1292 = vmatprep.subr.mxu0 0.0
        %1293 = vmatpush1.msra.mxu0 0.0
        %1294 = vmatprep.subr.mxu0 0.0
        %1295 = vmatpush1.msra.mxu0 0.0
        %1296 = vmatprep.subr.mxu0 0.0
        %1297 = vmatpush1.msra.mxu0 0.0
        %1298 = vmatprep.subr.mxu0 0.0
        %1299 = vmatpush1.msra.mxu0 0.0
        %1300 = vmatprep.subr.mxu0 0.0
        %1301 = vmatpush1.msra.mxu0 0.0
        %1302 = vmatprep.subr.mxu0 0.0
        %1303 = vmatpush1.msra.mxu0 0.0
        %1304 = vmatprep.subr.mxu0 0.0
        %1305 = vmatpush1.msra.mxu0 0.0
        %1306 = vmatprep.subr.mxu0 0.0
        %1307 = vmatpush1.msra.mxu0 0.0
        %1308 = vmatprep.subr.mxu0 0.0
        %1309 = vmatpush1.msra.mxu0 0.0
        %1310 = vmatprep.subr.mxu0 0.0
        %1311 = vmatpush1.msra.mxu0 0.0
        %1312 = vmatprep.subr.mxu0 0.0
        %1313 = vmatpush1.msra.mxu0 0.0
        %1314 = vmatprep.subr.mxu0 0.0
        %1315 = vmatpush1.msra.mxu0 0.0
        %1316 = vmatprep.subr.mxu0 0.0
        %1317 = vmatpush1.msra.mxu0 0.0
        %1318 = vmatprep.subr.mxu0 0.0
        %1319 = vmatpush1.msra.mxu0 0.0
        %1320 = vmatprep.subr.mxu0 0.0
        %1321 = vmatpush1.msra.mxu0 0.0
        %1322 = vmatprep.subr.mxu0 0.0
        %1323 = vmatpush1.msra.mxu0 0.0
        %1324 = vmatprep.subr.mxu0 0.0
        %1325 = vmatpush1.msra.mxu0 0.0
        %1326 = vmatprep.subr.mxu0 0.0
        %1327 = vmatpush1.msra.mxu0 0.0
        %1328 = vmatprep.subr.mxu0 0.0
        %1329 = vmatpush1.msra.mxu0 0.0
        %1330 = vmatprep.subr.mxu0 0.0
        %1331 = vmatpush1.msra.mxu0 0.0
        %1332 = vmatprep.subr.mxu0 0.0
        %1333 = vmatpush1.msra.mxu0 0.0
        %1334 = vmatprep.subr.mxu0 0.0
        %1335 = vmatpush1.msra.mxu0 0.0
        %1336 = vmatprep.subr.mxu0 0.0
        %1337 = vmatpush1.msra.mxu0 0.0
        %1338 = vmatprep.subr.mxu0 0.0
        %1339 = vmatpush1.msra.mxu0 0.0
        %1340 = vmatprep.mubr.f32.mxu0 0.0
        %1341 = vmatmul.mubr.f32.gmra.mrb[0].mxu0 %v1271
        %v1342 = vpop.f32.mrb[0].mxu0
        %v1343 = vadd.f32 0.0, %v1342
        %v1344 = vpop.f32.mrb[0].mxu0
        %1345 = vdwg.mxu0
        %v1347 = vsel %vm1269, %v1266, 0
        %v1349 = vsel %vm1273, %v921, 0
        %1351 = vmatprep.subr.mxu0 0.0
        %1352 = vmatpush1.msra.mxu0 %v1349
        %1353 = vmatprep.subr.mxu0 0.0
        %1354 = vmatpush1.msra.mxu0 0.0
        %1355 = vmatprep.subr.mxu0 0.0
        %1356 = vmatpush1.msra.mxu0 0.0
        %1357 = vmatprep.subr.mxu0 0.0
        %1358 = vmatpush1.msra.mxu0 0.0
        %1359 = vmatprep.subr.mxu0 0.0
        %1360 = vmatpush1.msra.mxu0 0.0
        %1361 = vmatprep.subr.mxu0 0.0
        %1362 = vmatpush1.msra.mxu0 0.0
        %1363 = vmatprep.subr.mxu0 0.0
        %1364 = vmatpush1.msra.mxu0 0.0
        %1365 = vmatprep.subr.mxu0 0.0
        %1366 = vmatpush1.msra.mxu0 0.0
        %1367 = vmatprep.subr.mxu0 0.0
        %1368 = vmatpush1.msra.mxu0 0.0
        %1369 = vmatprep.subr.mxu0 0.0
        %1370 = vmatpush1.msra.mxu0 0.0
        %1371 = vmatprep.subr.mxu0 0.0
        %1372 = vmatpush1.msra.mxu0 0.0
        %1373 = vmatprep.subr.mxu0 0.0
        %1374 = vmatpush1.msra.mxu0 0.0
        %1375 = vmatprep.subr.mxu0 0.0
        %1376 = vmatpush1.msra.mxu0 0.0
        %1377 = vmatprep.subr.mxu0 0.0
        %1378 = vmatpush1.msra.mxu0 0.0
        %1379 = vmatprep.subr.mxu0 0.0
        %1380 = vmatpush1.msra.mxu0 0.0
        %1381 = vmatprep.subr.mxu0 0.0
        %1382 = vmatpush1.msra.mxu0 0.0
        %1383 = vmatprep.subr.mxu0 0.0
        %1384 = vmatpush1.msra.mxu0 0.0
        %1385 = vmatprep.subr.mxu0 0.0
        %1386 = vmatpush1.msra.mxu0 0.0
        %1387 = vmatprep.subr.mxu0 0.0
        %1388 = vmatpush1.msra.mxu0 0.0
        %1389 = vmatprep.subr.mxu0 0.0
        %1390 = vmatpush1.msra.mxu0 0.0
        %1391 = vmatprep.subr.mxu0 0.0
        %1392 = vmatpush1.msra.mxu0 0.0
        %1393 = vmatprep.subr.mxu0 0.0
        %1394 = vmatpush1.msra.mxu0 0.0
        %1395 = vmatprep.subr.mxu0 0.0
        %1396 = vmatpush1.msra.mxu0 0.0
        %1397 = vmatprep.subr.mxu0 0.0
        %1398 = vmatpush1.msra.mxu0 0.0
        %1399 = vmatprep.subr.mxu0 0.0
        %1400 = vmatpush1.msra.mxu0 0.0
        %1401 = vmatprep.subr.mxu0 0.0
        %1402 = vmatpush1.msra.mxu0 0.0
        %1403 = vmatprep.subr.mxu0 0.0
        %1404 = vmatpush1.msra.mxu0 0.0
        %1405 = vmatprep.subr.mxu0 0.0
        %1406 = vmatpush1.msra.mxu0 0.0
        %1407 = vmatprep.subr.mxu0 0.0
        %1408 = vmatpush1.msra.mxu0 0.0
        %1409 = vmatprep.subr.mxu0 0.0
        %1410 = vmatpush1.msra.mxu0 0.0
        %1411 = vmatprep.subr.mxu0 0.0
        %1412 = vmatpush1.msra.mxu0 0.0
        %1413 = vmatprep.subr.mxu0 0.0
        %1414 = vmatpush1.msra.mxu0 0.0
        %1415 = vmatprep.mubr.f32.mxu0 0.0
        %1416 = vmatmul.mubr.f32.gmra.mrb[0].mxu0 %v1347
        %v1417 = vpop.f32.mrb[0].mxu0
        %v1418 = vadd.f32 0.0, %v1417
        %v1419 = vpop.f32.mrb[0].mxu0
        %1420 = vdwg.mxu0
        %v1422 = vsel %vm1269, %v1267, 0
        %v1424 = vsel %vm1273, %v920, 0
        %1426 = vmatprep.subr.mxu0 0.0
        %1427 = vmatpush1.msra.mxu0 %v1424
        %1428 = vmatprep.subr.mxu0 0.0
        %1429 = vmatpush1.msra.mxu0 0.0
        %1430 = vmatprep.subr.mxu0 0.0
        %1431 = vmatpush1.msra.mxu0 0.0
        %1432 = vmatprep.subr.mxu0 0.0
        %1433 = vmatpush1.msra.mxu0 0.0
        %1434 = vmatprep.subr.mxu0 0.0
        %1435 = vmatpush1.msra.mxu0 0.0
        %1436 = vmatprep.subr.mxu0 0.0
        %1437 = vmatpush1.msra.mxu0 0.0
        %1438 = vmatprep.subr.mxu0 0.0
        %1439 = vmatpush1.msra.mxu0 0.0
        %1440 = vmatprep.subr.mxu0 0.0
        %1441 = vmatpush1.msra.mxu0 0.0
        %1442 = vmatprep.subr.mxu0 0.0
        %1443 = vmatpush1.msra.mxu0 0.0
        %1444 = vmatprep.subr.mxu0 0.0
        %1445 = vmatpush1.msra.mxu0 0.0
        %1446 = vmatprep.subr.mxu0 0.0
        %1447 = vmatpush1.msra.mxu0 0.0
        %1448 = vmatprep.subr.mxu0 0.0
        %1449 = vmatpush1.msra.mxu0 0.0
        %1450 = vmatprep.subr.mxu0 0.0
        %1451 = vmatpush1.msra.mxu0 0.0
        %1452 = vmatprep.subr.mxu0 0.0
        %1453 = vmatpush1.msra.mxu0 0.0
        %1454 = vmatprep.subr.mxu0 0.0
        %1455 = vmatpush1.msra.mxu0 0.0
        %1456 = vmatprep.subr.mxu0 0.0
        %1457 = vmatpush1.msra.mxu0 0.0
        %1458 = vmatprep.subr.mxu0 0.0
        %1459 = vmatpush1.msra.mxu0 0.0
        %1460 = vmatprep.subr.mxu0 0.0
        %1461 = vmatpush1.msra.mxu0 0.0
        %1462 = vmatprep.subr.mxu0 0.0
        %1463 = vmatpush1.msra.mxu0 0.0
        %1464 = vmatprep.subr.mxu0 0.0
        %1465 = vmatpush1.msra.mxu0 0.0
        %1466 = vmatprep.subr.mxu0 0.0
        %1467 = vmatpush1.msra.mxu0 0.0
        %1468 = vmatprep.subr.mxu0 0.0
        %1469 = vmatpush1.msra.mxu0 0.0
        %1470 = vmatprep.subr.mxu0 0.0
        %1471 = vmatpush1.msra.mxu0 0.0
        %1472 = vmatprep.subr.mxu0 0.0
        %1473 = vmatpush1.msra.mxu0 0.0
        %1474 = vmatprep.subr.mxu0 0.0
        %1475 = vmatpush1.msra.mxu0 0.0
        %1476 = vmatprep.subr.mxu0 0.0
        %1477 = vmatpush1.msra.mxu0 0.0
        %1478 = vmatprep.subr.mxu0 0.0
        %1479 = vmatpush1.msra.mxu0 0.0
        %1480 = vmatprep.subr.mxu0 0.0
        %1481 = vmatpush1.msra.mxu0 0.0
        %1482 = vmatprep.subr.mxu0 0.0
        %1483 = vmatpush1.msra.mxu0 0.0
        %1484 = vmatprep.subr.mxu0 0.0
        %1485 = vmatpush1.msra.mxu0 0.0
        %1486 = vmatprep.subr.mxu0 0.0
        %1487 = vmatpush1.msra.mxu0 0.0
        %1488 = vmatprep.subr.mxu0 0.0
        %1489 = vmatpush1.msra.mxu0 0.0
        %1490 = vmatprep.mubr.f32.mxu0 0.0
        %1491 = vmatmul.mubr.f32.gmra.mrb[0].mxu0 %v1422
        %v1492 = vpop.f32.mrb[0].mxu0
        %v1493 = vadd.f32 0.0, %v1492
        %v1494 = vpop.f32.mrb[0].mxu0
        %1495 = vdwg.mxu0
        %v1497 = vsel %vm1269, %v1268, 0
        %v1499 = vsel %vm1273, %v922, 0
        %1501 = vmatprep.subr.mxu0 0.0
        %1502 = vmatpush1.msra.mxu0 %v1499
        %1503 = vmatprep.subr.mxu0 0.0
        %1504 = vmatpush1.msra.mxu0 0.0
        %1505 = vmatprep.subr.mxu0 0.0
        %1506 = vmatpush1.msra.mxu0 0.0
        %1507 = vmatprep.subr.mxu0 0.0
        %1508 = vmatpush1.msra.mxu0 0.0
        %1509 = vmatprep.subr.mxu0 0.0
        %1510 = vmatpush1.msra.mxu0 0.0
        %1511 = vmatprep.subr.mxu0 0.0
        %1512 = vmatpush1.msra.mxu0 0.0
        %1513 = vmatprep.subr.mxu0 0.0
        %1514 = vmatpush1.msra.mxu0 0.0
        %1515 = vmatprep.subr.mxu0 0.0
        %1516 = vmatpush1.msra.mxu0 0.0
        %1517 = vmatprep.subr.mxu0 0.0
        %1518 = vmatpush1.msra.mxu0 0.0
        %1519 = vmatprep.subr.mxu0 0.0
        %1520 = vmatpush1.msra.mxu0 0.0
        %1521 = vmatprep.subr.mxu0 0.0
        %1522 = vmatpush1.msra.mxu0 0.0
        %1523 = vmatprep.subr.mxu0 0.0
        %1524 = vmatpush1.msra.mxu0 0.0
        %1525 = vmatprep.subr.mxu0 0.0
        %1526 = vmatpush1.msra.mxu0 0.0
        %1527 = vmatprep.subr.mxu0 0.0
        %1528 = vmatpush1.msra.mxu0 0.0
        %1529 = vmatprep.subr.mxu0 0.0
        %1530 = vmatpush1.msra.mxu0 0.0
        %1531 = vmatprep.subr.mxu0 0.0
        %1532 = vmatpush1.msra.mxu0 0.0
        %1533 = vmatprep.subr.mxu0 0.0
        %1534 = vmatpush1.msra.mxu0 0.0
        %1535 = vmatprep.subr.mxu0 0.0
        %1536 = vmatpush1.msra.mxu0 0.0
        %1537 = vmatprep.subr.mxu0 0.0
        %1538 = vmatpush1.msra.mxu0 0.0
        %1539 = vmatprep.subr.mxu0 0.0
        %1540 = vmatpush1.msra.mxu0 0.0
        %1541 = vmatprep.subr.mxu0 0.0
        %1542 = vmatpush1.msra.mxu0 0.0
        %1543 = vmatprep.subr.mxu0 0.0
        %1544 = vmatpush1.msra.mxu0 0.0
        %1545 = vmatprep.subr.mxu0 0.0
        %1546 = vmatpush1.msra.mxu0 0.0
        %1547 = vmatprep.subr.mxu0 0.0
        %1548 = vmatpush1.msra.mxu0 0.0
        %1549 = vmatprep.subr.mxu0 0.0
        %1550 = vmatpush1.msra.mxu0 0.0
        %1551 = vmatprep.subr.mxu0 0.0
        %1552 = vmatpush1.msra.mxu0 0.0
        %1553 = vmatprep.subr.mxu0 0.0
        %1554 = vmatpush1.msra.mxu0 0.0
        %1555 = vmatprep.subr.mxu0 0.0
        %1556 = vmatpush1.msra.mxu0 0.0
        %1557 = vmatprep.subr.mxu0 0.0
        %1558 = vmatpush1.msra.mxu0 0.0
        %1559 = vmatprep.subr.mxu0 0.0
        %1560 = vmatpush1.msra.mxu0 0.0
        %1561 = vmatprep.subr.mxu0 0.0
        %1562 = vmatpush1.msra.mxu0 0.0
        %1563 = vmatprep.subr.mxu0 0.0
        %1564 = vmatpush1.msra.mxu0 0.0
        %1565 = vmatprep.mubr.f32.mxu0 0.0
        %1566 = vmatmul.mubr.f32.gmra.mrb[0].mxu0 %v1497
        %v1567 = vpop.f32.mrb[0].mxu0
        %v1568 = vadd.f32 0.0, %v1567
        %v1569 = vpop.f32.mrb[0].mxu0
        %1570 = vdwg.mxu0
        %v1572 = vunpack.c.l.s4 1983009808
        %v1573 = vunpack.c.0.s8 %v1572
        %v1574 = vlaneseq
        %v1575 = vshrl.u32 %v1574, 7
        %v1576 = vsub.s32 %v1573, %v1575
        %v1577 = vrot.slane %v877, %v1576
        %1578 = vrot.lane.b32.xlu0 %v1577, 120
        %v1579 = vpop.permute.xlu0 %1578
        %v1581 = vunpack.c.l.s4 1983009808
        %v1582 = vunpack.c.0.s8 %v1581
        %v1583 = vlaneseq
        %v1584 = vshrl.u32 %v1583, 7
        %v1585 = vsub.s32 %v1582, %v1584
        %v1586 = vrot.slane %v895, %v1585
        %1587 = vrot.lane.b32.xlu0 %v1586, 120
        %v1588 = vpop.permute.xlu0 %1587
        %v1589 = vsel %vm927, %v1579, 0
        %v1591 = vsel %vm927, %v1588, 0
        %1593 = vmatprep.subr.mxu0 0.0
        %1594 = vmatpush1.xpose.msra.mxu0 %v1591
        %1595 = vmatprep.subr.mxu0 0.0
        %1596 = vmatpush1.xpose.msra.mxu0 0.0
        %1597 = vmatprep.subr.mxu0 0.0
        %1598 = vmatpush1.xpose.msra.mxu0 0.0
        %1599 = vmatprep.subr.mxu0 0.0
        %1600 = vmatpush1.xpose.msra.mxu0 0.0
        %1601 = vmatprep.subr.mxu0 0.0
        %1602 = vmatpush1.xpose.msra.mxu0 0.0
        %1603 = vmatprep.subr.mxu0 0.0
        %1604 = vmatpush1.xpose.msra.mxu0 0.0
        %1605 = vmatprep.subr.mxu0 0.0
        %1606 = vmatpush1.xpose.msra.mxu0 0.0
        %1607 = vmatprep.subr.mxu0 0.0
        %1608 = vmatpush1.xpose.msra.mxu0 0.0
        %1609 = vmatprep.subr.mxu0 0.0
        %1610 = vmatpush1.xpose.msra.mxu0 0.0
        %1611 = vmatprep.subr.mxu0 0.0
        %1612 = vmatpush1.xpose.msra.mxu0 0.0
        %1613 = vmatprep.subr.mxu0 0.0
        %1614 = vmatpush1.xpose.msra.mxu0 0.0
        %1615 = vmatprep.subr.mxu0 0.0
        %1616 = vmatpush1.xpose.msra.mxu0 0.0
        %1617 = vmatprep.subr.mxu0 0.0
        %1618 = vmatpush1.xpose.msra.mxu0 0.0
        %1619 = vmatprep.subr.mxu0 0.0
        %1620 = vmatpush1.xpose.msra.mxu0 0.0
        %1621 = vmatprep.subr.mxu0 0.0
        %1622 = vmatpush1.xpose.msra.mxu0 0.0
        %1623 = vmatprep.subr.mxu0 0.0
        %1624 = vmatpush1.xpose.msra.mxu0 0.0
        %1625 = vmatprep.subr.mxu0 0.0
        %1626 = vmatpush1.xpose.msra.mxu0 0.0
        %1627 = vmatprep.subr.mxu0 0.0
        %1628 = vmatpush1.xpose.msra.mxu0 0.0
        %1629 = vmatprep.subr.mxu0 0.0
        %1630 = vmatpush1.xpose.msra.mxu0 0.0
        %1631 = vmatprep.subr.mxu0 0.0
        %1632 = vmatpush1.xpose.msra.mxu0 0.0
        %1633 = vmatprep.subr.mxu0 0.0
        %1634 = vmatpush1.xpose.msra.mxu0 0.0
        %1635 = vmatprep.subr.mxu0 0.0
        %1636 = vmatpush1.xpose.msra.mxu0 0.0
        %1637 = vmatprep.subr.mxu0 0.0
        %1638 = vmatpush1.xpose.msra.mxu0 0.0
        %1639 = vmatprep.subr.mxu0 0.0
        %1640 = vmatpush1.xpose.msra.mxu0 0.0
        %1641 = vmatprep.subr.mxu0 0.0
        %1642 = vmatpush1.xpose.msra.mxu0 0.0
        %1643 = vmatprep.subr.mxu0 0.0
        %1644 = vmatpush1.xpose.msra.mxu0 0.0
        %1645 = vmatprep.subr.mxu0 0.0
        %1646 = vmatpush1.xpose.msra.mxu0 0.0
        %1647 = vmatprep.subr.mxu0 0.0
        %1648 = vmatpush1.xpose.msra.mxu0 0.0
        %1649 = vmatprep.subr.mxu0 0.0
        %1650 = vmatpush1.xpose.msra.mxu0 0.0
        %1651 = vmatprep.subr.mxu0 0.0
        %1652 = vmatpush1.xpose.msra.mxu0 0.0
        %1653 = vmatprep.subr.mxu0 0.0
        %1654 = vmatpush1.xpose.msra.mxu0 0.0
        %1655 = vmatprep.subr.mxu0 0.0
        %1656 = vmatpush1.xpose.msra.mxu0 0.0
        %1657 = vmatprep.mubr.f32.mxu0 0.0
        %1658 = vmatmul.mubr.f32.gmra.mrb[0].mxu0 %v1589
        %v1659 = vpop.f32.mrb[0].mxu0
        %v1660 = vadd.f32 0.0, %v1659
        %v1661 = vpop.f32.mrb[0].mxu0
        %1662 = vdwg.mxu0
        %v1664 = vunpack.c.l.s4 1983009808
        %v1665 = vunpack.c.0.s8 %v1664
        %v1666 = vlaneseq
        %v1667 = vshrl.u32 %v1666, 7
        %v1668 = vsub.s32 %v1665, %v1667
        %v1669 = vrot.slane %v885, %v1668
        %1670 = vrot.lane.b32.xlu0 %v1669, 120
        %v1671 = vpop.permute.xlu0 %1670
        %v1673 = vunpack.c.l.s4 1983009808
        %v1674 = vunpack.c.0.s8 %v1673
        %v1675 = vlaneseq
        %v1676 = vshrl.u32 %v1675, 7
        %v1677 = vsub.s32 %v1674, %v1676
        %v1678 = vrot.slane %v903, %v1677
        %1679 = vrot.lane.b32.xlu0 %v1678, 120
        %v1680 = vpop.permute.xlu0 %1679
        %v1681 = vsel %vm927, %v1671, 0
        %v1683 = vsel %vm927, %v1680, 0
        %1685 = vmatprep.subr.mxu0 0.0
        %1686 = vmatpush1.xpose.msra.mxu0 %v1683
        %1687 = vmatprep.subr.mxu0 0.0
        %1688 = vmatpush1.xpose.msra.mxu0 0.0
        %1689 = vmatprep.subr.mxu0 0.0
        %1690 = vmatpush1.xpose.msra.mxu0 0.0
        %1691 = vmatprep.subr.mxu0 0.0
        %1692 = vmatpush1.xpose.msra.mxu0 0.0
        %1693 = vmatprep.subr.mxu0 0.0
        %1694 = vmatpush1.xpose.msra.mxu0 0.0
        %1695 = vmatprep.subr.mxu0 0.0
        %1696 = vmatpush1.xpose.msra.mxu0 0.0
        %1697 = vmatprep.subr.mxu0 0.0
        %1698 = vmatpush1.xpose.msra.mxu0 0.0
        %1699 = vmatprep.subr.mxu0 0.0
        %1700 = vmatpush1.xpose.msra.mxu0 0.0
        %1701 = vmatprep.subr.mxu0 0.0
        %1702 = vmatpush1.xpose.msra.mxu0 0.0
        %1703 = vmatprep.subr.mxu0 0.0
        %1704 = vmatpush1.xpose.msra.mxu0 0.0
        %1705 = vmatprep.subr.mxu0 0.0
        %1706 = vmatpush1.xpose.msra.mxu0 0.0
        %1707 = vmatprep.subr.mxu0 0.0
        %1708 = vmatpush1.xpose.msra.mxu0 0.0
        %1709 = vmatprep.subr.mxu0 0.0
        %1710 = vmatpush1.xpose.msra.mxu0 0.0
        %1711 = vmatprep.subr.mxu0 0.0
        %1712 = vmatpush1.xpose.msra.mxu0 0.0
        %1713 = vmatprep.subr.mxu0 0.0
        %1714 = vmatpush1.xpose.msra.mxu0 0.0
        %1715 = vmatprep.subr.mxu0 0.0
        %1716 = vmatpush1.xpose.msra.mxu0 0.0
        %1717 = vmatprep.subr.mxu0 0.0
        %1718 = vmatpush1.xpose.msra.mxu0 0.0
        %1719 = vmatprep.subr.mxu0 0.0
        %1720 = vmatpush1.xpose.msra.mxu0 0.0
        %1721 = vmatprep.subr.mxu0 0.0
        %1722 = vmatpush1.xpose.msra.mxu0 0.0
        %1723 = vmatprep.subr.mxu0 0.0
        %1724 = vmatpush1.xpose.msra.mxu0 0.0
        %1725 = vmatprep.subr.mxu0 0.0
        %1726 = vmatpush1.xpose.msra.mxu0 0.0
        %1727 = vmatprep.subr.mxu0 0.0
        %1728 = vmatpush1.xpose.msra.mxu0 0.0
        %1729 = vmatprep.subr.mxu0 0.0
        %1730 = vmatpush1.xpose.msra.mxu0 0.0
        %1731 = vmatprep.subr.mxu0 0.0
        %1732 = vmatpush1.xpose.msra.mxu0 0.0
        %1733 = vmatprep.subr.mxu0 0.0
        %1734 = vmatpush1.xpose.msra.mxu0 0.0
        %1735 = vmatprep.subr.mxu0 0.0
        %1736 = vmatpush1.xpose.msra.mxu0 0.0
        %1737 = vmatprep.subr.mxu0 0.0
        %1738 = vmatpush1.xpose.msra.mxu0 0.0
        %1739 = vmatprep.subr.mxu0 0.0
        %1740 = vmatpush1.xpose.msra.mxu0 0.0
        %1741 = vmatprep.subr.mxu0 0.0
        %1742 = vmatpush1.xpose.msra.mxu0 0.0
        %1743 = vmatprep.subr.mxu0 0.0
        %1744 = vmatpush1.xpose.msra.mxu0 0.0
        %1745 = vmatprep.subr.mxu0 0.0
        %1746 = vmatpush1.xpose.msra.mxu0 0.0
        %1747 = vmatprep.subr.mxu0 0.0
        %1748 = vmatpush1.xpose.msra.mxu0 0.0
        %1749 = vmatprep.mubr.f32.mxu0 0.0
        %1750 = vmatmul.mubr.f32.gmra.mrb[0].mxu0 %v1681
        %v1751 = vpop.f32.mrb[0].mxu0
        %v1752 = vadd.f32 0.0, %v1751
        %v1753 = vpop.f32.mrb[0].mxu0
        %1754 = vdwg.mxu0
        %v1756 = vunpack.c.l.s4 1983009808
        %v1757 = vunpack.c.0.s8 %v1756
        %v1758 = vlaneseq
        %v1759 = vshrl.u32 %v1758, 7
        %v1760 = vsub.s32 %v1757, %v1759
        %v1761 = vrot.slane %v884, %v1760
        %1762 = vrot.lane.b32.xlu0 %v1761, 120
        %v1763 = vpop.permute.xlu0 %1762
        %v1765 = vunpack.c.l.s4 1983009808
        %v1766 = vunpack.c.0.s8 %v1765
        %v1767 = vlaneseq
        %v1768 = vshrl.u32 %v1767, 7
        %v1769 = vsub.s32 %v1766, %v1768
        %v1770 = vrot.slane %v902, %v1769
        %1771 = vrot.lane.b32.xlu0 %v1770, 120
        %v1772 = vpop.permute.xlu0 %1771
        %v1773 = vsel %vm927, %v1763, 0
        %v1775 = vsel %vm927, %v1772, 0
        %1777 = vmatprep.subr.mxu0 0.0
        %1778 = vmatpush1.xpose.msra.mxu0 %v1775
        %1779 = vmatprep.subr.mxu0 0.0
        %1780 = vmatpush1.xpose.msra.mxu0 0.0
        %1781 = vmatprep.subr.mxu0 0.0
        %1782 = vmatpush1.xpose.msra.mxu0 0.0
        %1783 = vmatprep.subr.mxu0 0.0
        %1784 = vmatpush1.xpose.msra.mxu0 0.0
        %1785 = vmatprep.subr.mxu0 0.0
        %1786 = vmatpush1.xpose.msra.mxu0 0.0
        %1787 = vmatprep.subr.mxu0 0.0
        %1788 = vmatpush1.xpose.msra.mxu0 0.0
        %1789 = vmatprep.subr.mxu0 0.0
        %1790 = vmatpush1.xpose.msra.mxu0 0.0
        %1791 = vmatprep.subr.mxu0 0.0
        %1792 = vmatpush1.xpose.msra.mxu0 0.0
        %1793 = vmatprep.subr.mxu0 0.0
        %1794 = vmatpush1.xpose.msra.mxu0 0.0
        %1795 = vmatprep.subr.mxu0 0.0
        %1796 = vmatpush1.xpose.msra.mxu0 0.0
        %1797 = vmatprep.subr.mxu0 0.0
        %1798 = vmatpush1.xpose.msra.mxu0 0.0
        %1799 = vmatprep.subr.mxu0 0.0
        %1800 = vmatpush1.xpose.msra.mxu0 0.0
        %1801 = vmatprep.subr.mxu0 0.0
        %1802 = vmatpush1.xpose.msra.mxu0 0.0
        %1803 = vmatprep.subr.mxu0 0.0
        %1804 = vmatpush1.xpose.msra.mxu0 0.0
        %1805 = vmatprep.subr.mxu0 0.0
        %1806 = vmatpush1.xpose.msra.mxu0 0.0
        %1807 = vmatprep.subr.mxu0 0.0
        %1808 = vmatpush1.xpose.msra.mxu0 0.0
        %1809 = vmatprep.subr.mxu0 0.0
        %1810 = vmatpush1.xpose.msra.mxu0 0.0
        %1811 = vmatprep.subr.mxu0 0.0
        %1812 = vmatpush1.xpose.msra.mxu0 0.0
        %1813 = vmatprep.subr.mxu0 0.0
        %1814 = vmatpush1.xpose.msra.mxu0 0.0
        %1815 = vmatprep.subr.mxu0 0.0
        %1816 = vmatpush1.xpose.msra.mxu0 0.0
        %1817 = vmatprep.subr.mxu0 0.0
        %1818 = vmatpush1.xpose.msra.mxu0 0.0
        %1819 = vmatprep.subr.mxu0 0.0
        %1820 = vmatpush1.xpose.msra.mxu0 0.0
        %1821 = vmatprep.subr.mxu0 0.0
        %1822 = vmatpush1.xpose.msra.mxu0 0.0
        %1823 = vmatprep.subr.mxu0 0.0
        %1824 = vmatpush1.xpose.msra.mxu0 0.0
        %1825 = vmatprep.subr.mxu0 0.0
        %1826 = vmatpush1.xpose.msra.mxu0 0.0
        %1827 = vmatprep.subr.mxu0 0.0
        %1828 = vmatpush1.xpose.msra.mxu0 0.0
        %1829 = vmatprep.subr.mxu0 0.0
        %1830 = vmatpush1.xpose.msra.mxu0 0.0
        %1831 = vmatprep.subr.mxu0 0.0
        %1832 = vmatpush1.xpose.msra.mxu0 0.0
        %1833 = vmatprep.subr.mxu0 0.0
        %1834 = vmatpush1.xpose.msra.mxu0 0.0
        %1835 = vmatprep.subr.mxu0 0.0
        %1836 = vmatpush1.xpose.msra.mxu0 0.0
        %1837 = vmatprep.subr.mxu0 0.0
        %1838 = vmatpush1.xpose.msra.mxu0 0.0
        %1839 = vmatprep.subr.mxu0 0.0
        %1840 = vmatpush1.xpose.msra.mxu0 0.0
        %1841 = vmatprep.mubr.f32.mxu0 0.0
        %1842 = vmatmul.mubr.f32.gmra.mrb[0].mxu0 %v1773
        %v1843 = vpop.f32.mrb[0].mxu0
        %v1844 = vadd.f32 0.0, %v1843
        %v1845 = vpop.f32.mrb[0].mxu0
        %1846 = vdwg.mxu0
        %v1848 = vunpack.c.l.s4 1983009808
        %v1849 = vunpack.c.0.s8 %v1848
        %v1850 = vlaneseq
        %v1851 = vshrl.u32 %v1850, 7
        %v1852 = vsub.s32 %v1849, %v1851
        %v1853 = vrot.slane %v886, %v1852
        %1854 = vrot.lane.b32.xlu0 %v1853, 120
        %v1855 = vpop.permute.xlu0 %1854
        %v1857 = vunpack.c.l.s4 1983009808
        %v1858 = vunpack.c.0.s8 %v1857
        %v1859 = vlaneseq
        %v1860 = vshrl.u32 %v1859, 7
        %v1861 = vsub.s32 %v1858, %v1860
        %v1862 = vrot.slane %v904, %v1861
        %1863 = vrot.lane.b32.xlu0 %v1862, 120
        %v1864 = vpop.permute.xlu0 %1863
        %v1865 = vsel %vm927, %v1855, 0
        %v1867 = vsel %vm927, %v1864, 0
        %1869 = vmatprep.subr.mxu0 0.0
        %1870 = vmatpush1.xpose.msra.mxu0 %v1867
        %1871 = vmatprep.subr.mxu0 0.0
        %1872 = vmatpush1.xpose.msra.mxu0 0.0
        %1873 = vmatprep.subr.mxu0 0.0
        %1874 = vmatpush1.xpose.msra.mxu0 0.0
        %1875 = vmatprep.subr.mxu0 0.0
        %1876 = vmatpush1.xpose.msra.mxu0 0.0
        %1877 = vmatprep.subr.mxu0 0.0
        %1878 = vmatpush1.xpose.msra.mxu0 0.0
        %1879 = vmatprep.subr.mxu0 0.0
        %1880 = vmatpush1.xpose.msra.mxu0 0.0
        %1881 = vmatprep.subr.mxu0 0.0
        %1882 = vmatpush1.xpose.msra.mxu0 0.0
        %1883 = vmatprep.subr.mxu0 0.0
        %1884 = vmatpush1.xpose.msra.mxu0 0.0
        %1885 = vmatprep.subr.mxu0 0.0
        %1886 = vmatpush1.xpose.msra.mxu0 0.0
        %1887 = vmatprep.subr.mxu0 0.0
        %1888 = vmatpush1.xpose.msra.mxu0 0.0
        %1889 = vmatprep.subr.mxu0 0.0
        %1890 = vmatpush1.xpose.msra.mxu0 0.0
        %1891 = vmatprep.subr.mxu0 0.0
        %1892 = vmatpush1.xpose.msra.mxu0 0.0
        %1893 = vmatprep.subr.mxu0 0.0
        %1894 = vmatpush1.xpose.msra.mxu0 0.0
        %1895 = vmatprep.subr.mxu0 0.0
        %1896 = vmatpush1.xpose.msra.mxu0 0.0
        %1897 = vmatprep.subr.mxu0 0.0
        %1898 = vmatpush1.xpose.msra.mxu0 0.0
        %1899 = vmatprep.subr.mxu0 0.0
        %1900 = vmatpush1.xpose.msra.mxu0 0.0
        %1901 = vmatprep.subr.mxu0 0.0
        %1902 = vmatpush1.xpose.msra.mxu0 0.0
        %1903 = vmatprep.subr.mxu0 0.0
        %1904 = vmatpush1.xpose.msra.mxu0 0.0
        %1905 = vmatprep.subr.mxu0 0.0
        %1906 = vmatpush1.xpose.msra.mxu0 0.0
        %1907 = vmatprep.subr.mxu0 0.0
        %1908 = vmatpush1.xpose.msra.mxu0 0.0
        %1909 = vmatprep.subr.mxu0 0.0
        %1910 = vmatpush1.xpose.msra.mxu0 0.0
        %1911 = vmatprep.subr.mxu0 0.0
        %1912 = vmatpush1.xpose.msra.mxu0 0.0
        %1913 = vmatprep.subr.mxu0 0.0
        %1914 = vmatpush1.xpose.msra.mxu0 0.0
        %1915 = vmatprep.subr.mxu0 0.0
        %1916 = vmatpush1.xpose.msra.mxu0 0.0
        %1917 = vmatprep.subr.mxu0 0.0
        %1918 = vmatpush1.xpose.msra.mxu0 0.0
        %1919 = vmatprep.subr.mxu0 0.0
        %1920 = vmatpush1.xpose.msra.mxu0 0.0
        %1921 = vmatprep.subr.mxu0 0.0
        %1922 = vmatpush1.xpose.msra.mxu0 0.0
        %1923 = vmatprep.subr.mxu0 0.0
        %1924 = vmatpush1.xpose.msra.mxu0 0.0
        %1925 = vmatprep.subr.mxu0 0.0
        %1926 = vmatpush1.xpose.msra.mxu0 0.0
        %1927 = vmatprep.subr.mxu0 0.0
        %1928 = vmatpush1.xpose.msra.mxu0 0.0
        %1929 = vmatprep.subr.mxu0 0.0
        %1930 = vmatpush1.xpose.msra.mxu0 0.0
        %1931 = vmatprep.subr.mxu0 0.0
        %1932 = vmatpush1.xpose.msra.mxu0 0.0
        %1933 = vmatprep.mubr.f32.mxu0 0.0
        %1934 = vmatmul.mubr.f32.gmra.mrb[0].mxu0 %v1865
        %v1935 = vpop.f32.mrb[0].mxu0
        %v1936 = vadd.f32 0.0, %v1935
        %v1937 = vpop.f32.mrb[0].mxu0
        %1938 = vdwg.mxu0
        %v1939 = vsel %vm1224, %v1660, -inf
        %1940 = vmax.xlane.f32.xlu0 %v1939
        %v1941 = vpop.xlane.xlu0 %1940
        %v1942 = vsel %vm1224, %v1752, -inf
        %1943 = vmax.xlane.f32.xlu0 %v1942
        %v1944 = vpop.xlane.xlu0 %1943
        %v1945 = vsel %vm1224, %v1844, -inf
        %1946 = vmax.xlane.f32.xlu0 %v1945
        %v1947 = vpop.xlane.xlu0 %1946
        %v1948 = vsel %vm1224, %v1936, -inf
        %1949 = vmax.xlane.f32.xlu0 %v1948
        %v1950 = vpop.xlane.xlu0 %1949
        %v1951 = vsub.f32 %v1660, %v1941
        %v1952 = vsub.f32 %v1752, %v1944
        %v1953 = vsub.f32 %v1844, %v1947
        %v1954 = vsub.f32 %v1936, %v1950
        %v1955 = vmul.f32 %v1951, 1.442695
        %v1956 = vpow.pop %v1955
        %v1957 = vmul.f32 %v1952, 1.442695
        %v1958 = vpow.pop %v1957
        %v1959 = vmul.f32 %v1953, 1.442695
        %v1960 = vpow.pop %v1959
        %v1961 = vmul.f32 %v1954, 1.442695
        %v1962 = vpow.pop %v1961
        %v1963 = vsel %vm1224, %v1956, 0.0
        %1964 = vadd.xlane.f32.xlu0 %v1963
        %v1965 = vpop.xlane.xlu0 %1964
        %v1966 = vsel %vm1224, %v1958, 0.0
        %1967 = vadd.xlane.f32.xlu0 %v1966
        %v1968 = vpop.xlane.xlu0 %1967
        %v1969 = vsel %vm1224, %v1960, 0.0
        %1970 = vadd.xlane.f32.xlu0 %v1969
        %v1971 = vpop.xlane.xlu0 %1970
        %v1972 = vsel %vm1224, %v1962, 0.0
        %1973 = vadd.xlane.f32.xlu0 %v1972
        %v1974 = vpop.xlane.xlu0 %1973
        %v1975 = vrcp.pop %v1965
        %v1976 = vrcp.pop %v1968
        %v1977 = vrcp.pop %v1971
        %v1978 = vrcp.pop %v1974
        %v1979 = vmul.f32 %v1956, %v1975
        %v1980 = vmul.f32 %v1958, %v1976
        %v1981 = vmul.f32 %v1960, %v1977
        %v1982 = vmul.f32 %v1962, %v1978
        %v1984 = vunpack.c.l.s4 1983009808
        %v1985 = vunpack.c.0.s8 %v1984
        %v1986 = vlaneseq
        %v1987 = vshrl.u32 %v1986, 7
        %v1988 = vsub.s32 %v1985, %v1987
        %v1989 = vrot.slane %v913, %v1988
        %1990 = vrot.lane.b32.xlu0 %v1989, 120
        %v1991 = vpop.permute.xlu0 %1990
        %v1993 = vsel %vm1269, %v1979, 0
        %v1995 = vsel %vm1273, %v1991, 0
        %1997 = vmatprep.subr.mxu0 0.0
        %1998 = vmatpush1.msra.mxu0 %v1995
        %1999 = vmatprep.subr.mxu0 0.0
        %2000 = vmatpush1.msra.mxu0 0.0
        %2001 = vmatprep.subr.mxu0 0.0
        %2002 = vmatpush1.msra.mxu0 0.0
        %2003 = vmatprep.subr.mxu0 0.0
        %2004 = vmatpush1.msra.mxu0 0.0
        %2005 = vmatprep.subr.mxu0 0.0
        %2006 = vmatpush1.msra.mxu0 0.0
        %2007 = vmatprep.subr.mxu0 0.0
        %2008 = vmatpush1.msra.mxu0 0.0
        %2009 = vmatprep.subr.mxu0 0.0
        %2010 = vmatpush1.msra.mxu0 0.0
        %2011 = vmatprep.subr.mxu0 0.0
        %2012 = vmatpush1.msra.mxu0 0.0
        %2013 = vmatprep.subr.mxu0 0.0
        %2014 = vmatpush1.msra.mxu0 0.0
        %2015 = vmatprep.subr.mxu0 0.0
        %2016 = vmatpush1.msra.mxu0 0.0
        %2017 = vmatprep.subr.mxu0 0.0
        %2018 = vmatpush1.msra.mxu0 0.0
        %2019 = vmatprep.subr.mxu0 0.0
        %2020 = vmatpush1.msra.mxu0 0.0
        %2021 = vmatprep.subr.mxu0 0.0
        %2022 = vmatpush1.msra.mxu0 0.0
        %2023 = vmatprep.subr.mxu0 0.0
        %2024 = vmatpush1.msra.mxu0 0.0
        %2025 = vmatprep.subr.mxu0 0.0
        %2026 = vmatpush1.msra.mxu0 0.0
        %2027 = vmatprep.subr.mxu0 0.0
        %2028 = vmatpush1.msra.mxu0 0.0
        %2029 = vmatprep.subr.mxu0 0.0
        %2030 = vmatpush1.msra.mxu0 0.0
        %2031 = vmatprep.subr.mxu0 0.0
        %2032 = vmatpush1.msra.mxu0 0.0
        %2033 = vmatprep.subr.mxu0 0.0
        %2034 = vmatpush1.msra.mxu0 0.0
        %2035 = vmatprep.subr.mxu0 0.0
        %2036 = vmatpush1.msra.mxu0 0.0
        %2037 = vmatprep.subr.mxu0 0.0
        %2038 = vmatpush1.msra.mxu0 0.0
        %2039 = vmatprep.subr.mxu0 0.0
        %2040 = vmatpush1.msra.mxu0 0.0
        %2041 = vmatprep.subr.mxu0 0.0
        %2042 = vmatpush1.msra.mxu0 0.0
        %2043 = vmatprep.subr.mxu0 0.0
        %2044 = vmatpush1.msra.mxu0 0.0
        %2045 = vmatprep.subr.mxu0 0.0
        %2046 = vmatpush1.msra.mxu0 0.0
        %2047 = vmatprep.subr.mxu0 0.0
        %2048 = vmatpush1.msra.mxu0 0.0
        %2049 = vmatprep.subr.mxu0 0.0
        %2050 = vmatpush1.msra.mxu0 0.0
        %2051 = vmatprep.subr.mxu0 0.0
        %2052 = vmatpush1.msra.mxu0 0.0
        %2053 = vmatprep.subr.mxu0 0.0
        %2054 = vmatpush1.msra.mxu0 0.0
        %2055 = vmatprep.subr.mxu0 0.0
        %2056 = vmatpush1.msra.mxu0 0.0
        %2057 = vmatprep.subr.mxu0 0.0
        %2058 = vmatpush1.msra.mxu0 0.0
        %2059 = vmatprep.subr.mxu0 0.0
        %2060 = vmatpush1.msra.mxu0 0.0
        %2061 = vmatprep.mubr.f32.mxu0 0.0
        %2062 = vmatmul.mubr.f32.gmra.mrb[0].mxu0 %v1993
        %v2063 = vpop.f32.mrb[0].mxu0
        %v2064 = vadd.f32 0.0, %v2063
        %v2065 = vpop.f32.mrb[0].mxu0
        %2066 = vdwg.mxu0
        %v2068 = vunpack.c.l.s4 1983009808
        %v2069 = vunpack.c.0.s8 %v2068
        %v2070 = vlaneseq
        %v2071 = vshrl.u32 %v2070, 7
        %v2072 = vsub.s32 %v2069, %v2071
        %v2073 = vrot.slane %v921, %v2072
        %2074 = vrot.lane.b32.xlu0 %v2073, 120
        %v2075 = vpop.permute.xlu0 %2074
        %v2077 = vsel %vm1269, %v1980, 0
        %v2079 = vsel %vm1273, %v2075, 0
        %2081 = vmatprep.subr.mxu0 0.0
        %2082 = vmatpush1.msra.mxu0 %v2079
        %2083 = vmatprep.subr.mxu0 0.0
        %2084 = vmatpush1.msra.mxu0 0.0
        %2085 = vmatprep.subr.mxu0 0.0
        %2086 = vmatpush1.msra.mxu0 0.0
        %2087 = vmatprep.subr.mxu0 0.0
        %2088 = vmatpush1.msra.mxu0 0.0
        %2089 = vmatprep.subr.mxu0 0.0
        %2090 = vmatpush1.msra.mxu0 0.0
        %2091 = vmatprep.subr.mxu0 0.0
        %2092 = vmatpush1.msra.mxu0 0.0
        %2093 = vmatprep.subr.mxu0 0.0
        %2094 = vmatpush1.msra.mxu0 0.0
        %2095 = vmatprep.subr.mxu0 0.0
        %2096 = vmatpush1.msra.mxu0 0.0
        %2097 = vmatprep.subr.mxu0 0.0
        %2098 = vmatpush1.msra.mxu0 0.0
        %2099 = vmatprep.subr.mxu0 0.0
        %2100 = vmatpush1.msra.mxu0 0.0
        %2101 = vmatprep.subr.mxu0 0.0
        %2102 = vmatpush1.msra.mxu0 0.0
        %2103 = vmatprep.subr.mxu0 0.0
        %2104 = vmatpush1.msra.mxu0 0.0
        %2105 = vmatprep.subr.mxu0 0.0
        %2106 = vmatpush1.msra.mxu0 0.0
        %2107 = vmatprep.subr.mxu0 0.0
        %2108 = vmatpush1.msra.mxu0 0.0
        %2109 = vmatprep.subr.mxu0 0.0
        %2110 = vmatpush1.msra.mxu0 0.0
        %2111 = vmatprep.subr.mxu0 0.0
        %2112 = vmatpush1.msra.mxu0 0.0
        %2113 = vmatprep.subr.mxu0 0.0
        %2114 = vmatpush1.msra.mxu0 0.0
        %2115 = vmatprep.subr.mxu0 0.0
        %2116 = vmatpush1.msra.mxu0 0.0
        %2117 = vmatprep.subr.mxu0 0.0
        %2118 = vmatpush1.msra.mxu0 0.0
        %2119 = vmatprep.subr.mxu0 0.0
        %2120 = vmatpush1.msra.mxu0 0.0
        %2121 = vmatprep.subr.mxu0 0.0
        %2122 = vmatpush1.msra.mxu0 0.0
        %2123 = vmatprep.subr.mxu0 0.0
        %2124 = vmatpush1.msra.mxu0 0.0
        %2125 = vmatprep.subr.mxu0 0.0
        %2126 = vmatpush1.msra.mxu0 0.0
        %2127 = vmatprep.subr.mxu0 0.0
        %2128 = vmatpush1.msra.mxu0 0.0
        %2129 = vmatprep.subr.mxu0 0.0
        %2130 = vmatpush1.msra.mxu0 0.0
        %2131 = vmatprep.subr.mxu0 0.0
        %2132 = vmatpush1.msra.mxu0 0.0
        %2133 = vmatprep.subr.mxu0 0.0
        %2134 = vmatpush1.msra.mxu0 0.0
        %2135 = vmatprep.subr.mxu0 0.0
        %2136 = vmatpush1.msra.mxu0 0.0
        %2137 = vmatprep.subr.mxu0 0.0
        %2138 = vmatpush1.msra.mxu0 0.0
        %2139 = vmatprep.subr.mxu0 0.0
        %2140 = vmatpush1.msra.mxu0 0.0
        %2141 = vmatprep.subr.mxu0 0.0
        %2142 = vmatpush1.msra.mxu0 0.0
        %2143 = vmatprep.subr.mxu0 0.0
        %2144 = vmatpush1.msra.mxu0 0.0
        %2145 = vmatprep.mubr.f32.mxu0 0.0
        %2146 = vmatmul.mubr.f32.gmra.mrb[0].mxu0 %v2077
        %v2147 = vpop.f32.mrb[0].mxu0
        %v2148 = vadd.f32 0.0, %v2147
        %v2149 = vpop.f32.mrb[0].mxu0
        %2150 = vdwg.mxu0
        %v2152 = vunpack.c.l.s4 1983009808
        %v2153 = vunpack.c.0.s8 %v2152
        %v2154 = vlaneseq
        %v2155 = vshrl.u32 %v2154, 7
        %v2156 = vsub.s32 %v2153, %v2155
        %v2157 = vrot.slane %v920, %v2156
        %2158 = vrot.lane.b32.xlu0 %v2157, 120
        %v2159 = vpop.permute.xlu0 %2158
        %v2161 = vsel %vm1269, %v1981, 0
        %v2163 = vsel %vm1273, %v2159, 0
        %2165 = vmatprep.subr.mxu0 0.0
        %2166 = vmatpush1.msra.mxu0 %v2163
        %2167 = vmatprep.subr.mxu0 0.0
        %2168 = vmatpush1.msra.mxu0 0.0
        %2169 = vmatprep.subr.mxu0 0.0
        %2170 = vmatpush1.msra.mxu0 0.0
        %2171 = vmatprep.subr.mxu0 0.0
        %2172 = vmatpush1.msra.mxu0 0.0
        %2173 = vmatprep.subr.mxu0 0.0
        %2174 = vmatpush1.msra.mxu0 0.0
        %2175 = vmatprep.subr.mxu0 0.0
        %2176 = vmatpush1.msra.mxu0 0.0
        %2177 = vmatprep.subr.mxu0 0.0
        %2178 = vmatpush1.msra.mxu0 0.0
        %2179 = vmatprep.subr.mxu0 0.0
        %2180 = vmatpush1.msra.mxu0 0.0
        %2181 = vmatprep.subr.mxu0 0.0
        %2182 = vmatpush1.msra.mxu0 0.0
        %2183 = vmatprep.subr.mxu0 0.0
        %2184 = vmatpush1.msra.mxu0 0.0
        %2185 = vmatprep.subr.mxu0 0.0
        %2186 = vmatpush1.msra.mxu0 0.0
        %2187 = vmatprep.subr.mxu0 0.0
        %2188 = vmatpush1.msra.mxu0 0.0
        %2189 = vmatprep.subr.mxu0 0.0
        %2190 = vmatpush1.msra.mxu0 0.0
        %2191 = vmatprep.subr.mxu0 0.0
        %2192 = vmatpush1.msra.mxu0 0.0
        %2193 = vmatprep.subr.mxu0 0.0
        %2194 = vmatpush1.msra.mxu0 0.0
        %2195 = vmatprep.subr.mxu0 0.0
        %2196 = vmatpush1.msra.mxu0 0.0
        %2197 = vmatprep.subr.mxu0 0.0
        %2198 = vmatpush1.msra.mxu0 0.0
        %2199 = vmatprep.subr.mxu0 0.0
        %2200 = vmatpush1.msra.mxu0 0.0
        %2201 = vmatprep.subr.mxu0 0.0
        %2202 = vmatpush1.msra.mxu0 0.0
        %2203 = vmatprep.subr.mxu0 0.0
        %2204 = vmatpush1.msra.mxu0 0.0
        %2205 = vmatprep.subr.mxu0 0.0
        %2206 = vmatpush1.msra.mxu0 0.0
        %2207 = vmatprep.subr.mxu0 0.0
        %2208 = vmatpush1.msra.mxu0 0.0
        %2209 = vmatprep.subr.mxu0 0.0
        %2210 = vmatpush1.msra.mxu0 0.0
        %2211 = vmatprep.subr.mxu0 0.0
        %2212 = vmatpush1.msra.mxu0 0.0
        %2213 = vmatprep.subr.mxu0 0.0
        %2214 = vmatpush1.msra.mxu0 0.0
        %2215 = vmatprep.subr.mxu0 0.0
        %2216 = vmatpush1.msra.mxu0 0.0
        %2217 = vmatprep.subr.mxu0 0.0
        %2218 = vmatpush1.msra.mxu0 0.0
        %2219 = vmatprep.subr.mxu0 0.0
        %2220 = vmatpush1.msra.mxu0 0.0
        %2221 = vmatprep.subr.mxu0 0.0
        %2222 = vmatpush1.msra.mxu0 0.0
        %2223 = vmatprep.subr.mxu0 0.0
        %2224 = vmatpush1.msra.mxu0 0.0
        %2225 = vmatprep.subr.mxu0 0.0
        %2226 = vmatpush1.msra.mxu0 0.0
        %2227 = vmatprep.subr.mxu0 0.0
        %2228 = vmatpush1.msra.mxu0 0.0
        %2229 = vmatprep.mubr.f32.mxu0 0.0
        %2230 = vmatmul.mubr.f32.gmra.mrb[0].mxu0 %v2161
        %v2231 = vpop.f32.mrb[0].mxu0
        %v2232 = vadd.f32 0.0, %v2231
        %v2233 = vpop.f32.mrb[0].mxu0
        %2234 = vdwg.mxu0
        %v2236 = vunpack.c.l.s4 1983009808
        %v2237 = vunpack.c.0.s8 %v2236
        %v2238 = vlaneseq
        %v2239 = vshrl.u32 %v2238, 7
        %v2240 = vsub.s32 %v2237, %v2239
        %v2241 = vrot.slane %v922, %v2240
        %2242 = vrot.lane.b32.xlu0 %v2241, 120
        %v2243 = vpop.permute.xlu0 %2242
        %v2245 = vsel %vm1269, %v1982, 0
        %v2247 = vsel %vm1273, %v2243, 0
        %2249 = vmatprep.subr.mxu0 0.0
        %2250 = vmatpush1.msra.mxu0 %v2247
        %2251 = vmatprep.subr.mxu0 0.0
        %2252 = vmatpush1.msra.mxu0 0.0
        %2253 = vmatprep.subr.mxu0 0.0
        %2254 = vmatpush1.msra.mxu0 0.0
        %2255 = vmatprep.subr.mxu0 0.0
        %2256 = vmatpush1.msra.mxu0 0.0
        %2257 = vmatprep.subr.mxu0 0.0
        %2258 = vmatpush1.msra.mxu0 0.0
        %2259 = vmatprep.subr.mxu0 0.0
        %2260 = vmatpush1.msra.mxu0 0.0
        %2261 = vmatprep.subr.mxu0 0.0
        %2262 = vmatpush1.msra.mxu0 0.0
        %2263 = vmatprep.subr.mxu0 0.0
        %2264 = vmatpush1.msra.mxu0 0.0
        %2265 = vmatprep.subr.mxu0 0.0
        %2266 = vmatpush1.msra.mxu0 0.0
        %2267 = vmatprep.subr.mxu0 0.0
        %2268 = vmatpush1.msra.mxu0 0.0
        %2269 = vmatprep.subr.mxu0 0.0
        %2270 = vmatpush1.msra.mxu0 0.0
        %2271 = vmatprep.subr.mxu0 0.0
        %2272 = vmatpush1.msra.mxu0 0.0
        %2273 = vmatprep.subr.mxu0 0.0
        %2274 = vmatpush1.msra.mxu0 0.0
        %2275 = vmatprep.subr.mxu0 0.0
        %2276 = vmatpush1.msra.mxu0 0.0
        %2277 = vmatprep.subr.mxu0 0.0
        %2278 = vmatpush1.msra.mxu0 0.0
        %2279 = vmatprep.subr.mxu0 0.0
        %2280 = vmatpush1.msra.mxu0 0.0
        %2281 = vmatprep.subr.mxu0 0.0
        %2282 = vmatpush1.msra.mxu0 0.0
        %2283 = vmatprep.subr.mxu0 0.0
        %2284 = vmatpush1.msra.mxu0 0.0
        %2285 = vmatprep.subr.mxu0 0.0
        %2286 = vmatpush1.msra.mxu0 0.0
        %2287 = vmatprep.subr.mxu0 0.0
        %2288 = vmatpush1.msra.mxu0 0.0
        %2289 = vmatprep.subr.mxu0 0.0
        %2290 = vmatpush1.msra.mxu0 0.0
        %2291 = vmatprep.subr.mxu0 0.0
        %2292 = vmatpush1.msra.mxu0 0.0
        %2293 = vmatprep.subr.mxu0 0.0
        %2294 = vmatpush1.msra.mxu0 0.0
        %2295 = vmatprep.subr.mxu0 0.0
        %2296 = vmatpush1.msra.mxu0 0.0
        %2297 = vmatprep.subr.mxu0 0.0
        %2298 = vmatpush1.msra.mxu0 0.0
        %2299 = vmatprep.subr.mxu0 0.0
        %2300 = vmatpush1.msra.mxu0 0.0
        %2301 = vmatprep.subr.mxu0 0.0
        %2302 = vmatpush1.msra.mxu0 0.0
        %2303 = vmatprep.subr.mxu0 0.0
        %2304 = vmatpush1.msra.mxu0 0.0
        %2305 = vmatprep.subr.mxu0 0.0
        %2306 = vmatpush1.msra.mxu0 0.0
        %2307 = vmatprep.subr.mxu0 0.0
        %2308 = vmatpush1.msra.mxu0 0.0
        %2309 = vmatprep.subr.mxu0 0.0
        %2310 = vmatpush1.msra.mxu0 0.0
        %2311 = vmatprep.subr.mxu0 0.0
        %2312 = vmatpush1.msra.mxu0 0.0
        %2313 = vmatprep.mubr.f32.mxu0 0.0
        %2314 = vmatmul.mubr.f32.gmra.mrb[0].mxu0 %v2245
        %v2315 = vpop.f32.mrb[0].mxu0
        %v2316 = vadd.f32 0.0, %v2315
        %v2317 = vpop.f32.mrb[0].mxu0
        %2318 = vdwg.mxu0
        %v2323 = vcombine.low %v2064, %v2148
        %v2324 = vcombine.low %v2232, %v2316
        %v2326 = vunpack.c.l.s4 1983009808
        %v2327 = vunpack.c.0.s8 %v2326
        %v2328 = vlaneseq
        %v2329 = vshrl.u32 %v2328, 7
        %v2330 = vsub.s32 %v2327, %v2329
        %v2331 = vrot.slane %v2323, %v2330
        %v2333 = vunpack.c.l.s4 1983009808
        %v2334 = vunpack.c.0.s8 %v2333
        %v2335 = vlaneseq
        %v2336 = vshrl.u32 %v2335, 7
        %v2337 = vsub.s32 %v2334, %v2336
        %v2338 = vrot.slane %v2324, %v2337
        %v2339 = vcombine.low %v2331, %v2338
        %v2340 = vsel %vm927, %v2339, 0
        %2342 = vmatprep.subr.mxu0 0.0
        %2343 = vmatpush1.msra.mxu0 %v924
        %2344 = vmatprep.subr.mxu0 0.0
        %2345 = vmatpush1.msra.mxu0 0.0
        %2346 = vmatprep.subr.mxu0 0.0
        %2347 = vmatpush1.msra.mxu0 0.0
        %2348 = vmatprep.subr.mxu0 0.0
        %2349 = vmatpush1.msra.mxu0 0.0
        %2350 = vmatprep.subr.mxu0 0.0
        %2351 = vmatpush1.msra.mxu0 0.0
        %2352 = vmatprep.subr.mxu0 0.0
        %2353 = vmatpush1.msra.mxu0 0.0
        %2354 = vmatprep.subr.mxu0 0.0
        %2355 = vmatpush1.msra.mxu0 0.0
        %2356 = vmatprep.subr.mxu0 0.0
        %2357 = vmatpush1.msra.mxu0 0.0
        %2358 = vmatprep.subr.mxu0 0.0
        %2359 = vmatpush1.msra.mxu0 0.0
        %2360 = vmatprep.subr.mxu0 0.0
        %2361 = vmatpush1.msra.mxu0 0.0
        %2362 = vmatprep.subr.mxu0 0.0
        %2363 = vmatpush1.msra.mxu0 0.0
        %2364 = vmatprep.subr.mxu0 0.0
        %2365 = vmatpush1.msra.mxu0 0.0
        %2366 = vmatprep.subr.mxu0 0.0
        %2367 = vmatpush1.msra.mxu0 0.0
        %2368 = vmatprep.subr.mxu0 0.0
        %2369 = vmatpush1.msra.mxu0 0.0
        %2370 = vmatprep.subr.mxu0 0.0
        %2371 = vmatpush1.msra.mxu0 0.0
        %2372 = vmatprep.subr.mxu0 0.0
        %2373 = vmatpush1.msra.mxu0 0.0
        %2374 = vmatprep.subr.mxu0 0.0
        %2375 = vmatpush1.msra.mxu0 0.0
        %2376 = vmatprep.subr.mxu0 0.0
        %2377 = vmatpush1.msra.mxu0 0.0
        %2378 = vmatprep.subr.mxu0 0.0
        %2379 = vmatpush1.msra.mxu0 0.0
        %2380 = vmatprep.subr.mxu0 0.0
        %2381 = vmatpush1.msra.mxu0 0.0
        %2382 = vmatprep.subr.mxu0 0.0
        %2383 = vmatpush1.msra.mxu0 0.0
        %2384 = vmatprep.subr.mxu0 0.0
        %2385 = vmatpush1.msra.mxu0 0.0
        %2386 = vmatprep.subr.mxu0 0.0
        %2387 = vmatpush1.msra.mxu0 0.0
        %2388 = vmatprep.subr.mxu0 0.0
        %2389 = vmatpush1.msra.mxu0 0.0
        %2390 = vmatprep.subr.mxu0 0.0
        %2391 = vmatpush1.msra.mxu0 0.0
        %2392 = vmatprep.subr.mxu0 0.0
        %2393 = vmatpush1.msra.mxu0 0.0
        %2394 = vmatprep.subr.mxu0 0.0
        %2395 = vmatpush1.msra.mxu0 0.0
        %2396 = vmatprep.subr.mxu0 0.0
        %2397 = vmatpush1.msra.mxu0 0.0
        %2398 = vmatprep.subr.mxu0 0.0
        %2399 = vmatpush1.msra.mxu0 0.0
        %2400 = vmatprep.subr.mxu0 0.0
        %2401 = vmatpush1.msra.mxu0 0.0
        %2402 = vmatprep.subr.mxu0 0.0
        %2403 = vmatpush1.msra.mxu0 0.0
        %2404 = vmatprep.subr.mxu0 0.0
        %2405 = vmatpush1.msra.mxu0 0.0
        %2406 = vmatprep.mubr.f32.mxu0 0.0
        %2407 = vmatmul.mubr.f32.gmra.mrb[0].mxu0 %v2340
        %v2408 = vpop.f32.mrb[0].mxu0
        %v2409 = vadd.f32 0.0, %v2408
        %v2410 = vpop.f32.mrb[0].mxu0
        %2411 = vdwg.mxu0
        %v2416 = vcombine.low %v1343, %v1418
        %v2417 = vcombine.low %v1493, %v1568
        %v2419 = vunpack.c.l.s4 1983009808
        %v2420 = vunpack.c.0.s8 %v2419
        %v2421 = vlaneseq
        %v2422 = vshrl.u32 %v2421, 7
        %v2423 = vsub.s32 %v2420, %v2422
        %v2424 = vrot.slane %v2416, %v2423
        %v2426 = vunpack.c.l.s4 1983009808
        %v2427 = vunpack.c.0.s8 %v2426
        %v2428 = vlaneseq
        %v2429 = vshrl.u32 %v2428, 7
        %v2430 = vsub.s32 %v2427, %v2429
        %v2431 = vrot.slane %v2417, %v2430
        %v2432 = vcombine.low %v2424, %v2431
        %v2433 = vsel %vm927, %v2432, 0
        %2435 = vmatprep.subr.mxu0 0.0
        %2436 = vmatpush1.msra.mxu0 %v923
        %2437 = vmatprep.subr.mxu0 0.0
        %2438 = vmatpush1.msra.mxu0 0.0
        %2439 = vmatprep.subr.mxu0 0.0
        %2440 = vmatpush1.msra.mxu0 0.0
        %2441 = vmatprep.subr.mxu0 0.0
        %2442 = vmatpush1.msra.mxu0 0.0
        %2443 = vmatprep.subr.mxu0 0.0
        %2444 = vmatpush1.msra.mxu0 0.0
        %2445 = vmatprep.subr.mxu0 0.0
        %2446 = vmatpush1.msra.mxu0 0.0
        %2447 = vmatprep.subr.mxu0 0.0
        %2448 = vmatpush1.msra.mxu0 0.0
        %2449 = vmatprep.subr.mxu0 0.0
        %2450 = vmatpush1.msra.mxu0 0.0
        %2451 = vmatprep.subr.mxu0 0.0
        %2452 = vmatpush1.msra.mxu0 0.0
        %2453 = vmatprep.subr.mxu0 0.0
        %2454 = vmatpush1.msra.mxu0 0.0
        %2455 = vmatprep.subr.mxu0 0.0
        %2456 = vmatpush1.msra.mxu0 0.0
        %2457 = vmatprep.subr.mxu0 0.0
        %2458 = vmatpush1.msra.mxu0 0.0
        %2459 = vmatprep.subr.mxu0 0.0
        %2460 = vmatpush1.msra.mxu0 0.0
        %2461 = vmatprep.subr.mxu0 0.0
        %2462 = vmatpush1.msra.mxu0 0.0
        %2463 = vmatprep.subr.mxu0 0.0
        %2464 = vmatpush1.msra.mxu0 0.0
        %2465 = vmatprep.subr.mxu0 0.0
        %2466 = vmatpush1.msra.mxu0 0.0
        %2467 = vmatprep.subr.mxu0 0.0
        %2468 = vmatpush1.msra.mxu0 0.0
        %2469 = vmatprep.subr.mxu0 0.0
        %2470 = vmatpush1.msra.mxu0 0.0
        %2471 = vmatprep.subr.mxu0 0.0
        %2472 = vmatpush1.msra.mxu0 0.0
        %2473 = vmatprep.subr.mxu0 0.0
        %2474 = vmatpush1.msra.mxu0 0.0
        %2475 = vmatprep.subr.mxu0 0.0
        %2476 = vmatpush1.msra.mxu0 0.0
        %2477 = vmatprep.subr.mxu0 0.0
        %2478 = vmatpush1.msra.mxu0 0.0
        %2479 = vmatprep.subr.mxu0 0.0
        %2480 = vmatpush1.msra.mxu0 0.0
        %2481 = vmatprep.subr.mxu0 0.0
        %2482 = vmatpush1.msra.mxu0 0.0
        %2483 = vmatprep.subr.mxu0 0.0
        %2484 = vmatpush1.msra.mxu0 0.0
        %2485 = vmatprep.subr.mxu0 0.0
        %2486 = vmatpush1.msra.mxu0 0.0
        %2487 = vmatprep.subr.mxu0 0.0
        %2488 = vmatpush1.msra.mxu0 0.0
        %2489 = vmatprep.subr.mxu0 0.0
        %2490 = vmatpush1.msra.mxu0 0.0
        %2491 = vmatprep.subr.mxu0 0.0
        %2492 = vmatpush1.msra.mxu0 0.0
        %2493 = vmatprep.subr.mxu0 0.0
        %2494 = vmatpush1.msra.mxu0 0.0
        %2495 = vmatprep.subr.mxu0 0.0
        %2496 = vmatpush1.msra.mxu0 0.0
        %2497 = vmatprep.subr.mxu0 0.0
        %2498 = vmatpush1.msra.mxu0 0.0
        %2499 = vmatprep.mubr.f32.mxu0 0.0
        %2500 = vmatmul.mubr.f32.gmra.mrb[0].mxu0 %v2433
        %v2501 = vpop.f32.mrb[0].mxu0
        %v2502 = vadd.f32 %v2409, %v2501
        %v2503 = vpop.f32.mrb[0].mxu0
        %2504 = vdwg.mxu0
        %2505 = vrot.lane.b32.xlu0 %v1577, 112
        %v2506 = vpop.permute.xlu0 %2505
        %2507 = vrot.lane.b32.xlu0 %v1586, 112
        %v2508 = vpop.permute.xlu0 %2507
        %v2509 = vsel %vm927, %v2506, 0
        %v2511 = vsel %vm927, %v2508, 0
        %2513 = vmatprep.subr.mxu0 0.0
        %2514 = vmatpush1.xpose.msra.mxu0 %v2511
        %2515 = vmatprep.subr.mxu0 0.0
        %2516 = vmatpush1.xpose.msra.mxu0 0.0
        %2517 = vmatprep.subr.mxu0 0.0
        %2518 = vmatpush1.xpose.msra.mxu0 0.0
        %2519 = vmatprep.subr.mxu0 0.0
        %2520 = vmatpush1.xpose.msra.mxu0 0.0
        %2521 = vmatprep.subr.mxu0 0.0
        %2522 = vmatpush1.xpose.msra.mxu0 0.0
        %2523 = vmatprep.subr.mxu0 0.0
        %2524 = vmatpush1.xpose.msra.mxu0 0.0
        %2525 = vmatprep.subr.mxu0 0.0
        %2526 = vmatpush1.xpose.msra.mxu0 0.0
        %2527 = vmatprep.subr.mxu0 0.0
        %2528 = vmatpush1.xpose.msra.mxu0 0.0
        %2529 = vmatprep.subr.mxu0 0.0
        %2530 = vmatpush1.xpose.msra.mxu0 0.0
        %2531 = vmatprep.subr.mxu0 0.0
        %2532 = vmatpush1.xpose.msra.mxu0 0.0
        %2533 = vmatprep.subr.mxu0 0.0
        %2534 = vmatpush1.xpose.msra.mxu0 0.0
        %2535 = vmatprep.subr.mxu0 0.0
        %2536 = vmatpush1.xpose.msra.mxu0 0.0
        %2537 = vmatprep.subr.mxu0 0.0
        %2538 = vmatpush1.xpose.msra.mxu0 0.0
        %2539 = vmatprep.subr.mxu0 0.0
        %2540 = vmatpush1.xpose.msra.mxu0 0.0
        %2541 = vmatprep.subr.mxu0 0.0
        %2542 = vmatpush1.xpose.msra.mxu0 0.0
        %2543 = vmatprep.subr.mxu0 0.0
        %2544 = vmatpush1.xpose.msra.mxu0 0.0
        %2545 = vmatprep.subr.mxu0 0.0
        %2546 = vmatpush1.xpose.msra.mxu0 0.0
        %2547 = vmatprep.subr.mxu0 0.0
        %2548 = vmatpush1.xpose.msra.mxu0 0.0
        %2549 = vmatprep.subr.mxu0 0.0
        %2550 = vmatpush1.xpose.msra.mxu0 0.0
        %2551 = vmatprep.subr.mxu0 0.0
        %2552 = vmatpush1.xpose.msra.mxu0 0.0
        %2553 = vmatprep.subr.mxu0 0.0
        %2554 = vmatpush1.xpose.msra.mxu0 0.0
        %2555 = vmatprep.subr.mxu0 0.0
        %2556 = vmatpush1.xpose.msra.mxu0 0.0
        %2557 = vmatprep.subr.mxu0 0.0
        %2558 = vmatpush1.xpose.msra.mxu0 0.0
        %2559 = vmatprep.subr.mxu0 0.0
        %2560 = vmatpush1.xpose.msra.mxu0 0.0
        %2561 = vmatprep.subr.mxu0 0.0
        %2562 = vmatpush1.xpose.msra.mxu0 0.0
        %2563 = vmatprep.subr.mxu0 0.0
        %2564 = vmatpush1.xpose.msra.mxu0 0.0
        %2565 = vmatprep.subr.mxu0 0.0
        %2566 = vmatpush1.xpose.msra.mxu0 0.0
        %2567 = vmatprep.subr.mxu0 0.0
        %2568 = vmatpush1.xpose.msra.mxu0 0.0
        %2569 = vmatprep.subr.mxu0 0.0
        %2570 = vmatpush1.xpose.msra.mxu0 0.0
        %2571 = vmatprep.subr.mxu0 0.0
        %2572 = vmatpush1.xpose.msra.mxu0 0.0
        %2573 = vmatprep.subr.mxu0 0.0
        %2574 = vmatpush1.xpose.msra.mxu0 0.0
        %2575 = vmatprep.subr.mxu0 0.0
        %2576 = vmatpush1.xpose.msra.mxu0 0.0
        %2577 = vmatprep.mubr.f32.mxu0 0.0
        %2578 = vmatmul.mubr.f32.gmra.mrb[0].mxu0 %v2509
        %v2579 = vpop.f32.mrb[0].mxu0
        %v2580 = vadd.f32 0.0, %v2579
        %v2581 = vpop.f32.mrb[0].mxu0
        %2582 = vdwg.mxu0
        %2583 = vrot.lane.b32.xlu0 %v1669, 112
        %v2584 = vpop.permute.xlu0 %2583
        %2585 = vrot.lane.b32.xlu0 %v1678, 112
        %v2586 = vpop.permute.xlu0 %2585
        %v2587 = vsel %vm927, %v2584, 0
        %v2589 = vsel %vm927, %v2586, 0
        %2591 = vmatprep.subr.mxu0 0.0
        %2592 = vmatpush1.xpose.msra.mxu0 %v2589
        %2593 = vmatprep.subr.mxu0 0.0
        %2594 = vmatpush1.xpose.msra.mxu0 0.0
        %2595 = vmatprep.subr.mxu0 0.0
        %2596 = vmatpush1.xpose.msra.mxu0 0.0
        %2597 = vmatprep.subr.mxu0 0.0
        %2598 = vmatpush1.xpose.msra.mxu0 0.0
        %2599 = vmatprep.subr.mxu0 0.0
        %2600 = vmatpush1.xpose.msra.mxu0 0.0
        %2601 = vmatprep.subr.mxu0 0.0
        %2602 = vmatpush1.xpose.msra.mxu0 0.0
        %2603 = vmatprep.subr.mxu0 0.0
        %2604 = vmatpush1.xpose.msra.mxu0 0.0
        %2605 = vmatprep.subr.mxu0 0.0
        %2606 = vmatpush1.xpose.msra.mxu0 0.0
        %2607 = vmatprep.subr.mxu0 0.0
        %2608 = vmatpush1.xpose.msra.mxu0 0.0
        %2609 = vmatprep.subr.mxu0 0.0
        %2610 = vmatpush1.xpose.msra.mxu0 0.0
        %2611 = vmatprep.subr.mxu0 0.0
        %2612 = vmatpush1.xpose.msra.mxu0 0.0
        %2613 = vmatprep.subr.mxu0 0.0
        %2614 = vmatpush1.xpose.msra.mxu0 0.0
        %2615 = vmatprep.subr.mxu0 0.0
        %2616 = vmatpush1.xpose.msra.mxu0 0.0
        %2617 = vmatprep.subr.mxu0 0.0
        %2618 = vmatpush1.xpose.msra.mxu0 0.0
        %2619 = vmatprep.subr.mxu0 0.0
        %2620 = vmatpush1.xpose.msra.mxu0 0.0
        %2621 = vmatprep.subr.mxu0 0.0
        %2622 = vmatpush1.xpose.msra.mxu0 0.0
        %2623 = vmatprep.subr.mxu0 0.0
        %2624 = vmatpush1.xpose.msra.mxu0 0.0
        %2625 = vmatprep.subr.mxu0 0.0
        %2626 = vmatpush1.xpose.msra.mxu0 0.0
        %2627 = vmatprep.subr.mxu0 0.0
        %2628 = vmatpush1.xpose.msra.mxu0 0.0
        %2629 = vmatprep.subr.mxu0 0.0
        %2630 = vmatpush1.xpose.msra.mxu0 0.0
        %2631 = vmatprep.subr.mxu0 0.0
        %2632 = vmatpush1.xpose.msra.mxu0 0.0
        %2633 = vmatprep.subr.mxu0 0.0
        %2634 = vmatpush1.xpose.msra.mxu0 0.0
        %2635 = vmatprep.subr.mxu0 0.0
        %2636 = vmatpush1.xpose.msra.mxu0 0.0
        %2637 = vmatprep.subr.mxu0 0.0
        %2638 = vmatpush1.xpose.msra.mxu0 0.0
        %2639 = vmatprep.subr.mxu0 0.0
        %2640 = vmatpush1.xpose.msra.mxu0 0.0
        %2641 = vmatprep.subr.mxu0 0.0
        %2642 = vmatpush1.xpose.msra.mxu0 0.0
        %2643 = vmatprep.subr.mxu0 0.0
        %2644 = vmatpush1.xpose.msra.mxu0 0.0
        %2645 = vmatprep.subr.mxu0 0.0
        %2646 = vmatpush1.xpose.msra.mxu0 0.0
        %2647 = vmatprep.subr.mxu0 0.0
        %2648 = vmatpush1.xpose.msra.mxu0 0.0
        %2649 = vmatprep.subr.mxu0 0.0
        %2650 = vmatpush1.xpose.msra.mxu0 0.0
        %2651 = vmatprep.subr.mxu0 0.0
        %2652 = vmatpush1.xpose.msra.mxu0 0.0
        %2653 = vmatprep.subr.mxu0 0.0
        %2654 = vmatpush1.xpose.msra.mxu0 0.0
        %2655 = vmatprep.mubr.f32.mxu0 0.0
        %2656 = vmatmul.mubr.f32.gmra.mrb[0].mxu0 %v2587
        %v2657 = vpop.f32.mrb[0].mxu0
        %v2658 = vadd.f32 0.0, %v2657
        %v2659 = vpop.f32.mrb[0].mxu0
        %2660 = vdwg.mxu0
        %2661 = vrot.lane.b32.xlu0 %v1761, 112
        %v2662 = vpop.permute.xlu0 %2661
        %2663 = vrot.lane.b32.xlu0 %v1770, 112
        %v2664 = vpop.permute.xlu0 %2663
        %v2665 = vsel %vm927, %v2662, 0
        %v2667 = vsel %vm927, %v2664, 0
        %2669 = vmatprep.subr.mxu0 0.0
        %2670 = vmatpush1.xpose.msra.mxu0 %v2667
        %2671 = vmatprep.subr.mxu0 0.0
        %2672 = vmatpush1.xpose.msra.mxu0 0.0
        %2673 = vmatprep.subr.mxu0 0.0
        %2674 = vmatpush1.xpose.msra.mxu0 0.0
        %2675 = vmatprep.subr.mxu0 0.0
        %2676 = vmatpush1.xpose.msra.mxu0 0.0
        %2677 = vmatprep.subr.mxu0 0.0
        %2678 = vmatpush1.xpose.msra.mxu0 0.0
        %2679 = vmatprep.subr.mxu0 0.0
        %2680 = vmatpush1.xpose.msra.mxu0 0.0
        %2681 = vmatprep.subr.mxu0 0.0
        %2682 = vmatpush1.xpose.msra.mxu0 0.0
        %2683 = vmatprep.subr.mxu0 0.0
        %2684 = vmatpush1.xpose.msra.mxu0 0.0
        %2685 = vmatprep.subr.mxu0 0.0
        %2686 = vmatpush1.xpose.msra.mxu0 0.0
        %2687 = vmatprep.subr.mxu0 0.0
        %2688 = vmatpush1.xpose.msra.mxu0 0.0
        %2689 = vmatprep.subr.mxu0 0.0
        %2690 = vmatpush1.xpose.msra.mxu0 0.0
        %2691 = vmatprep.subr.mxu0 0.0
        %2692 = vmatpush1.xpose.msra.mxu0 0.0
        %2693 = vmatprep.subr.mxu0 0.0
        %2694 = vmatpush1.xpose.msra.mxu0 0.0
        %2695 = vmatprep.subr.mxu0 0.0
        %2696 = vmatpush1.xpose.msra.mxu0 0.0
        %2697 = vmatprep.subr.mxu0 0.0
        %2698 = vmatpush1.xpose.msra.mxu0 0.0
        %2699 = vmatprep.subr.mxu0 0.0
        %2700 = vmatpush1.xpose.msra.mxu0 0.0
        %2701 = vmatprep.subr.mxu0 0.0
        %2702 = vmatpush1.xpose.msra.mxu0 0.0
        %2703 = vmatprep.subr.mxu0 0.0
        %2704 = vmatpush1.xpose.msra.mxu0 0.0
        %2705 = vmatprep.subr.mxu0 0.0
        %2706 = vmatpush1.xpose.msra.mxu0 0.0
        %2707 = vmatprep.subr.mxu0 0.0
        %2708 = vmatpush1.xpose.msra.mxu0 0.0
        %2709 = vmatprep.subr.mxu0 0.0
        %2710 = vmatpush1.xpose.msra.mxu0 0.0
        %2711 = vmatprep.subr.mxu0 0.0
        %2712 = vmatpush1.xpose.msra.mxu0 0.0
        %2713 = vmatprep.subr.mxu0 0.0
        %2714 = vmatpush1.xpose.msra.mxu0 0.0
        %2715 = vmatprep.subr.mxu0 0.0
        %2716 = vmatpush1.xpose.msra.mxu0 0.0
        %2717 = vmatprep.subr.mxu0 0.0
        %2718 = vmatpush1.xpose.msra.mxu0 0.0
        %2719 = vmatprep.subr.mxu0 0.0
        %2720 = vmatpush1.xpose.msra.mxu0 0.0
        %2721 = vmatprep.subr.mxu0 0.0
        %2722 = vmatpush1.xpose.msra.mxu0 0.0
        %2723 = vmatprep.subr.mxu0 0.0
        %2724 = vmatpush1.xpose.msra.mxu0 0.0
        %2725 = vmatprep.subr.mxu0 0.0
        %2726 = vmatpush1.xpose.msra.mxu0 0.0
        %2727 = vmatprep.subr.mxu0 0.0
        %2728 = vmatpush1.xpose.msra.mxu0 0.0
        %2729 = vmatprep.subr.mxu0 0.0
        %2730 = vmatpush1.xpose.msra.mxu0 0.0
        %2731 = vmatprep.subr.mxu0 0.0
        %2732 = vmatpush1.xpose.msra.mxu0 0.0
        %2733 = vmatprep.mubr.f32.mxu0 0.0
        %2734 = vmatmul.mubr.f32.gmra.mrb[0].mxu0 %v2665
        %v2735 = vpop.f32.mrb[0].mxu0
        %v2736 = vadd.f32 0.0, %v2735
        %v2737 = vpop.f32.mrb[0].mxu0
        %2738 = vdwg.mxu0
        %2739 = vrot.lane.b32.xlu0 %v1853, 112
        %v2740 = vpop.permute.xlu0 %2739
        %2741 = vrot.lane.b32.xlu0 %v1862, 112
        %v2742 = vpop.permute.xlu0 %2741
        %v2743 = vsel %vm927, %v2740, 0
        %v2745 = vsel %vm927, %v2742, 0
        %2747 = vmatprep.subr.mxu0 0.0
        %2748 = vmatpush1.xpose.msra.mxu0 %v2745
        %2749 = vmatprep.subr.mxu0 0.0
        %2750 = vmatpush1.xpose.msra.mxu0 0.0
        %2751 = vmatprep.subr.mxu0 0.0
        %2752 = vmatpush1.xpose.msra.mxu0 0.0
        %2753 = vmatprep.subr.mxu0 0.0
        %2754 = vmatpush1.xpose.msra.mxu0 0.0
        %2755 = vmatprep.subr.mxu0 0.0
        %2756 = vmatpush1.xpose.msra.mxu0 0.0
        %2757 = vmatprep.subr.mxu0 0.0
        %2758 = vmatpush1.xpose.msra.mxu0 0.0
        %2759 = vmatprep.subr.mxu0 0.0
        %2760 = vmatpush1.xpose.msra.mxu0 0.0
        %2761 = vmatprep.subr.mxu0 0.0
        %2762 = vmatpush1.xpose.msra.mxu0 0.0
        %2763 = vmatprep.subr.mxu0 0.0
        %2764 = vmatpush1.xpose.msra.mxu0 0.0
        %2765 = vmatprep.subr.mxu0 0.0
        %2766 = vmatpush1.xpose.msra.mxu0 0.0
        %2767 = vmatprep.subr.mxu0 0.0
        %2768 = vmatpush1.xpose.msra.mxu0 0.0
        %2769 = vmatprep.subr.mxu0 0.0
        %2770 = vmatpush1.xpose.msra.mxu0 0.0
        %2771 = vmatprep.subr.mxu0 0.0
        %2772 = vmatpush1.xpose.msra.mxu0 0.0
        %2773 = vmatprep.subr.mxu0 0.0
        %2774 = vmatpush1.xpose.msra.mxu0 0.0
        %2775 = vmatprep.subr.mxu0 0.0
        %2776 = vmatpush1.xpose.msra.mxu0 0.0
        %2777 = vmatprep.subr.mxu0 0.0
        %2778 = vmatpush1.xpose.msra.mxu0 0.0
        %2779 = vmatprep.subr.mxu0 0.0
        %2780 = vmatpush1.xpose.msra.mxu0 0.0
        %2781 = vmatprep.subr.mxu0 0.0
        %2782 = vmatpush1.xpose.msra.mxu0 0.0
        %2783 = vmatprep.subr.mxu0 0.0
        %2784 = vmatpush1.xpose.msra.mxu0 0.0
        %2785 = vmatprep.subr.mxu0 0.0
        %2786 = vmatpush1.xpose.msra.mxu0 0.0
        %2787 = vmatprep.subr.mxu0 0.0
        %2788 = vmatpush1.xpose.msra.mxu0 0.0
        %2789 = vmatprep.subr.mxu0 0.0
        %2790 = vmatpush1.xpose.msra.mxu0 0.0
        %2791 = vmatprep.subr.mxu0 0.0
        %2792 = vmatpush1.xpose.msra.mxu0 0.0
        %2793 = vmatprep.subr.mxu0 0.0
        %2794 = vmatpush1.xpose.msra.mxu0 0.0
        %2795 = vmatprep.subr.mxu0 0.0
        %2796 = vmatpush1.xpose.msra.mxu0 0.0
        %2797 = vmatprep.subr.mxu0 0.0
        %2798 = vmatpush1.xpose.msra.mxu0 0.0
        %2799 = vmatprep.subr.mxu0 0.0
        %2800 = vmatpush1.xpose.msra.mxu0 0.0
        %2801 = vmatprep.subr.mxu0 0.0
        %2802 = vmatpush1.xpose.msra.mxu0 0.0
        %2803 = vmatprep.subr.mxu0 0.0
        %2804 = vmatpush1.xpose.msra.mxu0 0.0
        %2805 = vmatprep.subr.mxu0 0.0
        %2806 = vmatpush1.xpose.msra.mxu0 0.0
        %2807 = vmatprep.subr.mxu0 0.0
        %2808 = vmatpush1.xpose.msra.mxu0 0.0
        %2809 = vmatprep.subr.mxu0 0.0
        %2810 = vmatpush1.xpose.msra.mxu0 0.0
        %2811 = vmatprep.mubr.f32.mxu0 0.0
        %2812 = vmatmul.mubr.f32.gmra.mrb[0].mxu0 %v2743
        %v2813 = vpop.f32.mrb[0].mxu0
        %v2814 = vadd.f32 0.0, %v2813
        %v2815 = vpop.f32.mrb[0].mxu0
        %2816 = vdwg.mxu0
        %v2817 = vsel %vm1224, %v2580, -inf
        %2818 = vmax.xlane.f32.xlu0 %v2817
        %v2819 = vpop.xlane.xlu0 %2818
        %v2820 = vsel %vm1224, %v2658, -inf
        %2821 = vmax.xlane.f32.xlu0 %v2820
        %v2822 = vpop.xlane.xlu0 %2821
        %v2823 = vsel %vm1224, %v2736, -inf
        %2824 = vmax.xlane.f32.xlu0 %v2823
        %v2825 = vpop.xlane.xlu0 %2824
        %v2826 = vsel %vm1224, %v2814, -inf
        %2827 = vmax.xlane.f32.xlu0 %v2826
        %v2828 = vpop.xlane.xlu0 %2827
        %v2829 = vsub.f32 %v2580, %v2819
        %v2830 = vsub.f32 %v2658, %v2822
        %v2831 = vsub.f32 %v2736, %v2825
        %v2832 = vsub.f32 %v2814, %v2828
        %v2833 = vmul.f32 %v2829, 1.442695
        %v2834 = vpow.pop %v2833
        %v2835 = vmul.f32 %v2830, 1.442695
        %v2836 = vpow.pop %v2835
        %v2837 = vmul.f32 %v2831, 1.442695
        %v2838 = vpow.pop %v2837
        %v2839 = vmul.f32 %v2832, 1.442695
        %v2840 = vpow.pop %v2839
        %v2841 = vsel %vm1224, %v2834, 0.0
        %2842 = vadd.xlane.f32.xlu0 %v2841
        %v2843 = vpop.xlane.xlu0 %2842
        %v2844 = vsel %vm1224, %v2836, 0.0
        %2845 = vadd.xlane.f32.xlu0 %v2844
        %v2846 = vpop.xlane.xlu0 %2845
        %v2847 = vsel %vm1224, %v2838, 0.0
        %2848 = vadd.xlane.f32.xlu0 %v2847
        %v2849 = vpop.xlane.xlu0 %2848
        %v2850 = vsel %vm1224, %v2840, 0.0
        %2851 = vadd.xlane.f32.xlu0 %v2850
        %v2852 = vpop.xlane.xlu0 %2851
        %v2853 = vrcp.pop %v2843
        %v2854 = vrcp.pop %v2846
        %v2855 = vrcp.pop %v2849
        %v2856 = vrcp.pop %v2852
        %v2857 = vmul.f32 %v2834, %v2853
        %v2858 = vmul.f32 %v2836, %v2854
        %v2859 = vmul.f32 %v2838, %v2855
        %v2860 = vmul.f32 %v2840, %v2856
        %2861 = vrot.lane.b32.xlu0 %v1989, 112
        %v2862 = vpop.permute.xlu0 %2861
        %v2864 = vsel %vm1269, %v2857, 0
        %v2866 = vsel %vm1273, %v2862, 0
        %2868 = vmatprep.subr.mxu0 0.0
        %2869 = vmatpush1.msra.mxu0 %v2866
        %2870 = vmatprep.subr.mxu0 0.0
        %2871 = vmatpush1.msra.mxu0 0.0
        %2872 = vmatprep.subr.mxu0 0.0
        %2873 = vmatpush1.msra.mxu0 0.0
        %2874 = vmatprep.subr.mxu0 0.0
        %2875 = vmatpush1.msra.mxu0 0.0
        %2876 = vmatprep.subr.mxu0 0.0
        %2877 = vmatpush1.msra.mxu0 0.0
        %2878 = vmatprep.subr.mxu0 0.0
        %2879 = vmatpush1.msra.mxu0 0.0
        %2880 = vmatprep.subr.mxu0 0.0
        %2881 = vmatpush1.msra.mxu0 0.0
        %2882 = vmatprep.subr.mxu0 0.0
        %2883 = vmatpush1.msra.mxu0 0.0
        %2884 = vmatprep.subr.mxu0 0.0
        %2885 = vmatpush1.msra.mxu0 0.0
        %2886 = vmatprep.subr.mxu0 0.0
        %2887 = vmatpush1.msra.mxu0 0.0
        %2888 = vmatprep.subr.mxu0 0.0
        %2889 = vmatpush1.msra.mxu0 0.0
        %2890 = vmatprep.subr.mxu0 0.0
        %2891 = vmatpush1.msra.mxu0 0.0
        %2892 = vmatprep.subr.mxu0 0.0
        %2893 = vmatpush1.msra.mxu0 0.0
        %2894 = vmatprep.subr.mxu0 0.0
        %2895 = vmatpush1.msra.mxu0 0.0
        %2896 = vmatprep.subr.mxu0 0.0
        %2897 = vmatpush1.msra.mxu0 0.0
        %2898 = vmatprep.subr.mxu0 0.0
        %2899 = vmatpush1.msra.mxu0 0.0
        %2900 = vmatprep.subr.mxu0 0.0
        %2901 = vmatpush1.msra.mxu0 0.0
        %2902 = vmatprep.subr.mxu0 0.0
        %2903 = vmatpush1.msra.mxu0 0.0
        %2904 = vmatprep.subr.mxu0 0.0
        %2905 = vmatpush1.msra.mxu0 0.0
        %2906 = vmatprep.subr.mxu0 0.0
        %2907 = vmatpush1.msra.mxu0 0.0
        %2908 = vmatprep.subr.mxu0 0.0
        %2909 = vmatpush1.msra.mxu0 0.0
        %2910 = vmatprep.subr.mxu0 0.0
        %2911 = vmatpush1.msra.mxu0 0.0
        %2912 = vmatprep.subr.mxu0 0.0
        %2913 = vmatpush1.msra.mxu0 0.0
        %2914 = vmatprep.subr.mxu0 0.0
        %2915 = vmatpush1.msra.mxu0 0.0
        %2916 = vmatprep.subr.mxu0 0.0
        %2917 = vmatpush1.msra.mxu0 0.0
        %2918 = vmatprep.subr.mxu0 0.0
        %2919 = vmatpush1.msra.mxu0 0.0
        %2920 = vmatprep.subr.mxu0 0.0
        %2921 = vmatpush1.msra.mxu0 0.0
        %2922 = vmatprep.subr.mxu0 0.0
        %2923 = vmatpush1.msra.mxu0 0.0
        %2924 = vmatprep.subr.mxu0 0.0
        %2925 = vmatpush1.msra.mxu0 0.0
        %2926 = vmatprep.subr.mxu0 0.0
        %2927 = vmatpush1.msra.mxu0 0.0
        %2928 = vmatprep.subr.mxu0 0.0
        %2929 = vmatpush1.msra.mxu0 0.0
        %2930 = vmatprep.subr.mxu0 0.0
        %2931 = vmatpush1.msra.mxu0 0.0
        %2932 = vmatprep.mubr.f32.mxu0 0.0
        %2933 = vmatmul.mubr.f32.gmra.mrb[0].mxu0 %v2864
        %v2934 = vpop.f32.mrb[0].mxu0
        %v2935 = vadd.f32 0.0, %v2934
        %v2936 = vpop.f32.mrb[0].mxu0
        %2937 = vdwg.mxu0
        %2938 = vrot.lane.b32.xlu0 %v2073, 112
        %v2939 = vpop.permute.xlu0 %2938
        %v2941 = vsel %vm1269, %v2858, 0
        %v2943 = vsel %vm1273, %v2939, 0
        %2945 = vmatprep.subr.mxu0 0.0
        %2946 = vmatpush1.msra.mxu0 %v2943
        %2947 = vmatprep.subr.mxu0 0.0
        %2948 = vmatpush1.msra.mxu0 0.0
        %2949 = vmatprep.subr.mxu0 0.0
        %2950 = vmatpush1.msra.mxu0 0.0
        %2951 = vmatprep.subr.mxu0 0.0
        %2952 = vmatpush1.msra.mxu0 0.0
        %2953 = vmatprep.subr.mxu0 0.0
        %2954 = vmatpush1.msra.mxu0 0.0
        %2955 = vmatprep.subr.mxu0 0.0
        %2956 = vmatpush1.msra.mxu0 0.0
        %2957 = vmatprep.subr.mxu0 0.0
        %2958 = vmatpush1.msra.mxu0 0.0
        %2959 = vmatprep.subr.mxu0 0.0
        %2960 = vmatpush1.msra.mxu0 0.0
        %2961 = vmatprep.subr.mxu0 0.0
        %2962 = vmatpush1.msra.mxu0 0.0
        %2963 = vmatprep.subr.mxu0 0.0
        %2964 = vmatpush1.msra.mxu0 0.0
        %2965 = vmatprep.subr.mxu0 0.0
        %2966 = vmatpush1.msra.mxu0 0.0
        %2967 = vmatprep.subr.mxu0 0.0
        %2968 = vmatpush1.msra.mxu0 0.0
        %2969 = vmatprep.subr.mxu0 0.0
        %2970 = vmatpush1.msra.mxu0 0.0
        %2971 = vmatprep.subr.mxu0 0.0
        %2972 = vmatpush1.msra.mxu0 0.0
        %2973 = vmatprep.subr.mxu0 0.0
        %2974 = vmatpush1.msra.mxu0 0.0
        %2975 = vmatprep.subr.mxu0 0.0
        %2976 = vmatpush1.msra.mxu0 0.0
        %2977 = vmatprep.subr.mxu0 0.0
        %2978 = vmatpush1.msra.mxu0 0.0
        %2979 = vmatprep.subr.mxu0 0.0
        %2980 = vmatpush1.msra.mxu0 0.0
        %2981 = vmatprep.subr.mxu0 0.0
        %2982 = vmatpush1.msra.mxu0 0.0
        %2983 = vmatprep.subr.mxu0 0.0
        %2984 = vmatpush1.msra.mxu0 0.0
        %2985 = vmatprep.subr.mxu0 0.0
        %2986 = vmatpush1.msra.mxu0 0.0
        %2987 = vmatprep.subr.mxu0 0.0
        %2988 = vmatpush1.msra.mxu0 0.0
        %2989 = vmatprep.subr.mxu0 0.0
        %2990 = vmatpush1.msra.mxu0 0.0
        %2991 = vmatprep.subr.mxu0 0.0
        %2992 = vmatpush1.msra.mxu0 0.0
        %2993 = vmatprep.subr.mxu0 0.0
        %2994 = vmatpush1.msra.mxu0 0.0
        %2995 = vmatprep.subr.mxu0 0.0
        %2996 = vmatpush1.msra.mxu0 0.0
        %2997 = vmatprep.subr.mxu0 0.0
        %2998 = vmatpush1.msra.mxu0 0.0
        %2999 = vmatprep.subr.mxu0 0.0
        %3000 = vmatpush1.msra.mxu0 0.0
        %3001 = vmatprep.subr.mxu0 0.0
        %3002 = vmatpush1.msra.mxu0 0.0
        %3003 = vmatprep.subr.mxu0 0.0
        %3004 = vmatpush1.msra.mxu0 0.0
        %3005 = vmatprep.subr.mxu0 0.0
        %3006 = vmatpush1.msra.mxu0 0.0
        %3007 = vmatprep.subr.mxu0 0.0
        %3008 = vmatpush1.msra.mxu0 0.0
        %3009 = vmatprep.mubr.f32.mxu0 0.0
        %3010 = vmatmul.mubr.f32.gmra.mrb[0].mxu0 %v2941
        %v3011 = vpop.f32.mrb[0].mxu0
        %v3012 = vadd.f32 0.0, %v3011
        %v3013 = vpop.f32.mrb[0].mxu0
        %3014 = vdwg.mxu0
        %3015 = vrot.lane.b32.xlu0 %v2157, 112
        %v3016 = vpop.permute.xlu0 %3015
        %v3018 = vsel %vm1269, %v2859, 0
        %v3020 = vsel %vm1273, %v3016, 0
        %3022 = vmatprep.subr.mxu0 0.0
        %3023 = vmatpush1.msra.mxu0 %v3020
        %3024 = vmatprep.subr.mxu0 0.0
        %3025 = vmatpush1.msra.mxu0 0.0
        %3026 = vmatprep.subr.mxu0 0.0
        %3027 = vmatpush1.msra.mxu0 0.0
        %3028 = vmatprep.subr.mxu0 0.0
        %3029 = vmatpush1.msra.mxu0 0.0
        %3030 = vmatprep.subr.mxu0 0.0
        %3031 = vmatpush1.msra.mxu0 0.0
        %3032 = vmatprep.subr.mxu0 0.0
        %3033 = vmatpush1.msra.mxu0 0.0
        %3034 = vmatprep.subr.mxu0 0.0
        %3035 = vmatpush1.msra.mxu0 0.0
        %3036 = vmatprep.subr.mxu0 0.0
        %3037 = vmatpush1.msra.mxu0 0.0
        %3038 = vmatprep.subr.mxu0 0.0
        %3039 = vmatpush1.msra.mxu0 0.0
        %3040 = vmatprep.subr.mxu0 0.0
        %3041 = vmatpush1.msra.mxu0 0.0
        %3042 = vmatprep.subr.mxu0 0.0
        %3043 = vmatpush1.msra.mxu0 0.0
        %3044 = vmatprep.subr.mxu0 0.0
        %3045 = vmatpush1.msra.mxu0 0.0
        %3046 = vmatprep.subr.mxu0 0.0
        %3047 = vmatpush1.msra.mxu0 0.0
        %3048 = vmatprep.subr.mxu0 0.0
        %3049 = vmatpush1.msra.mxu0 0.0
        %3050 = vmatprep.subr.mxu0 0.0
        %3051 = vmatpush1.msra.mxu0 0.0
        %3052 = vmatprep.subr.mxu0 0.0
        %3053 = vmatpush1.msra.mxu0 0.0
        %3054 = vmatprep.subr.mxu0 0.0
        %3055 = vmatpush1.msra.mxu0 0.0
        %3056 = vmatprep.subr.mxu0 0.0
        %3057 = vmatpush1.msra.mxu0 0.0
        %3058 = vmatprep.subr.mxu0 0.0
        %3059 = vmatpush1.msra.mxu0 0.0
        %3060 = vmatprep.subr.mxu0 0.0
        %3061 = vmatpush1.msra.mxu0 0.0
        %3062 = vmatprep.subr.mxu0 0.0
        %3063 = vmatpush1.msra.mxu0 0.0
        %3064 = vmatprep.subr.mxu0 0.0
        %3065 = vmatpush1.msra.mxu0 0.0
        %3066 = vmatprep.subr.mxu0 0.0
        %3067 = vmatpush1.msra.mxu0 0.0
        %3068 = vmatprep.subr.mxu0 0.0
        %3069 = vmatpush1.msra.mxu0 0.0
        %3070 = vmatprep.subr.mxu0 0.0
        %3071 = vmatpush1.msra.mxu0 0.0
        %3072 = vmatprep.subr.mxu0 0.0
        %3073 = vmatpush1.msra.mxu0 0.0
        %3074 = vmatprep.subr.mxu0 0.0
        %3075 = vmatpush1.msra.mxu0 0.0
        %3076 = vmatprep.subr.mxu0 0.0
        %3077 = vmatpush1.msra.mxu0 0.0
        %3078 = vmatprep.subr.mxu0 0.0
        %3079 = vmatpush1.msra.mxu0 0.0
        %3080 = vmatprep.subr.mxu0 0.0
        %3081 = vmatpush1.msra.mxu0 0.0
        %3082 = vmatprep.subr.mxu0 0.0
        %3083 = vmatpush1.msra.mxu0 0.0
        %3084 = vmatprep.subr.mxu0 0.0
        %3085 = vmatpush1.msra.mxu0 0.0
        %3086 = vmatprep.mubr.f32.mxu0 0.0
        %3087 = vmatmul.mubr.f32.gmra.mrb[0].mxu0 %v3018
        %v3088 = vpop.f32.mrb[0].mxu0
        %v3089 = vadd.f32 0.0, %v3088
        %v3090 = vpop.f32.mrb[0].mxu0
        %3091 = vdwg.mxu0
        %3092 = vrot.lane.b32.xlu0 %v2241, 112
        %v3093 = vpop.permute.xlu0 %3092
        %v3095 = vsel %vm1269, %v2860, 0
        %v3097 = vsel %vm1273, %v3093, 0
        %3099 = vmatprep.subr.mxu0 0.0
        %3100 = vmatpush1.msra.mxu0 %v3097
        %3101 = vmatprep.subr.mxu0 0.0
        %3102 = vmatpush1.msra.mxu0 0.0
        %3103 = vmatprep.subr.mxu0 0.0
        %3104 = vmatpush1.msra.mxu0 0.0
        %3105 = vmatprep.subr.mxu0 0.0
        %3106 = vmatpush1.msra.mxu0 0.0
        %3107 = vmatprep.subr.mxu0 0.0
        %3108 = vmatpush1.msra.mxu0 0.0
        %3109 = vmatprep.subr.mxu0 0.0
        %3110 = vmatpush1.msra.mxu0 0.0
        %3111 = vmatprep.subr.mxu0 0.0
        %3112 = vmatpush1.msra.mxu0 0.0
        %3113 = vmatprep.subr.mxu0 0.0
        %3114 = vmatpush1.msra.mxu0 0.0
        %3115 = vmatprep.subr.mxu0 0.0
        %3116 = vmatpush1.msra.mxu0 0.0
        %3117 = vmatprep.subr.mxu0 0.0
        %3118 = vmatpush1.msra.mxu0 0.0
        %3119 = vmatprep.subr.mxu0 0.0
        %3120 = vmatpush1.msra.mxu0 0.0
        %3121 = vmatprep.subr.mxu0 0.0
        %3122 = vmatpush1.msra.mxu0 0.0
        %3123 = vmatprep.subr.mxu0 0.0
        %3124 = vmatpush1.msra.mxu0 0.0
        %3125 = vmatprep.subr.mxu0 0.0
        %3126 = vmatpush1.msra.mxu0 0.0
        %3127 = vmatprep.subr.mxu0 0.0
        %3128 = vmatpush1.msra.mxu0 0.0
        %3129 = vmatprep.subr.mxu0 0.0
        %3130 = vmatpush1.msra.mxu0 0.0
        %3131 = vmatprep.subr.mxu0 0.0
        %3132 = vmatpush1.msra.mxu0 0.0
        %3133 = vmatprep.subr.mxu0 0.0
        %3134 = vmatpush1.msra.mxu0 0.0
        %3135 = vmatprep.subr.mxu0 0.0
        %3136 = vmatpush1.msra.mxu0 0.0
        %3137 = vmatprep.subr.mxu0 0.0
        %3138 = vmatpush1.msra.mxu0 0.0
        %3139 = vmatprep.subr.mxu0 0.0
        %3140 = vmatpush1.msra.mxu0 0.0
        %3141 = vmatprep.subr.mxu0 0.0
        %3142 = vmatpush1.msra.mxu0 0.0
        %3143 = vmatprep.subr.mxu0 0.0
        %3144 = vmatpush1.msra.mxu0 0.0
        %3145 = vmatprep.subr.mxu0 0.0
        %3146 = vmatpush1.msra.mxu0 0.0
        %3147 = vmatprep.subr.mxu0 0.0
        %3148 = vmatpush1.msra.mxu0 0.0
        %3149 = vmatprep.subr.mxu0 0.0
        %3150 = vmatpush1.msra.mxu0 0.0
        %3151 = vmatprep.subr.mxu0 0.0
        %3152 = vmatpush1.msra.mxu0 0.0
        %3153 = vmatprep.subr.mxu0 0.0
        %3154 = vmatpush1.msra.mxu0 0.0
        %3155 = vmatprep.subr.mxu0 0.0
        %3156 = vmatpush1.msra.mxu0 0.0
        %3157 = vmatprep.subr.mxu0 0.0
        %3158 = vmatpush1.msra.mxu0 0.0
        %3159 = vmatprep.subr.mxu0 0.0
        %3160 = vmatpush1.msra.mxu0 0.0
        %3161 = vmatprep.subr.mxu0 0.0
        %3162 = vmatpush1.msra.mxu0 0.0
        %3163 = vmatprep.mubr.f32.mxu0 0.0
        %3164 = vmatmul.mubr.f32.gmra.mrb[0].mxu0 %v3095
        %v3165 = vpop.f32.mrb[0].mxu0
        %v3166 = vadd.f32 0.0, %v3165
        %v3167 = vpop.f32.mrb[0].mxu0
        %3168 = vdwg.mxu0
        %v3173 = vcombine.low %v2935, %v3012
        %v3174 = vcombine.low %v3089, %v3166
        %v3176 = vunpack.c.l.s4 1983009808
        %v3177 = vunpack.c.0.s8 %v3176
        %v3178 = vlaneseq
        %v3179 = vshrl.u32 %v3178, 7
        %v3180 = vsub.s32 %v3177, %v3179
        %v3181 = vrot.slane %v3173, %v3180
        %v3183 = vunpack.c.l.s4 1983009808
        %v3184 = vunpack.c.0.s8 %v3183
        %v3185 = vlaneseq
        %v3186 = vshrl.u32 %v3185, 7
        %v3187 = vsub.s32 %v3184, %v3186
        %v3188 = vrot.slane %v3174, %v3187
        %v3189 = vcombine.low %v3181, %v3188
        %v3190 = vsel %vm927, %v3189, 0
        %3192 = vmatprep.subr.mxu0 0.0
        %3193 = vmatpush1.msra.mxu0 %v925
        %3194 = vmatprep.subr.mxu0 0.0
        %3195 = vmatpush1.msra.mxu0 0.0
        %3196 = vmatprep.subr.mxu0 0.0
        %3197 = vmatpush1.msra.mxu0 0.0
        %3198 = vmatprep.subr.mxu0 0.0
        %3199 = vmatpush1.msra.mxu0 0.0
        %3200 = vmatprep.subr.mxu0 0.0
        %3201 = vmatpush1.msra.mxu0 0.0
        %3202 = vmatprep.subr.mxu0 0.0
        %3203 = vmatpush1.msra.mxu0 0.0
        %3204 = vmatprep.subr.mxu0 0.0
        %3205 = vmatpush1.msra.mxu0 0.0
        %3206 = vmatprep.subr.mxu0 0.0
        %3207 = vmatpush1.msra.mxu0 0.0
        %3208 = vmatprep.subr.mxu0 0.0
        %3209 = vmatpush1.msra.mxu0 0.0
        %3210 = vmatprep.subr.mxu0 0.0
        %3211 = vmatpush1.msra.mxu0 0.0
        %3212 = vmatprep.subr.mxu0 0.0
        %3213 = vmatpush1.msra.mxu0 0.0
        %3214 = vmatprep.subr.mxu0 0.0
        %3215 = vmatpush1.msra.mxu0 0.0
        %3216 = vmatprep.subr.mxu0 0.0
        %3217 = vmatpush1.msra.mxu0 0.0
        %3218 = vmatprep.subr.mxu0 0.0
        %3219 = vmatpush1.msra.mxu0 0.0
        %3220 = vmatprep.subr.mxu0 0.0
        %3221 = vmatpush1.msra.mxu0 0.0
        %3222 = vmatprep.subr.mxu0 0.0
        %3223 = vmatpush1.msra.mxu0 0.0
        %3224 = vmatprep.subr.mxu0 0.0
        %3225 = vmatpush1.msra.mxu0 0.0
        %3226 = vmatprep.subr.mxu0 0.0
        %3227 = vmatpush1.msra.mxu0 0.0
        %3228 = vmatprep.subr.mxu0 0.0
        %3229 = vmatpush1.msra.mxu0 0.0
        %3230 = vmatprep.subr.mxu0 0.0
        %3231 = vmatpush1.msra.mxu0 0.0
        %3232 = vmatprep.subr.mxu0 0.0
        %3233 = vmatpush1.msra.mxu0 0.0
        %3234 = vmatprep.subr.mxu0 0.0
        %3235 = vmatpush1.msra.mxu0 0.0
        %3236 = vmatprep.subr.mxu0 0.0
        %3237 = vmatpush1.msra.mxu0 0.0
        %3238 = vmatprep.subr.mxu0 0.0
        %3239 = vmatpush1.msra.mxu0 0.0
        %3240 = vmatprep.subr.mxu0 0.0
        %3241 = vmatpush1.msra.mxu0 0.0
        %3242 = vmatprep.subr.mxu0 0.0
        %3243 = vmatpush1.msra.mxu0 0.0
        %3244 = vmatprep.subr.mxu0 0.0
        %3245 = vmatpush1.msra.mxu0 0.0
        %3246 = vmatprep.subr.mxu0 0.0
        %3247 = vmatpush1.msra.mxu0 0.0
        %3248 = vmatprep.subr.mxu0 0.0
        %3249 = vmatpush1.msra.mxu0 0.0
        %3250 = vmatprep.subr.mxu0 0.0
        %3251 = vmatpush1.msra.mxu0 0.0
        %3252 = vmatprep.subr.mxu0 0.0
        %3253 = vmatpush1.msra.mxu0 0.0
        %3254 = vmatprep.subr.mxu0 0.0
        %3255 = vmatpush1.msra.mxu0 0.0
        %3256 = vmatprep.mubr.f32.mxu0 0.0
        %3257 = vmatmul.mubr.f32.gmra.mrb[0].mxu0 %v3190
        %v3258 = vpop.f32.mrb[0].mxu0
        %v3259 = vadd.f32 0.0, %v3258
        %v3260 = vpop.f32.mrb[0].mxu0
        %3261 = vdwg.mxu0
        %v3262 = vadd.f32 %v2502, %v3259
        %3263 = vrot.lane.b32.xlu0 %v1577, 104
        %v3264 = vpop.permute.xlu0 %3263
        %3265 = vrot.lane.b32.xlu0 %v1586, 104
        %v3266 = vpop.permute.xlu0 %3265
        %v3267 = vsel %vm927, %v3264, 0
        %v3269 = vsel %vm927, %v3266, 0
        %3271 = vmatprep.subr.mxu0 0.0
        %3272 = vmatpush1.xpose.msra.mxu0 %v3269
        %3273 = vmatprep.subr.mxu0 0.0
        %3274 = vmatpush1.xpose.msra.mxu0 0.0
        %3275 = vmatprep.subr.mxu0 0.0
        %3276 = vmatpush1.xpose.msra.mxu0 0.0
        %3277 = vmatprep.subr.mxu0 0.0
        %3278 = vmatpush1.xpose.msra.mxu0 0.0
        %3279 = vmatprep.subr.mxu0 0.0
        %3280 = vmatpush1.xpose.msra.mxu0 0.0
        %3281 = vmatprep.subr.mxu0 0.0
        %3282 = vmatpush1.xpose.msra.mxu0 0.0
        %3283 = vmatprep.subr.mxu0 0.0
        %3284 = vmatpush1.xpose.msra.mxu0 0.0
        %3285 = vmatprep.subr.mxu0 0.0
        %3286 = vmatpush1.xpose.msra.mxu0 0.0
        %3287 = vmatprep.subr.mxu0 0.0
        %3288 = vmatpush1.xpose.msra.mxu0 0.0
        %3289 = vmatprep.subr.mxu0 0.0
        %3290 = vmatpush1.xpose.msra.mxu0 0.0
        %3291 = vmatprep.subr.mxu0 0.0
        %3292 = vmatpush1.xpose.msra.mxu0 0.0
        %3293 = vmatprep.subr.mxu0 0.0
        %3294 = vmatpush1.xpose.msra.mxu0 0.0
        %3295 = vmatprep.subr.mxu0 0.0
        %3296 = vmatpush1.xpose.msra.mxu0 0.0
        %3297 = vmatprep.subr.mxu0 0.0
        %3298 = vmatpush1.xpose.msra.mxu0 0.0
        %3299 = vmatprep.subr.mxu0 0.0
        %3300 = vmatpush1.xpose.msra.mxu0 0.0
        %3301 = vmatprep.subr.mxu0 0.0
        %3302 = vmatpush1.xpose.msra.mxu0 0.0
        %3303 = vmatprep.subr.mxu0 0.0
        %3304 = vmatpush1.xpose.msra.mxu0 0.0
        %3305 = vmatprep.subr.mxu0 0.0
        %3306 = vmatpush1.xpose.msra.mxu0 0.0
        %3307 = vmatprep.subr.mxu0 0.0
        %3308 = vmatpush1.xpose.msra.mxu0 0.0
        %3309 = vmatprep.subr.mxu0 0.0
        %3310 = vmatpush1.xpose.msra.mxu0 0.0
        %3311 = vmatprep.subr.mxu0 0.0
        %3312 = vmatpush1.xpose.msra.mxu0 0.0
        %3313 = vmatprep.subr.mxu0 0.0
        %3314 = vmatpush1.xpose.msra.mxu0 0.0
        %3315 = vmatprep.subr.mxu0 0.0
        %3316 = vmatpush1.xpose.msra.mxu0 0.0
        %3317 = vmatprep.subr.mxu0 0.0
        %3318 = vmatpush1.xpose.msra.mxu0 0.0
        %3319 = vmatprep.subr.mxu0 0.0
        %3320 = vmatpush1.xpose.msra.mxu0 0.0
        %3321 = vmatprep.subr.mxu0 0.0
        %3322 = vmatpush1.xpose.msra.mxu0 0.0
        %3323 = vmatprep.subr.mxu0 0.0
        %3324 = vmatpush1.xpose.msra.mxu0 0.0
        %3325 = vmatprep.subr.mxu0 0.0
        %3326 = vmatpush1.xpose.msra.mxu0 0.0
        %3327 = vmatprep.subr.mxu0 0.0
        %3328 = vmatpush1.xpose.msra.mxu0 0.0
        %3329 = vmatprep.subr.mxu0 0.0
        %3330 = vmatpush1.xpose.msra.mxu0 0.0
        %3331 = vmatprep.subr.mxu0 0.0
        %3332 = vmatpush1.xpose.msra.mxu0 0.0
        %3333 = vmatprep.subr.mxu0 0.0
        %3334 = vmatpush1.xpose.msra.mxu0 0.0
        %3335 = vmatprep.mubr.f32.mxu0 0.0
        %3336 = vmatmul.mubr.f32.gmra.mrb[0].mxu0 %v3267
        %v3337 = vpop.f32.mrb[0].mxu0
        %v3338 = vadd.f32 0.0, %v3337
        %v3339 = vpop.f32.mrb[0].mxu0
        %3340 = vdwg.mxu0
        %3341 = vrot.lane.b32.xlu0 %v1669, 104
        %v3342 = vpop.permute.xlu0 %3341
        %3343 = vrot.lane.b32.xlu0 %v1678, 104
        %v3344 = vpop.permute.xlu0 %3343
        %v3345 = vsel %vm927, %v3342, 0
        %v3347 = vsel %vm927, %v3344, 0
        %3349 = vmatprep.subr.mxu0 0.0
        %3350 = vmatpush1.xpose.msra.mxu0 %v3347
        %3351 = vmatprep.subr.mxu0 0.0
        %3352 = vmatpush1.xpose.msra.mxu0 0.0
        %3353 = vmatprep.subr.mxu0 0.0
        %3354 = vmatpush1.xpose.msra.mxu0 0.0
        %3355 = vmatprep.subr.mxu0 0.0
        %3356 = vmatpush1.xpose.msra.mxu0 0.0
        %3357 = vmatprep.subr.mxu0 0.0
        %3358 = vmatpush1.xpose.msra.mxu0 0.0
        %3359 = vmatprep.subr.mxu0 0.0
        %3360 = vmatpush1.xpose.msra.mxu0 0.0
        %3361 = vmatprep.subr.mxu0 0.0
        %3362 = vmatpush1.xpose.msra.mxu0 0.0
        %3363 = vmatprep.subr.mxu0 0.0
        %3364 = vmatpush1.xpose.msra.mxu0 0.0
        %3365 = vmatprep.subr.mxu0 0.0
        %3366 = vmatpush1.xpose.msra.mxu0 0.0
        %3367 = vmatprep.subr.mxu0 0.0
        %3368 = vmatpush1.xpose.msra.mxu0 0.0
        %3369 = vmatprep.subr.mxu0 0.0
        %3370 = vmatpush1.xpose.msra.mxu0 0.0
        %3371 = vmatprep.subr.mxu0 0.0
        %3372 = vmatpush1.xpose.msra.mxu0 0.0
        %3373 = vmatprep.subr.mxu0 0.0
        %3374 = vmatpush1.xpose.msra.mxu0 0.0
        %3375 = vmatprep.subr.mxu0 0.0
        %3376 = vmatpush1.xpose.msra.mxu0 0.0
        %3377 = vmatprep.subr.mxu0 0.0
        %3378 = vmatpush1.xpose.msra.mxu0 0.0
        %3379 = vmatprep.subr.mxu0 0.0
        %3380 = vmatpush1.xpose.msra.mxu0 0.0
        %3381 = vmatprep.subr.mxu0 0.0
        %3382 = vmatpush1.xpose.msra.mxu0 0.0
        %3383 = vmatprep.subr.mxu0 0.0
        %3384 = vmatpush1.xpose.msra.mxu0 0.0
        %3385 = vmatprep.subr.mxu0 0.0
        %3386 = vmatpush1.xpose.msra.mxu0 0.0
        %3387 = vmatprep.subr.mxu0 0.0
        %3388 = vmatpush1.xpose.msra.mxu0 0.0
        %3389 = vmatprep.subr.mxu0 0.0
        %3390 = vmatpush1.xpose.msra.mxu0 0.0
        %3391 = vmatprep.subr.mxu0 0.0
        %3392 = vmatpush1.xpose.msra.mxu0 0.0
        %3393 = vmatprep.subr.mxu0 0.0
        %3394 = vmatpush1.xpose.msra.mxu0 0.0
        %3395 = vmatprep.subr.mxu0 0.0
        %3396 = vmatpush1.xpose.msra.mxu0 0.0
        %3397 = vmatprep.subr.mxu0 0.0
        %3398 = vmatpush1.xpose.msra.mxu0 0.0
        %3399 = vmatprep.subr.mxu0 0.0
        %3400 = vmatpush1.xpose.msra.mxu0 0.0
        %3401 = vmatprep.subr.mxu0 0.0
        %3402 = vmatpush1.xpose.msra.mxu0 0.0
        %3403 = vmatprep.subr.mxu0 0.0
        %3404 = vmatpush1.xpose.msra.mxu0 0.0
        %3405 = vmatprep.subr.mxu0 0.0
        %3406 = vmatpush1.xpose.msra.mxu0 0.0
        %3407 = vmatprep.subr.mxu0 0.0
        %3408 = vmatpush1.xpose.msra.mxu0 0.0
        %3409 = vmatprep.subr.mxu0 0.0
        %3410 = vmatpush1.xpose.msra.mxu0 0.0
        %3411 = vmatprep.subr.mxu0 0.0
        %3412 = vmatpush1.xpose.msra.mxu0 0.0
        %3413 = vmatprep.mubr.f32.mxu0 0.0
        %3414 = vmatmul.mubr.f32.gmra.mrb[0].mxu0 %v3345
        %v3415 = vpop.f32.mrb[0].mxu0
        %v3416 = vadd.f32 0.0, %v3415
        %v3417 = vpop.f32.mrb[0].mxu0
        %3418 = vdwg.mxu0
        %3419 = vrot.lane.b32.xlu0 %v1761, 104
        %v3420 = vpop.permute.xlu0 %3419
        %3421 = vrot.lane.b32.xlu0 %v1770, 104
        %v3422 = vpop.permute.xlu0 %3421
        %v3423 = vsel %vm927, %v3420, 0
        %v3425 = vsel %vm927, %v3422, 0
        %3427 = vmatprep.subr.mxu0 0.0
        %3428 = vmatpush1.xpose.msra.mxu0 %v3425
        %3429 = vmatprep.subr.mxu0 0.0
        %3430 = vmatpush1.xpose.msra.mxu0 0.0
        %3431 = vmatprep.subr.mxu0 0.0
        %3432 = vmatpush1.xpose.msra.mxu0 0.0
        %3433 = vmatprep.subr.mxu0 0.0
        %3434 = vmatpush1.xpose.msra.mxu0 0.0
        %3435 = vmatprep.subr.mxu0 0.0
        %3436 = vmatpush1.xpose.msra.mxu0 0.0
        %3437 = vmatprep.subr.mxu0 0.0
        %3438 = vmatpush1.xpose.msra.mxu0 0.0
        %3439 = vmatprep.subr.mxu0 0.0
        %3440 = vmatpush1.xpose.msra.mxu0 0.0
        %3441 = vmatprep.subr.mxu0 0.0
        %3442 = vmatpush1.xpose.msra.mxu0 0.0
        %3443 = vmatprep.subr.mxu0 0.0
        %3444 = vmatpush1.xpose.msra.mxu0 0.0
        %3445 = vmatprep.subr.mxu0 0.0
        %3446 = vmatpush1.xpose.msra.mxu0 0.0
        %3447 = vmatprep.subr.mxu0 0.0
        %3448 = vmatpush1.xpose.msra.mxu0 0.0
        %3449 = vmatprep.subr.mxu0 0.0
        %3450 = vmatpush1.xpose.msra.mxu0 0.0
        %3451 = vmatprep.subr.mxu0 0.0
        %3452 = vmatpush1.xpose.msra.mxu0 0.0
        %3453 = vmatprep.subr.mxu0 0.0
        %3454 = vmatpush1.xpose.msra.mxu0 0.0
        %3455 = vmatprep.subr.mxu0 0.0
        %3456 = vmatpush1.xpose.msra.mxu0 0.0
        %3457 = vmatprep.subr.mxu0 0.0
        %3458 = vmatpush1.xpose.msra.mxu0 0.0
        %3459 = vmatprep.subr.mxu0 0.0
        %3460 = vmatpush1.xpose.msra.mxu0 0.0
        %3461 = vmatprep.subr.mxu0 0.0
        %3462 = vmatpush1.xpose.msra.mxu0 0.0
        %3463 = vmatprep.subr.mxu0 0.0
        %3464 = vmatpush1.xpose.msra.mxu0 0.0
        %3465 = vmatprep.subr.mxu0 0.0
        %3466 = vmatpush1.xpose.msra.mxu0 0.0
        %3467 = vmatprep.subr.mxu0 0.0
        %3468 = vmatpush1.xpose.msra.mxu0 0.0
        %3469 = vmatprep.subr.mxu0 0.0
        %3470 = vmatpush1.xpose.msra.mxu0 0.0
        %3471 = vmatprep.subr.mxu0 0.0
        %3472 = vmatpush1.xpose.msra.mxu0 0.0
        %3473 = vmatprep.subr.mxu0 0.0
        %3474 = vmatpush1.xpose.msra.mxu0 0.0
        %3475 = vmatprep.subr.mxu0 0.0
        %3476 = vmatpush1.xpose.msra.mxu0 0.0
        %3477 = vmatprep.subr.mxu0 0.0
        %3478 = vmatpush1.xpose.msra.mxu0 0.0
        %3479 = vmatprep.subr.mxu0 0.0
        %3480 = vmatpush1.xpose.msra.mxu0 0.0
        %3481 = vmatprep.subr.mxu0 0.0
        %3482 = vmatpush1.xpose.msra.mxu0 0.0
        %3483 = vmatprep.subr.mxu0 0.0
        %3484 = vmatpush1.xpose.msra.mxu0 0.0
        %3485 = vmatprep.subr.mxu0 0.0
        %3486 = vmatpush1.xpose.msra.mxu0 0.0
        %3487 = vmatprep.subr.mxu0 0.0
        %3488 = vmatpush1.xpose.msra.mxu0 0.0
        %3489 = vmatprep.subr.mxu0 0.0
        %3490 = vmatpush1.xpose.msra.mxu0 0.0
        %3491 = vmatprep.mubr.f32.mxu0 0.0
        %3492 = vmatmul.mubr.f32.gmra.mrb[0].mxu0 %v3423
        %v3493 = vpop.f32.mrb[0].mxu0
        %v3494 = vadd.f32 0.0, %v3493
        %v3495 = vpop.f32.mrb[0].mxu0
        %3496 = vdwg.mxu0
        %3497 = vrot.lane.b32.xlu0 %v1853, 104
        %v3498 = vpop.permute.xlu0 %3497
        %3499 = vrot.lane.b32.xlu0 %v1862, 104
        %v3500 = vpop.permute.xlu0 %3499
        %v3501 = vsel %vm927, %v3498, 0
        %v3503 = vsel %vm927, %v3500, 0
        %3505 = vmatprep.subr.mxu0 0.0
        %3506 = vmatpush1.xpose.msra.mxu0 %v3503
        %3507 = vmatprep.subr.mxu0 0.0
        %3508 = vmatpush1.xpose.msra.mxu0 0.0
        %3509 = vmatprep.subr.mxu0 0.0
        %3510 = vmatpush1.xpose.msra.mxu0 0.0
        %3511 = vmatprep.subr.mxu0 0.0
        %3512 = vmatpush1.xpose.msra.mxu0 0.0
        %3513 = vmatprep.subr.mxu0 0.0
        %3514 = vmatpush1.xpose.msra.mxu0 0.0
        %3515 = vmatprep.subr.mxu0 0.0
        %3516 = vmatpush1.xpose.msra.mxu0 0.0
        %3517 = vmatprep.subr.mxu0 0.0
        %3518 = vmatpush1.xpose.msra.mxu0 0.0
        %3519 = vmatprep.subr.mxu0 0.0
        %3520 = vmatpush1.xpose.msra.mxu0 0.0
        %3521 = vmatprep.subr.mxu0 0.0
        %3522 = vmatpush1.xpose.msra.mxu0 0.0
        %3523 = vmatprep.subr.mxu0 0.0
        %3524 = vmatpush1.xpose.msra.mxu0 0.0
        %3525 = vmatprep.subr.mxu0 0.0
        %3526 = vmatpush1.xpose.msra.mxu0 0.0
        %3527 = vmatprep.subr.mxu0 0.0
        %3528 = vmatpush1.xpose.msra.mxu0 0.0
        %3529 = vmatprep.subr.mxu0 0.0
        %3530 = vmatpush1.xpose.msra.mxu0 0.0
        %3531 = vmatprep.subr.mxu0 0.0
        %3532 = vmatpush1.xpose.msra.mxu0 0.0
        %3533 = vmatprep.subr.mxu0 0.0
        %3534 = vmatpush1.xpose.msra.mxu0 0.0
        %3535 = vmatprep.subr.mxu0 0.0
        %3536 = vmatpush1.xpose.msra.mxu0 0.0
        %3537 = vmatprep.subr.mxu0 0.0
        %3538 = vmatpush1.xpose.msra.mxu0 0.0
        %3539 = vmatprep.subr.mxu0 0.0
        %3540 = vmatpush1.xpose.msra.mxu0 0.0
        %3541 = vmatprep.subr.mxu0 0.0
        %3542 = vmatpush1.xpose.msra.mxu0 0.0
        %3543 = vmatprep.subr.mxu0 0.0
        %3544 = vmatpush1.xpose.msra.mxu0 0.0
        %3545 = vmatprep.subr.mxu0 0.0
        %3546 = vmatpush1.xpose.msra.mxu0 0.0
        %3547 = vmatprep.subr.mxu0 0.0
        %3548 = vmatpush1.xpose.msra.mxu0 0.0
        %3549 = vmatprep.subr.mxu0 0.0
        %3550 = vmatpush1.xpose.msra.mxu0 0.0
        %3551 = vmatprep.subr.mxu0 0.0
        %3552 = vmatpush1.xpose.msra.mxu0 0.0
        %3553 = vmatprep.subr.mxu0 0.0
        %3554 = vmatpush1.xpose.msra.mxu0 0.0
        %3555 = vmatprep.subr.mxu0 0.0
        %3556 = vmatpush1.xpose.msra.mxu0 0.0
        %3557 = vmatprep.subr.mxu0 0.0
        %3558 = vmatpush1.xpose.msra.mxu0 0.0
        %3559 = vmatprep.subr.mxu0 0.0
        %3560 = vmatpush1.xpose.msra.mxu0 0.0
        %3561 = vmatprep.subr.mxu0 0.0
        %3562 = vmatpush1.xpose.msra.mxu0 0.0
        %3563 = vmatprep.subr.mxu0 0.0
        %3564 = vmatpush1.xpose.msra.mxu0 0.0
        %3565 = vmatprep.subr.mxu0 0.0
        %3566 = vmatpush1.xpose.msra.mxu0 0.0
        %3567 = vmatprep.subr.mxu0 0.0
        %3568 = vmatpush1.xpose.msra.mxu0 0.0
        %3569 = vmatprep.mubr.f32.mxu0 0.0
        %3570 = vmatmul.mubr.f32.gmra.mrb[0].mxu0 %v3501
        %v3571 = vpop.f32.mrb[0].mxu0
        %v3572 = vadd.f32 0.0, %v3571
        %v3573 = vpop.f32.mrb[0].mxu0
        %3574 = vdwg.mxu0
        %v3575 = vsel %vm1224, %v3338, -inf
        %3576 = vmax.xlane.f32.xlu0 %v3575
        %v3577 = vpop.xlane.xlu0 %3576
        %v3578 = vsel %vm1224, %v3416, -inf
        %3579 = vmax.xlane.f32.xlu0 %v3578
        %v3580 = vpop.xlane.xlu0 %3579
        %v3581 = vsel %vm1224, %v3494, -inf
        %3582 = vmax.xlane.f32.xlu0 %v3581
        %v3583 = vpop.xlane.xlu0 %3582
        %v3584 = vsel %vm1224, %v3572, -inf
        %3585 = vmax.xlane.f32.xlu0 %v3584
        %v3586 = vpop.xlane.xlu0 %3585
        %v3587 = vsub.f32 %v3338, %v3577
        %v3588 = vsub.f32 %v3416, %v3580
        %v3589 = vsub.f32 %v3494, %v3583
        %v3590 = vsub.f32 %v3572, %v3586
        %v3591 = vmul.f32 %v3587, 1.442695
        %v3592 = vpow.pop %v3591
        %v3593 = vmul.f32 %v3588, 1.442695
        %v3594 = vpow.pop %v3593
        %v3595 = vmul.f32 %v3589, 1.442695
        %v3596 = vpow.pop %v3595
        %v3597 = vmul.f32 %v3590, 1.442695
        %v3598 = vpow.pop %v3597
        %v3599 = vsel %vm1224, %v3592, 0.0
        %3600 = vadd.xlane.f32.xlu0 %v3599
        %v3601 = vpop.xlane.xlu0 %3600
        %v3602 = vsel %vm1224, %v3594, 0.0
        %3603 = vadd.xlane.f32.xlu0 %v3602
        %v3604 = vpop.xlane.xlu0 %3603
        %v3605 = vsel %vm1224, %v3596, 0.0
        %3606 = vadd.xlane.f32.xlu0 %v3605
        %v3607 = vpop.xlane.xlu0 %3606
        %v3608 = vsel %vm1224, %v3598, 0.0
        %3609 = vadd.xlane.f32.xlu0 %v3608
        %v3610 = vpop.xlane.xlu0 %3609
        %v3611 = vrcp.pop %v3601
        %v3612 = vrcp.pop %v3604
        %v3613 = vrcp.pop %v3607
        %v3614 = vrcp.pop %v3610
        %v3615 = vmul.f32 %v3592, %v3611
        %v3616 = vmul.f32 %v3594, %v3612
        %v3617 = vmul.f32 %v3596, %v3613
        %v3618 = vmul.f32 %v3598, %v3614
        %3619 = vrot.lane.b32.xlu0 %v1989, 104
        %v3620 = vpop.permute.xlu0 %3619
        %v3622 = vsel %vm1269, %v3615, 0
        %v3624 = vsel %vm1273, %v3620, 0
        %3626 = vmatprep.subr.mxu0 0.0
        %3627 = vmatpush1.msra.mxu0 %v3624
        %3628 = vmatprep.subr.mxu0 0.0
        %3629 = vmatpush1.msra.mxu0 0.0
        %3630 = vmatprep.subr.mxu0 0.0
        %3631 = vmatpush1.msra.mxu0 0.0
        %3632 = vmatprep.subr.mxu0 0.0
        %3633 = vmatpush1.msra.mxu0 0.0
        %3634 = vmatprep.subr.mxu0 0.0
        %3635 = vmatpush1.msra.mxu0 0.0
        %3636 = vmatprep.subr.mxu0 0.0
        %3637 = vmatpush1.msra.mxu0 0.0
        %3638 = vmatprep.subr.mxu0 0.0
        %3639 = vmatpush1.msra.mxu0 0.0
        %3640 = vmatprep.subr.mxu0 0.0
        %3641 = vmatpush1.msra.mxu0 0.0
        %3642 = vmatprep.subr.mxu0 0.0
        %3643 = vmatpush1.msra.mxu0 0.0
        %3644 = vmatprep.subr.mxu0 0.0
        %3645 = vmatpush1.msra.mxu0 0.0
        %3646 = vmatprep.subr.mxu0 0.0
        %3647 = vmatpush1.msra.mxu0 0.0
        %3648 = vmatprep.subr.mxu0 0.0
        %3649 = vmatpush1.msra.mxu0 0.0
        %3650 = vmatprep.subr.mxu0 0.0
        %3651 = vmatpush1.msra.mxu0 0.0
        %3652 = vmatprep.subr.mxu0 0.0
        %3653 = vmatpush1.msra.mxu0 0.0
        %3654 = vmatprep.subr.mxu0 0.0
        %3655 = vmatpush1.msra.mxu0 0.0
        %3656 = vmatprep.subr.mxu0 0.0
        %3657 = vmatpush1.msra.mxu0 0.0
        %3658 = vmatprep.subr.mxu0 0.0
        %3659 = vmatpush1.msra.mxu0 0.0
        %3660 = vmatprep.subr.mxu0 0.0
        %3661 = vmatpush1.msra.mxu0 0.0
        %3662 = vmatprep.subr.mxu0 0.0
        %3663 = vmatpush1.msra.mxu0 0.0
        %3664 = vmatprep.subr.mxu0 0.0
        %3665 = vmatpush1.msra.mxu0 0.0
        %3666 = vmatprep.subr.mxu0 0.0
        %3667 = vmatpush1.msra.mxu0 0.0
        %3668 = vmatprep.subr.mxu0 0.0
        %3669 = vmatpush1.msra.mxu0 0.0
        %3670 = vmatprep.subr.mxu0 0.0
        %3671 = vmatpush1.msra.mxu0 0.0
        %3672 = vmatprep.subr.mxu0 0.0
        %3673 = vmatpush1.msra.mxu0 0.0
        %3674 = vmatprep.subr.mxu0 0.0
        %3675 = vmatpush1.msra.mxu0 0.0
        %3676 = vmatprep.subr.mxu0 0.0
        %3677 = vmatpush1.msra.mxu0 0.0
        %3678 = vmatprep.subr.mxu0 0.0
        %3679 = vmatpush1.msra.mxu0 0.0
        %3680 = vmatprep.subr.mxu0 0.0
        %3681 = vmatpush1.msra.mxu0 0.0
        %3682 = vmatprep.subr.mxu0 0.0
        %3683 = vmatpush1.msra.mxu0 0.0
        %3684 = vmatprep.subr.mxu0 0.0
        %3685 = vmatpush1.msra.mxu0 0.0
        %3686 = vmatprep.subr.mxu0 0.0
        %3687 = vmatpush1.msra.mxu0 0.0
        %3688 = vmatprep.subr.mxu0 0.0
        %3689 = vmatpush1.msra.mxu0 0.0
        %3690 = vmatprep.mubr.f32.mxu0 0.0
        %3691 = vmatmul.mubr.f32.gmra.mrb[0].mxu0 %v3622
        %v3692 = vpop.f32.mrb[0].mxu0
        %v3693 = vadd.f32 0.0, %v3692
        %v3694 = vpop.f32.mrb[0].mxu0
        %3695 = vdwg.mxu0
        %3696 = vrot.lane.b32.xlu0 %v2073, 104
        %v3697 = vpop.permute.xlu0 %3696
        %v3699 = vsel %vm1269, %v3616, 0
        %v3701 = vsel %vm1273, %v3697, 0
        %3703 = vmatprep.subr.mxu0 0.0
        %3704 = vmatpush1.msra.mxu0 %v3701
        %3705 = vmatprep.subr.mxu0 0.0
        %3706 = vmatpush1.msra.mxu0 0.0
        %3707 = vmatprep.subr.mxu0 0.0
        %3708 = vmatpush1.msra.mxu0 0.0
        %3709 = vmatprep.subr.mxu0 0.0
        %3710 = vmatpush1.msra.mxu0 0.0
        %3711 = vmatprep.subr.mxu0 0.0
        %3712 = vmatpush1.msra.mxu0 0.0
        %3713 = vmatprep.subr.mxu0 0.0
        %3714 = vmatpush1.msra.mxu0 0.0
        %3715 = vmatprep.subr.mxu0 0.0
        %3716 = vmatpush1.msra.mxu0 0.0
        %3717 = vmatprep.subr.mxu0 0.0
        %3718 = vmatpush1.msra.mxu0 0.0
        %3719 = vmatprep.subr.mxu0 0.0
        %3720 = vmatpush1.msra.mxu0 0.0
        %3721 = vmatprep.subr.mxu0 0.0
        %3722 = vmatpush1.msra.mxu0 0.0
        %3723 = vmatprep.subr.mxu0 0.0
        %3724 = vmatpush1.msra.mxu0 0.0
        %3725 = vmatprep.subr.mxu0 0.0
        %3726 = vmatpush1.msra.mxu0 0.0
        %3727 = vmatprep.subr.mxu0 0.0
        %3728 = vmatpush1.msra.mxu0 0.0
        %3729 = vmatprep.subr.mxu0 0.0
        %3730 = vmatpush1.msra.mxu0 0.0
        %3731 = vmatprep.subr.mxu0 0.0
        %3732 = vmatpush1.msra.mxu0 0.0
        %3733 = vmatprep.subr.mxu0 0.0
        %3734 = vmatpush1.msra.mxu0 0.0
        %3735 = vmatprep.subr.mxu0 0.0
        %3736 = vmatpush1.msra.mxu0 0.0
        %3737 = vmatprep.subr.mxu0 0.0
        %3738 = vmatpush1.msra.mxu0 0.0
        %3739 = vmatprep.subr.mxu0 0.0
        %3740 = vmatpush1.msra.mxu0 0.0
        %3741 = vmatprep.subr.mxu0 0.0
        %3742 = vmatpush1.msra.mxu0 0.0
        %3743 = vmatprep.subr.mxu0 0.0
        %3744 = vmatpush1.msra.mxu0 0.0
        %3745 = vmatprep.subr.mxu0 0.0
        %3746 = vmatpush1.msra.mxu0 0.0
        %3747 = vmatprep.subr.mxu0 0.0
        %3748 = vmatpush1.msra.mxu0 0.0
        %3749 = vmatprep.subr.mxu0 0.0
        %3750 = vmatpush1.msra.mxu0 0.0
        %3751 = vmatprep.subr.mxu0 0.0
        %3752 = vmatpush1.msra.mxu0 0.0
        %3753 = vmatprep.subr.mxu0 0.0
        %3754 = vmatpush1.msra.mxu0 0.0
        %3755 = vmatprep.subr.mxu0 0.0
        %3756 = vmatpush1.msra.mxu0 0.0
        %3757 = vmatprep.subr.mxu0 0.0
        %3758 = vmatpush1.msra.mxu0 0.0
        %3759 = vmatprep.subr.mxu0 0.0
        %3760 = vmatpush1.msra.mxu0 0.0
        %3761 = vmatprep.subr.mxu0 0.0
        %3762 = vmatpush1.msra.mxu0 0.0
        %3763 = vmatprep.subr.mxu0 0.0
        %3764 = vmatpush1.msra.mxu0 0.0
        %3765 = vmatprep.subr.mxu0 0.0
        %3766 = vmatpush1.msra.mxu0 0.0
        %3767 = vmatprep.mubr.f32.mxu0 0.0
        %3768 = vmatmul.mubr.f32.gmra.mrb[0].mxu0 %v3699
        %v3769 = vpop.f32.mrb[0].mxu0
        %v3770 = vadd.f32 0.0, %v3769
        %v3771 = vpop.f32.mrb[0].mxu0
        %3772 = vdwg.mxu0
        %3773 = vrot.lane.b32.xlu0 %v2157, 104
        %v3774 = vpop.permute.xlu0 %3773
        %v3776 = vsel %vm1269, %v3617, 0
        %v3778 = vsel %vm1273, %v3774, 0
        %3780 = vmatprep.subr.mxu0 0.0
        %3781 = vmatpush1.msra.mxu0 %v3778
        %3782 = vmatprep.subr.mxu0 0.0
        %3783 = vmatpush1.msra.mxu0 0.0
        %3784 = vmatprep.subr.mxu0 0.0
        %3785 = vmatpush1.msra.mxu0 0.0
        %3786 = vmatprep.subr.mxu0 0.0
        %3787 = vmatpush1.msra.mxu0 0.0
        %3788 = vmatprep.subr.mxu0 0.0
        %3789 = vmatpush1.msra.mxu0 0.0
        %3790 = vmatprep.subr.mxu0 0.0
        %3791 = vmatpush1.msra.mxu0 0.0
        %3792 = vmatprep.subr.mxu0 0.0
        %3793 = vmatpush1.msra.mxu0 0.0
        %3794 = vmatprep.subr.mxu0 0.0
        %3795 = vmatpush1.msra.mxu0 0.0
        %3796 = vmatprep.subr.mxu0 0.0
        %3797 = vmatpush1.msra.mxu0 0.0
        %3798 = vmatprep.subr.mxu0 0.0
        %3799 = vmatpush1.msra.mxu0 0.0
        %3800 = vmatprep.subr.mxu0 0.0
        %3801 = vmatpush1.msra.mxu0 0.0
        %3802 = vmatprep.subr.mxu0 0.0
        %3803 = vmatpush1.msra.mxu0 0.0
        %3804 = vmatprep.subr.mxu0 0.0
        %3805 = vmatpush1.msra.mxu0 0.0
        %3806 = vmatprep.subr.mxu0 0.0
        %3807 = vmatpush1.msra.mxu0 0.0
        %3808 = vmatprep.subr.mxu0 0.0
        %3809 = vmatpush1.msra.mxu0 0.0
        %3810 = vmatprep.subr.mxu0 0.0
        %3811 = vmatpush1.msra.mxu0 0.0
        %3812 = vmatprep.subr.mxu0 0.0
        %3813 = vmatpush1.msra.mxu0 0.0
        %3814 = vmatprep.subr.mxu0 0.0
        %3815 = vmatpush1.msra.mxu0 0.0
        %3816 = vmatprep.subr.mxu0 0.0
        %3817 = vmatpush1.msra.mxu0 0.0
        %3818 = vmatprep.subr.mxu0 0.0
        %3819 = vmatpush1.msra.mxu0 0.0
        %3820 = vmatprep.subr.mxu0 0.0
        %3821 = vmatpush1.msra.mxu0 0.0
        %3822 = vmatprep.subr.mxu0 0.0
        %3823 = vmatpush1.msra.mxu0 0.0
        %3824 = vmatprep.subr.mxu0 0.0
        %3825 = vmatpush1.msra.mxu0 0.0
        %3826 = vmatprep.subr.mxu0 0.0
        %3827 = vmatpush1.msra.mxu0 0.0
        %3828 = vmatprep.subr.mxu0 0.0
        %3829 = vmatpush1.msra.mxu0 0.0
        %3830 = vmatprep.subr.mxu0 0.0
        %3831 = vmatpush1.msra.mxu0 0.0
        %3832 = vmatprep.subr.mxu0 0.0
        %3833 = vmatpush1.msra.mxu0 0.0
        %3834 = vmatprep.subr.mxu0 0.0
        %3835 = vmatpush1.msra.mxu0 0.0
        %3836 = vmatprep.subr.mxu0 0.0
        %3837 = vmatpush1.msra.mxu0 0.0
        %3838 = vmatprep.subr.mxu0 0.0
        %3839 = vmatpush1.msra.mxu0 0.0
        %3840 = vmatprep.subr.mxu0 0.0
        %3841 = vmatpush1.msra.mxu0 0.0
        %3842 = vmatprep.subr.mxu0 0.0
        %3843 = vmatpush1.msra.mxu0 0.0
        %3844 = vmatprep.mubr.f32.mxu0 0.0
        %3845 = vmatmul.mubr.f32.gmra.mrb[0].mxu0 %v3776
        %v3846 = vpop.f32.mrb[0].mxu0
        %v3847 = vadd.f32 0.0, %v3846
        %v3848 = vpop.f32.mrb[0].mxu0
        %3849 = vdwg.mxu0
        %3850 = vrot.lane.b32.xlu0 %v2241, 104
        %v3851 = vpop.permute.xlu0 %3850
        %v3853 = vsel %vm1269, %v3618, 0
        %v3855 = vsel %vm1273, %v3851, 0
        %3857 = vmatprep.subr.mxu0 0.0
        %3858 = vmatpush1.msra.mxu0 %v3855
        %3859 = vmatprep.subr.mxu0 0.0
        %3860 = vmatpush1.msra.mxu0 0.0
        %3861 = vmatprep.subr.mxu0 0.0
        %3862 = vmatpush1.msra.mxu0 0.0
        %3863 = vmatprep.subr.mxu0 0.0
        %3864 = vmatpush1.msra.mxu0 0.0
        %3865 = vmatprep.subr.mxu0 0.0
        %3866 = vmatpush1.msra.mxu0 0.0
        %3867 = vmatprep.subr.mxu0 0.0
        %3868 = vmatpush1.msra.mxu0 0.0
        %3869 = vmatprep.subr.mxu0 0.0
        %3870 = vmatpush1.msra.mxu0 0.0
        %3871 = vmatprep.subr.mxu0 0.0
        %3872 = vmatpush1.msra.mxu0 0.0
        %3873 = vmatprep.subr.mxu0 0.0
        %3874 = vmatpush1.msra.mxu0 0.0
        %3875 = vmatprep.subr.mxu0 0.0
        %3876 = vmatpush1.msra.mxu0 0.0
        %3877 = vmatprep.subr.mxu0 0.0
        %3878 = vmatpush1.msra.mxu0 0.0
        %3879 = vmatprep.subr.mxu0 0.0
        %3880 = vmatpush1.msra.mxu0 0.0
        %3881 = vmatprep.subr.mxu0 0.0
        %3882 = vmatpush1.msra.mxu0 0.0
        %3883 = vmatprep.subr.mxu0 0.0
        %3884 = vmatpush1.msra.mxu0 0.0
        %3885 = vmatprep.subr.mxu0 0.0
        %3886 = vmatpush1.msra.mxu0 0.0
        %3887 = vmatprep.subr.mxu0 0.0
        %3888 = vmatpush1.msra.mxu0 0.0
        %3889 = vmatprep.subr.mxu0 0.0
        %3890 = vmatpush1.msra.mxu0 0.0
        %3891 = vmatprep.subr.mxu0 0.0
        %3892 = vmatpush1.msra.mxu0 0.0
        %3893 = vmatprep.subr.mxu0 0.0
        %3894 = vmatpush1.msra.mxu0 0.0
        %3895 = vmatprep.subr.mxu0 0.0
        %3896 = vmatpush1.msra.mxu0 0.0
        %3897 = vmatprep.subr.mxu0 0.0
        %3898 = vmatpush1.msra.mxu0 0.0
        %3899 = vmatprep.subr.mxu0 0.0
        %3900 = vmatpush1.msra.mxu0 0.0
        %3901 = vmatprep.subr.mxu0 0.0
        %3902 = vmatpush1.msra.mxu0 0.0
        %3903 = vmatprep.subr.mxu0 0.0
        %3904 = vmatpush1.msra.mxu0 0.0
        %3905 = vmatprep.subr.mxu0 0.0
        %3906 = vmatpush1.msra.mxu0 0.0
        %3907 = vmatprep.subr.mxu0 0.0
        %3908 = vmatpush1.msra.mxu0 0.0
        %3909 = vmatprep.subr.mxu0 0.0
        %3910 = vmatpush1.msra.mxu0 0.0
        %3911 = vmatprep.subr.mxu0 0.0
        %3912 = vmatpush1.msra.mxu0 0.0
        %3913 = vmatprep.subr.mxu0 0.0
        %3914 = vmatpush1.msra.mxu0 0.0
        %3915 = vmatprep.subr.mxu0 0.0
        %3916 = vmatpush1.msra.mxu0 0.0
        %3917 = vmatprep.subr.mxu0 0.0
        %3918 = vmatpush1.msra.mxu0 0.0
        %3919 = vmatprep.subr.mxu0 0.0
        %3920 = vmatpush1.msra.mxu0 0.0
        %3921 = vmatprep.mubr.f32.mxu0 0.0
        %3922 = vmatmul.mubr.f32.gmra.mrb[0].mxu0 %v3853
        %v3923 = vpop.f32.mrb[0].mxu0
        %v3924 = vadd.f32 0.0, %v3923
        %v3925 = vpop.f32.mrb[0].mxu0
        %3926 = vdwg.mxu0
        %v3931 = vcombine.low %v3693, %v3770
        %v3932 = vcombine.low %v3847, %v3924
        %v3934 = vunpack.c.l.s4 1983009808
        %v3935 = vunpack.c.0.s8 %v3934
        %v3936 = vlaneseq
        %v3937 = vshrl.u32 %v3936, 7
        %v3938 = vsub.s32 %v3935, %v3937
        %v3939 = vrot.slane %v3931, %v3938
        %v3941 = vunpack.c.l.s4 1983009808
        %v3942 = vunpack.c.0.s8 %v3941
        %v3943 = vlaneseq
        %v3944 = vshrl.u32 %v3943, 7
        %v3945 = vsub.s32 %v3942, %v3944
        %v3946 = vrot.slane %v3932, %v3945
        %v3947 = vcombine.low %v3939, %v3946
        %v3948 = vsel %vm927, %v3947, 0
        %3950 = vmatprep.subr.mxu0 0.0
        %3951 = vmatpush1.msra.mxu0 %v926
        %3952 = vmatprep.subr.mxu0 0.0
        %3953 = vmatpush1.msra.mxu0 0.0
        %3954 = vmatprep.subr.mxu0 0.0
        %3955 = vmatpush1.msra.mxu0 0.0
        %3956 = vmatprep.subr.mxu0 0.0
        %3957 = vmatpush1.msra.mxu0 0.0
        %3958 = vmatprep.subr.mxu0 0.0
        %3959 = vmatpush1.msra.mxu0 0.0
        %3960 = vmatprep.subr.mxu0 0.0
        %3961 = vmatpush1.msra.mxu0 0.0
        %3962 = vmatprep.subr.mxu0 0.0
        %3963 = vmatpush1.msra.mxu0 0.0
        %3964 = vmatprep.subr.mxu0 0.0
        %3965 = vmatpush1.msra.mxu0 0.0
        %3966 = vmatprep.subr.mxu0 0.0
        %3967 = vmatpush1.msra.mxu0 0.0
        %3968 = vmatprep.subr.mxu0 0.0
        %3969 = vmatpush1.msra.mxu0 0.0
        %3970 = vmatprep.subr.mxu0 0.0
        %3971 = vmatpush1.msra.mxu0 0.0
        %3972 = vmatprep.subr.mxu0 0.0
        %3973 = vmatpush1.msra.mxu0 0.0
        %3974 = vmatprep.subr.mxu0 0.0
        %3975 = vmatpush1.msra.mxu0 0.0
        %3976 = vmatprep.subr.mxu0 0.0
        %3977 = vmatpush1.msra.mxu0 0.0
        %3978 = vmatprep.subr.mxu0 0.0
        %3979 = vmatpush1.msra.mxu0 0.0
        %3980 = vmatprep.subr.mxu0 0.0
        %3981 = vmatpush1.msra.mxu0 0.0
        %3982 = vmatprep.subr.mxu0 0.0
        %3983 = vmatpush1.msra.mxu0 0.0
        %3984 = vmatprep.subr.mxu0 0.0
        %3985 = vmatpush1.msra.mxu0 0.0
        %3986 = vmatprep.subr.mxu0 0.0
        %3987 = vmatpush1.msra.mxu0 0.0
        %3988 = vmatprep.subr.mxu0 0.0
        %3989 = vmatpush1.msra.mxu0 0.0
        %3990 = vmatprep.subr.mxu0 0.0
        %3991 = vmatpush1.msra.mxu0 0.0
        %3992 = vmatprep.subr.mxu0 0.0
        %3993 = vmatpush1.msra.mxu0 0.0
        %3994 = vmatprep.subr.mxu0 0.0
        %3995 = vmatpush1.msra.mxu0 0.0
        %3996 = vmatprep.subr.mxu0 0.0
        %3997 = vmatpush1.msra.mxu0 0.0
        %3998 = vmatprep.subr.mxu0 0.0
        %3999 = vmatpush1.msra.mxu0 0.0
        %4000 = vmatprep.subr.mxu0 0.0
        %4001 = vmatpush1.msra.mxu0 0.0
        %4002 = vmatprep.subr.mxu0 0.0
        %4003 = vmatpush1.msra.mxu0 0.0
        %4004 = vmatprep.subr.mxu0 0.0
        %4005 = vmatpush1.msra.mxu0 0.0
        %4006 = vmatprep.subr.mxu0 0.0
        %4007 = vmatpush1.msra.mxu0 0.0
        %4008 = vmatprep.subr.mxu0 0.0
        %4009 = vmatpush1.msra.mxu0 0.0
        %4010 = vmatprep.subr.mxu0 0.0
        %4011 = vmatpush1.msra.mxu0 0.0
        %4012 = vmatprep.subr.mxu0 0.0
        %4013 = vmatpush1.msra.mxu0 0.0
        %4014 = vmatprep.mubr.f32.mxu0 0.0
        %4015 = vmatmul.mubr.f32.gmra.mrb[0].mxu0 %v3948
        %v4016 = vpop.f32.mrb[0].mxu0
        %v4017 = vadd.f32 0.0, %v4016
        %v4018 = vpop.f32.mrb[0].mxu0
        %4019 = vdwg.mxu0
        %v4020 = vadd.f32 %v3262, %v4017
        %v4021 = vld [vmem:[%s8] sm:$0x1]
        %v4023 = vlaneseq
        %v4024 = vshrl.u32 %v4023, 7
        %v4025 = vsub.s32 0, %v4024
        %v4026 = vrot.slane %v4021, %v4025
        %v4028 = vadd.f32 %v4020, %v4026
        %v4030 = vcombine.high %v4028, %v4028
        %v4032 = vunpack.c.l.s4 1983009808
        %v4033 = vunpack.c.0.s8 %v4032
        %v4034 = vlaneseq
        %v4035 = vshrl.u32 %v4034, 7
        %v4036 = vsub.s32 %v4033, %v4035
        %v4037 = vrot.slane %v4028, %v4036
        %v4039 = vunpack.c.l.s4 1983009808
        %v4040 = vunpack.c.0.s8 %v4039
        %v4041 = vlaneseq
        %v4042 = vshrl.u32 %v4041, 7
        %v4043 = vsub.s32 %v4040, %v4042
        %v4044 = vrot.slane %v4030, %v4043
        %v4045 = vcombine.high %v4037, %v4037
        %v4046 = vcombine.high %v4044, %v4044
        %v4051 = vadd.f32 %v598, %v4037
        %v4052 = vadd.f32 %v599, %v4045
        %v4053 = vadd.f32 %v600, %v4044
        %v4054 = vadd.f32 %v601, %v4046
        %v4055 = vld [vmem:[%s9] sm:$0x1]
        %v4056 = vld [vmem:[%s10] sm:$0x1]
        %v4061 = vcombine.low %v4051, %v4052
        %v4062 = vcombine.low %v4053, %v4054
        %v4064 = vunpack.c.l.s4 1983009808
        %v4065 = vunpack.c.0.s8 %v4064
        %v4066 = vlaneseq
        %v4067 = vshrl.u32 %v4066, 7
        %v4068 = vsub.s32 %v4065, %v4067
        %v4069 = vrot.slane %v4061, %v4068
        %v4071 = vunpack.c.l.s4 1983009808
        %v4072 = vunpack.c.0.s8 %v4071
        %v4073 = vlaneseq
        %v4074 = vshrl.u32 %v4073, 7
        %v4075 = vsub.s32 %v4072, %v4074
        %v4076 = vrot.slane %v4062, %v4075
        %v4077 = vcombine.low %v4069, %v4076
        %v4079 = vsel %vm642, %v4077, 0.0
        %4080 = vadd.xlane.f32.xlu0 %v4079
        %v4081 = vpop.xlane.xlu0 %4080
        %v4082 = vrcp.pop 32.0
        %v4083 = vmul.f32 %v4081, %v4082
        %v4086 = vunpack.c.l.s4 269488144
        %v4087 = vunpack.c.0.s8 %v4086
        %v4088 = vlaneseq
        %v4089 = vshrl.u32 %v4088, 7
        %v4090 = vsub.s32 %v4087, %v4089
        %v4091 = vrot.slane %v4083, %v4090
        %v4093 = vunpack.c.l.s4 842150450
        %v4094 = vunpack.c.0.s8 %v4093
        %v4095 = vlaneseq
        %v4096 = vshrl.u32 %v4095, 7
        %v4097 = vsub.s32 %v4094, %v4096
        %v4098 = vrot.slane %v4083, %v4097
        %v4100 = vunpack.c.l.s4 1414812756
        %v4101 = vunpack.c.0.s8 %v4100
        %v4102 = vlaneseq
        %v4103 = vshrl.u32 %v4102, 7
        %v4104 = vsub.s32 %v4101, %v4103
        %v4105 = vrot.slane %v4083, %v4104
        %v4107 = vunpack.c.l.s4 1987475062
        %v4108 = vunpack.c.0.s8 %v4107
        %v4109 = vlaneseq
        %v4110 = vshrl.u32 %v4109, 7
        %v4111 = vsub.s32 %v4108, %v4110
        %v4112 = vrot.slane %v4083, %v4111
        %v4117 = vsub.f32 %v4051, %v4091
        %v4118 = vsub.f32 %v4052, %v4098
        %v4119 = vsub.f32 %v4053, %v4105
        %v4120 = vsub.f32 %v4054, %v4112
        %v4121 = vmul.f32 %v4117, %v4117
        %v4122 = vmul.f32 %v4118, %v4118
        %v4123 = vmul.f32 %v4119, %v4119
        %v4124 = vmul.f32 %v4120, %v4120
        %v4129 = vcombine.low %v4121, %v4122
        %v4130 = vcombine.low %v4123, %v4124
        %v4132 = vunpack.c.l.s4 1983009808
        %v4133 = vunpack.c.0.s8 %v4132
        %v4134 = vlaneseq
        %v4135 = vshrl.u32 %v4134, 7
        %v4136 = vsub.s32 %v4133, %v4135
        %v4137 = vrot.slane %v4129, %v4136
        %v4139 = vunpack.c.l.s4 1983009808
        %v4140 = vunpack.c.0.s8 %v4139
        %v4141 = vlaneseq
        %v4142 = vshrl.u32 %v4141, 7
        %v4143 = vsub.s32 %v4140, %v4142
        %v4144 = vrot.slane %v4130, %v4143
        %v4145 = vcombine.low %v4137, %v4144
        %v4147 = vsel %vm642, %v4145, 0.0
        %4148 = vadd.xlane.f32.xlu0 %v4147
        %v4149 = vpop.xlane.xlu0 %4148
        %v4150 = vmul.f32 %v4149, %v4082
        %v4151 = vadd.f32 %v4150, 1e-05
        %v4152 = vrsqrt.pop %v4151
        %v4155 = vunpack.c.l.s4 269488144
        %v4156 = vunpack.c.0.s8 %v4155
        %v4157 = vlaneseq
        %v4158 = vshrl.u32 %v4157, 7
        %v4159 = vsub.s32 %v4156, %v4158
        %v4160 = vrot.slane %v4152, %v4159
        %v4162 = vunpack.c.l.s4 842150450
        %v4163 = vunpack.c.0.s8 %v4162
        %v4164 = vlaneseq
        %v4165 = vshrl.u32 %v4164, 7
        %v4166 = vsub.s32 %v4163, %v4165
        %v4167 = vrot.slane %v4152, %v4166
        %v4169 = vunpack.c.l.s4 1414812756
        %v4170 = vunpack.c.0.s8 %v4169
        %v4171 = vlaneseq
        %v4172 = vshrl.u32 %v4171, 7
        %v4173 = vsub.s32 %v4170, %v4172
        %v4174 = vrot.slane %v4152, %v4173
        %v4176 = vunpack.c.l.s4 1987475062
        %v4177 = vunpack.c.0.s8 %v4176
        %v4178 = vlaneseq
        %v4179 = vshrl.u32 %v4178, 7
        %v4180 = vsub.s32 %v4177, %v4179
        %v4181 = vrot.slane %v4152, %v4180
        %v4186 = vmul.f32 %v4117, %v4160
        %v4187 = vmul.f32 %v4118, %v4167
        %v4188 = vmul.f32 %v4119, %v4174
        %v4189 = vmul.f32 %v4120, %v4181
        %v4191 = vlaneseq
        %v4192 = vshrl.u32 %v4191, 7
        %v4193 = vsub.s32 0, %v4192
        %v4194 = vrot.slane %v4055, %v4193
        %v4195 = vcombine.high %v4194, %v4194
        %v4197 = vunpack.c.l.s4 1983009808
        %v4198 = vunpack.c.0.s8 %v4197
        %v4199 = vlaneseq
        %v4200 = vshrl.u32 %v4199, 7
        %v4201 = vsub.s32 %v4198, %v4200
        %v4202 = vrot.slane %v4194, %v4201
        %v4204 = vunpack.c.l.s4 1983009808
        %v4205 = vunpack.c.0.s8 %v4204
        %v4206 = vlaneseq
        %v4207 = vshrl.u32 %v4206, 7
        %v4208 = vsub.s32 %v4205, %v4207
        %v4209 = vrot.slane %v4195, %v4208
        %v4210 = vcombine.high %v4202, %v4202
        %v4211 = vcombine.high %v4209, %v4209
        %v4216 = vmul.f32 %v4186, %v4202
        %v4217 = vmul.f32 %v4187, %v4210
        %v4218 = vmul.f32 %v4188, %v4209
        %v4219 = vmul.f32 %v4189, %v4211
        %v4221 = vlaneseq
        %v4222 = vshrl.u32 %v4221, 7
        %v4223 = vsub.s32 0, %v4222
        %v4224 = vrot.slane %v4056, %v4223
        %v4225 = vcombine.high %v4224, %v4224
        %v4227 = vunpack.c.l.s4 1983009808
        %v4228 = vunpack.c.0.s8 %v4227
        %v4229 = vlaneseq
        %v4230 = vshrl.u32 %v4229, 7
        %v4231 = vsub.s32 %v4228, %v4230
        %v4232 = vrot.slane %v4224, %v4231
        %v4234 = vunpack.c.l.s4 1983009808
        %v4235 = vunpack.c.0.s8 %v4234
        %v4236 = vlaneseq
        %v4237 = vshrl.u32 %v4236, 7
        %v4238 = vsub.s32 %v4235, %v4237
        %v4239 = vrot.slane %v4225, %v4238
        %v4240 = vcombine.high %v4232, %v4232
        %v4241 = vcombine.high %v4239, %v4239
        %v4246 = vadd.f32 %v4216, %v4232
        %v4247 = vadd.f32 %v4217, %v4240
        %v4248 = vadd.f32 %v4218, %v4239
        %v4249 = vadd.f32 %v4219, %v4241
        %v4250 = vld [vmem:[#allocation7] sm:$0xff]
        %v4251 = vld [vmem:[#allocation7 + $0x8] sm:$0xff]
        %v4252 = vld [vmem:[#allocation7 + $0x10] sm:$0xff]
        %v4253 = vld [vmem:[#allocation7 + $0x18] sm:$0xff]
        %v4254 = vld [vmem:[%s13] sm:$0xff]
        %v4255 = vld [vmem:[%s13 + $0x8] sm:$0xff]
        %v4256 = vld [vmem:[%s13 + $0x10] sm:$0xff]
        %v4257 = vld [vmem:[%s13 + $0x18] sm:$0xff]
        %v4258 = vld [vmem:[%s13 + $0x20] sm:$0xff]
        %v4259 = vld [vmem:[%s13 + $0x28] sm:$0xff]
        %v4260 = vld [vmem:[%s13 + $0x30] sm:$0xff]
        %v4261 = vld [vmem:[%s13 + $0x38] sm:$0xff]
        %v4262 = vld [vmem:[%s12] sm:$0x1]
        %v4264 = vlaneseq
        %v4265 = vshrl.u32 %v4264, 7
        %v4266 = vsub.s32 0, %v4265
        %v4267 = vrot.slane %v4262, %v4266
        %v4273 = vcombine.low %v4246, %v4247
        %v4274 = vcombine.low %v4248, %v4249
        %v4276 = vunpack.c.l.s4 1983009808
        %v4277 = vunpack.c.0.s8 %v4276
        %v4278 = vlaneseq
        %v4279 = vshrl.u32 %v4278, 7
        %v4280 = vsub.s32 %v4277, %v4279
        %v4281 = vrot.slane %v4273, %v4280
        %v4283 = vunpack.c.l.s4 1983009808
        %v4284 = vunpack.c.0.s8 %v4283
        %v4285 = vlaneseq
        %v4286 = vshrl.u32 %v4285, 7
        %v4287 = vsub.s32 %v4284, %v4286
        %v4288 = vrot.slane %v4274, %v4287
        %v4289 = vcombine.low %v4281, %v4288
        %v4290 = vsel %vm642, %v4289, 0
        %4292 = vmatprep.subr.mxu0 0.0
        %4293 = vmatpush1.msra.mxu0 %v4250
        %4294 = vmatprep.subr.mxu0 0.0
        %4295 = vmatpush1.msra.mxu0 %v4251
        %4296 = vmatprep.subr.mxu0 0.0
        %4297 = vmatpush1.msra.mxu0 %v4252
        %4298 = vmatprep.subr.mxu0 0.0
        %4299 = vmatpush1.msra.mxu0 %v4253
        %4300 = vmatprep.subr.mxu0 0.0
        %4301 = vmatpush1.msra.mxu0 0.0
        %4302 = vmatprep.subr.mxu0 0.0
        %4303 = vmatpush1.msra.mxu0 0.0
        %4304 = vmatprep.subr.mxu0 0.0
        %4305 = vmatpush1.msra.mxu0 0.0
        %4306 = vmatprep.subr.mxu0 0.0
        %4307 = vmatpush1.msra.mxu0 0.0
        %4308 = vmatprep.subr.mxu0 0.0
        %4309 = vmatpush1.msra.mxu0 0.0
        %4310 = vmatprep.subr.mxu0 0.0
        %4311 = vmatpush1.msra.mxu0 0.0
        %4312 = vmatprep.subr.mxu0 0.0
        %4313 = vmatpush1.msra.mxu0 0.0
        %4314 = vmatprep.subr.mxu0 0.0
        %4315 = vmatpush1.msra.mxu0 0.0
        %4316 = vmatprep.subr.mxu0 0.0
        %4317 = vmatpush1.msra.mxu0 0.0
        %4318 = vmatprep.subr.mxu0 0.0
        %4319 = vmatpush1.msra.mxu0 0.0
        %4320 = vmatprep.subr.mxu0 0.0
        %4321 = vmatpush1.msra.mxu0 0.0
        %4322 = vmatprep.subr.mxu0 0.0
        %4323 = vmatpush1.msra.mxu0 0.0
        %4324 = vmatprep.subr.mxu0 0.0
        %4325 = vmatpush1.msra.mxu0 0.0
        %4326 = vmatprep.subr.mxu0 0.0
        %4327 = vmatpush1.msra.mxu0 0.0
        %4328 = vmatprep.subr.mxu0 0.0
        %4329 = vmatpush1.msra.mxu0 0.0
        %4330 = vmatprep.subr.mxu0 0.0
        %4331 = vmatpush1.msra.mxu0 0.0
        %4332 = vmatprep.subr.mxu0 0.0
        %4333 = vmatpush1.msra.mxu0 0.0
        %4334 = vmatprep.subr.mxu0 0.0
        %4335 = vmatpush1.msra.mxu0 0.0
        %4336 = vmatprep.subr.mxu0 0.0
        %4337 = vmatpush1.msra.mxu0 0.0
        %4338 = vmatprep.subr.mxu0 0.0
        %4339 = vmatpush1.msra.mxu0 0.0
        %4340 = vmatprep.subr.mxu0 0.0
        %4341 = vmatpush1.msra.mxu0 0.0
        %4342 = vmatprep.subr.mxu0 0.0
        %4343 = vmatpush1.msra.mxu0 0.0
        %4344 = vmatprep.subr.mxu0 0.0
        %4345 = vmatpush1.msra.mxu0 0.0
        %4346 = vmatprep.subr.mxu0 0.0
        %4347 = vmatpush1.msra.mxu0 0.0
        %4348 = vmatprep.subr.mxu0 0.0
        %4349 = vmatpush1.msra.mxu0 0.0
        %4350 = vmatprep.subr.mxu0 0.0
        %4351 = vmatpush1.msra.mxu0 0.0
        %4352 = vmatprep.subr.mxu0 0.0
        %4353 = vmatpush1.msra.mxu0 0.0
        %4354 = vmatprep.subr.mxu0 0.0
        %4355 = vmatpush1.msra.mxu0 0.0
        %4356 = vmatprep.mubr.f32.mxu0 0.0
        %4357 = vmatmul.mubr.f32.gmra.mrb[0].mxu0 %v4290
        %v4358 = vpop.f32.mrb[0].mxu0
        %v4359 = vadd.f32 %v4267, %v4358
        %v4360 = vpop.f32.mrb[0].mxu0
        %4361 = vdwg.mxu0
        %v4362 = vmax.f32 %v4359, 0.0
        %v4363 = vld [vmem:[%s14] sm:$0x1]
        %v4365 = vlaneseq
        %v4366 = vshrl.u32 %v4365, 7
        %v4367 = vsub.s32 0, %v4366
        %v4368 = vrot.slane %v4363, %v4367
        %vm4370 = vcmask 523264
        %v4372 = vsel %vm4370, %v4362, 0
        %4374 = vmatprep.subr.mxu0 0.0
        %4375 = vmatpush1.msra.mxu0 %v4254
        %4376 = vmatprep.subr.mxu0 0.0
        %4377 = vmatpush1.msra.mxu0 %v4255
        %4378 = vmatprep.subr.mxu0 0.0
        %4379 = vmatpush1.msra.mxu0 %v4256
        %4380 = vmatprep.subr.mxu0 0.0
        %4381 = vmatpush1.msra.mxu0 %v4257
        %4382 = vmatprep.subr.mxu0 0.0
        %4383 = vmatpush1.msra.mxu0 %v4258
        %4384 = vmatprep.subr.mxu0 0.0
        %4385 = vmatpush1.msra.mxu0 %v4259
        %4386 = vmatprep.subr.mxu0 0.0
        %4387 = vmatpush1.msra.mxu0 %v4260
        %4388 = vmatprep.subr.mxu0 0.0
        %4389 = vmatpush1.msra.mxu0 %v4261
        %4390 = vmatprep.subr.mxu0 0.0
        %4391 = vmatpush1.msra.mxu0 0.0
        %4392 = vmatprep.subr.mxu0 0.0
        %4393 = vmatpush1.msra.mxu0 0.0
        %4394 = vmatprep.subr.mxu0 0.0
        %4395 = vmatpush1.msra.mxu0 0.0
        %4396 = vmatprep.subr.mxu0 0.0
        %4397 = vmatpush1.msra.mxu0 0.0
        %4398 = vmatprep.subr.mxu0 0.0
        %4399 = vmatpush1.msra.mxu0 0.0
        %4400 = vmatprep.subr.mxu0 0.0
        %4401 = vmatpush1.msra.mxu0 0.0
        %4402 = vmatprep.subr.mxu0 0.0
        %4403 = vmatpush1.msra.mxu0 0.0
        %4404 = vmatprep.subr.mxu0 0.0
        %4405 = vmatpush1.msra.mxu0 0.0
        %4406 = vmatprep.subr.mxu0 0.0
        %4407 = vmatpush1.msra.mxu0 0.0
        %4408 = vmatprep.subr.mxu0 0.0
        %4409 = vmatpush1.msra.mxu0 0.0
        %4410 = vmatprep.subr.mxu0 0.0
        %4411 = vmatpush1.msra.mxu0 0.0
        %4412 = vmatprep.subr.mxu0 0.0
        %4413 = vmatpush1.msra.mxu0 0.0
        %4414 = vmatprep.subr.mxu0 0.0
        %4415 = vmatpush1.msra.mxu0 0.0
        %4416 = vmatprep.subr.mxu0 0.0
        %4417 = vmatpush1.msra.mxu0 0.0
        %4418 = vmatprep.subr.mxu0 0.0
        %4419 = vmatpush1.msra.mxu0 0.0
        %4420 = vmatprep.subr.mxu0 0.0
        %4421 = vmatpush1.msra.mxu0 0.0
        %4422 = vmatprep.subr.mxu0 0.0
        %4423 = vmatpush1.msra.mxu0 0.0
        %4424 = vmatprep.subr.mxu0 0.0
        %4425 = vmatpush1.msra.mxu0 0.0
        %4426 = vmatprep.subr.mxu0 0.0
        %4427 = vmatpush1.msra.mxu0 0.0
        %4428 = vmatprep.subr.mxu0 0.0
        %4429 = vmatpush1.msra.mxu0 0.0
        %4430 = vmatprep.subr.mxu0 0.0
        %4431 = vmatpush1.msra.mxu0 0.0
        %4432 = vmatprep.subr.mxu0 0.0
        %4433 = vmatpush1.msra.mxu0 0.0
        %4434 = vmatprep.subr.mxu0 0.0
        %4435 = vmatpush1.msra.mxu0 0.0
        %4436 = vmatprep.subr.mxu0 0.0
        %4437 = vmatpush1.msra.mxu0 0.0
        %4438 = vmatprep.mubr.f32.mxu0 0.0
        %4439 = vmatmul.mubr.f32.gmra.mrb[0].mxu0 %v4372
        %v4440 = vpop.f32.mrb[0].mxu0
        %v4441 = vadd.f32 %v4368, %v4440
        %v4442 = vpop.f32.mrb[0].mxu0
        %4443 = vdwg.mxu0
        %v4445 = vcombine.high %v4441, %v4441
        %v4447 = vunpack.c.l.s4 1983009808
        %v4448 = vunpack.c.0.s8 %v4447
        %v4449 = vlaneseq
        %v4450 = vshrl.u32 %v4449, 7
        %v4451 = vsub.s32 %v4448, %v4450
        %v4452 = vrot.slane %v4441, %v4451
        %v4454 = vunpack.c.l.s4 1983009808
        %v4455 = vunpack.c.0.s8 %v4454
        %v4456 = vlaneseq
        %v4457 = vshrl.u32 %v4456, 7
        %v4458 = vsub.s32 %v4455, %v4457
        %v4459 = vrot.slane %v4445, %v4458
        %v4460 = vcombine.high %v4452, %v4452
        %v4461 = vcombine.high %v4459, %v4459
        %v4466 = vadd.f32 %v4246, %v4452
        %v4467 = vadd.f32 %v4247, %v4460
        %v4468 = vadd.f32 %v4248, %v4459
        %v4469 = vadd.f32 %v4249, %v4461
        %v4470 = vld [vmem:[%s15] sm:$0x1]
        %v4471 = vld [vmem:[%s16] sm:$0x1]
        %v4476 = vcombine.low %v4466, %v4467
        %v4477 = vcombine.low %v4468, %v4469
        %v4479 = vunpack.c.l.s4 1983009808
        %v4480 = vunpack.c.0.s8 %v4479
        %v4481 = vlaneseq
        %v4482 = vshrl.u32 %v4481, 7
        %v4483 = vsub.s32 %v4480, %v4482
        %v4484 = vrot.slane %v4476, %v4483
        %v4486 = vunpack.c.l.s4 1983009808
        %v4487 = vunpack.c.0.s8 %v4486
        %v4488 = vlaneseq
        %v4489 = vshrl.u32 %v4488, 7
        %v4490 = vsub.s32 %v4487, %v4489
        %v4491 = vrot.slane %v4477, %v4490
        %v4492 = vcombine.low %v4484, %v4491
        %v4494 = vsel %vm642, %v4492, 0.0
        %4495 = vadd.xlane.f32.xlu0 %v4494
        %v4496 = vpop.xlane.xlu0 %4495
        %v4497 = vmul.f32 %v4496, %v4082
        %v4500 = vunpack.c.l.s4 269488144
        %v4501 = vunpack.c.0.s8 %v4500
        %v4502 = vlaneseq
        %v4503 = vshrl.u32 %v4502, 7
        %v4504 = vsub.s32 %v4501, %v4503
        %v4505 = vrot.slane %v4497, %v4504
        %v4507 = vunpack.c.l.s4 842150450
        %v4508 = vunpack.c.0.s8 %v4507
        %v4509 = vlaneseq
        %v4510 = vshrl.u32 %v4509, 7
        %v4511 = vsub.s32 %v4508, %v4510
        %v4512 = vrot.slane %v4497, %v4511
        %v4514 = vunpack.c.l.s4 1414812756
        %v4515 = vunpack.c.0.s8 %v4514
        %v4516 = vlaneseq
        %v4517 = vshrl.u32 %v4516, 7
        %v4518 = vsub.s32 %v4515, %v4517
        %v4519 = vrot.slane %v4497, %v4518
        %v4521 = vunpack.c.l.s4 1987475062
        %v4522 = vunpack.c.0.s8 %v4521
        %v4523 = vlaneseq
        %v4524 = vshrl.u32 %v4523, 7
        %v4525 = vsub.s32 %v4522, %v4524
        %v4526 = vrot.slane %v4497, %v4525
        %v4531 = vsub.f32 %v4466, %v4505
        %v4532 = vsub.f32 %v4467, %v4512
        %v4533 = vsub.f32 %v4468, %v4519
        %v4534 = vsub.f32 %v4469, %v4526
        %v4535 = vmul.f32 %v4531, %v4531
        %v4536 = vmul.f32 %v4532, %v4532
        %v4537 = vmul.f32 %v4533, %v4533
        %v4538 = vmul.f32 %v4534, %v4534
        %v4543 = vcombine.low %v4535, %v4536
        %v4544 = vcombine.low %v4537, %v4538
        %v4546 = vunpack.c.l.s4 1983009808
        %v4547 = vunpack.c.0.s8 %v4546
        %v4548 = vlaneseq
        %v4549 = vshrl.u32 %v4548, 7
        %v4550 = vsub.s32 %v4547, %v4549
        %v4551 = vrot.slane %v4543, %v4550
        %v4553 = vunpack.c.l.s4 1983009808
        %v4554 = vunpack.c.0.s8 %v4553
        %v4555 = vlaneseq
        %v4556 = vshrl.u32 %v4555, 7
        %v4557 = vsub.s32 %v4554, %v4556
        %v4558 = vrot.slane %v4544, %v4557
        %v4559 = vcombine.low %v4551, %v4558
        %v4561 = vsel %vm642, %v4559, 0.0
        %4562 = vadd.xlane.f32.xlu0 %v4561
        %v4563 = vpop.xlane.xlu0 %4562
        %v4564 = vmul.f32 %v4563, %v4082
        %v4565 = vadd.f32 %v4564, 1e-05
        %v4566 = vrsqrt.pop %v4565
        %v4569 = vunpack.c.l.s4 269488144
        %v4570 = vunpack.c.0.s8 %v4569
        %v4571 = vlaneseq
        %v4572 = vshrl.u32 %v4571, 7
        %v4573 = vsub.s32 %v4570, %v4572
        %v4574 = vrot.slane %v4566, %v4573
        %v4576 = vunpack.c.l.s4 842150450
        %v4577 = vunpack.c.0.s8 %v4576
        %v4578 = vlaneseq
        %v4579 = vshrl.u32 %v4578, 7
        %v4580 = vsub.s32 %v4577, %v4579
        %v4581 = vrot.slane %v4566, %v4580
        %v4583 = vunpack.c.l.s4 1414812756
        %v4584 = vunpack.c.0.s8 %v4583
        %v4585 = vlaneseq
        %v4586 = vshrl.u32 %v4585, 7
        %v4587 = vsub.s32 %v4584, %v4586
        %v4588 = vrot.slane %v4566, %v4587
        %v4590 = vunpack.c.l.s4 1987475062
        %v4591 = vunpack.c.0.s8 %v4590
        %v4592 = vlaneseq
        %v4593 = vshrl.u32 %v4592, 7
        %v4594 = vsub.s32 %v4591, %v4593
        %v4595 = vrot.slane %v4566, %v4594
        %v4600 = vmul.f32 %v4531, %v4574
        %v4601 = vmul.f32 %v4532, %v4581
        %v4602 = vmul.f32 %v4533, %v4588
        %v4603 = vmul.f32 %v4534, %v4595
        %v4605 = vlaneseq
        %v4606 = vshrl.u32 %v4605, 7
        %v4607 = vsub.s32 0, %v4606
        %v4608 = vrot.slane %v4470, %v4607
        %v4609 = vcombine.high %v4608, %v4608
        %v4611 = vunpack.c.l.s4 1983009808
        %v4612 = vunpack.c.0.s8 %v4611
        %v4613 = vlaneseq
        %v4614 = vshrl.u32 %v4613, 7
        %v4615 = vsub.s32 %v4612, %v4614
        %v4616 = vrot.slane %v4608, %v4615
        %v4618 = vunpack.c.l.s4 1983009808
        %v4619 = vunpack.c.0.s8 %v4618
        %v4620 = vlaneseq
        %v4621 = vshrl.u32 %v4620, 7
        %v4622 = vsub.s32 %v4619, %v4621
        %v4623 = vrot.slane %v4609, %v4622
        %v4624 = vcombine.high %v4616, %v4616
        %v4625 = vcombine.high %v4623, %v4623
        %v4630 = vmul.f32 %v4600, %v4616
        %v4631 = vmul.f32 %v4601, %v4624
        %v4632 = vmul.f32 %v4602, %v4623
        %v4633 = vmul.f32 %v4603, %v4625
        %v4635 = vlaneseq
        %v4636 = vshrl.u32 %v4635, 7
        %v4637 = vsub.s32 0, %v4636
        %v4638 = vrot.slane %v4471, %v4637
        %v4639 = vcombine.high %v4638, %v4638
        %v4641 = vunpack.c.l.s4 1983009808
        %v4642 = vunpack.c.0.s8 %v4641
        %v4643 = vlaneseq
        %v4644 = vshrl.u32 %v4643, 7
        %v4645 = vsub.s32 %v4642, %v4644
        %v4646 = vrot.slane %v4638, %v4645
        %v4648 = vunpack.c.l.s4 1983009808
        %v4649 = vunpack.c.0.s8 %v4648
        %v4650 = vlaneseq
        %v4651 = vshrl.u32 %v4650, 7
        %v4652 = vsub.s32 %v4649, %v4651
        %v4653 = vrot.slane %v4639, %v4652
        %v4654 = vcombine.high %v4646, %v4646
        %v4655 = vcombine.high %v4653, %v4653
        %v4660 = vadd.f32 %v4630, %v4646
        %v4661 = vadd.f32 %v4631, %v4654
        %v4662 = vadd.f32 %v4632, %v4653
        %v4663 = vadd.f32 %v4633, %v4655
        %s4664 = scalar_lea.vmem %s1, 32
        %v4665 = vld [vmem:[%s4664] sm:$0xff]
        %v4666 = vld [vmem:[%s4664 + $0x8] sm:$0xff]
        %v4667 = vld [vmem:[%s4664 + $0x10] sm:$0xff]
        %v4668 = vld [vmem:[%s4664 + $0x18] sm:$0xff]
        %s4669 = scalar_lea.vmem %s2, 32
        %v4670 = vld [vmem:[%s4669] sm:$0xff]
        %v4671 = vld [vmem:[%s4669 + $0x8] sm:$0xff]
        %v4672 = vld [vmem:[%s4669 + $0x10] sm:$0xff]
        %v4673 = vld [vmem:[%s4669 + $0x18] sm:$0xff]
        %s4674 = scalar_lea.vmem %s3, 32
        %v4675 = vld [vmem:[%s4674] sm:$0xff]
        %v4676 = vld [vmem:[%s4674 + $0x8] sm:$0xff]
        %v4677 = vld [vmem:[%s4674 + $0x10] sm:$0xff]
        %v4678 = vld [vmem:[%s4674 + $0x18] sm:$0xff]
        %s4679 = scalar_lea.vmem %s4, 1
        %v4680 = vld [vmem:[%s4679] sm:$0x1]
        %v4682 = vlaneseq
        %v4683 = vshrl.u32 %v4682, 7
        %v4684 = vsub.s32 0, %v4683
        %v4685 = vrot.slane %v4680, %v4684
        %v4691 = vcombine.low %v4660, %v4661
        %v4692 = vcombine.low %v4662, %v4663
        %v4694 = vunpack.c.l.s4 1983009808
        %v4695 = vunpack.c.0.s8 %v4694
        %v4696 = vlaneseq
        %v4697 = vshrl.u32 %v4696, 7
        %v4698 = vsub.s32 %v4695, %v4697
        %v4699 = vrot.slane %v4691, %v4698
        %v4701 = vunpack.c.l.s4 1983009808
        %v4702 = vunpack.c.0.s8 %v4701
        %v4703 = vlaneseq
        %v4704 = vshrl.u32 %v4703, 7
        %v4705 = vsub.s32 %v4702, %v4704
        %v4706 = vrot.slane %v4692, %v4705
        %v4707 = vcombine.low %v4699, %v4706
        %v4708 = vsel %vm642, %v4707, 0
        %4710 = vmatprep.subr.mxu0 0.0
        %4711 = vmatpush1.msra.mxu0 %v4665
        %4712 = vmatprep.subr.mxu0 0.0
        %4713 = vmatpush1.msra.mxu0 %v4666
        %4714 = vmatprep.subr.mxu0 0.0
        %4715 = vmatpush1.msra.mxu0 %v4667
        %4716 = vmatprep.subr.mxu0 0.0
        %4717 = vmatpush1.msra.mxu0 %v4668
        %4718 = vmatprep.subr.mxu0 0.0
        %4719 = vmatpush1.msra.mxu0 0.0
        %4720 = vmatprep.subr.mxu0 0.0
        %4721 = vmatpush1.msra.mxu0 0.0
        %4722 = vmatprep.subr.mxu0 0.0
        %4723 = vmatpush1.msra.mxu0 0.0
        %4724 = vmatprep.subr.mxu0 0.0
        %4725 = vmatpush1.msra.mxu0 0.0
        %4726 = vmatprep.subr.mxu0 0.0
        %4727 = vmatpush1.msra.mxu0 0.0
        %4728 = vmatprep.subr.mxu0 0.0
        %4729 = vmatpush1.msra.mxu0 0.0
        %4730 = vmatprep.subr.mxu0 0.0
        %4731 = vmatpush1.msra.mxu0 0.0
        %4732 = vmatprep.subr.mxu0 0.0
        %4733 = vmatpush1.msra.mxu0 0.0
        %4734 = vmatprep.subr.mxu0 0.0
        %4735 = vmatpush1.msra.mxu0 0.0
        %4736 = vmatprep.subr.mxu0 0.0
        %4737 = vmatpush1.msra.mxu0 0.0
        %4738 = vmatprep.subr.mxu0 0.0
        %4739 = vmatpush1.msra.mxu0 0.0
        %4740 = vmatprep.subr.mxu0 0.0
        %4741 = vmatpush1.msra.mxu0 0.0
        %4742 = vmatprep.subr.mxu0 0.0
        %4743 = vmatpush1.msra.mxu0 0.0
        %4744 = vmatprep.subr.mxu0 0.0
        %4745 = vmatpush1.msra.mxu0 0.0
        %4746 = vmatprep.subr.mxu0 0.0
        %4747 = vmatpush1.msra.mxu0 0.0
        %4748 = vmatprep.subr.mxu0 0.0
        %4749 = vmatpush1.msra.mxu0 0.0
        %4750 = vmatprep.subr.mxu0 0.0
        %4751 = vmatpush1.msra.mxu0 0.0
        %4752 = vmatprep.subr.mxu0 0.0
        %4753 = vmatpush1.msra.mxu0 0.0
        %4754 = vmatprep.subr.mxu0 0.0
        %4755 = vmatpush1.msra.mxu0 0.0
        %4756 = vmatprep.subr.mxu0 0.0
        %4757 = vmatpush1.msra.mxu0 0.0
        %4758 = vmatprep.subr.mxu0 0.0
        %4759 = vmatpush1.msra.mxu0 0.0
        %4760 = vmatprep.subr.mxu0 0.0
        %4761 = vmatpush1.msra.mxu0 0.0
        %4762 = vmatprep.subr.mxu0 0.0
        %4763 = vmatpush1.msra.mxu0 0.0
        %4764 = vmatprep.subr.mxu0 0.0
        %4765 = vmatpush1.msra.mxu0 0.0
        %4766 = vmatprep.subr.mxu0 0.0
        %4767 = vmatpush1.msra.mxu0 0.0
        %4768 = vmatprep.subr.mxu0 0.0
        %4769 = vmatpush1.msra.mxu0 0.0
        %4770 = vmatprep.subr.mxu0 0.0
        %4771 = vmatpush1.msra.mxu0 0.0
        %4772 = vmatprep.subr.mxu0 0.0
        %4773 = vmatpush1.msra.mxu0 0.0
        %4774 = vmatprep.mubr.f32.mxu0 0.0
        %4775 = vmatmul.mubr.f32.gmra.mrb[0].mxu0 %v4708
        %v4776 = vpop.f32.mrb[0].mxu0
        %v4777 = vadd.f32 %v4685, %v4776
        %v4778 = vpop.f32.mrb[0].mxu0
        %4779 = vdwg.mxu0
        %s4780 = scalar_lea.vmem %s5, 1
        %v4781 = vld [vmem:[%s4780] sm:$0x1]
        %v4783 = vlaneseq
        %v4784 = vshrl.u32 %v4783, 7
        %v4785 = vsub.s32 0, %v4784
        %v4786 = vrot.slane %v4781, %v4785
        %4788 = vmatprep.subr.mxu0 0.0
        %4789 = vmatpush1.msra.mxu0 %v4670
        %4790 = vmatprep.subr.mxu0 0.0
        %4791 = vmatpush1.msra.mxu0 %v4671
        %4792 = vmatprep.subr.mxu0 0.0
        %4793 = vmatpush1.msra.mxu0 %v4672
        %4794 = vmatprep.subr.mxu0 0.0
        %4795 = vmatpush1.msra.mxu0 %v4673
        %4796 = vmatprep.subr.mxu0 0.0
        %4797 = vmatpush1.msra.mxu0 0.0
        %4798 = vmatprep.subr.mxu0 0.0
        %4799 = vmatpush1.msra.mxu0 0.0
        %4800 = vmatprep.subr.mxu0 0.0
        %4801 = vmatpush1.msra.mxu0 0.0
        %4802 = vmatprep.subr.mxu0 0.0
        %4803 = vmatpush1.msra.mxu0 0.0
        %4804 = vmatprep.subr.mxu0 0.0
        %4805 = vmatpush1.msra.mxu0 0.0
        %4806 = vmatprep.subr.mxu0 0.0
        %4807 = vmatpush1.msra.mxu0 0.0
        %4808 = vmatprep.subr.mxu0 0.0
        %4809 = vmatpush1.msra.mxu0 0.0
        %4810 = vmatprep.subr.mxu0 0.0
        %4811 = vmatpush1.msra.mxu0 0.0
        %4812 = vmatprep.subr.mxu0 0.0
        %4813 = vmatpush1.msra.mxu0 0.0
        %4814 = vmatprep.subr.mxu0 0.0
        %4815 = vmatpush1.msra.mxu0 0.0
        %4816 = vmatprep.subr.mxu0 0.0
        %4817 = vmatpush1.msra.mxu0 0.0
        %4818 = vmatprep.subr.mxu0 0.0
        %4819 = vmatpush1.msra.mxu0 0.0
        %4820 = vmatprep.subr.mxu0 0.0
        %4821 = vmatpush1.msra.mxu0 0.0
        %4822 = vmatprep.subr.mxu0 0.0
        %4823 = vmatpush1.msra.mxu0 0.0
        %4824 = vmatprep.subr.mxu0 0.0
        %4825 = vmatpush1.msra.mxu0 0.0
        %4826 = vmatprep.subr.mxu0 0.0
        %4827 = vmatpush1.msra.mxu0 0.0
        %4828 = vmatprep.subr.mxu0 0.0
        %4829 = vmatpush1.msra.mxu0 0.0
        %4830 = vmatprep.subr.mxu0 0.0
        %4831 = vmatpush1.msra.mxu0 0.0
        %4832 = vmatprep.subr.mxu0 0.0
        %4833 = vmatpush1.msra.mxu0 0.0
        %4834 = vmatprep.subr.mxu0 0.0
        %4835 = vmatpush1.msra.mxu0 0.0
        %4836 = vmatprep.subr.mxu0 0.0
        %4837 = vmatpush1.msra.mxu0 0.0
        %4838 = vmatprep.subr.mxu0 0.0
        %4839 = vmatpush1.msra.mxu0 0.0
        %4840 = vmatprep.subr.mxu0 0.0
        %4841 = vmatpush1.msra.mxu0 0.0
        %4842 = vmatprep.subr.mxu0 0.0
        %4843 = vmatpush1.msra.mxu0 0.0
        %4844 = vmatprep.subr.mxu0 0.0
        %4845 = vmatpush1.msra.mxu0 0.0
        %4846 = vmatprep.subr.mxu0 0.0
        %4847 = vmatpush1.msra.mxu0 0.0
        %4848 = vmatprep.subr.mxu0 0.0
        %4849 = vmatpush1.msra.mxu0 0.0
        %4850 = vmatprep.subr.mxu0 0.0
        %4851 = vmatpush1.msra.mxu0 0.0
        %4852 = vmatprep.mubr.f32.mxu0 0.0
        %4853 = vmatmul.mubr.f32.gmra.mrb[0].mxu0 %v4708
        %v4854 = vpop.f32.mrb[0].mxu0
        %v4855 = vadd.f32 %v4786, %v4854
        %v4856 = vpop.f32.mrb[0].mxu0
        %4857 = vdwg.mxu0
        %s4858 = scalar_lea.vmem %s6, 1
        %v4859 = vld [vmem:[%s4858] sm:$0x1]
        %v4861 = vlaneseq
        %v4862 = vshrl.u32 %v4861, 7
        %v4863 = vsub.s32 0, %v4862
        %v4864 = vrot.slane %v4859, %v4863
        %4866 = vmatprep.subr.mxu0 0.0
        %4867 = vmatpush1.msra.mxu0 %v4675
        %4868 = vmatprep.subr.mxu0 0.0
        %4869 = vmatpush1.msra.mxu0 %v4676
        %4870 = vmatprep.subr.mxu0 0.0
        %4871 = vmatpush1.msra.mxu0 %v4677
        %4872 = vmatprep.subr.mxu0 0.0
        %4873 = vmatpush1.msra.mxu0 %v4678
        %4874 = vmatprep.subr.mxu0 0.0
        %4875 = vmatpush1.msra.mxu0 0.0
        %4876 = vmatprep.subr.mxu0 0.0
        %4877 = vmatpush1.msra.mxu0 0.0
        %4878 = vmatprep.subr.mxu0 0.0
        %4879 = vmatpush1.msra.mxu0 0.0
        %4880 = vmatprep.subr.mxu0 0.0
        %4881 = vmatpush1.msra.mxu0 0.0
        %4882 = vmatprep.subr.mxu0 0.0
        %4883 = vmatpush1.msra.mxu0 0.0
        %4884 = vmatprep.subr.mxu0 0.0
        %4885 = vmatpush1.msra.mxu0 0.0
        %4886 = vmatprep.subr.mxu0 0.0
        %4887 = vmatpush1.msra.mxu0 0.0
        %4888 = vmatprep.subr.mxu0 0.0
        %4889 = vmatpush1.msra.mxu0 0.0
        %4890 = vmatprep.subr.mxu0 0.0
        %4891 = vmatpush1.msra.mxu0 0.0
        %4892 = vmatprep.subr.mxu0 0.0
        %4893 = vmatpush1.msra.mxu0 0.0
        %4894 = vmatprep.subr.mxu0 0.0
        %4895 = vmatpush1.msra.mxu0 0.0
        %4896 = vmatprep.subr.mxu0 0.0
        %4897 = vmatpush1.msra.mxu0 0.0
        %4898 = vmatprep.subr.mxu0 0.0
        %4899 = vmatpush1.msra.mxu0 0.0
        %4900 = vmatprep.subr.mxu0 0.0
        %4901 = vmatpush1.msra.mxu0 0.0
        %4902 = vmatprep.subr.mxu0 0.0
        %4903 = vmatpush1.msra.mxu0 0.0
        %4904 = vmatprep.subr.mxu0 0.0
        %4905 = vmatpush1.msra.mxu0 0.0
        %4906 = vmatprep.subr.mxu0 0.0
        %4907 = vmatpush1.msra.mxu0 0.0
        %4908 = vmatprep.subr.mxu0 0.0
        %4909 = vmatpush1.msra.mxu0 0.0
        %4910 = vmatprep.subr.mxu0 0.0
        %4911 = vmatpush1.msra.mxu0 0.0
        %4912 = vmatprep.subr.mxu0 0.0
        %4913 = vmatpush1.msra.mxu0 0.0
        %4914 = vmatprep.subr.mxu0 0.0
        %4915 = vmatpush1.msra.mxu0 0.0
        %4916 = vmatprep.subr.mxu0 0.0
        %4917 = vmatpush1.msra.mxu0 0.0
        %4918 = vmatprep.subr.mxu0 0.0
        %4919 = vmatpush1.msra.mxu0 0.0
        %4920 = vmatprep.subr.mxu0 0.0
        %4921 = vmatpush1.msra.mxu0 0.0
        %4922 = vmatprep.subr.mxu0 0.0
        %4923 = vmatpush1.msra.mxu0 0.0
        %4924 = vmatprep.subr.mxu0 0.0
        %4925 = vmatpush1.msra.mxu0 0.0
        %4926 = vmatprep.subr.mxu0 0.0
        %4927 = vmatpush1.msra.mxu0 0.0
        %4928 = vmatprep.subr.mxu0 0.0
        %4929 = vmatpush1.msra.mxu0 0.0
        %4930 = vmatprep.mubr.f32.mxu0 0.0
        %4931 = vmatmul.mubr.f32.gmra.mrb[0].mxu0 %v4708
        %v4932 = vpop.f32.mrb[0].mxu0
        %v4933 = vadd.f32 %v4864, %v4932
        %v4934 = vpop.f32.mrb[0].mxu0
        %4935 = vdwg.mxu0
        %v4937 = vcombine.high %v4777, %v4777
        %v4939 = vunpack.c.l.s4 1983009808
        %v4940 = vunpack.c.0.s8 %v4939
        %v4941 = vlaneseq
        %v4942 = vshrl.u32 %v4941, 7
        %v4943 = vsub.s32 %v4940, %v4942
        %v4944 = vrot.slane %v4777, %v4943
        %v4946 = vunpack.c.l.s4 1983009808
        %v4947 = vunpack.c.0.s8 %v4946
        %v4948 = vlaneseq
        %v4949 = vshrl.u32 %v4948, 7
        %v4950 = vsub.s32 %v4947, %v4949
        %v4951 = vrot.slane %v4937, %v4950
        %v4952 = vcombine.high %v4944, %v4944
        %v4953 = vcombine.high %v4951, %v4951
        %v4955 = vcombine.high %v4855, %v4855
        %v4957 = vunpack.c.l.s4 1983009808
        %v4958 = vunpack.c.0.s8 %v4957
        %v4959 = vlaneseq
        %v4960 = vshrl.u32 %v4959, 7
        %v4961 = vsub.s32 %v4958, %v4960
        %v4962 = vrot.slane %v4855, %v4961
        %v4964 = vunpack.c.l.s4 1983009808
        %v4965 = vunpack.c.0.s8 %v4964
        %v4966 = vlaneseq
        %v4967 = vshrl.u32 %v4966, 7
        %v4968 = vsub.s32 %v4965, %v4967
        %v4969 = vrot.slane %v4955, %v4968
        %v4970 = vcombine.high %v4962, %v4962
        %v4971 = vcombine.high %v4969, %v4969
        %v4973 = vcombine.high %v4933, %v4933
        %v4975 = vunpack.c.l.s4 1983009808
        %v4976 = vunpack.c.0.s8 %v4975
        %v4977 = vlaneseq
        %v4978 = vshrl.u32 %v4977, 7
        %v4979 = vsub.s32 %v4976, %v4978
        %v4980 = vrot.slane %v4933, %v4979
        %v4982 = vunpack.c.l.s4 1983009808
        %v4983 = vunpack.c.0.s8 %v4982
        %v4984 = vlaneseq
        %v4985 = vshrl.u32 %v4984, 7
        %v4986 = vsub.s32 %v4983, %v4985
        %v4987 = vrot.slane %v4973, %v4986
        %v4988 = vcombine.high %v4980, %v4980
        %v4989 = vcombine.high %v4987, %v4987
        %s4990 = scalar_lea.vmem [#allocation5], 32
        %v4991 = vld [vmem:[%s4990] sm:$0xff]
        %v4992 = vld [vmem:[%s4990 + $0x8] sm:$0xff]
        %v4993 = vld [vmem:[%s4990 + $0x10] sm:$0xff]
        %v4994 = vld [vmem:[%s4990 + $0x18] sm:$0xff]
        %v4995 = vsel %vm927, %v4944, 0
        %v4997 = vsel %vm927, %v4962, 0
        %4999 = vmatprep.subr.mxu0 0.0
        %5000 = vmatpush1.xpose.msra.mxu0 %v4997
        %5001 = vmatprep.subr.mxu0 0.0
        %5002 = vmatpush1.xpose.msra.mxu0 0.0
        %5003 = vmatprep.subr.mxu0 0.0
        %5004 = vmatpush1.xpose.msra.mxu0 0.0
        %5005 = vmatprep.subr.mxu0 0.0
        %5006 = vmatpush1.xpose.msra.mxu0 0.0
        %5007 = vmatprep.subr.mxu0 0.0
        %5008 = vmatpush1.xpose.msra.mxu0 0.0
        %5009 = vmatprep.subr.mxu0 0.0
        %5010 = vmatpush1.xpose.msra.mxu0 0.0
        %5011 = vmatprep.subr.mxu0 0.0
        %5012 = vmatpush1.xpose.msra.mxu0 0.0
        %5013 = vmatprep.subr.mxu0 0.0
        %5014 = vmatpush1.xpose.msra.mxu0 0.0
        %5015 = vmatprep.subr.mxu0 0.0
        %5016 = vmatpush1.xpose.msra.mxu0 0.0
        %5017 = vmatprep.subr.mxu0 0.0
        %5018 = vmatpush1.xpose.msra.mxu0 0.0
        %5019 = vmatprep.subr.mxu0 0.0
        %5020 = vmatpush1.xpose.msra.mxu0 0.0
        %5021 = vmatprep.subr.mxu0 0.0
        %5022 = vmatpush1.xpose.msra.mxu0 0.0
        %5023 = vmatprep.subr.mxu0 0.0
        %5024 = vmatpush1.xpose.msra.mxu0 0.0
        %5025 = vmatprep.subr.mxu0 0.0
        %5026 = vmatpush1.xpose.msra.mxu0 0.0
        %5027 = vmatprep.subr.mxu0 0.0
        %5028 = vmatpush1.xpose.msra.mxu0 0.0
        %5029 = vmatprep.subr.mxu0 0.0
        %5030 = vmatpush1.xpose.msra.mxu0 0.0
        %5031 = vmatprep.subr.mxu0 0.0
        %5032 = vmatpush1.xpose.msra.mxu0 0.0
        %5033 = vmatprep.subr.mxu0 0.0
        %5034 = vmatpush1.xpose.msra.mxu0 0.0
        %5035 = vmatprep.subr.mxu0 0.0
        %5036 = vmatpush1.xpose.msra.mxu0 0.0
        %5037 = vmatprep.subr.mxu0 0.0
        %5038 = vmatpush1.xpose.msra.mxu0 0.0
        %5039 = vmatprep.subr.mxu0 0.0
        %5040 = vmatpush1.xpose.msra.mxu0 0.0
        %5041 = vmatprep.subr.mxu0 0.0
        %5042 = vmatpush1.xpose.msra.mxu0 0.0
        %5043 = vmatprep.subr.mxu0 0.0
        %5044 = vmatpush1.xpose.msra.mxu0 0.0
        %5045 = vmatprep.subr.mxu0 0.0
        %5046 = vmatpush1.xpose.msra.mxu0 0.0
        %5047 = vmatprep.subr.mxu0 0.0
        %5048 = vmatpush1.xpose.msra.mxu0 0.0
        %5049 = vmatprep.subr.mxu0 0.0
        %5050 = vmatpush1.xpose.msra.mxu0 0.0
        %5051 = vmatprep.subr.mxu0 0.0
        %5052 = vmatpush1.xpose.msra.mxu0 0.0
        %5053 = vmatprep.subr.mxu0 0.0
        %5054 = vmatpush1.xpose.msra.mxu0 0.0
        %5055 = vmatprep.subr.mxu0 0.0
        %5056 = vmatpush1.xpose.msra.mxu0 0.0
        %5057 = vmatprep.subr.mxu0 0.0
        %5058 = vmatpush1.xpose.msra.mxu0 0.0
        %5059 = vmatprep.subr.mxu0 0.0
        %5060 = vmatpush1.xpose.msra.mxu0 0.0
        %5061 = vmatprep.subr.mxu0 0.0
        %5062 = vmatpush1.xpose.msra.mxu0 0.0
        %5063 = vmatprep.mubr.f32.mxu0 0.0
        %5064 = vmatmul.mubr.f32.gmra.mrb[0].mxu0 %v4995
        %v5065 = vpop.f32.mrb[0].mxu0
        %v5066 = vadd.f32 0.0, %v5065
        %v5067 = vpop.f32.mrb[0].mxu0
        %5068 = vdwg.mxu0
        %v5069 = vsel %vm927, %v4952, 0
        %v5071 = vsel %vm927, %v4970, 0
        %5073 = vmatprep.subr.mxu0 0.0
        %5074 = vmatpush1.xpose.msra.mxu0 %v5071
        %5075 = vmatprep.subr.mxu0 0.0
        %5076 = vmatpush1.xpose.msra.mxu0 0.0
        %5077 = vmatprep.subr.mxu0 0.0
        %5078 = vmatpush1.xpose.msra.mxu0 0.0
        %5079 = vmatprep.subr.mxu0 0.0
        %5080 = vmatpush1.xpose.msra.mxu0 0.0
        %5081 = vmatprep.subr.mxu0 0.0
        %5082 = vmatpush1.xpose.msra.mxu0 0.0
        %5083 = vmatprep.subr.mxu0 0.0
        %5084 = vmatpush1.xpose.msra.mxu0 0.0
        %5085 = vmatprep.subr.mxu0 0.0
        %5086 = vmatpush1.xpose.msra.mxu0 0.0
        %5087 = vmatprep.subr.mxu0 0.0
        %5088 = vmatpush1.xpose.msra.mxu0 0.0
        %5089 = vmatprep.subr.mxu0 0.0
        %5090 = vmatpush1.xpose.msra.mxu0 0.0
        %5091 = vmatprep.subr.mxu0 0.0
        %5092 = vmatpush1.xpose.msra.mxu0 0.0
        %5093 = vmatprep.subr.mxu0 0.0
        %5094 = vmatpush1.xpose.msra.mxu0 0.0
        %5095 = vmatprep.subr.mxu0 0.0
        %5096 = vmatpush1.xpose.msra.mxu0 0.0
        %5097 = vmatprep.subr.mxu0 0.0
        %5098 = vmatpush1.xpose.msra.mxu0 0.0
        %5099 = vmatprep.subr.mxu0 0.0
        %5100 = vmatpush1.xpose.msra.mxu0 0.0
        %5101 = vmatprep.subr.mxu0 0.0
        %5102 = vmatpush1.xpose.msra.mxu0 0.0
        %5103 = vmatprep.subr.mxu0 0.0
        %5104 = vmatpush1.xpose.msra.mxu0 0.0
        %5105 = vmatprep.subr.mxu0 0.0
        %5106 = vmatpush1.xpose.msra.mxu0 0.0
        %5107 = vmatprep.subr.mxu0 0.0
        %5108 = vmatpush1.xpose.msra.mxu0 0.0
        %5109 = vmatprep.subr.mxu0 0.0
        %5110 = vmatpush1.xpose.msra.mxu0 0.0
        %5111 = vmatprep.subr.mxu0 0.0
        %5112 = vmatpush1.xpose.msra.mxu0 0.0
        %5113 = vmatprep.subr.mxu0 0.0
        %5114 = vmatpush1.xpose.msra.mxu0 0.0
        %5115 = vmatprep.subr.mxu0 0.0
        %5116 = vmatpush1.xpose.msra.mxu0 0.0
        %5117 = vmatprep.subr.mxu0 0.0
        %5118 = vmatpush1.xpose.msra.mxu0 0.0
        %5119 = vmatprep.subr.mxu0 0.0
        %5120 = vmatpush1.xpose.msra.mxu0 0.0
        %5121 = vmatprep.subr.mxu0 0.0
        %5122 = vmatpush1.xpose.msra.mxu0 0.0
        %5123 = vmatprep.subr.mxu0 0.0
        %5124 = vmatpush1.xpose.msra.mxu0 0.0
        %5125 = vmatprep.subr.mxu0 0.0
        %5126 = vmatpush1.xpose.msra.mxu0 0.0
        %5127 = vmatprep.subr.mxu0 0.0
        %5128 = vmatpush1.xpose.msra.mxu0 0.0
        %5129 = vmatprep.subr.mxu0 0.0
        %5130 = vmatpush1.xpose.msra.mxu0 0.0
        %5131 = vmatprep.subr.mxu0 0.0
        %5132 = vmatpush1.xpose.msra.mxu0 0.0
        %5133 = vmatprep.subr.mxu0 0.0
        %5134 = vmatpush1.xpose.msra.mxu0 0.0
        %5135 = vmatprep.subr.mxu0 0.0
        %5136 = vmatpush1.xpose.msra.mxu0 0.0
        %5137 = vmatprep.mubr.f32.mxu0 0.0
        %5138 = vmatmul.mubr.f32.gmra.mrb[0].mxu0 %v5069
        %v5139 = vpop.f32.mrb[0].mxu0
        %v5140 = vadd.f32 0.0, %v5139
        %v5141 = vpop.f32.mrb[0].mxu0
        %5142 = vdwg.mxu0
        %v5143 = vsel %vm927, %v4951, 0
        %v5145 = vsel %vm927, %v4969, 0
        %5147 = vmatprep.subr.mxu0 0.0
        %5148 = vmatpush1.xpose.msra.mxu0 %v5145
        %5149 = vmatprep.subr.mxu0 0.0
        %5150 = vmatpush1.xpose.msra.mxu0 0.0
        %5151 = vmatprep.subr.mxu0 0.0
        %5152 = vmatpush1.xpose.msra.mxu0 0.0
        %5153 = vmatprep.subr.mxu0 0.0
        %5154 = vmatpush1.xpose.msra.mxu0 0.0
        %5155 = vmatprep.subr.mxu0 0.0
        %5156 = vmatpush1.xpose.msra.mxu0 0.0
        %5157 = vmatprep.subr.mxu0 0.0
        %5158 = vmatpush1.xpose.msra.mxu0 0.0
        %5159 = vmatprep.subr.mxu0 0.0
        %5160 = vmatpush1.xpose.msra.mxu0 0.0
        %5161 = vmatprep.subr.mxu0 0.0
        %5162 = vmatpush1.xpose.msra.mxu0 0.0
        %5163 = vmatprep.subr.mxu0 0.0
        %5164 = vmatpush1.xpose.msra.mxu0 0.0
        %5165 = vmatprep.subr.mxu0 0.0
        %5166 = vmatpush1.xpose.msra.mxu0 0.0
        %5167 = vmatprep.subr.mxu0 0.0
        %5168 = vmatpush1.xpose.msra.mxu0 0.0
        %5169 = vmatprep.subr.mxu0 0.0
        %5170 = vmatpush1.xpose.msra.mxu0 0.0
        %5171 = vmatprep.subr.mxu0 0.0
        %5172 = vmatpush1.xpose.msra.mxu0 0.0
        %5173 = vmatprep.subr.mxu0 0.0
        %5174 = vmatpush1.xpose.msra.mxu0 0.0
        %5175 = vmatprep.subr.mxu0 0.0
        %5176 = vmatpush1.xpose.msra.mxu0 0.0
        %5177 = vmatprep.subr.mxu0 0.0
        %5178 = vmatpush1.xpose.msra.mxu0 0.0
        %5179 = vmatprep.subr.mxu0 0.0
        %5180 = vmatpush1.xpose.msra.mxu0 0.0
        %5181 = vmatprep.subr.mxu0 0.0
        %5182 = vmatpush1.xpose.msra.mxu0 0.0
        %5183 = vmatprep.subr.mxu0 0.0
        %5184 = vmatpush1.xpose.msra.mxu0 0.0
        %5185 = vmatprep.subr.mxu0 0.0
        %5186 = vmatpush1.xpose.msra.mxu0 0.0
        %5187 = vmatprep.subr.mxu0 0.0
        %5188 = vmatpush1.xpose.msra.mxu0 0.0
        %5189 = vmatprep.subr.mxu0 0.0
        %5190 = vmatpush1.xpose.msra.mxu0 0.0
        %5191 = vmatprep.subr.mxu0 0.0
        %5192 = vmatpush1.xpose.msra.mxu0 0.0
        %5193 = vmatprep.subr.mxu0 0.0
        %5194 = vmatpush1.xpose.msra.mxu0 0.0
        %5195 = vmatprep.subr.mxu0 0.0
        %5196 = vmatpush1.xpose.msra.mxu0 0.0
        %5197 = vmatprep.subr.mxu0 0.0
        %5198 = vmatpush1.xpose.msra.mxu0 0.0
        %5199 = vmatprep.subr.mxu0 0.0
        %5200 = vmatpush1.xpose.msra.mxu0 0.0
        %5201 = vmatprep.subr.mxu0 0.0
        %5202 = vmatpush1.xpose.msra.mxu0 0.0
        %5203 = vmatprep.subr.mxu0 0.0
        %5204 = vmatpush1.xpose.msra.mxu0 0.0
        %5205 = vmatprep.subr.mxu0 0.0
        %5206 = vmatpush1.xpose.msra.mxu0 0.0
        %5207 = vmatprep.subr.mxu0 0.0
        %5208 = vmatpush1.xpose.msra.mxu0 0.0
        %5209 = vmatprep.subr.mxu0 0.0
        %5210 = vmatpush1.xpose.msra.mxu0 0.0
        %5211 = vmatprep.mubr.f32.mxu0 0.0
        %5212 = vmatmul.mubr.f32.gmra.mrb[0].mxu0 %v5143
        %v5213 = vpop.f32.mrb[0].mxu0
        %v5214 = vadd.f32 0.0, %v5213
        %v5215 = vpop.f32.mrb[0].mxu0
        %5216 = vdwg.mxu0
        %v5217 = vsel %vm927, %v4953, 0
        %v5219 = vsel %vm927, %v4971, 0
        %5221 = vmatprep.subr.mxu0 0.0
        %5222 = vmatpush1.xpose.msra.mxu0 %v5219
        %5223 = vmatprep.subr.mxu0 0.0
        %5224 = vmatpush1.xpose.msra.mxu0 0.0
        %5225 = vmatprep.subr.mxu0 0.0
        %5226 = vmatpush1.xpose.msra.mxu0 0.0
        %5227 = vmatprep.subr.mxu0 0.0
        %5228 = vmatpush1.xpose.msra.mxu0 0.0
        %5229 = vmatprep.subr.mxu0 0.0
        %5230 = vmatpush1.xpose.msra.mxu0 0.0
        %5231 = vmatprep.subr.mxu0 0.0
        %5232 = vmatpush1.xpose.msra.mxu0 0.0
        %5233 = vmatprep.subr.mxu0 0.0
        %5234 = vmatpush1.xpose.msra.mxu0 0.0
        %5235 = vmatprep.subr.mxu0 0.0
        %5236 = vmatpush1.xpose.msra.mxu0 0.0
        %5237 = vmatprep.subr.mxu0 0.0
        %5238 = vmatpush1.xpose.msra.mxu0 0.0
        %5239 = vmatprep.subr.mxu0 0.0
        %5240 = vmatpush1.xpose.msra.mxu0 0.0
        %5241 = vmatprep.subr.mxu0 0.0
        %5242 = vmatpush1.xpose.msra.mxu0 0.0
        %5243 = vmatprep.subr.mxu0 0.0
        %5244 = vmatpush1.xpose.msra.mxu0 0.0
        %5245 = vmatprep.subr.mxu0 0.0
        %5246 = vmatpush1.xpose.msra.mxu0 0.0
        %5247 = vmatprep.subr.mxu0 0.0
        %5248 = vmatpush1.xpose.msra.mxu0 0.0
        %5249 = vmatprep.subr.mxu0 0.0
        %5250 = vmatpush1.xpose.msra.mxu0 0.0
        %5251 = vmatprep.subr.mxu0 0.0
        %5252 = vmatpush1.xpose.msra.mxu0 0.0
        %5253 = vmatprep.subr.mxu0 0.0
        %5254 = vmatpush1.xpose.msra.mxu0 0.0
        %5255 = vmatprep.subr.mxu0 0.0
        %5256 = vmatpush1.xpose.msra.mxu0 0.0
        %5257 = vmatprep.subr.mxu0 0.0
        %5258 = vmatpush1.xpose.msra.mxu0 0.0
        %5259 = vmatprep.subr.mxu0 0.0
        %5260 = vmatpush1.xpose.msra.mxu0 0.0
        %5261 = vmatprep.subr.mxu0 0.0
        %5262 = vmatpush1.xpose.msra.mxu0 0.0
        %5263 = vmatprep.subr.mxu0 0.0
        %5264 = vmatpush1.xpose.msra.mxu0 0.0
        %5265 = vmatprep.subr.mxu0 0.0
        %5266 = vmatpush1.xpose.msra.mxu0 0.0
        %5267 = vmatprep.subr.mxu0 0.0
        %5268 = vmatpush1.xpose.msra.mxu0 0.0
        %5269 = vmatprep.subr.mxu0 0.0
        %5270 = vmatpush1.xpose.msra.mxu0 0.0
        %5271 = vmatprep.subr.mxu0 0.0
        %5272 = vmatpush1.xpose.msra.mxu0 0.0
        %5273 = vmatprep.subr.mxu0 0.0
        %5274 = vmatpush1.xpose.msra.mxu0 0.0
        %5275 = vmatprep.subr.mxu0 0.0
        %5276 = vmatpush1.xpose.msra.mxu0 0.0
        %5277 = vmatprep.subr.mxu0 0.0
        %5278 = vmatpush1.xpose.msra.mxu0 0.0
        %5279 = vmatprep.subr.mxu0 0.0
        %5280 = vmatpush1.xpose.msra.mxu0 0.0
        %5281 = vmatprep.subr.mxu0 0.0
        %5282 = vmatpush1.xpose.msra.mxu0 0.0
        %5283 = vmatprep.subr.mxu0 0.0
        %5284 = vmatpush1.xpose.msra.mxu0 0.0
        %5285 = vmatprep.mubr.f32.mxu0 0.0
        %5286 = vmatmul.mubr.f32.gmra.mrb[0].mxu0 %v5217
        %v5287 = vpop.f32.mrb[0].mxu0
        %v5288 = vadd.f32 0.0, %v5287
        %v5289 = vpop.f32.mrb[0].mxu0
        %5290 = vdwg.mxu0
        %v5291 = vsel %vm1224, %v5066, -inf
        %5292 = vmax.xlane.f32.xlu0 %v5291
        %v5293 = vpop.xlane.xlu0 %5292
        %v5294 = vsel %vm1224, %v5140, -inf
        %5295 = vmax.xlane.f32.xlu0 %v5294
        %v5296 = vpop.xlane.xlu0 %5295
        %v5297 = vsel %vm1224, %v5214, -inf
        %5298 = vmax.xlane.f32.xlu0 %v5297
        %v5299 = vpop.xlane.xlu0 %5298
        %v5300 = vsel %vm1224, %v5288, -inf
        %5301 = vmax.xlane.f32.xlu0 %v5300
        %v5302 = vpop.xlane.xlu0 %5301
        %v5303 = vsub.f32 %v5066, %v5293
        %v5304 = vsub.f32 %v5140, %v5296
        %v5305 = vsub.f32 %v5214, %v5299
        %v5306 = vsub.f32 %v5288, %v5302
        %v5307 = vmul.f32 %v5303, 1.442695
        %v5308 = vpow.pop %v5307
        %v5309 = vmul.f32 %v5304, 1.442695
        %v5310 = vpow.pop %v5309
        %v5311 = vmul.f32 %v5305, 1.442695
        %v5312 = vpow.pop %v5311
        %v5313 = vmul.f32 %v5306, 1.442695
        %v5314 = vpow.pop %v5313
        %v5315 = vsel %vm1224, %v5308, 0.0
        %5316 = vadd.xlane.f32.xlu0 %v5315
        %v5317 = vpop.xlane.xlu0 %5316
        %v5318 = vsel %vm1224, %v5310, 0.0
        %5319 = vadd.xlane.f32.xlu0 %v5318
        %v5320 = vpop.xlane.xlu0 %5319
        %v5321 = vsel %vm1224, %v5312, 0.0
        %5322 = vadd.xlane.f32.xlu0 %v5321
        %v5323 = vpop.xlane.xlu0 %5322
        %v5324 = vsel %vm1224, %v5314, 0.0
        %5325 = vadd.xlane.f32.xlu0 %v5324
        %v5326 = vpop.xlane.xlu0 %5325
        %v5327 = vrcp.pop %v5317
        %v5328 = vrcp.pop %v5320
        %v5329 = vrcp.pop %v5323
        %v5330 = vrcp.pop %v5326
        %v5331 = vmul.f32 %v5308, %v5327
        %v5332 = vmul.f32 %v5310, %v5328
        %v5333 = vmul.f32 %v5312, %v5329
        %v5334 = vmul.f32 %v5314, %v5330
        %v5336 = vsel %vm1269, %v5331, 0
        %v5338 = vsel %vm1273, %v4980, 0
        %5340 = vmatprep.subr.mxu0 0.0
        %5341 = vmatpush1.msra.mxu0 %v5338
        %5342 = vmatprep.subr.mxu0 0.0
        %5343 = vmatpush1.msra.mxu0 0.0
        %5344 = vmatprep.subr.mxu0 0.0
        %5345 = vmatpush1.msra.mxu0 0.0
        %5346 = vmatprep.subr.mxu0 0.0
        %5347 = vmatpush1.msra.mxu0 0.0
        %5348 = vmatprep.subr.mxu0 0.0
        %5349 = vmatpush1.msra.mxu0 0.0
        %5350 = vmatprep.subr.mxu0 0.0
        %5351 = vmatpush1.msra.mxu0 0.0
        %5352 = vmatprep.subr.mxu0 0.0
        %5353 = vmatpush1.msra.mxu0 0.0
        %5354 = vmatprep.subr.mxu0 0.0
        %5355 = vmatpush1.msra.mxu0 0.0
        %5356 = vmatprep.subr.mxu0 0.0
        %5357 = vmatpush1.msra.mxu0 0.0
        %5358 = vmatprep.subr.mxu0 0.0
        %5359 = vmatpush1.msra.mxu0 0.0
        %5360 = vmatprep.subr.mxu0 0.0
        %5361 = vmatpush1.msra.mxu0 0.0
        %5362 = vmatprep.subr.mxu0 0.0
        %5363 = vmatpush1.msra.mxu0 0.0
        %5364 = vmatprep.subr.mxu0 0.0
        %5365 = vmatpush1.msra.mxu0 0.0
        %5366 = vmatprep.subr.mxu0 0.0
        %5367 = vmatpush1.msra.mxu0 0.0
        %5368 = vmatprep.subr.mxu0 0.0
        %5369 = vmatpush1.msra.mxu0 0.0
        %5370 = vmatprep.subr.mxu0 0.0
        %5371 = vmatpush1.msra.mxu0 0.0
        %5372 = vmatprep.subr.mxu0 0.0
        %5373 = vmatpush1.msra.mxu0 0.0
        %5374 = vmatprep.subr.mxu0 0.0
        %5375 = vmatpush1.msra.mxu0 0.0
        %5376 = vmatprep.subr.mxu0 0.0
        %5377 = vmatpush1.msra.mxu0 0.0
        %5378 = vmatprep.subr.mxu0 0.0
        %5379 = vmatpush1.msra.mxu0 0.0
        %5380 = vmatprep.subr.mxu0 0.0
        %5381 = vmatpush1.msra.mxu0 0.0
        %5382 = vmatprep.subr.mxu0 0.0
        %5383 = vmatpush1.msra.mxu0 0.0
        %5384 = vmatprep.subr.mxu0 0.0
        %5385 = vmatpush1.msra.mxu0 0.0
        %5386 = vmatprep.subr.mxu0 0.0
        %5387 = vmatpush1.msra.mxu0 0.0
        %5388 = vmatprep.subr.mxu0 0.0
        %5389 = vmatpush1.msra.mxu0 0.0
        %5390 = vmatprep.subr.mxu0 0.0
        %5391 = vmatpush1.msra.mxu0 0.0
        %5392 = vmatprep.subr.mxu0 0.0
        %5393 = vmatpush1.msra.mxu0 0.0
        %5394 = vmatprep.subr.mxu0 0.0
        %5395 = vmatpush1.msra.mxu0 0.0
        %5396 = vmatprep.subr.mxu0 0.0
        %5397 = vmatpush1.msra.mxu0 0.0
        %5398 = vmatprep.subr.mxu0 0.0
        %5399 = vmatpush1.msra.mxu0 0.0
        %5400 = vmatprep.subr.mxu0 0.0
        %5401 = vmatpush1.msra.mxu0 0.0
        %5402 = vmatprep.subr.mxu0 0.0
        %5403 = vmatpush1.msra.mxu0 0.0
        %5404 = vmatprep.mubr.f32.mxu0 0.0
        %5405 = vmatmul.mubr.f32.gmra.mrb[0].mxu0 %v5336
        %v5406 = vpop.f32.mrb[0].mxu0
        %v5407 = vadd.f32 0.0, %v5406
        %v5408 = vpop.f32.mrb[0].mxu0
        %5409 = vdwg.mxu0
        %v5411 = vsel %vm1269, %v5332, 0
        %v5413 = vsel %vm1273, %v4988, 0
        %5415 = vmatprep.subr.mxu0 0.0
        %5416 = vmatpush1.msra.mxu0 %v5413
        %5417 = vmatprep.subr.mxu0 0.0
        %5418 = vmatpush1.msra.mxu0 0.0
        %5419 = vmatprep.subr.mxu0 0.0
        %5420 = vmatpush1.msra.mxu0 0.0
        %5421 = vmatprep.subr.mxu0 0.0
        %5422 = vmatpush1.msra.mxu0 0.0
        %5423 = vmatprep.subr.mxu0 0.0
        %5424 = vmatpush1.msra.mxu0 0.0
        %5425 = vmatprep.subr.mxu0 0.0
        %5426 = vmatpush1.msra.mxu0 0.0
        %5427 = vmatprep.subr.mxu0 0.0
        %5428 = vmatpush1.msra.mxu0 0.0
        %5429 = vmatprep.subr.mxu0 0.0
        %5430 = vmatpush1.msra.mxu0 0.0
        %5431 = vmatprep.subr.mxu0 0.0
        %5432 = vmatpush1.msra.mxu0 0.0
        %5433 = vmatprep.subr.mxu0 0.0
        %5434 = vmatpush1.msra.mxu0 0.0
        %5435 = vmatprep.subr.mxu0 0.0
        %5436 = vmatpush1.msra.mxu0 0.0
        %5437 = vmatprep.subr.mxu0 0.0
        %5438 = vmatpush1.msra.mxu0 0.0
        %5439 = vmatprep.subr.mxu0 0.0
        %5440 = vmatpush1.msra.mxu0 0.0
        %5441 = vmatprep.subr.mxu0 0.0
        %5442 = vmatpush1.msra.mxu0 0.0
        %5443 = vmatprep.subr.mxu0 0.0
        %5444 = vmatpush1.msra.mxu0 0.0
        %5445 = vmatprep.subr.mxu0 0.0
        %5446 = vmatpush1.msra.mxu0 0.0
        %5447 = vmatprep.subr.mxu0 0.0
        %5448 = vmatpush1.msra.mxu0 0.0
        %5449 = vmatprep.subr.mxu0 0.0
        %5450 = vmatpush1.msra.mxu0 0.0
        %5451 = vmatprep.subr.mxu0 0.0
        %5452 = vmatpush1.msra.mxu0 0.0
        %5453 = vmatprep.subr.mxu0 0.0
        %5454 = vmatpush1.msra.mxu0 0.0
        %5455 = vmatprep.subr.mxu0 0.0
        %5456 = vmatpush1.msra.mxu0 0.0
        %5457 = vmatprep.subr.mxu0 0.0
        %5458 = vmatpush1.msra.mxu0 0.0
        %5459 = vmatprep.subr.mxu0 0.0
        %5460 = vmatpush1.msra.mxu0 0.0
        %5461 = vmatprep.subr.mxu0 0.0
        %5462 = vmatpush1.msra.mxu0 0.0
        %5463 = vmatprep.subr.mxu0 0.0
        %5464 = vmatpush1.msra.mxu0 0.0
        %5465 = vmatprep.subr.mxu0 0.0
        %5466 = vmatpush1.msra.mxu0 0.0
        %5467 = vmatprep.subr.mxu0 0.0
        %5468 = vmatpush1.msra.mxu0 0.0
        %5469 = vmatprep.subr.mxu0 0.0
        %5470 = vmatpush1.msra.mxu0 0.0
        %5471 = vmatprep.subr.mxu0 0.0
        %5472 = vmatpush1.msra.mxu0 0.0
        %5473 = vmatprep.subr.mxu0 0.0
        %5474 = vmatpush1.msra.mxu0 0.0
        %5475 = vmatprep.subr.mxu0 0.0
        %5476 = vmatpush1.msra.mxu0 0.0
        %5477 = vmatprep.subr.mxu0 0.0
        %5478 = vmatpush1.msra.mxu0 0.0
        %5479 = vmatprep.mubr.f32.mxu0 0.0
        %5480 = vmatmul.mubr.f32.gmra.mrb[0].mxu0 %v5411
        %v5481 = vpop.f32.mrb[0].mxu0
        %v5482 = vadd.f32 0.0, %v5481
        %v5483 = vpop.f32.mrb[0].mxu0
        %5484 = vdwg.mxu0
        %v5486 = vsel %vm1269, %v5333, 0
        %v5488 = vsel %vm1273, %v4987, 0
        %5490 = vmatprep.subr.mxu0 0.0
        %5491 = vmatpush1.msra.mxu0 %v5488
        %5492 = vmatprep.subr.mxu0 0.0
        %5493 = vmatpush1.msra.mxu0 0.0
        %5494 = vmatprep.subr.mxu0 0.0
        %5495 = vmatpush1.msra.mxu0 0.0
        %5496 = vmatprep.subr.mxu0 0.0
        %5497 = vmatpush1.msra.mxu0 0.0
        %5498 = vmatprep.subr.mxu0 0.0
        %5499 = vmatpush1.msra.mxu0 0.0
        %5500 = vmatprep.subr.mxu0 0.0
        %5501 = vmatpush1.msra.mxu0 0.0
        %5502 = vmatprep.subr.mxu0 0.0
        %5503 = vmatpush1.msra.mxu0 0.0
        %5504 = vmatprep.subr.mxu0 0.0
        %5505 = vmatpush1.msra.mxu0 0.0
        %5506 = vmatprep.subr.mxu0 0.0
        %5507 = vmatpush1.msra.mxu0 0.0
        %5508 = vmatprep.subr.mxu0 0.0
        %5509 = vmatpush1.msra.mxu0 0.0
        %5510 = vmatprep.subr.mxu0 0.0
        %5511 = vmatpush1.msra.mxu0 0.0
        %5512 = vmatprep.subr.mxu0 0.0
        %5513 = vmatpush1.msra.mxu0 0.0
        %5514 = vmatprep.subr.mxu0 0.0
        %5515 = vmatpush1.msra.mxu0 0.0
        %5516 = vmatprep.subr.mxu0 0.0
        %5517 = vmatpush1.msra.mxu0 0.0
        %5518 = vmatprep.subr.mxu0 0.0
        %5519 = vmatpush1.msra.mxu0 0.0
        %5520 = vmatprep.subr.mxu0 0.0
        %5521 = vmatpush1.msra.mxu0 0.0
        %5522 = vmatprep.subr.mxu0 0.0
        %5523 = vmatpush1.msra.mxu0 0.0
        %5524 = vmatprep.subr.mxu0 0.0
        %5525 = vmatpush1.msra.mxu0 0.0
        %5526 = vmatprep.subr.mxu0 0.0
        %5527 = vmatpush1.msra.mxu0 0.0
        %5528 = vmatprep.subr.mxu0 0.0
        %5529 = vmatpush1.msra.mxu0 0.0
        %5530 = vmatprep.subr.mxu0 0.0
        %5531 = vmatpush1.msra.mxu0 0.0
        %5532 = vmatprep.subr.mxu0 0.0
        %5533 = vmatpush1.msra.mxu0 0.0
        %5534 = vmatprep.subr.mxu0 0.0
        %5535 = vmatpush1.msra.mxu0 0.0
        %5536 = vmatprep.subr.mxu0 0.0
        %5537 = vmatpush1.msra.mxu0 0.0
        %5538 = vmatprep.subr.mxu0 0.0
        %5539 = vmatpush1.msra.mxu0 0.0
        %5540 = vmatprep.subr.mxu0 0.0
        %5541 = vmatpush1.msra.mxu0 0.0
        %5542 = vmatprep.subr.mxu0 0.0
        %5543 = vmatpush1.msra.mxu0 0.0
        %5544 = vmatprep.subr.mxu0 0.0
        %5545 = vmatpush1.msra.mxu0 0.0
        %5546 = vmatprep.subr.mxu0 0.0
        %5547 = vmatpush1.msra.mxu0 0.0
        %5548 = vmatprep.subr.mxu0 0.0
        %5549 = vmatpush1.msra.mxu0 0.0
        %5550 = vmatprep.subr.mxu0 0.0
        %5551 = vmatpush1.msra.mxu0 0.0
        %5552 = vmatprep.subr.mxu0 0.0
        %5553 = vmatpush1.msra.mxu0 0.0
        %5554 = vmatprep.mubr.f32.mxu0 0.0
        %5555 = vmatmul.mubr.f32.gmra.mrb[0].mxu0 %v5486
        %v5556 = vpop.f32.mrb[0].mxu0
        %v5557 = vadd.f32 0.0, %v5556
        %v5558 = vpop.f32.mrb[0].mxu0
        %5559 = vdwg.mxu0
        %v5561 = vsel %vm1269, %v5334, 0
        %v5563 = vsel %vm1273, %v4989, 0
        %5565 = vmatprep.subr.mxu0 0.0
        %5566 = vmatpush1.msra.mxu0 %v5563
        %5567 = vmatprep.subr.mxu0 0.0
        %5568 = vmatpush1.msra.mxu0 0.0
        %5569 = vmatprep.subr.mxu0 0.0
        %5570 = vmatpush1.msra.mxu0 0.0
        %5571 = vmatprep.subr.mxu0 0.0
        %5572 = vmatpush1.msra.mxu0 0.0
        %5573 = vmatprep.subr.mxu0 0.0
        %5574 = vmatpush1.msra.mxu0 0.0
        %5575 = vmatprep.subr.mxu0 0.0
        %5576 = vmatpush1.msra.mxu0 0.0
        %5577 = vmatprep.subr.mxu0 0.0
        %5578 = vmatpush1.msra.mxu0 0.0
        %5579 = vmatprep.subr.mxu0 0.0
        %5580 = vmatpush1.msra.mxu0 0.0
        %5581 = vmatprep.subr.mxu0 0.0
        %5582 = vmatpush1.msra.mxu0 0.0
        %5583 = vmatprep.subr.mxu0 0.0
        %5584 = vmatpush1.msra.mxu0 0.0
        %5585 = vmatprep.subr.mxu0 0.0
        %5586 = vmatpush1.msra.mxu0 0.0
        %5587 = vmatprep.subr.mxu0 0.0
        %5588 = vmatpush1.msra.mxu0 0.0
        %5589 = vmatprep.subr.mxu0 0.0
        %5590 = vmatpush1.msra.mxu0 0.0
        %5591 = vmatprep.subr.mxu0 0.0
        %5592 = vmatpush1.msra.mxu0 0.0
        %5593 = vmatprep.subr.mxu0 0.0
        %5594 = vmatpush1.msra.mxu0 0.0
        %5595 = vmatprep.subr.mxu0 0.0
        %5596 = vmatpush1.msra.mxu0 0.0
        %5597 = vmatprep.subr.mxu0 0.0
        %5598 = vmatpush1.msra.mxu0 0.0
        %5599 = vmatprep.subr.mxu0 0.0
        %5600 = vmatpush1.msra.mxu0 0.0
        %5601 = vmatprep.subr.mxu0 0.0
        %5602 = vmatpush1.msra.mxu0 0.0
        %5603 = vmatprep.subr.mxu0 0.0
        %5604 = vmatpush1.msra.mxu0 0.0
        %5605 = vmatprep.subr.mxu0 0.0
        %5606 = vmatpush1.msra.mxu0 0.0
        %5607 = vmatprep.subr.mxu0 0.0
        %5608 = vmatpush1.msra.mxu0 0.0
        %5609 = vmatprep.subr.mxu0 0.0
        %5610 = vmatpush1.msra.mxu0 0.0
        %5611 = vmatprep.subr.mxu0 0.0
        %5612 = vmatpush1.msra.mxu0 0.0
        %5613 = vmatprep.subr.mxu0 0.0
        %5614 = vmatpush1.msra.mxu0 0.0
        %5615 = vmatprep.subr.mxu0 0.0
        %5616 = vmatpush1.msra.mxu0 0.0
        %5617 = vmatprep.subr.mxu0 0.0
        %5618 = vmatpush1.msra.mxu0 0.0
        %5619 = vmatprep.subr.mxu0 0.0
        %5620 = vmatpush1.msra.mxu0 0.0
        %5621 = vmatprep.subr.mxu0 0.0
        %5622 = vmatpush1.msra.mxu0 0.0
        %5623 = vmatprep.subr.mxu0 0.0
        %5624 = vmatpush1.msra.mxu0 0.0
        %5625 = vmatprep.subr.mxu0 0.0
        %5626 = vmatpush1.msra.mxu0 0.0
        %5627 = vmatprep.subr.mxu0 0.0
        %5628 = vmatpush1.msra.mxu0 0.0
        %5629 = vmatprep.mubr.f32.mxu0 0.0
        %5630 = vmatmul.mubr.f32.gmra.mrb[0].mxu0 %v5561
        %v5631 = vpop.f32.mrb[0].mxu0
        %v5632 = vadd.f32 0.0, %v5631
        %v5633 = vpop.f32.mrb[0].mxu0
        %5634 = vdwg.mxu0
        %v5636 = vunpack.c.l.s4 1983009808
        %v5637 = vunpack.c.0.s8 %v5636
        %v5638 = vlaneseq
        %v5639 = vshrl.u32 %v5638, 7
        %v5640 = vsub.s32 %v5637, %v5639
        %v5641 = vrot.slane %v4944, %v5640
        %5642 = vrot.lane.b32.xlu0 %v5641, 120
        %v5643 = vpop.permute.xlu0 %5642
        %v5645 = vunpack.c.l.s4 1983009808
        %v5646 = vunpack.c.0.s8 %v5645
        %v5647 = vlaneseq
        %v5648 = vshrl.u32 %v5647, 7
        %v5649 = vsub.s32 %v5646, %v5648
        %v5650 = vrot.slane %v4962, %v5649
        %5651 = vrot.lane.b32.xlu0 %v5650, 120
        %v5652 = vpop.permute.xlu0 %5651
        %v5653 = vsel %vm927, %v5643, 0
        %v5655 = vsel %vm927, %v5652, 0
        %5657 = vmatprep.subr.mxu0 0.0
        %5658 = vmatpush1.xpose.msra.mxu0 %v5655
        %5659 = vmatprep.subr.mxu0 0.0
        %5660 = vmatpush1.xpose.msra.mxu0 0.0
        %5661 = vmatprep.subr.mxu0 0.0
        %5662 = vmatpush1.xpose.msra.mxu0 0.0
        %5663 = vmatprep.subr.mxu0 0.0
        %5664 = vmatpush1.xpose.msra.mxu0 0.0
        %5665 = vmatprep.subr.mxu0 0.0
        %5666 = vmatpush1.xpose.msra.mxu0 0.0
        %5667 = vmatprep.subr.mxu0 0.0
        %5668 = vmatpush1.xpose.msra.mxu0 0.0
        %5669 = vmatprep.subr.mxu0 0.0
        %5670 = vmatpush1.xpose.msra.mxu0 0.0
        %5671 = vmatprep.subr.mxu0 0.0
        %5672 = vmatpush1.xpose.msra.mxu0 0.0
        %5673 = vmatprep.subr.mxu0 0.0
        %5674 = vmatpush1.xpose.msra.mxu0 0.0
        %5675 = vmatprep.subr.mxu0 0.0
        %5676 = vmatpush1.xpose.msra.mxu0 0.0
        %5677 = vmatprep.subr.mxu0 0.0
        %5678 = vmatpush1.xpose.msra.mxu0 0.0
        %5679 = vmatprep.subr.mxu0 0.0
        %5680 = vmatpush1.xpose.msra.mxu0 0.0
        %5681 = vmatprep.subr.mxu0 0.0
        %5682 = vmatpush1.xpose.msra.mxu0 0.0
        %5683 = vmatprep.subr.mxu0 0.0
        %5684 = vmatpush1.xpose.msra.mxu0 0.0
        %5685 = vmatprep.subr.mxu0 0.0
        %5686 = vmatpush1.xpose.msra.mxu0 0.0
        %5687 = vmatprep.subr.mxu0 0.0
        %5688 = vmatpush1.xpose.msra.mxu0 0.0
        %5689 = vmatprep.subr.mxu0 0.0
        %5690 = vmatpush1.xpose.msra.mxu0 0.0
        %5691 = vmatprep.subr.mxu0 0.0
        %5692 = vmatpush1.xpose.msra.mxu0 0.0
        %5693 = vmatprep.subr.mxu0 0.0
        %5694 = vmatpush1.xpose.msra.mxu0 0.0
        %5695 = vmatprep.subr.mxu0 0.0
        %5696 = vmatpush1.xpose.msra.mxu0 0.0
        %5697 = vmatprep.subr.mxu0 0.0
        %5698 = vmatpush1.xpose.msra.mxu0 0.0
        %5699 = vmatprep.subr.mxu0 0.0
        %5700 = vmatpush1.xpose.msra.mxu0 0.0
        %5701 = vmatprep.subr.mxu0 0.0
        %5702 = vmatpush1.xpose.msra.mxu0 0.0
        %5703 = vmatprep.subr.mxu0 0.0
        %5704 = vmatpush1.xpose.msra.mxu0 0.0
        %5705 = vmatprep.subr.mxu0 0.0
        %5706 = vmatpush1.xpose.msra.mxu0 0.0
        %5707 = vmatprep.subr.mxu0 0.0
        %5708 = vmatpush1.xpose.msra.mxu0 0.0
        %5709 = vmatprep.subr.mxu0 0.0
        %5710 = vmatpush1.xpose.msra.mxu0 0.0
        %5711 = vmatprep.subr.mxu0 0.0
        %5712 = vmatpush1.xpose.msra.mxu0 0.0
        %5713 = vmatprep.subr.mxu0 0.0
        %5714 = vmatpush1.xpose.msra.mxu0 0.0
        %5715 = vmatprep.subr.mxu0 0.0
        %5716 = vmatpush1.xpose.msra.mxu0 0.0
        %5717 = vmatprep.subr.mxu0 0.0
        %5718 = vmatpush1.xpose.msra.mxu0 0.0
        %5719 = vmatprep.subr.mxu0 0.0
        %5720 = vmatpush1.xpose.msra.mxu0 0.0
        %5721 = vmatprep.mubr.f32.mxu0 0.0
        %5722 = vmatmul.mubr.f32.gmra.mrb[0].mxu0 %v5653
        %v5723 = vpop.f32.mrb[0].mxu0
        %v5724 = vadd.f32 0.0, %v5723
        %v5725 = vpop.f32.mrb[0].mxu0
        %5726 = vdwg.mxu0
        %v5728 = vunpack.c.l.s4 1983009808
        %v5729 = vunpack.c.0.s8 %v5728
        %v5730 = vlaneseq
        %v5731 = vshrl.u32 %v5730, 7
        %v5732 = vsub.s32 %v5729, %v5731
        %v5733 = vrot.slane %v4952, %v5732
        %5734 = vrot.lane.b32.xlu0 %v5733, 120
        %v5735 = vpop.permute.xlu0 %5734
        %v5737 = vunpack.c.l.s4 1983009808
        %v5738 = vunpack.c.0.s8 %v5737
        %v5739 = vlaneseq
        %v5740 = vshrl.u32 %v5739, 7
        %v5741 = vsub.s32 %v5738, %v5740
        %v5742 = vrot.slane %v4970, %v5741
        %5743 = vrot.lane.b32.xlu0 %v5742, 120
        %v5744 = vpop.permute.xlu0 %5743
        %v5745 = vsel %vm927, %v5735, 0
        %v5747 = vsel %vm927, %v5744, 0
        %5749 = vmatprep.subr.mxu0 0.0
        %5750 = vmatpush1.xpose.msra.mxu0 %v5747
        %5751 = vmatprep.subr.mxu0 0.0
        %5752 = vmatpush1.xpose.msra.mxu0 0.0
        %5753 = vmatprep.subr.mxu0 0.0
        %5754 = vmatpush1.xpose.msra.mxu0 0.0
        %5755 = vmatprep.subr.mxu0 0.0
        %5756 = vmatpush1.xpose.msra.mxu0 0.0
        %5757 = vmatprep.subr.mxu0 0.0
        %5758 = vmatpush1.xpose.msra.mxu0 0.0
        %5759 = vmatprep.subr.mxu0 0.0
        %5760 = vmatpush1.xpose.msra.mxu0 0.0
        %5761 = vmatprep.subr.mxu0 0.0
        %5762 = vmatpush1.xpose.msra.mxu0 0.0
        %5763 = vmatprep.subr.mxu0 0.0
        %5764 = vmatpush1.xpose.msra.mxu0 0.0
        %5765 = vmatprep.subr.mxu0 0.0
        %5766 = vmatpush1.xpose.msra.mxu0 0.0
        %5767 = vmatprep.subr.mxu0 0.0
        %5768 = vmatpush1.xpose.msra.mxu0 0.0
        %5769 = vmatprep.subr.mxu0 0.0
        %5770 = vmatpush1.xpose.msra.mxu0 0.0
        %5771 = vmatprep.subr.mxu0 0.0
        %5772 = vmatpush1.xpose.msra.mxu0 0.0
        %5773 = vmatprep.subr.mxu0 0.0
        %5774 = vmatpush1.xpose.msra.mxu0 0.0
        %5775 = vmatprep.subr.mxu0 0.0
        %5776 = vmatpush1.xpose.msra.mxu0 0.0
        %5777 = vmatprep.subr.mxu0 0.0
        %5778 = vmatpush1.xpose.msra.mxu0 0.0
        %5779 = vmatprep.subr.mxu0 0.0
        %5780 = vmatpush1.xpose.msra.mxu0 0.0
        %5781 = vmatprep.subr.mxu0 0.0
        %5782 = vmatpush1.xpose.msra.mxu0 0.0
        %5783 = vmatprep.subr.mxu0 0.0
        %5784 = vmatpush1.xpose.msra.mxu0 0.0
        %5785 = vmatprep.subr.mxu0 0.0
        %5786 = vmatpush1.xpose.msra.mxu0 0.0
        %5787 = vmatprep.subr.mxu0 0.0
        %5788 = vmatpush1.xpose.msra.mxu0 0.0
        %5789 = vmatprep.subr.mxu0 0.0
        %5790 = vmatpush1.xpose.msra.mxu0 0.0
        %5791 = vmatprep.subr.mxu0 0.0
        %5792 = vmatpush1.xpose.msra.mxu0 0.0
        %5793 = vmatprep.subr.mxu0 0.0
        %5794 = vmatpush1.xpose.msra.mxu0 0.0
        %5795 = vmatprep.subr.mxu0 0.0
        %5796 = vmatpush1.xpose.msra.mxu0 0.0
        %5797 = vmatprep.subr.mxu0 0.0
        %5798 = vmatpush1.xpose.msra.mxu0 0.0
        %5799 = vmatprep.subr.mxu0 0.0
        %5800 = vmatpush1.xpose.msra.mxu0 0.0
        %5801 = vmatprep.subr.mxu0 0.0
        %5802 = vmatpush1.xpose.msra.mxu0 0.0
        %5803 = vmatprep.subr.mxu0 0.0
        %5804 = vmatpush1.xpose.msra.mxu0 0.0
        %5805 = vmatprep.subr.mxu0 0.0
        %5806 = vmatpush1.xpose.msra.mxu0 0.0
        %5807 = vmatprep.subr.mxu0 0.0
        %5808 = vmatpush1.xpose.msra.mxu0 0.0
        %5809 = vmatprep.subr.mxu0 0.0
        %5810 = vmatpush1.xpose.msra.mxu0 0.0
        %5811 = vmatprep.subr.mxu0 0.0
        %5812 = vmatpush1.xpose.msra.mxu0 0.0
        %5813 = vmatprep.mubr.f32.mxu0 0.0
        %5814 = vmatmul.mubr.f32.gmra.mrb[0].mxu0 %v5745
        %v5815 = vpop.f32.mrb[0].mxu0
        %v5816 = vadd.f32 0.0, %v5815
        %v5817 = vpop.f32.mrb[0].mxu0
        %5818 = vdwg.mxu0
        %v5820 = vunpack.c.l.s4 1983009808
        %v5821 = vunpack.c.0.s8 %v5820
        %v5822 = vlaneseq
        %v5823 = vshrl.u32 %v5822, 7
        %v5824 = vsub.s32 %v5821, %v5823
        %v5825 = vrot.slane %v4951, %v5824
        %5826 = vrot.lane.b32.xlu0 %v5825, 120
        %v5827 = vpop.permute.xlu0 %5826
        %v5829 = vunpack.c.l.s4 1983009808
        %v5830 = vunpack.c.0.s8 %v5829
        %v5831 = vlaneseq
        %v5832 = vshrl.u32 %v5831, 7
        %v5833 = vsub.s32 %v5830, %v5832
        %v5834 = vrot.slane %v4969, %v5833
        %5835 = vrot.lane.b32.xlu0 %v5834, 120
        %v5836 = vpop.permute.xlu0 %5835
        %v5837 = vsel %vm927, %v5827, 0
        %v5839 = vsel %vm927, %v5836, 0
        %5841 = vmatprep.subr.mxu0 0.0
        %5842 = vmatpush1.xpose.msra.mxu0 %v5839
        %5843 = vmatprep.subr.mxu0 0.0
        %5844 = vmatpush1.xpose.msra.mxu0 0.0
        %5845 = vmatprep.subr.mxu0 0.0
        %5846 = vmatpush1.xpose.msra.mxu0 0.0
        %5847 = vmatprep.subr.mxu0 0.0
        %5848 = vmatpush1.xpose.msra.mxu0 0.0
        %5849 = vmatprep.subr.mxu0 0.0
        %5850 = vmatpush1.xpose.msra.mxu0 0.0
        %5851 = vmatprep.subr.mxu0 0.0
        %5852 = vmatpush1.xpose.msra.mxu0 0.0
        %5853 = vmatprep.subr.mxu0 0.0
        %5854 = vmatpush1.xpose.msra.mxu0 0.0
        %5855 = vmatprep.subr.mxu0 0.0
        %5856 = vmatpush1.xpose.msra.mxu0 0.0
        %5857 = vmatprep.subr.mxu0 0.0
        %5858 = vmatpush1.xpose.msra.mxu0 0.0
        %5859 = vmatprep.subr.mxu0 0.0
        %5860 = vmatpush1.xpose.msra.mxu0 0.0
        %5861 = vmatprep.subr.mxu0 0.0
        %5862 = vmatpush1.xpose.msra.mxu0 0.0
        %5863 = vmatprep.subr.mxu0 0.0
        %5864 = vmatpush1.xpose.msra.mxu0 0.0
        %5865 = vmatprep.subr.mxu0 0.0
        %5866 = vmatpush1.xpose.msra.mxu0 0.0
        %5867 = vmatprep.subr.mxu0 0.0
        %5868 = vmatpush1.xpose.msra.mxu0 0.0
        %5869 = vmatprep.subr.mxu0 0.0
        %5870 = vmatpush1.xpose.msra.mxu0 0.0
        %5871 = vmatprep.subr.mxu0 0.0
        %5872 = vmatpush1.xpose.msra.mxu0 0.0
        %5873 = vmatprep.subr.mxu0 0.0
        %5874 = vmatpush1.xpose.msra.mxu0 0.0
        %5875 = vmatprep.subr.mxu0 0.0
        %5876 = vmatpush1.xpose.msra.mxu0 0.0
        %5877 = vmatprep.subr.mxu0 0.0
        %5878 = vmatpush1.xpose.msra.mxu0 0.0
        %5879 = vmatprep.subr.mxu0 0.0
        %5880 = vmatpush1.xpose.msra.mxu0 0.0
        %5881 = vmatprep.subr.mxu0 0.0
        %5882 = vmatpush1.xpose.msra.mxu0 0.0
        %5883 = vmatprep.subr.mxu0 0.0
        %5884 = vmatpush1.xpose.msra.mxu0 0.0
        %5885 = vmatprep.subr.mxu0 0.0
        %5886 = vmatpush1.xpose.msra.mxu0 0.0
        %5887 = vmatprep.subr.mxu0 0.0
        %5888 = vmatpush1.xpose.msra.mxu0 0.0
        %5889 = vmatprep.subr.mxu0 0.0
        %5890 = vmatpush1.xpose.msra.mxu0 0.0
        %5891 = vmatprep.subr.mxu0 0.0
        %5892 = vmatpush1.xpose.msra.mxu0 0.0
        %5893 = vmatprep.subr.mxu0 0.0
        %5894 = vmatpush1.xpose.msra.mxu0 0.0
        %5895 = vmatprep.subr.mxu0 0.0
        %5896 = vmatpush1.xpose.msra.mxu0 0.0
        %5897 = vmatprep.subr.mxu0 0.0
        %5898 = vmatpush1.xpose.msra.mxu0 0.0
        %5899 = vmatprep.subr.mxu0 0.0
        %5900 = vmatpush1.xpose.msra.mxu0 0.0
        %5901 = vmatprep.subr.mxu0 0.0
        %5902 = vmatpush1.xpose.msra.mxu0 0.0
        %5903 = vmatprep.subr.mxu0 0.0
        %5904 = vmatpush1.xpose.msra.mxu0 0.0
        %5905 = vmatprep.mubr.f32.mxu0 0.0
        %5906 = vmatmul.mubr.f32.gmra.mrb[0].mxu0 %v5837
        %v5907 = vpop.f32.mrb[0].mxu0
        %v5908 = vadd.f32 0.0, %v5907
        %v5909 = vpop.f32.mrb[0].mxu0
        %5910 = vdwg.mxu0
        %v5912 = vunpack.c.l.s4 1983009808
        %v5913 = vunpack.c.0.s8 %v5912
        %v5914 = vlaneseq
        %v5915 = vshrl.u32 %v5914, 7
        %v5916 = vsub.s32 %v5913, %v5915
        %v5917 = vrot.slane %v4953, %v5916
        %5918 = vrot.lane.b32.xlu0 %v5917, 120
        %v5919 = vpop.permute.xlu0 %5918
        %v5921 = vunpack.c.l.s4 1983009808
        %v5922 = vunpack.c.0.s8 %v5921
        %v5923 = vlaneseq
        %v5924 = vshrl.u32 %v5923, 7
        %v5925 = vsub.s32 %v5922, %v5924
        %v5926 = vrot.slane %v4971, %v5925
        %5927 = vrot.lane.b32.xlu0 %v5926, 120
        %v5928 = vpop.permute.xlu0 %5927
        %v5929 = vsel %vm927, %v5919, 0
        %v5931 = vsel %vm927, %v5928, 0
        %5933 = vmatprep.subr.mxu0 0.0
        %5934 = vmatpush1.xpose.msra.mxu0 %v5931
        %5935 = vmatprep.subr.mxu0 0.0
        %5936 = vmatpush1.xpose.msra.mxu0 0.0
        %5937 = vmatprep.subr.mxu0 0.0
        %5938 = vmatpush1.xpose.msra.mxu0 0.0
        %5939 = vmatprep.subr.mxu0 0.0
        %5940 = vmatpush1.xpose.msra.mxu0 0.0
        %5941 = vmatprep.subr.mxu0 0.0
        %5942 = vmatpush1.xpose.msra.mxu0 0.0
        %5943 = vmatprep.subr.mxu0 0.0
        %5944 = vmatpush1.xpose.msra.mxu0 0.0
        %5945 = vmatprep.subr.mxu0 0.0
        %5946 = vmatpush1.xpose.msra.mxu0 0.0
        %5947 = vmatprep.subr.mxu0 0.0
        %5948 = vmatpush1.xpose.msra.mxu0 0.0
        %5949 = vmatprep.subr.mxu0 0.0
        %5950 = vmatpush1.xpose.msra.mxu0 0.0
        %5951 = vmatprep.subr.mxu0 0.0
        %5952 = vmatpush1.xpose.msra.mxu0 0.0
        %5953 = vmatprep.subr.mxu0 0.0
        %5954 = vmatpush1.xpose.msra.mxu0 0.0
        %5955 = vmatprep.subr.mxu0 0.0
        %5956 = vmatpush1.xpose.msra.mxu0 0.0
        %5957 = vmatprep.subr.mxu0 0.0
        %5958 = vmatpush1.xpose.msra.mxu0 0.0
        %5959 = vmatprep.subr.mxu0 0.0
        %5960 = vmatpush1.xpose.msra.mxu0 0.0
        %5961 = vmatprep.subr.mxu0 0.0
        %5962 = vmatpush1.xpose.msra.mxu0 0.0
        %5963 = vmatprep.subr.mxu0 0.0
        %5964 = vmatpush1.xpose.msra.mxu0 0.0
        %5965 = vmatprep.subr.mxu0 0.0
        %5966 = vmatpush1.xpose.msra.mxu0 0.0
        %5967 = vmatprep.subr.mxu0 0.0
        %5968 = vmatpush1.xpose.msra.mxu0 0.0
        %5969 = vmatprep.subr.mxu0 0.0
        %5970 = vmatpush1.xpose.msra.mxu0 0.0
        %5971 = vmatprep.subr.mxu0 0.0
        %5972 = vmatpush1.xpose.msra.mxu0 0.0
        %5973 = vmatprep.subr.mxu0 0.0
        %5974 = vmatpush1.xpose.msra.mxu0 0.0
        %5975 = vmatprep.subr.mxu0 0.0
        %5976 = vmatpush1.xpose.msra.mxu0 0.0
        %5977 = vmatprep.subr.mxu0 0.0
        %5978 = vmatpush1.xpose.msra.mxu0 0.0
        %5979 = vmatprep.subr.mxu0 0.0
        %5980 = vmatpush1.xpose.msra.mxu0 0.0
        %5981 = vmatprep.subr.mxu0 0.0
        %5982 = vmatpush1.xpose.msra.mxu0 0.0
        %5983 = vmatprep.subr.mxu0 0.0
        %5984 = vmatpush1.xpose.msra.mxu0 0.0
        %5985 = vmatprep.subr.mxu0 0.0
        %5986 = vmatpush1.xpose.msra.mxu0 0.0
        %5987 = vmatprep.subr.mxu0 0.0
        %5988 = vmatpush1.xpose.msra.mxu0 0.0
        %5989 = vmatprep.subr.mxu0 0.0
        %5990 = vmatpush1.xpose.msra.mxu0 0.0
        %5991 = vmatprep.subr.mxu0 0.0
        %5992 = vmatpush1.xpose.msra.mxu0 0.0
        %5993 = vmatprep.subr.mxu0 0.0
        %5994 = vmatpush1.xpose.msra.mxu0 0.0
        %5995 = vmatprep.subr.mxu0 0.0
        %5996 = vmatpush1.xpose.msra.mxu0 0.0
        %5997 = vmatprep.mubr.f32.mxu0 0.0
        %5998 = vmatmul.mubr.f32.gmra.mrb[0].mxu0 %v5929
        %v5999 = vpop.f32.mrb[0].mxu0
        %v6000 = vadd.f32 0.0, %v5999
        %v6001 = vpop.f32.mrb[0].mxu0
        %6002 = vdwg.mxu0
        %v6003 = vsel %vm1224, %v5724, -inf
        %6004 = vmax.xlane.f32.xlu0 %v6003
        %v6005 = vpop.xlane.xlu0 %6004
        %v6006 = vsel %vm1224, %v5816, -inf
        %6007 = vmax.xlane.f32.xlu0 %v6006
        %v6008 = vpop.xlane.xlu0 %6007
        %v6009 = vsel %vm1224, %v5908, -inf
        %6010 = vmax.xlane.f32.xlu0 %v6009
        %v6011 = vpop.xlane.xlu0 %6010
        %v6012 = vsel %vm1224, %v6000, -inf
        %6013 = vmax.xlane.f32.xlu0 %v6012
        %v6014 = vpop.xlane.xlu0 %6013
        %v6015 = vsub.f32 %v5724, %v6005
        %v6016 = vsub.f32 %v5816, %v6008
        %v6017 = vsub.f32 %v5908, %v6011
        %v6018 = vsub.f32 %v6000, %v6014
        %v6019 = vmul.f32 %v6015, 1.442695
        %v6020 = vpow.pop %v6019
        %v6021 = vmul.f32 %v6016, 1.442695
        %v6022 = vpow.pop %v6021
        %v6023 = vmul.f32 %v6017, 1.442695
        %v6024 = vpow.pop %v6023
        %v6025 = vmul.f32 %v6018, 1.442695
        %v6026 = vpow.pop %v6025
        %v6027 = vsel %vm1224, %v6020, 0.0
        %6028 = vadd.xlane.f32.xlu0 %v6027
        %v6029 = vpop.xlane.xlu0 %6028
        %v6030 = vsel %vm1224, %v6022, 0.0
        %6031 = vadd.xlane.f32.xlu0 %v6030
        %v6032 = vpop.xlane.xlu0 %6031
        %v6033 = vsel %vm1224, %v6024, 0.0
        %6034 = vadd.xlane.f32.xlu0 %v6033
        %v6035 = vpop.xlane.xlu0 %6034
        %v6036 = vsel %vm1224, %v6026, 0.0
        %6037 = vadd.xlane.f32.xlu0 %v6036
        %v6038 = vpop.xlane.xlu0 %6037
        %v6039 = vrcp.pop %v6029
        %v6040 = vrcp.pop %v6032
        %v6041 = vrcp.pop %v6035
        %v6042 = vrcp.pop %v6038
        %v6043 = vmul.f32 %v6020, %v6039
        %v6044 = vmul.f32 %v6022, %v6040
        %v6045 = vmul.f32 %v6024, %v6041
        %v6046 = vmul.f32 %v6026, %v6042
        %v6048 = vunpack.c.l.s4 1983009808
        %v6049 = vunpack.c.0.s8 %v6048
        %v6050 = vlaneseq
        %v6051 = vshrl.u32 %v6050, 7
        %v6052 = vsub.s32 %v6049, %v6051
        %v6053 = vrot.slane %v4980, %v6052
        %6054 = vrot.lane.b32.xlu0 %v6053, 120
        %v6055 = vpop.permute.xlu0 %6054
        %v6057 = vsel %vm1269, %v6043, 0
        %v6059 = vsel %vm1273, %v6055, 0
        %6061 = vmatprep.subr.mxu0 0.0
        %6062 = vmatpush1.msra.mxu0 %v6059
        %6063 = vmatprep.subr.mxu0 0.0
        %6064 = vmatpush1.msra.mxu0 0.0
        %6065 = vmatprep.subr.mxu0 0.0
        %6066 = vmatpush1.msra.mxu0 0.0
        %6067 = vmatprep.subr.mxu0 0.0
        %6068 = vmatpush1.msra.mxu0 0.0
        %6069 = vmatprep.subr.mxu0 0.0
        %6070 = vmatpush1.msra.mxu0 0.0
        %6071 = vmatprep.subr.mxu0 0.0
        %6072 = vmatpush1.msra.mxu0 0.0
        %6073 = vmatprep.subr.mxu0 0.0
        %6074 = vmatpush1.msra.mxu0 0.0
        %6075 = vmatprep.subr.mxu0 0.0
        %6076 = vmatpush1.msra.mxu0 0.0
        %6077 = vmatprep.subr.mxu0 0.0
        %6078 = vmatpush1.msra.mxu0 0.0
        %6079 = vmatprep.subr.mxu0 0.0
        %6080 = vmatpush1.msra.mxu0 0.0
        %6081 = vmatprep.subr.mxu0 0.0
        %6082 = vmatpush1.msra.mxu0 0.0
        %6083 = vmatprep.subr.mxu0 0.0
        %6084 = vmatpush1.msra.mxu0 0.0
        %6085 = vmatprep.subr.mxu0 0.0
        %6086 = vmatpush1.msra.mxu0 0.0
        %6087 = vmatprep.subr.mxu0 0.0
        %6088 = vmatpush1.msra.mxu0 0.0
        %6089 = vmatprep.subr.mxu0 0.0
        %6090 = vmatpush1.msra.mxu0 0.0
        %6091 = vmatprep.subr.mxu0 0.0
        %6092 = vmatpush1.msra.mxu0 0.0
        %6093 = vmatprep.subr.mxu0 0.0
        %6094 = vmatpush1.msra.mxu0 0.0
        %6095 = vmatprep.subr.mxu0 0.0
        %6096 = vmatpush1.msra.mxu0 0.0
        %6097 = vmatprep.subr.mxu0 0.0
        %6098 = vmatpush1.msra.mxu0 0.0
        %6099 = vmatprep.subr.mxu0 0.0
        %6100 = vmatpush1.msra.mxu0 0.0
        %6101 = vmatprep.subr.mxu0 0.0
        %6102 = vmatpush1.msra.mxu0 0.0
        %6103 = vmatprep.subr.mxu0 0.0
        %6104 = vmatpush1.msra.mxu0 0.0
        %6105 = vmatprep.subr.mxu0 0.0
        %6106 = vmatpush1.msra.mxu0 0.0
        %6107 = vmatprep.subr.mxu0 0.0
        %6108 = vmatpush1.msra.mxu0 0.0
        %6109 = vmatprep.subr.mxu0 0.0
        %6110 = vmatpush1.msra.mxu0 0.0
        %6111 = vmatprep.subr.mxu0 0.0
        %6112 = vmatpush1.msra.mxu0 0.0
        %6113 = vmatprep.subr.mxu0 0.0
        %6114 = vmatpush1.msra.mxu0 0.0
        %6115 = vmatprep.subr.mxu0 0.0
        %6116 = vmatpush1.msra.mxu0 0.0
        %6117 = vmatprep.subr.mxu0 0.0
        %6118 = vmatpush1.msra.mxu0 0.0
        %6119 = vmatprep.subr.mxu0 0.0
        %6120 = vmatpush1.msra.mxu0 0.0
        %6121 = vmatprep.subr.mxu0 0.0
        %6122 = vmatpush1.msra.mxu0 0.0
        %6123 = vmatprep.subr.mxu0 0.0
        %6124 = vmatpush1.msra.mxu0 0.0
        %6125 = vmatprep.mubr.f32.mxu0 0.0
        %6126 = vmatmul.mubr.f32.gmra.mrb[0].mxu0 %v6057
        %v6127 = vpop.f32.mrb[0].mxu0
        %v6128 = vadd.f32 0.0, %v6127
        %v6129 = vpop.f32.mrb[0].mxu0
        %6130 = vdwg.mxu0
        %v6132 = vunpack.c.l.s4 1983009808
        %v6133 = vunpack.c.0.s8 %v6132
        %v6134 = vlaneseq
        %v6135 = vshrl.u32 %v6134, 7
        %v6136 = vsub.s32 %v6133, %v6135
        %v6137 = vrot.slane %v4988, %v6136
        %6138 = vrot.lane.b32.xlu0 %v6137, 120
        %v6139 = vpop.permute.xlu0 %6138
        %v6141 = vsel %vm1269, %v6044, 0
        %v6143 = vsel %vm1273, %v6139, 0
        %6145 = vmatprep.subr.mxu0 0.0
        %6146 = vmatpush1.msra.mxu0 %v6143
        %6147 = vmatprep.subr.mxu0 0.0
        %6148 = vmatpush1.msra.mxu0 0.0
        %6149 = vmatprep.subr.mxu0 0.0
        %6150 = vmatpush1.msra.mxu0 0.0
        %6151 = vmatprep.subr.mxu0 0.0
        %6152 = vmatpush1.msra.mxu0 0.0
        %6153 = vmatprep.subr.mxu0 0.0
        %6154 = vmatpush1.msra.mxu0 0.0
        %6155 = vmatprep.subr.mxu0 0.0
        %6156 = vmatpush1.msra.mxu0 0.0
        %6157 = vmatprep.subr.mxu0 0.0
        %6158 = vmatpush1.msra.mxu0 0.0
        %6159 = vmatprep.subr.mxu0 0.0
        %6160 = vmatpush1.msra.mxu0 0.0
        %6161 = vmatprep.subr.mxu0 0.0
        %6162 = vmatpush1.msra.mxu0 0.0
        %6163 = vmatprep.subr.mxu0 0.0
        %6164 = vmatpush1.msra.mxu0 0.0
        %6165 = vmatprep.subr.mxu0 0.0
        %6166 = vmatpush1.msra.mxu0 0.0
        %6167 = vmatprep.subr.mxu0 0.0
        %6168 = vmatpush1.msra.mxu0 0.0
        %6169 = vmatprep.subr.mxu0 0.0
        %6170 = vmatpush1.msra.mxu0 0.0
        %6171 = vmatprep.subr.mxu0 0.0
        %6172 = vmatpush1.msra.mxu0 0.0
        %6173 = vmatprep.subr.mxu0 0.0
        %6174 = vmatpush1.msra.mxu0 0.0
        %6175 = vmatprep.subr.mxu0 0.0
        %6176 = vmatpush1.msra.mxu0 0.0
        %6177 = vmatprep.subr.mxu0 0.0
        %6178 = vmatpush1.msra.mxu0 0.0
        %6179 = vmatprep.subr.mxu0 0.0
        %6180 = vmatpush1.msra.mxu0 0.0
        %6181 = vmatprep.subr.mxu0 0.0
        %6182 = vmatpush1.msra.mxu0 0.0
        %6183 = vmatprep.subr.mxu0 0.0
        %6184 = vmatpush1.msra.mxu0 0.0
        %6185 = vmatprep.subr.mxu0 0.0
        %6186 = vmatpush1.msra.mxu0 0.0
        %6187 = vmatprep.subr.mxu0 0.0
        %6188 = vmatpush1.msra.mxu0 0.0
        %6189 = vmatprep.subr.mxu0 0.0
        %6190 = vmatpush1.msra.mxu0 0.0
        %6191 = vmatprep.subr.mxu0 0.0
        %6192 = vmatpush1.msra.mxu0 0.0
        %6193 = vmatprep.subr.mxu0 0.0
        %6194 = vmatpush1.msra.mxu0 0.0
        %6195 = vmatprep.subr.mxu0 0.0
        %6196 = vmatpush1.msra.mxu0 0.0
        %6197 = vmatprep.subr.mxu0 0.0
        %6198 = vmatpush1.msra.mxu0 0.0
        %6199 = vmatprep.subr.mxu0 0.0
        %6200 = vmatpush1.msra.mxu0 0.0
        %6201 = vmatprep.subr.mxu0 0.0
        %6202 = vmatpush1.msra.mxu0 0.0
        %6203 = vmatprep.subr.mxu0 0.0
        %6204 = vmatpush1.msra.mxu0 0.0
        %6205 = vmatprep.subr.mxu0 0.0
        %6206 = vmatpush1.msra.mxu0 0.0
        %6207 = vmatprep.subr.mxu0 0.0
        %6208 = vmatpush1.msra.mxu0 0.0
        %6209 = vmatprep.mubr.f32.mxu0 0.0
        %6210 = vmatmul.mubr.f32.gmra.mrb[0].mxu0 %v6141
        %v6211 = vpop.f32.mrb[0].mxu0
        %v6212 = vadd.f32 0.0, %v6211
        %v6213 = vpop.f32.mrb[0].mxu0
        %6214 = vdwg.mxu0
        %v6216 = vunpack.c.l.s4 1983009808
        %v6217 = vunpack.c.0.s8 %v6216
        %v6218 = vlaneseq
        %v6219 = vshrl.u32 %v6218, 7
        %v6220 = vsub.s32 %v6217, %v6219
        %v6221 = vrot.slane %v4987, %v6220
        %6222 = vrot.lane.b32.xlu0 %v6221, 120
        %v6223 = vpop.permute.xlu0 %6222
        %v6225 = vsel %vm1269, %v6045, 0
        %v6227 = vsel %vm1273, %v6223, 0
        %6229 = vmatprep.subr.mxu0 0.0
        %6230 = vmatpush1.msra.mxu0 %v6227
        %6231 = vmatprep.subr.mxu0 0.0
        %6232 = vmatpush1.msra.mxu0 0.0
        %6233 = vmatprep.subr.mxu0 0.0
        %6234 = vmatpush1.msra.mxu0 0.0
        %6235 = vmatprep.subr.mxu0 0.0
        %6236 = vmatpush1.msra.mxu0 0.0
        %6237 = vmatprep.subr.mxu0 0.0
        %6238 = vmatpush1.msra.mxu0 0.0
        %6239 = vmatprep.subr.mxu0 0.0
        %6240 = vmatpush1.msra.mxu0 0.0
        %6241 = vmatprep.subr.mxu0 0.0
        %6242 = vmatpush1.msra.mxu0 0.0
        %6243 = vmatprep.subr.mxu0 0.0
        %6244 = vmatpush1.msra.mxu0 0.0
        %6245 = vmatprep.subr.mxu0 0.0
        %6246 = vmatpush1.msra.mxu0 0.0
        %6247 = vmatprep.subr.mxu0 0.0
        %6248 = vmatpush1.msra.mxu0 0.0
        %6249 = vmatprep.subr.mxu0 0.0
        %6250 = vmatpush1.msra.mxu0 0.0
        %6251 = vmatprep.subr.mxu0 0.0
        %6252 = vmatpush1.msra.mxu0 0.0
        %6253 = vmatprep.subr.mxu0 0.0
        %6254 = vmatpush1.msra.mxu0 0.0
        %6255 = vmatprep.subr.mxu0 0.0
        %6256 = vmatpush1.msra.mxu0 0.0
        %6257 = vmatprep.subr.mxu0 0.0
        %6258 = vmatpush1.msra.mxu0 0.0
        %6259 = vmatprep.subr.mxu0 0.0
        %6260 = vmatpush1.msra.mxu0 0.0
        %6261 = vmatprep.subr.mxu0 0.0
        %6262 = vmatpush1.msra.mxu0 0.0
        %6263 = vmatprep.subr.mxu0 0.0
        %6264 = vmatpush1.msra.mxu0 0.0
        %6265 = vmatprep.subr.mxu0 0.0
        %6266 = vmatpush1.msra.mxu0 0.0
        %6267 = vmatprep.subr.mxu0 0.0
        %6268 = vmatpush1.msra.mxu0 0.0
        %6269 = vmatprep.subr.mxu0 0.0
        %6270 = vmatpush1.msra.mxu0 0.0
        %6271 = vmatprep.subr.mxu0 0.0
        %6272 = vmatpush1.msra.mxu0 0.0
        %6273 = vmatprep.subr.mxu0 0.0
        %6274 = vmatpush1.msra.mxu0 0.0
        %6275 = vmatprep.subr.mxu0 0.0
        %6276 = vmatpush1.msra.mxu0 0.0
        %6277 = vmatprep.subr.mxu0 0.0
        %6278 = vmatpush1.msra.mxu0 0.0
        %6279 = vmatprep.subr.mxu0 0.0
        %6280 = vmatpush1.msra.mxu0 0.0
        %6281 = vmatprep.subr.mxu0 0.0
        %6282 = vmatpush1.msra.mxu0 0.0
        %6283 = vmatprep.subr.mxu0 0.0
        %6284 = vmatpush1.msra.mxu0 0.0
        %6285 = vmatprep.subr.mxu0 0.0
        %6286 = vmatpush1.msra.mxu0 0.0
        %6287 = vmatprep.subr.mxu0 0.0
        %6288 = vmatpush1.msra.mxu0 0.0
        %6289 = vmatprep.subr.mxu0 0.0
        %6290 = vmatpush1.msra.mxu0 0.0
        %6291 = vmatprep.subr.mxu0 0.0
        %6292 = vmatpush1.msra.mxu0 0.0
        %6293 = vmatprep.mubr.f32.mxu0 0.0
        %6294 = vmatmul.mubr.f32.gmra.mrb[0].mxu0 %v6225
        %v6295 = vpop.f32.mrb[0].mxu0
        %v6296 = vadd.f32 0.0, %v6295
        %v6297 = vpop.f32.mrb[0].mxu0
        %6298 = vdwg.mxu0
        %v6300 = vunpack.c.l.s4 1983009808
        %v6301 = vunpack.c.0.s8 %v6300
        %v6302 = vlaneseq
        %v6303 = vshrl.u32 %v6302, 7
        %v6304 = vsub.s32 %v6301, %v6303
        %v6305 = vrot.slane %v4989, %v6304
        %6306 = vrot.lane.b32.xlu0 %v6305, 120
        %v6307 = vpop.permute.xlu0 %6306
        %v6309 = vsel %vm1269, %v6046, 0
        %v6311 = vsel %vm1273, %v6307, 0
        %6313 = vmatprep.subr.mxu0 0.0
        %6314 = vmatpush1.msra.mxu0 %v6311
        %6315 = vmatprep.subr.mxu0 0.0
        %6316 = vmatpush1.msra.mxu0 0.0
        %6317 = vmatprep.subr.mxu0 0.0
        %6318 = vmatpush1.msra.mxu0 0.0
        %6319 = vmatprep.subr.mxu0 0.0
        %6320 = vmatpush1.msra.mxu0 0.0
        %6321 = vmatprep.subr.mxu0 0.0
        %6322 = vmatpush1.msra.mxu0 0.0
        %6323 = vmatprep.subr.mxu0 0.0
        %6324 = vmatpush1.msra.mxu0 0.0
        %6325 = vmatprep.subr.mxu0 0.0
        %6326 = vmatpush1.msra.mxu0 0.0
        %6327 = vmatprep.subr.mxu0 0.0
        %6328 = vmatpush1.msra.mxu0 0.0
        %6329 = vmatprep.subr.mxu0 0.0
        %6330 = vmatpush1.msra.mxu0 0.0
        %6331 = vmatprep.subr.mxu0 0.0
        %6332 = vmatpush1.msra.mxu0 0.0
        %6333 = vmatprep.subr.mxu0 0.0
        %6334 = vmatpush1.msra.mxu0 0.0
        %6335 = vmatprep.subr.mxu0 0.0
        %6336 = vmatpush1.msra.mxu0 0.0
        %6337 = vmatprep.subr.mxu0 0.0
        %6338 = vmatpush1.msra.mxu0 0.0
        %6339 = vmatprep.subr.mxu0 0.0
        %6340 = vmatpush1.msra.mxu0 0.0
        %6341 = vmatprep.subr.mxu0 0.0
        %6342 = vmatpush1.msra.mxu0 0.0
        %6343 = vmatprep.subr.mxu0 0.0
        %6344 = vmatpush1.msra.mxu0 0.0
        %6345 = vmatprep.subr.mxu0 0.0
        %6346 = vmatpush1.msra.mxu0 0.0
        %6347 = vmatprep.subr.mxu0 0.0
        %6348 = vmatpush1.msra.mxu0 0.0
        %6349 = vmatprep.subr.mxu0 0.0
        %6350 = vmatpush1.msra.mxu0 0.0
        %6351 = vmatprep.subr.mxu0 0.0
        %6352 = vmatpush1.msra.mxu0 0.0
        %6353 = vmatprep.subr.mxu0 0.0
        %6354 = vmatpush1.msra.mxu0 0.0
        %6355 = vmatprep.subr.mxu0 0.0
        %6356 = vmatpush1.msra.mxu0 0.0
        %6357 = vmatprep.subr.mxu0 0.0
        %6358 = vmatpush1.msra.mxu0 0.0
        %6359 = vmatprep.subr.mxu0 0.0
        %6360 = vmatpush1.msra.mxu0 0.0
        %6361 = vmatprep.subr.mxu0 0.0
        %6362 = vmatpush1.msra.mxu0 0.0
        %6363 = vmatprep.subr.mxu0 0.0
        %6364 = vmatpush1.msra.mxu0 0.0
        %6365 = vmatprep.subr.mxu0 0.0
        %6366 = vmatpush1.msra.mxu0 0.0
        %6367 = vmatprep.subr.mxu0 0.0
        %6368 = vmatpush1.msra.mxu0 0.0
        %6369 = vmatprep.subr.mxu0 0.0
        %6370 = vmatpush1.msra.mxu0 0.0
        %6371 = vmatprep.subr.mxu0 0.0
        %6372 = vmatpush1.msra.mxu0 0.0
        %6373 = vmatprep.subr.mxu0 0.0
        %6374 = vmatpush1.msra.mxu0 0.0
        %6375 = vmatprep.subr.mxu0 0.0
        %6376 = vmatpush1.msra.mxu0 0.0
        %6377 = vmatprep.mubr.f32.mxu0 0.0
        %6378 = vmatmul.mubr.f32.gmra.mrb[0].mxu0 %v6309
        %v6379 = vpop.f32.mrb[0].mxu0
        %v6380 = vadd.f32 0.0, %v6379
        %v6381 = vpop.f32.mrb[0].mxu0
        %6382 = vdwg.mxu0
        %v6387 = vcombine.low %v6128, %v6212
        %v6388 = vcombine.low %v6296, %v6380
        %v6390 = vunpack.c.l.s4 1983009808
        %v6391 = vunpack.c.0.s8 %v6390
        %v6392 = vlaneseq
        %v6393 = vshrl.u32 %v6392, 7
        %v6394 = vsub.s32 %v6391, %v6393
        %v6395 = vrot.slane %v6387, %v6394
        %v6397 = vunpack.c.l.s4 1983009808
        %v6398 = vunpack.c.0.s8 %v6397
        %v6399 = vlaneseq
        %v6400 = vshrl.u32 %v6399, 7
        %v6401 = vsub.s32 %v6398, %v6400
        %v6402 = vrot.slane %v6388, %v6401
        %v6403 = vcombine.low %v6395, %v6402
        %v6404 = vsel %vm927, %v6403, 0
        %6406 = vmatprep.subr.mxu0 0.0
        %6407 = vmatpush1.msra.mxu0 %v4992
        %6408 = vmatprep.subr.mxu0 0.0
        %6409 = vmatpush1.msra.mxu0 0.0
        %6410 = vmatprep.subr.mxu0 0.0
        %6411 = vmatpush1.msra.mxu0 0.0
        %6412 = vmatprep.subr.mxu0 0.0
        %6413 = vmatpush1.msra.mxu0 0.0
        %6414 = vmatprep.subr.mxu0 0.0
        %6415 = vmatpush1.msra.mxu0 0.0
        %6416 = vmatprep.subr.mxu0 0.0
        %6417 = vmatpush1.msra.mxu0 0.0
        %6418 = vmatprep.subr.mxu0 0.0
        %6419 = vmatpush1.msra.mxu0 0.0
        %6420 = vmatprep.subr.mxu0 0.0
        %6421 = vmatpush1.msra.mxu0 0.0
        %6422 = vmatprep.subr.mxu0 0.0
        %6423 = vmatpush1.msra.mxu0 0.0
        %6424 = vmatprep.subr.mxu0 0.0
        %6425 = vmatpush1.msra.mxu0 0.0
        %6426 = vmatprep.subr.mxu0 0.0
        %6427 = vmatpush1.msra.mxu0 0.0
        %6428 = vmatprep.subr.mxu0 0.0
        %6429 = vmatpush1.msra.mxu0 0.0
        %6430 = vmatprep.subr.mxu0 0.0
        %6431 = vmatpush1.msra.mxu0 0.0
        %6432 = vmatprep.subr.mxu0 0.0
        %6433 = vmatpush1.msra.mxu0 0.0
        %6434 = vmatprep.subr.mxu0 0.0
        %6435 = vmatpush1.msra.mxu0 0.0
        %6436 = vmatprep.subr.mxu0 0.0
        %6437 = vmatpush1.msra.mxu0 0.0
        %6438 = vmatprep.subr.mxu0 0.0
        %6439 = vmatpush1.msra.mxu0 0.0
        %6440 = vmatprep.subr.mxu0 0.0
        %6441 = vmatpush1.msra.mxu0 0.0
        %6442 = vmatprep.subr.mxu0 0.0
        %6443 = vmatpush1.msra.mxu0 0.0
        %6444 = vmatprep.subr.mxu0 0.0
        %6445 = vmatpush1.msra.mxu0 0.0
        %6446 = vmatprep.subr.mxu0 0.0
        %6447 = vmatpush1.msra.mxu0 0.0
        %6448 = vmatprep.subr.mxu0 0.0
        %6449 = vmatpush1.msra.mxu0 0.0
        %6450 = vmatprep.subr.mxu0 0.0
        %6451 = vmatpush1.msra.mxu0 0.0
        %6452 = vmatprep.subr.mxu0 0.0
        %6453 = vmatpush1.msra.mxu0 0.0
        %6454 = vmatprep.subr.mxu0 0.0
        %6455 = vmatpush1.msra.mxu0 0.0
        %6456 = vmatprep.subr.mxu0 0.0
        %6457 = vmatpush1.msra.mxu0 0.0
        %6458 = vmatprep.subr.mxu0 0.0
        %6459 = vmatpush1.msra.mxu0 0.0
        %6460 = vmatprep.subr.mxu0 0.0
        %6461 = vmatpush1.msra.mxu0 0.0
        %6462 = vmatprep.subr.mxu0 0.0
        %6463 = vmatpush1.msra.mxu0 0.0
        %6464 = vmatprep.subr.mxu0 0.0
        %6465 = vmatpush1.msra.mxu0 0.0
        %6466 = vmatprep.subr.mxu0 0.0
        %6467 = vmatpush1.msra.mxu0 0.0
        %6468 = vmatprep.subr.mxu0 0.0
        %6469 = vmatpush1.msra.mxu0 0.0
        %6470 = vmatprep.mubr.f32.mxu0 0.0
        %6471 = vmatmul.mubr.f32.gmra.mrb[0].mxu0 %v6404
        %v6472 = vpop.f32.mrb[0].mxu0
        %v6473 = vadd.f32 0.0, %v6472
        %v6474 = vpop.f32.mrb[0].mxu0
        %6475 = vdwg.mxu0
        %v6480 = vcombine.low %v5407, %v5482
        %v6481 = vcombine.low %v5557, %v5632
        %v6483 = vunpack.c.l.s4 1983009808
        %v6484 = vunpack.c.0.s8 %v6483
        %v6485 = vlaneseq
        %v6486 = vshrl.u32 %v6485, 7
        %v6487 = vsub.s32 %v6484, %v6486
        %v6488 = vrot.slane %v6480, %v6487
        %v6490 = vunpack.c.l.s4 1983009808
        %v6491 = vunpack.c.0.s8 %v6490
        %v6492 = vlaneseq
        %v6493 = vshrl.u32 %v6492, 7
        %v6494 = vsub.s32 %v6491, %v6493
        %v6495 = vrot.slane %v6481, %v6494
        %v6496 = vcombine.low %v6488, %v6495
        %v6497 = vsel %vm927, %v6496, 0
        %6499 = vmatprep.subr.mxu0 0.0
        %6500 = vmatpush1.msra.mxu0 %v4991
        %6501 = vmatprep.subr.mxu0 0.0
        %6502 = vmatpush1.msra.mxu0 0.0
        %6503 = vmatprep.subr.mxu0 0.0
        %6504 = vmatpush1.msra.mxu0 0.0
        %6505 = vmatprep.subr.mxu0 0.0
        %6506 = vmatpush1.msra.mxu0 0.0
        %6507 = vmatprep.subr.mxu0 0.0
        %6508 = vmatpush1.msra.mxu0 0.0
        %6509 = vmatprep.subr.mxu0 0.0
        %6510 = vmatpush1.msra.mxu0 0.0
        %6511 = vmatprep.subr.mxu0 0.0
        %6512 = vmatpush1.msra.mxu0 0.0
        %6513 = vmatprep.subr.mxu0 0.0
        %6514 = vmatpush1.msra.mxu0 0.0
        %6515 = vmatprep.subr.mxu0 0.0
        %6516 = vmatpush1.msra.mxu0 0.0
        %6517 = vmatprep.subr.mxu0 0.0
        %6518 = vmatpush1.msra.mxu0 0.0
        %6519 = vmatprep.subr.mxu0 0.0
        %6520 = vmatpush1.msra.mxu0 0.0
        %6521 = vmatprep.subr.mxu0 0.0
        %6522 = vmatpush1.msra.mxu0 0.0
        %6523 = vmatprep.subr.mxu0 0.0
        %6524 = vmatpush1.msra.mxu0 0.0
        %6525 = vmatprep.subr.mxu0 0.0
        %6526 = vmatpush1.msra.mxu0 0.0
        %6527 = vmatprep.subr.mxu0 0.0
        %6528 = vmatpush1.msra.mxu0 0.0
        %6529 = vmatprep.subr.mxu0 0.0
        %6530 = vmatpush1.msra.mxu0 0.0
        %6531 = vmatprep.subr.mxu0 0.0
        %6532 = vmatpush1.msra.mxu0 0.0
        %6533 = vmatprep.subr.mxu0 0.0
        %6534 = vmatpush1.msra.mxu0 0.0
        %6535 = vmatprep.subr.mxu0 0.0
        %6536 = vmatpush1.msra.mxu0 0.0
        %6537 = vmatprep.subr.mxu0 0.0
        %6538 = vmatpush1.msra.mxu0 0.0
        %6539 = vmatprep.subr.mxu0 0.0
        %6540 = vmatpush1.msra.mxu0 0.0
        %6541 = vmatprep.subr.mxu0 0.0
        %6542 = vmatpush1.msra.mxu0 0.0
        %6543 = vmatprep.subr.mxu0 0.0
        %6544 = vmatpush1.msra.mxu0 0.0
        %6545 = vmatprep.subr.mxu0 0.0
        %6546 = vmatpush1.msra.mxu0 0.0
        %6547 = vmatprep.subr.mxu0 0.0
        %6548 = vmatpush1.msra.mxu0 0.0
        %6549 = vmatprep.subr.mxu0 0.0
        %6550 = vmatpush1.msra.mxu0 0.0
        %6551 = vmatprep.subr.mxu0 0.0
        %6552 = vmatpush1.msra.mxu0 0.0
        %6553 = vmatprep.subr.mxu0 0.0
        %6554 = vmatpush1.msra.mxu0 0.0
        %6555 = vmatprep.subr.mxu0 0.0
        %6556 = vmatpush1.msra.mxu0 0.0
        %6557 = vmatprep.subr.mxu0 0.0
        %6558 = vmatpush1.msra.mxu0 0.0
        %6559 = vmatprep.subr.mxu0 0.0
        %6560 = vmatpush1.msra.mxu0 0.0
        %6561 = vmatprep.subr.mxu0 0.0
        %6562 = vmatpush1.msra.mxu0 0.0
        %6563 = vmatprep.mubr.f32.mxu0 0.0
        %6564 = vmatmul.mubr.f32.gmra.mrb[0].mxu0 %v6497
        %v6565 = vpop.f32.mrb[0].mxu0
        %v6566 = vadd.f32 %v6473, %v6565
        %v6567 = vpop.f32.mrb[0].mxu0
        %6568 = vdwg.mxu0
        %6569 = vrot.lane.b32.xlu0 %v5641, 112
        %v6570 = vpop.permute.xlu0 %6569
        %6571 = vrot.lane.b32.xlu0 %v5650, 112
        %v6572 = vpop.permute.xlu0 %6571
        %v6573 = vsel %vm927, %v6570, 0
        %v6575 = vsel %vm927, %v6572, 0
        %6577 = vmatprep.subr.mxu0 0.0
        %6578 = vmatpush1.xpose.msra.mxu0 %v6575
        %6579 = vmatprep.subr.mxu0 0.0
        %6580 = vmatpush1.xpose.msra.mxu0 0.0
        %6581 = vmatprep.subr.mxu0 0.0
        %6582 = vmatpush1.xpose.msra.mxu0 0.0
        %6583 = vmatprep.subr.mxu0 0.0
        %6584 = vmatpush1.xpose.msra.mxu0 0.0
        %6585 = vmatprep.subr.mxu0 0.0
        %6586 = vmatpush1.xpose.msra.mxu0 0.0
        %6587 = vmatprep.subr.mxu0 0.0
        %6588 = vmatpush1.xpose.msra.mxu0 0.0
        %6589 = vmatprep.subr.mxu0 0.0
        %6590 = vmatpush1.xpose.msra.mxu0 0.0
        %6591 = vmatprep.subr.mxu0 0.0
        %6592 = vmatpush1.xpose.msra.mxu0 0.0
        %6593 = vmatprep.subr.mxu0 0.0
        %6594 = vmatpush1.xpose.msra.mxu0 0.0
        %6595 = vmatprep.subr.mxu0 0.0
        %6596 = vmatpush1.xpose.msra.mxu0 0.0
        %6597 = vmatprep.subr.mxu0 0.0
        %6598 = vmatpush1.xpose.msra.mxu0 0.0
        %6599 = vmatprep.subr.mxu0 0.0
        %6600 = vmatpush1.xpose.msra.mxu0 0.0
        %6601 = vmatprep.subr.mxu0 0.0
        %6602 = vmatpush1.xpose.msra.mxu0 0.0
        %6603 = vmatprep.subr.mxu0 0.0
        %6604 = vmatpush1.xpose.msra.mxu0 0.0
        %6605 = vmatprep.subr.mxu0 0.0
        %6606 = vmatpush1.xpose.msra.mxu0 0.0
        %6607 = vmatprep.subr.mxu0 0.0
        %6608 = vmatpush1.xpose.msra.mxu0 0.0
        %6609 = vmatprep.subr.mxu0 0.0
        %6610 = vmatpush1.xpose.msra.mxu0 0.0
        %6611 = vmatprep.subr.mxu0 0.0
        %6612 = vmatpush1.xpose.msra.mxu0 0.0
        %6613 = vmatprep.subr.mxu0 0.0
        %6614 = vmatpush1.xpose.msra.mxu0 0.0
        %6615 = vmatprep.subr.mxu0 0.0
        %6616 = vmatpush1.xpose.msra.mxu0 0.0
        %6617 = vmatprep.subr.mxu0 0.0
        %6618 = vmatpush1.xpose.msra.mxu0 0.0
        %6619 = vmatprep.subr.mxu0 0.0
        %6620 = vmatpush1.xpose.msra.mxu0 0.0
        %6621 = vmatprep.subr.mxu0 0.0
        %6622 = vmatpush1.xpose.msra.mxu0 0.0
        %6623 = vmatprep.subr.mxu0 0.0
        %6624 = vmatpush1.xpose.msra.mxu0 0.0
        %6625 = vmatprep.subr.mxu0 0.0
        %6626 = vmatpush1.xpose.msra.mxu0 0.0
        %6627 = vmatprep.subr.mxu0 0.0
        %6628 = vmatpush1.xpose.msra.mxu0 0.0
        %6629 = vmatprep.subr.mxu0 0.0
        %6630 = vmatpush1.xpose.msra.mxu0 0.0
        %6631 = vmatprep.subr.mxu0 0.0
        %6632 = vmatpush1.xpose.msra.mxu0 0.0
        %6633 = vmatprep.subr.mxu0 0.0
        %6634 = vmatpush1.xpose.msra.mxu0 0.0
        %6635 = vmatprep.subr.mxu0 0.0
        %6636 = vmatpush1.xpose.msra.mxu0 0.0
        %6637 = vmatprep.subr.mxu0 0.0
        %6638 = vmatpush1.xpose.msra.mxu0 0.0
        %6639 = vmatprep.subr.mxu0 0.0
        %6640 = vmatpush1.xpose.msra.mxu0 0.0
        %6641 = vmatprep.mubr.f32.mxu0 0.0
        %6642 = vmatmul.mubr.f32.gmra.mrb[0].mxu0 %v6573
        %v6643 = vpop.f32.mrb[0].mxu0
        %v6644 = vadd.f32 0.0, %v6643
        %v6645 = vpop.f32.mrb[0].mxu0
        %6646 = vdwg.mxu0
        %6647 = vrot.lane.b32.xlu0 %v5733, 112
        %v6648 = vpop.permute.xlu0 %6647
        %6649 = vrot.lane.b32.xlu0 %v5742, 112
        %v6650 = vpop.permute.xlu0 %6649
        %v6651 = vsel %vm927, %v6648, 0
        %v6653 = vsel %vm927, %v6650, 0
        %6655 = vmatprep.subr.mxu0 0.0
        %6656 = vmatpush1.xpose.msra.mxu0 %v6653
        %6657 = vmatprep.subr.mxu0 0.0
        %6658 = vmatpush1.xpose.msra.mxu0 0.0
        %6659 = vmatprep.subr.mxu0 0.0
        %6660 = vmatpush1.xpose.msra.mxu0 0.0
        %6661 = vmatprep.subr.mxu0 0.0
        %6662 = vmatpush1.xpose.msra.mxu0 0.0
        %6663 = vmatprep.subr.mxu0 0.0
        %6664 = vmatpush1.xpose.msra.mxu0 0.0
        %6665 = vmatprep.subr.mxu0 0.0
        %6666 = vmatpush1.xpose.msra.mxu0 0.0
        %6667 = vmatprep.subr.mxu0 0.0
        %6668 = vmatpush1.xpose.msra.mxu0 0.0
        %6669 = vmatprep.subr.mxu0 0.0
        %6670 = vmatpush1.xpose.msra.mxu0 0.0
        %6671 = vmatprep.subr.mxu0 0.0
        %6672 = vmatpush1.xpose.msra.mxu0 0.0
        %6673 = vmatprep.subr.mxu0 0.0
        %6674 = vmatpush1.xpose.msra.mxu0 0.0
        %6675 = vmatprep.subr.mxu0 0.0
        %6676 = vmatpush1.xpose.msra.mxu0 0.0
        %6677 = vmatprep.subr.mxu0 0.0
        %6678 = vmatpush1.xpose.msra.mxu0 0.0
        %6679 = vmatprep.subr.mxu0 0.0
        %6680 = vmatpush1.xpose.msra.mxu0 0.0
        %6681 = vmatprep.subr.mxu0 0.0
        %6682 = vmatpush1.xpose.msra.mxu0 0.0
        %6683 = vmatprep.subr.mxu0 0.0
        %6684 = vmatpush1.xpose.msra.mxu0 0.0
        %6685 = vmatprep.subr.mxu0 0.0
        %6686 = vmatpush1.xpose.msra.mxu0 0.0
        %6687 = vmatprep.subr.mxu0 0.0
        %6688 = vmatpush1.xpose.msra.mxu0 0.0
        %6689 = vmatprep.subr.mxu0 0.0
        %6690 = vmatpush1.xpose.msra.mxu0 0.0
        %6691 = vmatprep.subr.mxu0 0.0
        %6692 = vmatpush1.xpose.msra.mxu0 0.0
        %6693 = vmatprep.subr.mxu0 0.0
        %6694 = vmatpush1.xpose.msra.mxu0 0.0
        %6695 = vmatprep.subr.mxu0 0.0
        %6696 = vmatpush1.xpose.msra.mxu0 0.0
        %6697 = vmatprep.subr.mxu0 0.0
        %6698 = vmatpush1.xpose.msra.mxu0 0.0
        %6699 = vmatprep.subr.mxu0 0.0
        %6700 = vmatpush1.xpose.msra.mxu0 0.0
        %6701 = vmatprep.subr.mxu0 0.0
        %6702 = vmatpush1.xpose.msra.mxu0 0.0
        %6703 = vmatprep.subr.mxu0 0.0
        %6704 = vmatpush1.xpose.msra.mxu0 0.0
        %6705 = vmatprep.subr.mxu0 0.0
        %6706 = vmatpush1.xpose.msra.mxu0 0.0
        %6707 = vmatprep.subr.mxu0 0.0
        %6708 = vmatpush1.xpose.msra.mxu0 0.0
        %6709 = vmatprep.subr.mxu0 0.0
        %6710 = vmatpush1.xpose.msra.mxu0 0.0
        %6711 = vmatprep.subr.mxu0 0.0
        %6712 = vmatpush1.xpose.msra.mxu0 0.0
        %6713 = vmatprep.subr.mxu0 0.0
        %6714 = vmatpush1.xpose.msra.mxu0 0.0
        %6715 = vmatprep.subr.mxu0 0.0
        %6716 = vmatpush1.xpose.msra.mxu0 0.0
        %6717 = vmatprep.subr.mxu0 0.0
        %6718 = vmatpush1.xpose.msra.mxu0 0.0
        %6719 = vmatprep.mubr.f32.mxu0 0.0
        %6720 = vmatmul.mubr.f32.gmra.mrb[0].mxu0 %v6651
        %v6721 = vpop.f32.mrb[0].mxu0
        %v6722 = vadd.f32 0.0, %v6721
        %v6723 = vpop.f32.mrb[0].mxu0
        %6724 = vdwg.mxu0
        %6725 = vrot.lane.b32.xlu0 %v5825, 112
        %v6726 = vpop.permute.xlu0 %6725
        %6727 = vrot.lane.b32.xlu0 %v5834, 112
        %v6728 = vpop.permute.xlu0 %6727
        %v6729 = vsel %vm927, %v6726, 0
        %v6731 = vsel %vm927, %v6728, 0
        %6733 = vmatprep.subr.mxu0 0.0
        %6734 = vmatpush1.xpose.msra.mxu0 %v6731
        %6735 = vmatprep.subr.mxu0 0.0
        %6736 = vmatpush1.xpose.msra.mxu0 0.0
        %6737 = vmatprep.subr.mxu0 0.0
        %6738 = vmatpush1.xpose.msra.mxu0 0.0
        %6739 = vmatprep.subr.mxu0 0.0
        %6740 = vmatpush1.xpose.msra.mxu0 0.0
        %6741 = vmatprep.subr.mxu0 0.0
        %6742 = vmatpush1.xpose.msra.mxu0 0.0
        %6743 = vmatprep.subr.mxu0 0.0
        %6744 = vmatpush1.xpose.msra.mxu0 0.0
        %6745 = vmatprep.subr.mxu0 0.0
        %6746 = vmatpush1.xpose.msra.mxu0 0.0
        %6747 = vmatprep.subr.mxu0 0.0
        %6748 = vmatpush1.xpose.msra.mxu0 0.0
        %6749 = vmatprep.subr.mxu0 0.0
        %6750 = vmatpush1.xpose.msra.mxu0 0.0
        %6751 = vmatprep.subr.mxu0 0.0
        %6752 = vmatpush1.xpose.msra.mxu0 0.0
        %6753 = vmatprep.subr.mxu0 0.0
        %6754 = vmatpush1.xpose.msra.mxu0 0.0
        %6755 = vmatprep.subr.mxu0 0.0
        %6756 = vmatpush1.xpose.msra.mxu0 0.0
        %6757 = vmatprep.subr.mxu0 0.0
        %6758 = vmatpush1.xpose.msra.mxu0 0.0
        %6759 = vmatprep.subr.mxu0 0.0
        %6760 = vmatpush1.xpose.msra.mxu0 0.0
        %6761 = vmatprep.subr.mxu0 0.0
        %6762 = vmatpush1.xpose.msra.mxu0 0.0
        %6763 = vmatprep.subr.mxu0 0.0
        %6764 = vmatpush1.xpose.msra.mxu0 0.0
        %6765 = vmatprep.subr.mxu0 0.0
        %6766 = vmatpush1.xpose.msra.mxu0 0.0
        %6767 = vmatprep.subr.mxu0 0.0
        %6768 = vmatpush1.xpose.msra.mxu0 0.0
        %6769 = vmatprep.subr.mxu0 0.0
        %6770 = vmatpush1.xpose.msra.mxu0 0.0
        %6771 = vmatprep.subr.mxu0 0.0
        %6772 = vmatpush1.xpose.msra.mxu0 0.0
        %6773 = vmatprep.subr.mxu0 0.0
        %6774 = vmatpush1.xpose.msra.mxu0 0.0
        %6775 = vmatprep.subr.mxu0 0.0
        %6776 = vmatpush1.xpose.msra.mxu0 0.0
        %6777 = vmatprep.subr.mxu0 0.0
        %6778 = vmatpush1.xpose.msra.mxu0 0.0
        %6779 = vmatprep.subr.mxu0 0.0
        %6780 = vmatpush1.xpose.msra.mxu0 0.0
        %6781 = vmatprep.subr.mxu0 0.0
        %6782 = vmatpush1.xpose.msra.mxu0 0.0
        %6783 = vmatprep.subr.mxu0 0.0
        %6784 = vmatpush1.xpose.msra.mxu0 0.0
        %6785 = vmatprep.subr.mxu0 0.0
        %6786 = vmatpush1.xpose.msra.mxu0 0.0
        %6787 = vmatprep.subr.mxu0 0.0
        %6788 = vmatpush1.xpose.msra.mxu0 0.0
        %6789 = vmatprep.subr.mxu0 0.0
        %6790 = vmatpush1.xpose.msra.mxu0 0.0
        %6791 = vmatprep.subr.mxu0 0.0
        %6792 = vmatpush1.xpose.msra.mxu0 0.0
        %6793 = vmatprep.subr.mxu0 0.0
        %6794 = vmatpush1.xpose.msra.mxu0 0.0
        %6795 = vmatprep.subr.mxu0 0.0
        %6796 = vmatpush1.xpose.msra.mxu0 0.0
        %6797 = vmatprep.mubr.f32.mxu0 0.0
        %6798 = vmatmul.mubr.f32.gmra.mrb[0].mxu0 %v6729
        %v6799 = vpop.f32.mrb[0].mxu0
        %v6800 = vadd.f32 0.0, %v6799
        %v6801 = vpop.f32.mrb[0].mxu0
        %6802 = vdwg.mxu0
        %6803 = vrot.lane.b32.xlu0 %v5917, 112
        %v6804 = vpop.permute.xlu0 %6803
        %6805 = vrot.lane.b32.xlu0 %v5926, 112
        %v6806 = vpop.permute.xlu0 %6805
        %v6807 = vsel %vm927, %v6804, 0
        %v6809 = vsel %vm927, %v6806, 0
        %6811 = vmatprep.subr.mxu0 0.0
        %6812 = vmatpush1.xpose.msra.mxu0 %v6809
        %6813 = vmatprep.subr.mxu0 0.0
        %6814 = vmatpush1.xpose.msra.mxu0 0.0
        %6815 = vmatprep.subr.mxu0 0.0
        %6816 = vmatpush1.xpose.msra.mxu0 0.0
        %6817 = vmatprep.subr.mxu0 0.0
        %6818 = vmatpush1.xpose.msra.mxu0 0.0
        %6819 = vmatprep.subr.mxu0 0.0
        %6820 = vmatpush1.xpose.msra.mxu0 0.0
        %6821 = vmatprep.subr.mxu0 0.0
        %6822 = vmatpush1.xpose.msra.mxu0 0.0
        %6823 = vmatprep.subr.mxu0 0.0
        %6824 = vmatpush1.xpose.msra.mxu0 0.0
        %6825 = vmatprep.subr.mxu0 0.0
        %6826 = vmatpush1.xpose.msra.mxu0 0.0
        %6827 = vmatprep.subr.mxu0 0.0
        %6828 = vmatpush1.xpose.msra.mxu0 0.0
        %6829 = vmatprep.subr.mxu0 0.0
        %6830 = vmatpush1.xpose.msra.mxu0 0.0
        %6831 = vmatprep.subr.mxu0 0.0
        %6832 = vmatpush1.xpose.msra.mxu0 0.0
        %6833 = vmatprep.subr.mxu0 0.0
        %6834 = vmatpush1.xpose.msra.mxu0 0.0
        %6835 = vmatprep.subr.mxu0 0.0
        %6836 = vmatpush1.xpose.msra.mxu0 0.0
        %6837 = vmatprep.subr.mxu0 0.0
        %6838 = vmatpush1.xpose.msra.mxu0 0.0
        %6839 = vmatprep.subr.mxu0 0.0
        %6840 = vmatpush1.xpose.msra.mxu0 0.0
        %6841 = vmatprep.subr.mxu0 0.0
        %6842 = vmatpush1.xpose.msra.mxu0 0.0
        %6843 = vmatprep.subr.mxu0 0.0
        %6844 = vmatpush1.xpose.msra.mxu0 0.0
        %6845 = vmatprep.subr.mxu0 0.0
        %6846 = vmatpush1.xpose.msra.mxu0 0.0
        %6847 = vmatprep.subr.mxu0 0.0
        %6848 = vmatpush1.xpose.msra.mxu0 0.0
        %6849 = vmatprep.subr.mxu0 0.0
        %6850 = vmatpush1.xpose.msra.mxu0 0.0
        %6851 = vmatprep.subr.mxu0 0.0
        %6852 = vmatpush1.xpose.msra.mxu0 0.0
        %6853 = vmatprep.subr.mxu0 0.0
        %6854 = vmatpush1.xpose.msra.mxu0 0.0
        %6855 = vmatprep.subr.mxu0 0.0
        %6856 = vmatpush1.xpose.msra.mxu0 0.0
        %6857 = vmatprep.subr.mxu0 0.0
        %6858 = vmatpush1.xpose.msra.mxu0 0.0
        %6859 = vmatprep.subr.mxu0 0.0
        %6860 = vmatpush1.xpose.msra.mxu0 0.0
        %6861 = vmatprep.subr.mxu0 0.0
        %6862 = vmatpush1.xpose.msra.mxu0 0.0
        %6863 = vmatprep.subr.mxu0 0.0
        %6864 = vmatpush1.xpose.msra.mxu0 0.0
        %6865 = vmatprep.subr.mxu0 0.0
        %6866 = vmatpush1.xpose.msra.mxu0 0.0
        %6867 = vmatprep.subr.mxu0 0.0
        %6868 = vmatpush1.xpose.msra.mxu0 0.0
        %6869 = vmatprep.subr.mxu0 0.0
        %6870 = vmatpush1.xpose.msra.mxu0 0.0
        %6871 = vmatprep.subr.mxu0 0.0
        %6872 = vmatpush1.xpose.msra.mxu0 0.0
        %6873 = vmatprep.subr.mxu0 0.0
        %6874 = vmatpush1.xpose.msra.mxu0 0.0
        %6875 = vmatprep.mubr.f32.mxu0 0.0
        %6876 = vmatmul.mubr.f32.gmra.mrb[0].mxu0 %v6807
        %v6877 = vpop.f32.mrb[0].mxu0
        %v6878 = vadd.f32 0.0, %v6877
        %v6879 = vpop.f32.mrb[0].mxu0
        %6880 = vdwg.mxu0
        %v6881 = vsel %vm1224, %v6644, -inf
        %6882 = vmax.xlane.f32.xlu0 %v6881
        %v6883 = vpop.xlane.xlu0 %6882
        %v6884 = vsel %vm1224, %v6722, -inf
        %6885 = vmax.xlane.f32.xlu0 %v6884
        %v6886 = vpop.xlane.xlu0 %6885
        %v6887 = vsel %vm1224, %v6800, -inf
        %6888 = vmax.xlane.f32.xlu0 %v6887
        %v6889 = vpop.xlane.xlu0 %6888
        %v6890 = vsel %vm1224, %v6878, -inf
        %6891 = vmax.xlane.f32.xlu0 %v6890
        %v6892 = vpop.xlane.xlu0 %6891
        %v6893 = vsub.f32 %v6644, %v6883
        %v6894 = vsub.f32 %v6722, %v6886
        %v6895 = vsub.f32 %v6800, %v6889
        %v6896 = vsub.f32 %v6878, %v6892
        %v6897 = vmul.f32 %v6893, 1.442695
        %v6898 = vpow.pop %v6897
        %v6899 = vmul.f32 %v6894, 1.442695
        %v6900 = vpow.pop %v6899
        %v6901 = vmul.f32 %v6895, 1.442695
        %v6902 = vpow.pop %v6901
        %v6903 = vmul.f32 %v6896, 1.442695
        %v6904 = vpow.pop %v6903
        %v6905 = vsel %vm1224, %v6898, 0.0
        %6906 = vadd.xlane.f32.xlu0 %v6905
        %v6907 = vpop.xlane.xlu0 %6906
        %v6908 = vsel %vm1224, %v6900, 0.0
        %6909 = vadd.xlane.f32.xlu0 %v6908
        %v6910 = vpop.xlane.xlu0 %6909
        %v6911 = vsel %vm1224, %v6902, 0.0
        %6912 = vadd.xlane.f32.xlu0 %v6911
        %v6913 = vpop.xlane.xlu0 %6912
        %v6914 = vsel %vm1224, %v6904, 0.0
        %6915 = vadd.xlane.f32.xlu0 %v6914
        %v6916 = vpop.xlane.xlu0 %6915
        %v6917 = vrcp.pop %v6907
        %v6918 = vrcp.pop %v6910
        %v6919 = vrcp.pop %v6913
        %v6920 = vrcp.pop %v6916
        %v6921 = vmul.f32 %v6898, %v6917
        %v6922 = vmul.f32 %v6900, %v6918
        %v6923 = vmul.f32 %v6902, %v6919
        %v6924 = vmul.f32 %v6904, %v6920
        %6925 = vrot.lane.b32.xlu0 %v6053, 112
        %v6926 = vpop.permute.xlu0 %6925
        %v6928 = vsel %vm1269, %v6921, 0
        %v6930 = vsel %vm1273, %v6926, 0
        %6932 = vmatprep.subr.mxu0 0.0
        %6933 = vmatpush1.msra.mxu0 %v6930
        %6934 = vmatprep.subr.mxu0 0.0
        %6935 = vmatpush1.msra.mxu0 0.0
        %6936 = vmatprep.subr.mxu0 0.0
        %6937 = vmatpush1.msra.mxu0 0.0
        %6938 = vmatprep.subr.mxu0 0.0
        %6939 = vmatpush1.msra.mxu0 0.0
        %6940 = vmatprep.subr.mxu0 0.0
        %6941 = vmatpush1.msra.mxu0 0.0
        %6942 = vmatprep.subr.mxu0 0.0
        %6943 = vmatpush1.msra.mxu0 0.0
        %6944 = vmatprep.subr.mxu0 0.0
        %6945 = vmatpush1.msra.mxu0 0.0
        %6946 = vmatprep.subr.mxu0 0.0
        %6947 = vmatpush1.msra.mxu0 0.0
        %6948 = vmatprep.subr.mxu0 0.0
        %6949 = vmatpush1.msra.mxu0 0.0
        %6950 = vmatprep.subr.mxu0 0.0
        %6951 = vmatpush1.msra.mxu0 0.0
        %6952 = vmatprep.subr.mxu0 0.0
        %6953 = vmatpush1.msra.mxu0 0.0
        %6954 = vmatprep.subr.mxu0 0.0
        %6955 = vmatpush1.msra.mxu0 0.0
        %6956 = vmatprep.subr.mxu0 0.0
        %6957 = vmatpush1.msra.mxu0 0.0
        %6958 = vmatprep.subr.mxu0 0.0
        %6959 = vmatpush1.msra.mxu0 0.0
        %6960 = vmatprep.subr.mxu0 0.0
        %6961 = vmatpush1.msra.mxu0 0.0
        %6962 = vmatprep.subr.mxu0 0.0
        %6963 = vmatpush1.msra.mxu0 0.0
        %6964 = vmatprep.subr.mxu0 0.0
        %6965 = vmatpush1.msra.mxu0 0.0
        %6966 = vmatprep.subr.mxu0 0.0
        %6967 = vmatpush1.msra.mxu0 0.0
        %6968 = vmatprep.subr.mxu0 0.0
        %6969 = vmatpush1.msra.mxu0 0.0
        %6970 = vmatprep.subr.mxu0 0.0
        %6971 = vmatpush1.msra.mxu0 0.0
        %6972 = vmatprep.subr.mxu0 0.0
        %6973 = vmatpush1.msra.mxu0 0.0
        %6974 = vmatprep.subr.mxu0 0.0
        %6975 = vmatpush1.msra.mxu0 0.0
        %6976 = vmatprep.subr.mxu0 0.0
        %6977 = vmatpush1.msra.mxu0 0.0
        %6978 = vmatprep.subr.mxu0 0.0
        %6979 = vmatpush1.msra.mxu0 0.0
        %6980 = vmatprep.subr.mxu0 0.0
        %6981 = vmatpush1.msra.mxu0 0.0
        %6982 = vmatprep.subr.mxu0 0.0
        %6983 = vmatpush1.msra.mxu0 0.0
        %6984 = vmatprep.subr.mxu0 0.0
        %6985 = vmatpush1.msra.mxu0 0.0
        %6986 = vmatprep.subr.mxu0 0.0
        %6987 = vmatpush1.msra.mxu0 0.0
        %6988 = vmatprep.subr.mxu0 0.0
        %6989 = vmatpush1.msra.mxu0 0.0
        %6990 = vmatprep.subr.mxu0 0.0
        %6991 = vmatpush1.msra.mxu0 0.0
        %6992 = vmatprep.subr.mxu0 0.0
        %6993 = vmatpush1.msra.mxu0 0.0
        %6994 = vmatprep.subr.mxu0 0.0
        %6995 = vmatpush1.msra.mxu0 0.0
        %6996 = vmatprep.mubr.f32.mxu0 0.0
        %6997 = vmatmul.mubr.f32.gmra.mrb[0].mxu0 %v6928
        %v6998 = vpop.f32.mrb[0].mxu0
        %v6999 = vadd.f32 0.0, %v6998
        %v7000 = vpop.f32.mrb[0].mxu0
        %7001 = vdwg.mxu0
        %7002 = vrot.lane.b32.xlu0 %v6137, 112
        %v7003 = vpop.permute.xlu0 %7002
        %v7005 = vsel %vm1269, %v6922, 0
        %v7007 = vsel %vm1273, %v7003, 0
        %7009 = vmatprep.subr.mxu0 0.0
        %7010 = vmatpush1.msra.mxu0 %v7007
        %7011 = vmatprep.subr.mxu0 0.0
        %7012 = vmatpush1.msra.mxu0 0.0
        %7013 = vmatprep.subr.mxu0 0.0
        %7014 = vmatpush1.msra.mxu0 0.0
        %7015 = vmatprep.subr.mxu0 0.0
        %7016 = vmatpush1.msra.mxu0 0.0
        %7017 = vmatprep.subr.mxu0 0.0
        %7018 = vmatpush1.msra.mxu0 0.0
        %7019 = vmatprep.subr.mxu0 0.0
        %7020 = vmatpush1.msra.mxu0 0.0
        %7021 = vmatprep.subr.mxu0 0.0
        %7022 = vmatpush1.msra.mxu0 0.0
        %7023 = vmatprep.subr.mxu0 0.0
        %7024 = vmatpush1.msra.mxu0 0.0
        %7025 = vmatprep.subr.mxu0 0.0
        %7026 = vmatpush1.msra.mxu0 0.0
        %7027 = vmatprep.subr.mxu0 0.0
        %7028 = vmatpush1.msra.mxu0 0.0
        %7029 = vmatprep.subr.mxu0 0.0
        %7030 = vmatpush1.msra.mxu0 0.0
        %7031 = vmatprep.subr.mxu0 0.0
        %7032 = vmatpush1.msra.mxu0 0.0
        %7033 = vmatprep.subr.mxu0 0.0
        %7034 = vmatpush1.msra.mxu0 0.0
        %7035 = vmatprep.subr.mxu0 0.0
        %7036 = vmatpush1.msra.mxu0 0.0
        %7037 = vmatprep.subr.mxu0 0.0
        %7038 = vmatpush1.msra.mxu0 0.0
        %7039 = vmatprep.subr.mxu0 0.0
        %7040 = vmatpush1.msra.mxu0 0.0
        %7041 = vmatprep.subr.mxu0 0.0
        %7042 = vmatpush1.msra.mxu0 0.0
        %7043 = vmatprep.subr.mxu0 0.0
        %7044 = vmatpush1.msra.mxu0 0.0
        %7045 = vmatprep.subr.mxu0 0.0
        %7046 = vmatpush1.msra.mxu0 0.0
        %7047 = vmatprep.subr.mxu0 0.0
        %7048 = vmatpush1.msra.mxu0 0.0
        %7049 = vmatprep.subr.mxu0 0.0
        %7050 = vmatpush1.msra.mxu0 0.0
        %7051 = vmatprep.subr.mxu0 0.0
        %7052 = vmatpush1.msra.mxu0 0.0
        %7053 = vmatprep.subr.mxu0 0.0
        %7054 = vmatpush1.msra.mxu0 0.0
        %7055 = vmatprep.subr.mxu0 0.0
        %7056 = vmatpush1.msra.mxu0 0.0
        %7057 = vmatprep.subr.mxu0 0.0
        %7058 = vmatpush1.msra.mxu0 0.0
        %7059 = vmatprep.subr.mxu0 0.0
        %7060 = vmatpush1.msra.mxu0 0.0
        %7061 = vmatprep.subr.mxu0 0.0
        %7062 = vmatpush1.msra.mxu0 0.0
        %7063 = vmatprep.subr.mxu0 0.0
        %7064 = vmatpush1.msra.mxu0 0.0
        %7065 = vmatprep.subr.mxu0 0.0
        %7066 = vmatpush1.msra.mxu0 0.0
        %7067 = vmatprep.subr.mxu0 0.0
        %7068 = vmatpush1.msra.mxu0 0.0
        %7069 = vmatprep.subr.mxu0 0.0
        %7070 = vmatpush1.msra.mxu0 0.0
        %7071 = vmatprep.subr.mxu0 0.0
        %7072 = vmatpush1.msra.mxu0 0.0
        %7073 = vmatprep.mubr.f32.mxu0 0.0
        %7074 = vmatmul.mubr.f32.gmra.mrb[0].mxu0 %v7005
        %v7075 = vpop.f32.mrb[0].mxu0
        %v7076 = vadd.f32 0.0, %v7075
        %v7077 = vpop.f32.mrb[0].mxu0
        %7078 = vdwg.mxu0
        %7079 = vrot.lane.b32.xlu0 %v6221, 112
        %v7080 = vpop.permute.xlu0 %7079
        %v7082 = vsel %vm1269, %v6923, 0
        %v7084 = vsel %vm1273, %v7080, 0
        %7086 = vmatprep.subr.mxu0 0.0
        %7087 = vmatpush1.msra.mxu0 %v7084
        %7088 = vmatprep.subr.mxu0 0.0
        %7089 = vmatpush1.msra.mxu0 0.0
        %7090 = vmatprep.subr.mxu0 0.0
        %7091 = vmatpush1.msra.mxu0 0.0
        %7092 = vmatprep.subr.mxu0 0.0
        %7093 = vmatpush1.msra.mxu0 0.0
        %7094 = vmatprep.subr.mxu0 0.0
        %7095 = vmatpush1.msra.mxu0 0.0
        %7096 = vmatprep.subr.mxu0 0.0
        %7097 = vmatpush1.msra.mxu0 0.0
        %7098 = vmatprep.subr.mxu0 0.0
        %7099 = vmatpush1.msra.mxu0 0.0
        %7100 = vmatprep.subr.mxu0 0.0
        %7101 = vmatpush1.msra.mxu0 0.0
        %7102 = vmatprep.subr.mxu0 0.0
        %7103 = vmatpush1.msra.mxu0 0.0
        %7104 = vmatprep.subr.mxu0 0.0
        %7105 = vmatpush1.msra.mxu0 0.0
        %7106 = vmatprep.subr.mxu0 0.0
        %7107 = vmatpush1.msra.mxu0 0.0
        %7108 = vmatprep.subr.mxu0 0.0
        %7109 = vmatpush1.msra.mxu0 0.0
        %7110 = vmatprep.subr.mxu0 0.0
        %7111 = vmatpush1.msra.mxu0 0.0
        %7112 = vmatprep.subr.mxu0 0.0
        %7113 = vmatpush1.msra.mxu0 0.0
        %7114 = vmatprep.subr.mxu0 0.0
        %7115 = vmatpush1.msra.mxu0 0.0
        %7116 = vmatprep.subr.mxu0 0.0
        %7117 = vmatpush1.msra.mxu0 0.0
        %7118 = vmatprep.subr.mxu0 0.0
        %7119 = vmatpush1.msra.mxu0 0.0
        %7120 = vmatprep.subr.mxu0 0.0
        %7121 = vmatpush1.msra.mxu0 0.0
        %7122 = vmatprep.subr.mxu0 0.0
        %7123 = vmatpush1.msra.mxu0 0.0
        %7124 = vmatprep.subr.mxu0 0.0
        %7125 = vmatpush1.msra.mxu0 0.0
        %7126 = vmatprep.subr.mxu0 0.0
        %7127 = vmatpush1.msra.mxu0 0.0
        %7128 = vmatprep.subr.mxu0 0.0
        %7129 = vmatpush1.msra.mxu0 0.0
        %7130 = vmatprep.subr.mxu0 0.0
        %7131 = vmatpush1.msra.mxu0 0.0
        %7132 = vmatprep.subr.mxu0 0.0
        %7133 = vmatpush1.msra.mxu0 0.0
        %7134 = vmatprep.subr.mxu0 0.0
        %7135 = vmatpush1.msra.mxu0 0.0
        %7136 = vmatprep.subr.mxu0 0.0
        %7137 = vmatpush1.msra.mxu0 0.0
        %7138 = vmatprep.subr.mxu0 0.0
        %7139 = vmatpush1.msra.mxu0 0.0
        %7140 = vmatprep.subr.mxu0 0.0
        %7141 = vmatpush1.msra.mxu0 0.0
        %7142 = vmatprep.subr.mxu0 0.0
        %7143 = vmatpush1.msra.mxu0 0.0
        %7144 = vmatprep.subr.mxu0 0.0
        %7145 = vmatpush1.msra.mxu0 0.0
        %7146 = vmatprep.subr.mxu0 0.0
        %7147 = vmatpush1.msra.mxu0 0.0
        %7148 = vmatprep.subr.mxu0 0.0
        %7149 = vmatpush1.msra.mxu0 0.0
        %7150 = vmatprep.mubr.f32.mxu0 0.0
        %7151 = vmatmul.mubr.f32.gmra.mrb[0].mxu0 %v7082
        %v7152 = vpop.f32.mrb[0].mxu0
        %v7153 = vadd.f32 0.0, %v7152
        %v7154 = vpop.f32.mrb[0].mxu0
        %7155 = vdwg.mxu0
        %7156 = vrot.lane.b32.xlu0 %v6305, 112
        %v7157 = vpop.permute.xlu0 %7156
        %v7159 = vsel %vm1269, %v6924, 0
        %v7161 = vsel %vm1273, %v7157, 0
        %7163 = vmatprep.subr.mxu0 0.0
        %7164 = vmatpush1.msra.mxu0 %v7161
        %7165 = vmatprep.subr.mxu0 0.0
        %7166 = vmatpush1.msra.mxu0 0.0
        %7167 = vmatprep.subr.mxu0 0.0
        %7168 = vmatpush1.msra.mxu0 0.0
        %7169 = vmatprep.subr.mxu0 0.0
        %7170 = vmatpush1.msra.mxu0 0.0
        %7171 = vmatprep.subr.mxu0 0.0
        %7172 = vmatpush1.msra.mxu0 0.0
        %7173 = vmatprep.subr.mxu0 0.0
        %7174 = vmatpush1.msra.mxu0 0.0
        %7175 = vmatprep.subr.mxu0 0.0
        %7176 = vmatpush1.msra.mxu0 0.0
        %7177 = vmatprep.subr.mxu0 0.0
        %7178 = vmatpush1.msra.mxu0 0.0
        %7179 = vmatprep.subr.mxu0 0.0
        %7180 = vmatpush1.msra.mxu0 0.0
        %7181 = vmatprep.subr.mxu0 0.0
        %7182 = vmatpush1.msra.mxu0 0.0
        %7183 = vmatprep.subr.mxu0 0.0
        %7184 = vmatpush1.msra.mxu0 0.0
        %7185 = vmatprep.subr.mxu0 0.0
        %7186 = vmatpush1.msra.mxu0 0.0
        %7187 = vmatprep.subr.mxu0 0.0
        %7188 = vmatpush1.msra.mxu0 0.0
        %7189 = vmatprep.subr.mxu0 0.0
        %7190 = vmatpush1.msra.mxu0 0.0
        %7191 = vmatprep.subr.mxu0 0.0
        %7192 = vmatpush1.msra.mxu0 0.0
        %7193 = vmatprep.subr.mxu0 0.0
        %7194 = vmatpush1.msra.mxu0 0.0
        %7195 = vmatprep.subr.mxu0 0.0
        %7196 = vmatpush1.msra.mxu0 0.0
        %7197 = vmatprep.subr.mxu0 0.0
        %7198 = vmatpush1.msra.mxu0 0.0
        %7199 = vmatprep.subr.mxu0 0.0
        %7200 = vmatpush1.msra.mxu0 0.0
        %7201 = vmatprep.subr.mxu0 0.0
        %7202 = vmatpush1.msra.mxu0 0.0
        %7203 = vmatprep.subr.mxu0 0.0
        %7204 = vmatpush1.msra.mxu0 0.0
        %7205 = vmatprep.subr.mxu0 0.0
        %7206 = vmatpush1.msra.mxu0 0.0
        %7207 = vmatprep.subr.mxu0 0.0
        %7208 = vmatpush1.msra.mxu0 0.0
        %7209 = vmatprep.subr.mxu0 0.0
        %7210 = vmatpush1.msra.mxu0 0.0
        %7211 = vmatprep.subr.mxu0 0.0
        %7212 = vmatpush1.msra.mxu0 0.0
        %7213 = vmatprep.subr.mxu0 0.0
        %7214 = vmatpush1.msra.mxu0 0.0
        %7215 = vmatprep.subr.mxu0 0.0
        %7216 = vmatpush1.msra.mxu0 0.0
        %7217 = vmatprep.subr.mxu0 0.0
        %7218 = vmatpush1.msra.mxu0 0.0
        %7219 = vmatprep.subr.mxu0 0.0
        %7220 = vmatpush1.msra.mxu0 0.0
        %7221 = vmatprep.subr.mxu0 0.0
        %7222 = vmatpush1.msra.mxu0 0.0
        %7223 = vmatprep.subr.mxu0 0.0
        %7224 = vmatpush1.msra.mxu0 0.0
        %7225 = vmatprep.subr.mxu0 0.0
        %7226 = vmatpush1.msra.mxu0 0.0
        %7227 = vmatprep.mubr.f32.mxu0 0.0
        %7228 = vmatmul.mubr.f32.gmra.mrb[0].mxu0 %v7159
        %v7229 = vpop.f32.mrb[0].mxu0
        %v7230 = vadd.f32 0.0, %v7229
        %v7231 = vpop.f32.mrb[0].mxu0
        %7232 = vdwg.mxu0
        %v7237 = vcombine.low %v6999, %v7076
        %v7238 = vcombine.low %v7153, %v7230
        %v7240 = vunpack.c.l.s4 1983009808
        %v7241 = vunpack.c.0.s8 %v7240
        %v7242 = vlaneseq
        %v7243 = vshrl.u32 %v7242, 7
        %v7244 = vsub.s32 %v7241, %v7243
        %v7245 = vrot.slane %v7237, %v7244
        %v7247 = vunpack.c.l.s4 1983009808
        %v7248 = vunpack.c.0.s8 %v7247
        %v7249 = vlaneseq
        %v7250 = vshrl.u32 %v7249, 7
        %v7251 = vsub.s32 %v7248, %v7250
        %v7252 = vrot.slane %v7238, %v7251
        %v7253 = vcombine.low %v7245, %v7252
        %v7254 = vsel %vm927, %v7253, 0
        %7256 = vmatprep.subr.mxu0 0.0
        %7257 = vmatpush1.msra.mxu0 %v4993
        %7258 = vmatprep.subr.mxu0 0.0
        %7259 = vmatpush1.msra.mxu0 0.0
        %7260 = vmatprep.subr.mxu0 0.0
        %7261 = vmatpush1.msra.mxu0 0.0
        %7262 = vmatprep.subr.mxu0 0.0
        %7263 = vmatpush1.msra.mxu0 0.0
        %7264 = vmatprep.subr.mxu0 0.0
        %7265 = vmatpush1.msra.mxu0 0.0
        %7266 = vmatprep.subr.mxu0 0.0
        %7267 = vmatpush1.msra.mxu0 0.0
        %7268 = vmatprep.subr.mxu0 0.0
        %7269 = vmatpush1.msra.mxu0 0.0
        %7270 = vmatprep.subr.mxu0 0.0
        %7271 = vmatpush1.msra.mxu0 0.0
        %7272 = vmatprep.subr.mxu0 0.0
        %7273 = vmatpush1.msra.mxu0 0.0
        %7274 = vmatprep.subr.mxu0 0.0
        %7275 = vmatpush1.msra.mxu0 0.0
        %7276 = vmatprep.subr.mxu0 0.0
        %7277 = vmatpush1.msra.mxu0 0.0
        %7278 = vmatprep.subr.mxu0 0.0
        %7279 = vmatpush1.msra.mxu0 0.0
        %7280 = vmatprep.subr.mxu0 0.0
        %7281 = vmatpush1.msra.mxu0 0.0
        %7282 = vmatprep.subr.mxu0 0.0
        %7283 = vmatpush1.msra.mxu0 0.0
        %7284 = vmatprep.subr.mxu0 0.0
        %7285 = vmatpush1.msra.mxu0 0.0
        %7286 = vmatprep.subr.mxu0 0.0
        %7287 = vmatpush1.msra.mxu0 0.0
        %7288 = vmatprep.subr.mxu0 0.0
        %7289 = vmatpush1.msra.mxu0 0.0
        %7290 = vmatprep.subr.mxu0 0.0
        %7291 = vmatpush1.msra.mxu0 0.0
        %7292 = vmatprep.subr.mxu0 0.0
        %7293 = vmatpush1.msra.mxu0 0.0
        %7294 = vmatprep.subr.mxu0 0.0
        %7295 = vmatpush1.msra.mxu0 0.0
        %7296 = vmatprep.subr.mxu0 0.0
        %7297 = vmatpush1.msra.mxu0 0.0
        %7298 = vmatprep.subr.mxu0 0.0
        %7299 = vmatpush1.msra.mxu0 0.0
        %7300 = vmatprep.subr.mxu0 0.0
        %7301 = vmatpush1.msra.mxu0 0.0
        %7302 = vmatprep.subr.mxu0 0.0
        %7303 = vmatpush1.msra.mxu0 0.0
        %7304 = vmatprep.subr.mxu0 0.0
        %7305 = vmatpush1.msra.mxu0 0.0
        %7306 = vmatprep.subr.mxu0 0.0
        %7307 = vmatpush1.msra.mxu0 0.0
        %7308 = vmatprep.subr.mxu0 0.0
        %7309 = vmatpush1.msra.mxu0 0.0
        %7310 = vmatprep.subr.mxu0 0.0
        %7311 = vmatpush1.msra.mxu0 0.0
        %7312 = vmatprep.subr.mxu0 0.0
        %7313 = vmatpush1.msra.mxu0 0.0
        %7314 = vmatprep.subr.mxu0 0.0
        %7315 = vmatpush1.msra.mxu0 0.0
        %7316 = vmatprep.subr.mxu0 0.0
        %7317 = vmatpush1.msra.mxu0 0.0
        %7318 = vmatprep.subr.mxu0 0.0
        %7319 = vmatpush1.msra.mxu0 0.0
        %7320 = vmatprep.mubr.f32.mxu0 0.0
        %7321 = vmatmul.mubr.f32.gmra.mrb[0].mxu0 %v7254
        %v7322 = vpop.f32.mrb[0].mxu0
        %v7323 = vadd.f32 0.0, %v7322
        %v7324 = vpop.f32.mrb[0].mxu0
        %7325 = vdwg.mxu0
        %v7326 = vadd.f32 %v6566, %v7323
        %7327 = vrot.lane.b32.xlu0 %v5641, 104
        %v7328 = vpop.permute.xlu0 %7327
        %7329 = vrot.lane.b32.xlu0 %v5650, 104
        %v7330 = vpop.permute.xlu0 %7329
        %v7331 = vsel %vm927, %v7328, 0
        %v7333 = vsel %vm927, %v7330, 0
        %7335 = vmatprep.subr.mxu0 0.0
        %7336 = vmatpush1.xpose.msra.mxu0 %v7333
        %7337 = vmatprep.subr.mxu0 0.0
        %7338 = vmatpush1.xpose.msra.mxu0 0.0
        %7339 = vmatprep.subr.mxu0 0.0
        %7340 = vmatpush1.xpose.msra.mxu0 0.0
        %7341 = vmatprep.subr.mxu0 0.0
        %7342 = vmatpush1.xpose.msra.mxu0 0.0
        %7343 = vmatprep.subr.mxu0 0.0
        %7344 = vmatpush1.xpose.msra.mxu0 0.0
        %7345 = vmatprep.subr.mxu0 0.0
        %7346 = vmatpush1.xpose.msra.mxu0 0.0
        %7347 = vmatprep.subr.mxu0 0.0
        %7348 = vmatpush1.xpose.msra.mxu0 0.0
        %7349 = vmatprep.subr.mxu0 0.0
        %7350 = vmatpush1.xpose.msra.mxu0 0.0
        %7351 = vmatprep.subr.mxu0 0.0
        %7352 = vmatpush1.xpose.msra.mxu0 0.0
        %7353 = vmatprep.subr.mxu0 0.0
        %7354 = vmatpush1.xpose.msra.mxu0 0.0
        %7355 = vmatprep.subr.mxu0 0.0
        %7356 = vmatpush1.xpose.msra.mxu0 0.0
        %7357 = vmatprep.subr.mxu0 0.0
        %7358 = vmatpush1.xpose.msra.mxu0 0.0
        %7359 = vmatprep.subr.mxu0 0.0
        %7360 = vmatpush1.xpose.msra.mxu0 0.0
        %7361 = vmatprep.subr.mxu0 0.0
        %7362 = vmatpush1.xpose.msra.mxu0 0.0
        %7363 = vmatprep.subr.mxu0 0.0
        %7364 = vmatpush1.xpose.msra.mxu0 0.0
        %7365 = vmatprep.subr.mxu0 0.0
        %7366 = vmatpush1.xpose.msra.mxu0 0.0
        %7367 = vmatprep.subr.mxu0 0.0
        %7368 = vmatpush1.xpose.msra.mxu0 0.0
        %7369 = vmatprep.subr.mxu0 0.0
        %7370 = vmatpush1.xpose.msra.mxu0 0.0
        %7371 = vmatprep.subr.mxu0 0.0
        %7372 = vmatpush1.xpose.msra.mxu0 0.0
        %7373 = vmatprep.subr.mxu0 0.0
        %7374 = vmatpush1.xpose.msra.mxu0 0.0
        %7375 = vmatprep.subr.mxu0 0.0
        %7376 = vmatpush1.xpose.msra.mxu0 0.0
        %7377 = vmatprep.subr.mxu0 0.0
        %7378 = vmatpush1.xpose.msra.mxu0 0.0
        %7379 = vmatprep.subr.mxu0 0.0
        %7380 = vmatpush1.xpose.msra.mxu0 0.0
        %7381 = vmatprep.subr.mxu0 0.0
        %7382 = vmatpush1.xpose.msra.mxu0 0.0
        %7383 = vmatprep.subr.mxu0 0.0
        %7384 = vmatpush1.xpose.msra.mxu0 0.0
        %7385 = vmatprep.subr.mxu0 0.0
        %7386 = vmatpush1.xpose.msra.mxu0 0.0
        %7387 = vmatprep.subr.mxu0 0.0
        %7388 = vmatpush1.xpose.msra.mxu0 0.0
        %7389 = vmatprep.subr.mxu0 0.0
        %7390 = vmatpush1.xpose.msra.mxu0 0.0
        %7391 = vmatprep.subr.mxu0 0.0
        %7392 = vmatpush1.xpose.msra.mxu0 0.0
        %7393 = vmatprep.subr.mxu0 0.0
        %7394 = vmatpush1.xpose.msra.mxu0 0.0
        %7395 = vmatprep.subr.mxu0 0.0
        %7396 = vmatpush1.xpose.msra.mxu0 0.0
        %7397 = vmatprep.subr.mxu0 0.0
        %7398 = vmatpush1.xpose.msra.mxu0 0.0
        %7399 = vmatprep.mubr.f32.mxu0 0.0
        %7400 = vmatmul.mubr.f32.gmra.mrb[0].mxu0 %v7331
        %v7401 = vpop.f32.mrb[0].mxu0
        %v7402 = vadd.f32 0.0, %v7401
        %v7403 = vpop.f32.mrb[0].mxu0
        %7404 = vdwg.mxu0
        %7405 = vrot.lane.b32.xlu0 %v5733, 104
        %v7406 = vpop.permute.xlu0 %7405
        %7407 = vrot.lane.b32.xlu0 %v5742, 104
        %v7408 = vpop.permute.xlu0 %7407
        %v7409 = vsel %vm927, %v7406, 0
        %v7411 = vsel %vm927, %v7408, 0
        %7413 = vmatprep.subr.mxu0 0.0
        %7414 = vmatpush1.xpose.msra.mxu0 %v7411
        %7415 = vmatprep.subr.mxu0 0.0
        %7416 = vmatpush1.xpose.msra.mxu0 0.0
        %7417 = vmatprep.subr.mxu0 0.0
        %7418 = vmatpush1.xpose.msra.mxu0 0.0
        %7419 = vmatprep.subr.mxu0 0.0
        %7420 = vmatpush1.xpose.msra.mxu0 0.0
        %7421 = vmatprep.subr.mxu0 0.0
        %7422 = vmatpush1.xpose.msra.mxu0 0.0
        %7423 = vmatprep.subr.mxu0 0.0
        %7424 = vmatpush1.xpose.msra.mxu0 0.0
        %7425 = vmatprep.subr.mxu0 0.0
        %7426 = vmatpush1.xpose.msra.mxu0 0.0
        %7427 = vmatprep.subr.mxu0 0.0
        %7428 = vmatpush1.xpose.msra.mxu0 0.0
        %7429 = vmatprep.subr.mxu0 0.0
        %7430 = vmatpush1.xpose.msra.mxu0 0.0
        %7431 = vmatprep.subr.mxu0 0.0
        %7432 = vmatpush1.xpose.msra.mxu0 0.0
        %7433 = vmatprep.subr.mxu0 0.0
        %7434 = vmatpush1.xpose.msra.mxu0 0.0
        %7435 = vmatprep.subr.mxu0 0.0
        %7436 = vmatpush1.xpose.msra.mxu0 0.0
        %7437 = vmatprep.subr.mxu0 0.0
        %7438 = vmatpush1.xpose.msra.mxu0 0.0
        %7439 = vmatprep.subr.mxu0 0.0
        %7440 = vmatpush1.xpose.msra.mxu0 0.0
        %7441 = vmatprep.subr.mxu0 0.0
        %7442 = vmatpush1.xpose.msra.mxu0 0.0
        %7443 = vmatprep.subr.mxu0 0.0
        %7444 = vmatpush1.xpose.msra.mxu0 0.0
        %7445 = vmatprep.subr.mxu0 0.0
        %7446 = vmatpush1.xpose.msra.mxu0 0.0
        %7447 = vmatprep.subr.mxu0 0.0
        %7448 = vmatpush1.xpose.msra.mxu0 0.0
        %7449 = vmatprep.subr.mxu0 0.0
        %7450 = vmatpush1.xpose.msra.mxu0 0.0
        %7451 = vmatprep.subr.mxu0 0.0
        %7452 = vmatpush1.xpose.msra.mxu0 0.0
        %7453 = vmatprep.subr.mxu0 0.0
        %7454 = vmatpush1.xpose.msra.mxu0 0.0
        %7455 = vmatprep.subr.mxu0 0.0
        %7456 = vmatpush1.xpose.msra.mxu0 0.0
        %7457 = vmatprep.subr.mxu0 0.0
        %7458 = vmatpush1.xpose.msra.mxu0 0.0
        %7459 = vmatprep.subr.mxu0 0.0
        %7460 = vmatpush1.xpose.msra.mxu0 0.0
        %7461 = vmatprep.subr.mxu0 0.0
        %7462 = vmatpush1.xpose.msra.mxu0 0.0
        %7463 = vmatprep.subr.mxu0 0.0
        %7464 = vmatpush1.xpose.msra.mxu0 0.0
        %7465 = vmatprep.subr.mxu0 0.0
        %7466 = vmatpush1.xpose.msra.mxu0 0.0
        %7467 = vmatprep.subr.mxu0 0.0
        %7468 = vmatpush1.xpose.msra.mxu0 0.0
        %7469 = vmatprep.subr.mxu0 0.0
        %7470 = vmatpush1.xpose.msra.mxu0 0.0
        %7471 = vmatprep.subr.mxu0 0.0
        %7472 = vmatpush1.xpose.msra.mxu0 0.0
        %7473 = vmatprep.subr.mxu0 0.0
        %7474 = vmatpush1.xpose.msra.mxu0 0.0
        %7475 = vmatprep.subr.mxu0 0.0
        %7476 = vmatpush1.xpose.msra.mxu0 0.0
        %7477 = vmatprep.mubr.f32.mxu0 0.0
        %7478 = vmatmul.mubr.f32.gmra.mrb[0].mxu0 %v7409
        %v7479 = vpop.f32.mrb[0].mxu0
        %v7480 = vadd.f32 0.0, %v7479
        %v7481 = vpop.f32.mrb[0].mxu0
        %7482 = vdwg.mxu0
        %7483 = vrot.lane.b32.xlu0 %v5825, 104
        %v7484 = vpop.permute.xlu0 %7483
        %7485 = vrot.lane.b32.xlu0 %v5834, 104
        %v7486 = vpop.permute.xlu0 %7485
        %v7487 = vsel %vm927, %v7484, 0
        %v7489 = vsel %vm927, %v7486, 0
        %7491 = vmatprep.subr.mxu0 0.0
        %7492 = vmatpush1.xpose.msra.mxu0 %v7489
        %7493 = vmatprep.subr.mxu0 0.0
        %7494 = vmatpush1.xpose.msra.mxu0 0.0
        %7495 = vmatprep.subr.mxu0 0.0
        %7496 = vmatpush1.xpose.msra.mxu0 0.0
        %7497 = vmatprep.subr.mxu0 0.0
        %7498 = vmatpush1.xpose.msra.mxu0 0.0
        %7499 = vmatprep.subr.mxu0 0.0
        %7500 = vmatpush1.xpose.msra.mxu0 0.0
        %7501 = vmatprep.subr.mxu0 0.0
        %7502 = vmatpush1.xpose.msra.mxu0 0.0
        %7503 = vmatprep.subr.mxu0 0.0
        %7504 = vmatpush1.xpose.msra.mxu0 0.0
        %7505 = vmatprep.subr.mxu0 0.0
        %7506 = vmatpush1.xpose.msra.mxu0 0.0
        %7507 = vmatprep.subr.mxu0 0.0
        %7508 = vmatpush1.xpose.msra.mxu0 0.0
        %7509 = vmatprep.subr.mxu0 0.0
        %7510 = vmatpush1.xpose.msra.mxu0 0.0
        %7511 = vmatprep.subr.mxu0 0.0
        %7512 = vmatpush1.xpose.msra.mxu0 0.0
        %7513 = vmatprep.subr.mxu0 0.0
        %7514 = vmatpush1.xpose.msra.mxu0 0.0
        %7515 = vmatprep.subr.mxu0 0.0
        %7516 = vmatpush1.xpose.msra.mxu0 0.0
        %7517 = vmatprep.subr.mxu0 0.0
        %7518 = vmatpush1.xpose.msra.mxu0 0.0
        %7519 = vmatprep.subr.mxu0 0.0
        %7520 = vmatpush1.xpose.msra.mxu0 0.0
        %7521 = vmatprep.subr.mxu0 0.0
        %7522 = vmatpush1.xpose.msra.mxu0 0.0
        %7523 = vmatprep.subr.mxu0 0.0
        %7524 = vmatpush1.xpose.msra.mxu0 0.0
        %7525 = vmatprep.subr.mxu0 0.0
        %7526 = vmatpush1.xpose.msra.mxu0 0.0
        %7527 = vmatprep.subr.mxu0 0.0
        %7528 = vmatpush1.xpose.msra.mxu0 0.0
        %7529 = vmatprep.subr.mxu0 0.0
        %7530 = vmatpush1.xpose.msra.mxu0 0.0
        %7531 = vmatprep.subr.mxu0 0.0
        %7532 = vmatpush1.xpose.msra.mxu0 0.0
        %7533 = vmatprep.subr.mxu0 0.0
        %7534 = vmatpush1.xpose.msra.mxu0 0.0
        %7535 = vmatprep.subr.mxu0 0.0
        %7536 = vmatpush1.xpose.msra.mxu0 0.0
        %7537 = vmatprep.subr.mxu0 0.0
        %7538 = vmatpush1.xpose.msra.mxu0 0.0
        %7539 = vmatprep.subr.mxu0 0.0
        %7540 = vmatpush1.xpose.msra.mxu0 0.0
        %7541 = vmatprep.subr.mxu0 0.0
        %7542 = vmatpush1.xpose.msra.mxu0 0.0
        %7543 = vmatprep.subr.mxu0 0.0
        %7544 = vmatpush1.xpose.msra.mxu0 0.0
        %7545 = vmatprep.subr.mxu0 0.0
        %7546 = vmatpush1.xpose.msra.mxu0 0.0
        %7547 = vmatprep.subr.mxu0 0.0
        %7548 = vmatpush1.xpose.msra.mxu0 0.0
        %7549 = vmatprep.subr.mxu0 0.0
        %7550 = vmatpush1.xpose.msra.mxu0 0.0
        %7551 = vmatprep.subr.mxu0 0.0
        %7552 = vmatpush1.xpose.msra.mxu0 0.0
        %7553 = vmatprep.subr.mxu0 0.0
        %7554 = vmatpush1.xpose.msra.mxu0 0.0
        %7555 = vmatprep.mubr.f32.mxu0 0.0
        %7556 = vmatmul.mubr.f32.gmra.mrb[0].mxu0 %v7487
        %v7557 = vpop.f32.mrb[0].mxu0
        %v7558 = vadd.f32 0.0, %v7557
        %v7559 = vpop.f32.mrb[0].mxu0
        %7560 = vdwg.mxu0
        %7561 = vrot.lane.b32.xlu0 %v5917, 104
        %v7562 = vpop.permute.xlu0 %7561
        %7563 = vrot.lane.b32.xlu0 %v5926, 104
        %v7564 = vpop.permute.xlu0 %7563
        %v7565 = vsel %vm927, %v7562, 0
        %v7567 = vsel %vm927, %v7564, 0
        %7569 = vmatprep.subr.mxu0 0.0
        %7570 = vmatpush1.xpose.msra.mxu0 %v7567
        %7571 = vmatprep.subr.mxu0 0.0
        %7572 = vmatpush1.xpose.msra.mxu0 0.0
        %7573 = vmatprep.subr.mxu0 0.0
        %7574 = vmatpush1.xpose.msra.mxu0 0.0
        %7575 = vmatprep.subr.mxu0 0.0
        %7576 = vmatpush1.xpose.msra.mxu0 0.0
        %7577 = vmatprep.subr.mxu0 0.0
        %7578 = vmatpush1.xpose.msra.mxu0 0.0
        %7579 = vmatprep.subr.mxu0 0.0
        %7580 = vmatpush1.xpose.msra.mxu0 0.0
        %7581 = vmatprep.subr.mxu0 0.0
        %7582 = vmatpush1.xpose.msra.mxu0 0.0
        %7583 = vmatprep.subr.mxu0 0.0
        %7584 = vmatpush1.xpose.msra.mxu0 0.0
        %7585 = vmatprep.subr.mxu0 0.0
        %7586 = vmatpush1.xpose.msra.mxu0 0.0
        %7587 = vmatprep.subr.mxu0 0.0
        %7588 = vmatpush1.xpose.msra.mxu0 0.0
        %7589 = vmatprep.subr.mxu0 0.0
        %7590 = vmatpush1.xpose.msra.mxu0 0.0
        %7591 = vmatprep.subr.mxu0 0.0
        %7592 = vmatpush1.xpose.msra.mxu0 0.0
        %7593 = vmatprep.subr.mxu0 0.0
        %7594 = vmatpush1.xpose.msra.mxu0 0.0
        %7595 = vmatprep.subr.mxu0 0.0
        %7596 = vmatpush1.xpose.msra.mxu0 0.0
        %7597 = vmatprep.subr.mxu0 0.0
        %7598 = vmatpush1.xpose.msra.mxu0 0.0
        %7599 = vmatprep.subr.mxu0 0.0
        %7600 = vmatpush1.xpose.msra.mxu0 0.0
        %7601 = vmatprep.subr.mxu0 0.0
        %7602 = vmatpush1.xpose.msra.mxu0 0.0
        %7603 = vmatprep.subr.mxu0 0.0
        %7604 = vmatpush1.xpose.msra.mxu0 0.0
        %7605 = vmatprep.subr.mxu0 0.0
        %7606 = vmatpush1.xpose.msra.mxu0 0.0
        %7607 = vmatprep.subr.mxu0 0.0
        %7608 = vmatpush1.xpose.msra.mxu0 0.0
        %7609 = vmatprep.subr.mxu0 0.0
        %7610 = vmatpush1.xpose.msra.mxu0 0.0
        %7611 = vmatprep.subr.mxu0 0.0
        %7612 = vmatpush1.xpose.msra.mxu0 0.0
        %7613 = vmatprep.subr.mxu0 0.0
        %7614 = vmatpush1.xpose.msra.mxu0 0.0
        %7615 = vmatprep.subr.mxu0 0.0
        %7616 = vmatpush1.xpose.msra.mxu0 0.0
        %7617 = vmatprep.subr.mxu0 0.0
        %7618 = vmatpush1.xpose.msra.mxu0 0.0
        %7619 = vmatprep.subr.mxu0 0.0
        %7620 = vmatpush1.xpose.msra.mxu0 0.0
        %7621 = vmatprep.subr.mxu0 0.0
        %7622 = vmatpush1.xpose.msra.mxu0 0.0
        %7623 = vmatprep.subr.mxu0 0.0
        %7624 = vmatpush1.xpose.msra.mxu0 0.0
        %7625 = vmatprep.subr.mxu0 0.0
        %7626 = vmatpush1.xpose.msra.mxu0 0.0
        %7627 = vmatprep.subr.mxu0 0.0
        %7628 = vmatpush1.xpose.msra.mxu0 0.0
        %7629 = vmatprep.subr.mxu0 0.0
        %7630 = vmatpush1.xpose.msra.mxu0 0.0
        %7631 = vmatprep.subr.mxu0 0.0
        %7632 = vmatpush1.xpose.msra.mxu0 0.0
        %7633 = vmatprep.mubr.f32.mxu0 0.0
        %7634 = vmatmul.mubr.f32.gmra.mrb[0].mxu0 %v7565
        %v7635 = vpop.f32.mrb[0].mxu0
        %v7636 = vadd.f32 0.0, %v7635
        %v7637 = vpop.f32.mrb[0].mxu0
        %7638 = vdwg.mxu0
        %v7639 = vsel %vm1224, %v7402, -inf
        %7640 = vmax.xlane.f32.xlu0 %v7639
        %v7641 = vpop.xlane.xlu0 %7640
        %v7642 = vsel %vm1224, %v7480, -inf
        %7643 = vmax.xlane.f32.xlu0 %v7642
        %v7644 = vpop.xlane.xlu0 %7643
        %v7645 = vsel %vm1224, %v7558, -inf
        %7646 = vmax.xlane.f32.xlu0 %v7645
        %v7647 = vpop.xlane.xlu0 %7646
        %v7648 = vsel %vm1224, %v7636, -inf
        %7649 = vmax.xlane.f32.xlu0 %v7648
        %v7650 = vpop.xlane.xlu0 %7649
        %v7651 = vsub.f32 %v7402, %v7641
        %v7652 = vsub.f32 %v7480, %v7644
        %v7653 = vsub.f32 %v7558, %v7647
        %v7654 = vsub.f32 %v7636, %v7650
        %v7655 = vmul.f32 %v7651, 1.442695
        %v7656 = vpow.pop %v7655
        %v7657 = vmul.f32 %v7652, 1.442695
        %v7658 = vpow.pop %v7657
        %v7659 = vmul.f32 %v7653, 1.442695
        %v7660 = vpow.pop %v7659
        %v7661 = vmul.f32 %v7654, 1.442695
        %v7662 = vpow.pop %v7661
        %v7663 = vsel %vm1224, %v7656, 0.0
        %7664 = vadd.xlane.f32.xlu0 %v7663
        %v7665 = vpop.xlane.xlu0 %7664
        %v7666 = vsel %vm1224, %v7658, 0.0
        %7667 = vadd.xlane.f32.xlu0 %v7666
        %v7668 = vpop.xlane.xlu0 %7667
        %v7669 = vsel %vm1224, %v7660, 0.0
        %7670 = vadd.xlane.f32.xlu0 %v7669
        %v7671 = vpop.xlane.xlu0 %7670
        %v7672 = vsel %vm1224, %v7662, 0.0
        %7673 = vadd.xlane.f32.xlu0 %v7672
        %v7674 = vpop.xlane.xlu0 %7673
        %v7675 = vrcp.pop %v7665
        %v7676 = vrcp.pop %v7668
        %v7677 = vrcp.pop %v7671
        %v7678 = vrcp.pop %v7674
        %v7679 = vmul.f32 %v7656, %v7675
        %v7680 = vmul.f32 %v7658, %v7676
        %v7681 = vmul.f32 %v7660, %v7677
        %v7682 = vmul.f32 %v7662, %v7678
        %7683 = vrot.lane.b32.xlu0 %v6053, 104
        %v7684 = vpop.permute.xlu0 %7683
        %v7686 = vsel %vm1269, %v7679, 0
        %v7688 = vsel %vm1273, %v7684, 0
        %7690 = vmatprep.subr.mxu0 0.0
        %7691 = vmatpush1.msra.mxu0 %v7688
        %7692 = vmatprep.subr.mxu0 0.0
        %7693 = vmatpush1.msra.mxu0 0.0
        %7694 = vmatprep.subr.mxu0 0.0
        %7695 = vmatpush1.msra.mxu0 0.0
        %7696 = vmatprep.subr.mxu0 0.0
        %7697 = vmatpush1.msra.mxu0 0.0
        %7698 = vmatprep.subr.mxu0 0.0
        %7699 = vmatpush1.msra.mxu0 0.0
        %7700 = vmatprep.subr.mxu0 0.0
        %7701 = vmatpush1.msra.mxu0 0.0
        %7702 = vmatprep.subr.mxu0 0.0
        %7703 = vmatpush1.msra.mxu0 0.0
        %7704 = vmatprep.subr.mxu0 0.0
        %7705 = vmatpush1.msra.mxu0 0.0
        %7706 = vmatprep.subr.mxu0 0.0
        %7707 = vmatpush1.msra.mxu0 0.0
        %7708 = vmatprep.subr.mxu0 0.0
        %7709 = vmatpush1.msra.mxu0 0.0
        %7710 = vmatprep.subr.mxu0 0.0
        %7711 = vmatpush1.msra.mxu0 0.0
        %7712 = vmatprep.subr.mxu0 0.0
        %7713 = vmatpush1.msra.mxu0 0.0
        %7714 = vmatprep.subr.mxu0 0.0
        %7715 = vmatpush1.msra.mxu0 0.0
        %7716 = vmatprep.subr.mxu0 0.0
        %7717 = vmatpush1.msra.mxu0 0.0
        %7718 = vmatprep.subr.mxu0 0.0
        %7719 = vmatpush1.msra.mxu0 0.0
        %7720 = vmatprep.subr.mxu0 0.0
        %7721 = vmatpush1.msra.mxu0 0.0
        %7722 = vmatprep.subr.mxu0 0.0
        %7723 = vmatpush1.msra.mxu0 0.0
        %7724 = vmatprep.subr.mxu0 0.0
        %7725 = vmatpush1.msra.mxu0 0.0
        %7726 = vmatprep.subr.mxu0 0.0
        %7727 = vmatpush1.msra.mxu0 0.0
        %7728 = vmatprep.subr.mxu0 0.0
        %7729 = vmatpush1.msra.mxu0 0.0
        %7730 = vmatprep.subr.mxu0 0.0
        %7731 = vmatpush1.msra.mxu0 0.0
        %7732 = vmatprep.subr.mxu0 0.0
        %7733 = vmatpush1.msra.mxu0 0.0
        %7734 = vmatprep.subr.mxu0 0.0
        %7735 = vmatpush1.msra.mxu0 0.0
        %7736 = vmatprep.subr.mxu0 0.0
        %7737 = vmatpush1.msra.mxu0 0.0
        %7738 = vmatprep.subr.mxu0 0.0
        %7739 = vmatpush1.msra.mxu0 0.0
        %7740 = vmatprep.subr.mxu0 0.0
        %7741 = vmatpush1.msra.mxu0 0.0
        %7742 = vmatprep.subr.mxu0 0.0
        %7743 = vmatpush1.msra.mxu0 0.0
        %7744 = vmatprep.subr.mxu0 0.0
        %7745 = vmatpush1.msra.mxu0 0.0
        %7746 = vmatprep.subr.mxu0 0.0
        %7747 = vmatpush1.msra.mxu0 0.0
        %7748 = vmatprep.subr.mxu0 0.0
        %7749 = vmatpush1.msra.mxu0 0.0
        %7750 = vmatprep.subr.mxu0 0.0
        %7751 = vmatpush1.msra.mxu0 0.0
        %7752 = vmatprep.subr.mxu0 0.0
        %7753 = vmatpush1.msra.mxu0 0.0
        %7754 = vmatprep.mubr.f32.mxu0 0.0
        %7755 = vmatmul.mubr.f32.gmra.mrb[0].mxu0 %v7686
        %v7756 = vpop.f32.mrb[0].mxu0
        %v7757 = vadd.f32 0.0, %v7756
        %v7758 = vpop.f32.mrb[0].mxu0
        %7759 = vdwg.mxu0
        %7760 = vrot.lane.b32.xlu0 %v6137, 104
        %v7761 = vpop.permute.xlu0 %7760
        %v7763 = vsel %vm1269, %v7680, 0
        %v7765 = vsel %vm1273, %v7761, 0
        %7767 = vmatprep.subr.mxu0 0.0
        %7768 = vmatpush1.msra.mxu0 %v7765
        %7769 = vmatprep.subr.mxu0 0.0
        %7770 = vmatpush1.msra.mxu0 0.0
        %7771 = vmatprep.subr.mxu0 0.0
        %7772 = vmatpush1.msra.mxu0 0.0
        %7773 = vmatprep.subr.mxu0 0.0
        %7774 = vmatpush1.msra.mxu0 0.0
        %7775 = vmatprep.subr.mxu0 0.0
        %7776 = vmatpush1.msra.mxu0 0.0
        %7777 = vmatprep.subr.mxu0 0.0
        %7778 = vmatpush1.msra.mxu0 0.0
        %7779 = vmatprep.subr.mxu0 0.0
        %7780 = vmatpush1.msra.mxu0 0.0
        %7781 = vmatprep.subr.mxu0 0.0
        %7782 = vmatpush1.msra.mxu0 0.0
        %7783 = vmatprep.subr.mxu0 0.0
        %7784 = vmatpush1.msra.mxu0 0.0
        %7785 = vmatprep.subr.mxu0 0.0
        %7786 = vmatpush1.msra.mxu0 0.0
        %7787 = vmatprep.subr.mxu0 0.0
        %7788 = vmatpush1.msra.mxu0 0.0
        %7789 = vmatprep.subr.mxu0 0.0
        %7790 = vmatpush1.msra.mxu0 0.0
        %7791 = vmatprep.subr.mxu0 0.0
        %7792 = vmatpush1.msra.mxu0 0.0
        %7793 = vmatprep.subr.mxu0 0.0
        %7794 = vmatpush1.msra.mxu0 0.0
        %7795 = vmatprep.subr.mxu0 0.0
        %7796 = vmatpush1.msra.mxu0 0.0
        %7797 = vmatprep.subr.mxu0 0.0
        %7798 = vmatpush1.msra.mxu0 0.0
        %7799 = vmatprep.subr.mxu0 0.0
        %7800 = vmatpush1.msra.mxu0 0.0
        %7801 = vmatprep.subr.mxu0 0.0
        %7802 = vmatpush1.msra.mxu0 0.0
        %7803 = vmatprep.subr.mxu0 0.0
        %7804 = vmatpush1.msra.mxu0 0.0
        %7805 = vmatprep.subr.mxu0 0.0
        %7806 = vmatpush1.msra.mxu0 0.0
        %7807 = vmatprep.subr.mxu0 0.0
        %7808 = vmatpush1.msra.mxu0 0.0
        %7809 = vmatprep.subr.mxu0 0.0
        %7810 = vmatpush1.msra.mxu0 0.0
        %7811 = vmatprep.subr.mxu0 0.0
        %7812 = vmatpush1.msra.mxu0 0.0
        %7813 = vmatprep.subr.mxu0 0.0
        %7814 = vmatpush1.msra.mxu0 0.0
        %7815 = vmatprep.subr.mxu0 0.0
        %7816 = vmatpush1.msra.mxu0 0.0
        %7817 = vmatprep.subr.mxu0 0.0
        %7818 = vmatpush1.msra.mxu0 0.0
        %7819 = vmatprep.subr.mxu0 0.0
        %7820 = vmatpush1.msra.mxu0 0.0
        %7821 = vmatprep.subr.mxu0 0.0
        %7822 = vmatpush1.msra.mxu0 0.0
        %7823 = vmatprep.subr.mxu0 0.0
        %7824 = vmatpush1.msra.mxu0 0.0
        %7825 = vmatprep.subr.mxu0 0.0
        %7826 = vmatpush1.msra.mxu0 0.0
        %7827 = vmatprep.subr.mxu0 0.0
        %7828 = vmatpush1.msra.mxu0 0.0
        %7829 = vmatprep.subr.mxu0 0.0
        %7830 = vmatpush1.msra.mxu0 0.0
        %7831 = vmatprep.mubr.f32.mxu0 0.0
        %7832 = vmatmul.mubr.f32.gmra.mrb[0].mxu0 %v7763
        %v7833 = vpop.f32.mrb[0].mxu0
        %v7834 = vadd.f32 0.0, %v7833
        %v7835 = vpop.f32.mrb[0].mxu0
        %7836 = vdwg.mxu0
        %7837 = vrot.lane.b32.xlu0 %v6221, 104
        %v7838 = vpop.permute.xlu0 %7837
        %v7840 = vsel %vm1269, %v7681, 0
        %v7842 = vsel %vm1273, %v7838, 0
        %7844 = vmatprep.subr.mxu0 0.0
        %7845 = vmatpush1.msra.mxu0 %v7842
        %7846 = vmatprep.subr.mxu0 0.0
        %7847 = vmatpush1.msra.mxu0 0.0
        %7848 = vmatprep.subr.mxu0 0.0
        %7849 = vmatpush1.msra.mxu0 0.0
        %7850 = vmatprep.subr.mxu0 0.0
        %7851 = vmatpush1.msra.mxu0 0.0
        %7852 = vmatprep.subr.mxu0 0.0
        %7853 = vmatpush1.msra.mxu0 0.0
        %7854 = vmatprep.subr.mxu0 0.0
        %7855 = vmatpush1.msra.mxu0 0.0
        %7856 = vmatprep.subr.mxu0 0.0
        %7857 = vmatpush1.msra.mxu0 0.0
        %7858 = vmatprep.subr.mxu0 0.0
        %7859 = vmatpush1.msra.mxu0 0.0
        %7860 = vmatprep.subr.mxu0 0.0
        %7861 = vmatpush1.msra.mxu0 0.0
        %7862 = vmatprep.subr.mxu0 0.0
        %7863 = vmatpush1.msra.mxu0 0.0
        %7864 = vmatprep.subr.mxu0 0.0
        %7865 = vmatpush1.msra.mxu0 0.0
        %7866 = vmatprep.subr.mxu0 0.0
        %7867 = vmatpush1.msra.mxu0 0.0
        %7868 = vmatprep.subr.mxu0 0.0
        %7869 = vmatpush1.msra.mxu0 0.0
        %7870 = vmatprep.subr.mxu0 0.0
        %7871 = vmatpush1.msra.mxu0 0.0
        %7872 = vmatprep.subr.mxu0 0.0
        %7873 = vmatpush1.msra.mxu0 0.0
        %7874 = vmatprep.subr.mxu0 0.0
        %7875 = vmatpush1.msra.mxu0 0.0
        %7876 = vmatprep.subr.mxu0 0.0
        %7877 = vmatpush1.msra.mxu0 0.0
        %7878 = vmatprep.subr.mxu0 0.0
        %7879 = vmatpush1.msra.mxu0 0.0
        %7880 = vmatprep.subr.mxu0 0.0
        %7881 = vmatpush1.msra.mxu0 0.0
        %7882 = vmatprep.subr.mxu0 0.0
        %7883 = vmatpush1.msra.mxu0 0.0
        %7884 = vmatprep.subr.mxu0 0.0
        %7885 = vmatpush1.msra.mxu0 0.0
        %7886 = vmatprep.subr.mxu0 0.0
        %7887 = vmatpush1.msra.mxu0 0.0
        %7888 = vmatprep.subr.mxu0 0.0
        %7889 = vmatpush1.msra.mxu0 0.0
        %7890 = vmatprep.subr.mxu0 0.0
        %7891 = vmatpush1.msra.mxu0 0.0
        %7892 = vmatprep.subr.mxu0 0.0
        %7893 = vmatpush1.msra.mxu0 0.0
        %7894 = vmatprep.subr.mxu0 0.0
        %7895 = vmatpush1.msra.mxu0 0.0
        %7896 = vmatprep.subr.mxu0 0.0
        %7897 = vmatpush1.msra.mxu0 0.0
        %7898 = vmatprep.subr.mxu0 0.0
        %7899 = vmatpush1.msra.mxu0 0.0
        %7900 = vmatprep.subr.mxu0 0.0
        %7901 = vmatpush1.msra.mxu0 0.0
        %7902 = vmatprep.subr.mxu0 0.0
        %7903 = vmatpush1.msra.mxu0 0.0
        %7904 = vmatprep.subr.mxu0 0.0
        %7905 = vmatpush1.msra.mxu0 0.0
        %7906 = vmatprep.subr.mxu0 0.0
        %7907 = vmatpush1.msra.mxu0 0.0
        %7908 = vmatprep.mubr.f32.mxu0 0.0
        %7909 = vmatmul.mubr.f32.gmra.mrb[0].mxu0 %v7840
        %v7910 = vpop.f32.mrb[0].mxu0
        %v7911 = vadd.f32 0.0, %v7910
        %v7912 = vpop.f32.mrb[0].mxu0
        %7913 = vdwg.mxu0
        %7914 = vrot.lane.b32.xlu0 %v6305, 104
        %v7915 = vpop.permute.xlu0 %7914
        %v7917 = vsel %vm1269, %v7682, 0
        %v7919 = vsel %vm1273, %v7915, 0
        %7921 = vmatprep.subr.mxu0 0.0
        %7922 = vmatpush1.msra.mxu0 %v7919
        %7923 = vmatprep.subr.mxu0 0.0
        %7924 = vmatpush1.msra.mxu0 0.0
        %7925 = vmatprep.subr.mxu0 0.0
        %7926 = vmatpush1.msra.mxu0 0.0
        %7927 = vmatprep.subr.mxu0 0.0
        %7928 = vmatpush1.msra.mxu0 0.0
        %7929 = vmatprep.subr.mxu0 0.0
        %7930 = vmatpush1.msra.mxu0 0.0
        %7931 = vmatprep.subr.mxu0 0.0
        %7932 = vmatpush1.msra.mxu0 0.0
        %7933 = vmatprep.subr.mxu0 0.0
        %7934 = vmatpush1.msra.mxu0 0.0
        %7935 = vmatprep.subr.mxu0 0.0
        %7936 = vmatpush1.msra.mxu0 0.0
        %7937 = vmatprep.subr.mxu0 0.0
        %7938 = vmatpush1.msra.mxu0 0.0
        %7939 = vmatprep.subr.mxu0 0.0
        %7940 = vmatpush1.msra.mxu0 0.0
        %7941 = vmatprep.subr.mxu0 0.0
        %7942 = vmatpush1.msra.mxu0 0.0
        %7943 = vmatprep.subr.mxu0 0.0
        %7944 = vmatpush1.msra.mxu0 0.0
        %7945 = vmatprep.subr.mxu0 0.0
        %7946 = vmatpush1.msra.mxu0 0.0
        %7947 = vmatprep.subr.mxu0 0.0
        %7948 = vmatpush1.msra.mxu0 0.0
        %7949 = vmatprep.subr.mxu0 0.0
        %7950 = vmatpush1.msra.mxu0 0.0
        %7951 = vmatprep.subr.mxu0 0.0
        %7952 = vmatpush1.msra.mxu0 0.0
        %7953 = vmatprep.subr.mxu0 0.0
        %7954 = vmatpush1.msra.mxu0 0.0
        %7955 = vmatprep.subr.mxu0 0.0
        %7956 = vmatpush1.msra.mxu0 0.0
        %7957 = vmatprep.subr.mxu0 0.0
        %7958 = vmatpush1.msra.mxu0 0.0
        %7959 = vmatprep.subr.mxu0 0.0
        %7960 = vmatpush1.msra.mxu0 0.0
        %7961 = vmatprep.subr.mxu0 0.0
        %7962 = vmatpush1.msra.mxu0 0.0
        %7963 = vmatprep.subr.mxu0 0.0
        %7964 = vmatpush1.msra.mxu0 0.0
        %7965 = vmatprep.subr.mxu0 0.0
        %7966 = vmatpush1.msra.mxu0 0.0
        %7967 = vmatprep.subr.mxu0 0.0
        %7968 = vmatpush1.msra.mxu0 0.0
        %7969 = vmatprep.subr.mxu0 0.0
        %7970 = vmatpush1.msra.mxu0 0.0
        %7971 = vmatprep.subr.mxu0 0.0
        %7972 = vmatpush1.msra.mxu0 0.0
        %7973 = vmatprep.subr.mxu0 0.0
        %7974 = vmatpush1.msra.mxu0 0.0
        %7975 = vmatprep.subr.mxu0 0.0
        %7976 = vmatpush1.msra.mxu0 0.0
        %7977 = vmatprep.subr.mxu0 0.0
        %7978 = vmatpush1.msra.mxu0 0.0
        %7979 = vmatprep.subr.mxu0 0.0
        %7980 = vmatpush1.msra.mxu0 0.0
        %7981 = vmatprep.subr.mxu0 0.0
        %7982 = vmatpush1.msra.mxu0 0.0
        %7983 = vmatprep.subr.mxu0 0.0
        %7984 = vmatpush1.msra.mxu0 0.0
        %7985 = vmatprep.mubr.f32.mxu0 0.0
        %7986 = vmatmul.mubr.f32.gmra.mrb[0].mxu0 %v7917
        %v7987 = vpop.f32.mrb[0].mxu0
        %v7988 = vadd.f32 0.0, %v7987
        %v7989 = vpop.f32.mrb[0].mxu0
        %7990 = vdwg.mxu0
        %v7995 = vcombine.low %v7757, %v7834
        %v7996 = vcombine.low %v7911, %v7988
        %v7998 = vunpack.c.l.s4 1983009808
        %v7999 = vunpack.c.0.s8 %v7998
        %v8000 = vlaneseq
        %v8001 = vshrl.u32 %v8000, 7
        %v8002 = vsub.s32 %v7999, %v8001
        %v8003 = vrot.slane %v7995, %v8002
        %v8005 = vunpack.c.l.s4 1983009808
        %v8006 = vunpack.c.0.s8 %v8005
        %v8007 = vlaneseq
        %v8008 = vshrl.u32 %v8007, 7
        %v8009 = vsub.s32 %v8006, %v8008
        %v8010 = vrot.slane %v7996, %v8009
        %v8011 = vcombine.low %v8003, %v8010
        %v8012 = vsel %vm927, %v8011, 0
        %8014 = vmatprep.subr.mxu0 0.0
        %8015 = vmatpush1.msra.mxu0 %v4994
        %8016 = vmatprep.subr.mxu0 0.0
        %8017 = vmatpush1.msra.mxu0 0.0
        %8018 = vmatprep.subr.mxu0 0.0
        %8019 = vmatpush1.msra.mxu0 0.0
        %8020 = vmatprep.subr.mxu0 0.0
        %8021 = vmatpush1.msra.mxu0 0.0
        %8022 = vmatprep.subr.mxu0 0.0
        %8023 = vmatpush1.msra.mxu0 0.0
        %8024 = vmatprep.subr.mxu0 0.0
        %8025 = vmatpush1.msra.mxu0 0.0
        %8026 = vmatprep.subr.mxu0 0.0
        %8027 = vmatpush1.msra.mxu0 0.0
        %8028 = vmatprep.subr.mxu0 0.0
        %8029 = vmatpush1.msra.mxu0 0.0
        %8030 = vmatprep.subr.mxu0 0.0
        %8031 = vmatpush1.msra.mxu0 0.0
        %8032 = vmatprep.subr.mxu0 0.0
        %8033 = vmatpush1.msra.mxu0 0.0
        %8034 = vmatprep.subr.mxu0 0.0
        %8035 = vmatpush1.msra.mxu0 0.0
        %8036 = vmatprep.subr.mxu0 0.0
        %8037 = vmatpush1.msra.mxu0 0.0
        %8038 = vmatprep.subr.mxu0 0.0
        %8039 = vmatpush1.msra.mxu0 0.0
        %8040 = vmatprep.subr.mxu0 0.0
        %8041 = vmatpush1.msra.mxu0 0.0
        %8042 = vmatprep.subr.mxu0 0.0
        %8043 = vmatpush1.msra.mxu0 0.0
        %8044 = vmatprep.subr.mxu0 0.0
        %8045 = vmatpush1.msra.mxu0 0.0
        %8046 = vmatprep.subr.mxu0 0.0
        %8047 = vmatpush1.msra.mxu0 0.0
        %8048 = vmatprep.subr.mxu0 0.0
        %8049 = vmatpush1.msra.mxu0 0.0
        %8050 = vmatprep.subr.mxu0 0.0
        %8051 = vmatpush1.msra.mxu0 0.0
        %8052 = vmatprep.subr.mxu0 0.0
        %8053 = vmatpush1.msra.mxu0 0.0
        %8054 = vmatprep.subr.mxu0 0.0
        %8055 = vmatpush1.msra.mxu0 0.0
        %8056 = vmatprep.subr.mxu0 0.0
        %8057 = vmatpush1.msra.mxu0 0.0
        %8058 = vmatprep.subr.mxu0 0.0
        %8059 = vmatpush1.msra.mxu0 0.0
        %8060 = vmatprep.subr.mxu0 0.0
        %8061 = vmatpush1.msra.mxu0 0.0
        %8062 = vmatprep.subr.mxu0 0.0
        %8063 = vmatpush1.msra.mxu0 0.0
        %8064 = vmatprep.subr.mxu0 0.0
        %8065 = vmatpush1.msra.mxu0 0.0
        %8066 = vmatprep.subr.mxu0 0.0
        %8067 = vmatpush1.msra.mxu0 0.0
        %8068 = vmatprep.subr.mxu0 0.0
        %8069 = vmatpush1.msra.mxu0 0.0
        %8070 = vmatprep.subr.mxu0 0.0
        %8071 = vmatpush1.msra.mxu0 0.0
        %8072 = vmatprep.subr.mxu0 0.0
        %8073 = vmatpush1.msra.mxu0 0.0
        %8074 = vmatprep.subr.mxu0 0.0
        %8075 = vmatpush1.msra.mxu0 0.0
        %8076 = vmatprep.subr.mxu0 0.0
        %8077 = vmatpush1.msra.mxu0 0.0
        %8078 = vmatprep.mubr.f32.mxu0 0.0
        %8079 = vmatmul.mubr.f32.gmra.mrb[0].mxu0 %v8012
        %v8080 = vpop.f32.mrb[0].mxu0
        %v8081 = vadd.f32 0.0, %v8080
        %v8082 = vpop.f32.mrb[0].mxu0
        %8083 = vdwg.mxu0
        %v8084 = vadd.f32 %v7326, %v8081
        %s8085 = scalar_lea.vmem %s8, 1
        %v8086 = vld [vmem:[%s8085] sm:$0x1]
        %v8088 = vlaneseq
        %v8089 = vshrl.u32 %v8088, 7
        %v8090 = vsub.s32 0, %v8089
        %v8091 = vrot.slane %v8086, %v8090
        %v8093 = vadd.f32 %v8084, %v8091
        %v8095 = vcombine.high %v8093, %v8093
        %v8097 = vunpack.c.l.s4 1983009808
        %v8098 = vunpack.c.0.s8 %v8097
        %v8099 = vlaneseq
        %v8100 = vshrl.u32 %v8099, 7
        %v8101 = vsub.s32 %v8098, %v8100
        %v8102 = vrot.slane %v8093, %v8101
        %v8104 = vunpack.c.l.s4 1983009808
        %v8105 = vunpack.c.0.s8 %v8104
        %v8106 = vlaneseq
        %v8107 = vshrl.u32 %v8106, 7
        %v8108 = vsub.s32 %v8105, %v8107
        %v8109 = vrot.slane %v8095, %v8108
        %v8110 = vcombine.high %v8102, %v8102
        %v8111 = vcombine.high %v8109, %v8109
        %v8116 = vadd.f32 %v4660, %v8102
        %v8117 = vadd.f32 %v4661, %v8110
        %v8118 = vadd.f32 %v4662, %v8109
        %v8119 = vadd.f32 %v4663, %v8111
        %s8120 = scalar_lea.vmem %s9, 1
        %v8121 = vld [vmem:[%s8120] sm:$0x1]
        %s8122 = scalar_lea.vmem %s10, 1
        %v8123 = vld [vmem:[%s8122] sm:$0x1]
        %v8128 = vcombine.low %v8116, %v8117
        %v8129 = vcombine.low %v8118, %v8119
        %v8131 = vunpack.c.l.s4 1983009808
        %v8132 = vunpack.c.0.s8 %v8131
        %v8133 = vlaneseq
        %v8134 = vshrl.u32 %v8133, 7
        %v8135 = vsub.s32 %v8132, %v8134
        %v8136 = vrot.slane %v8128, %v8135
        %v8138 = vunpack.c.l.s4 1983009808
        %v8139 = vunpack.c.0.s8 %v8138
        %v8140 = vlaneseq
        %v8141 = vshrl.u32 %v8140, 7
        %v8142 = vsub.s32 %v8139, %v8141
        %v8143 = vrot.slane %v8129, %v8142
        %v8144 = vcombine.low %v8136, %v8143
        %v8146 = vsel %vm642, %v8144, 0.0
        %8147 = vadd.xlane.f32.xlu0 %v8146
        %v8148 = vpop.xlane.xlu0 %8147
        %v8149 = vmul.f32 %v8148, %v4082
        %v8152 = vunpack.c.l.s4 269488144
        %v8153 = vunpack.c.0.s8 %v8152
        %v8154 = vlaneseq
        %v8155 = vshrl.u32 %v8154, 7
        %v8156 = vsub.s32 %v8153, %v8155
        %v8157 = vrot.slane %v8149, %v8156
        %v8159 = vunpack.c.l.s4 842150450
        %v8160 = vunpack.c.0.s8 %v8159
        %v8161 = vlaneseq
        %v8162 = vshrl.u32 %v8161, 7
        %v8163 = vsub.s32 %v8160, %v8162
        %v8164 = vrot.slane %v8149, %v8163
        %v8166 = vunpack.c.l.s4 1414812756
        %v8167 = vunpack.c.0.s8 %v8166
        %v8168 = vlaneseq
        %v8169 = vshrl.u32 %v8168, 7
        %v8170 = vsub.s32 %v8167, %v8169
        %v8171 = vrot.slane %v8149, %v8170
        %v8173 = vunpack.c.l.s4 1987475062
        %v8174 = vunpack.c.0.s8 %v8173
        %v8175 = vlaneseq
        %v8176 = vshrl.u32 %v8175, 7
        %v8177 = vsub.s32 %v8174, %v8176
        %v8178 = vrot.slane %v8149, %v8177
        %v8183 = vsub.f32 %v8116, %v8157
        %v8184 = vsub.f32 %v8117, %v8164
        %v8185 = vsub.f32 %v8118, %v8171
        %v8186 = vsub.f32 %v8119, %v8178
        %v8187 = vmul.f32 %v8183, %v8183
        %v8188 = vmul.f32 %v8184, %v8184
        %v8189 = vmul.f32 %v8185, %v8185
        %v8190 = vmul.f32 %v8186, %v8186
        %v8195 = vcombine.low %v8187, %v8188
        %v8196 = vcombine.low %v8189, %v8190
        %v8198 = vunpack.c.l.s4 1983009808
        %v8199 = vunpack.c.0.s8 %v8198
        %v8200 = vlaneseq
        %v8201 = vshrl.u32 %v8200, 7
        %v8202 = vsub.s32 %v8199, %v8201
        %v8203 = vrot.slane %v8195, %v8202
        %v8205 = vunpack.c.l.s4 1983009808
        %v8206 = vunpack.c.0.s8 %v8205
        %v8207 = vlaneseq
        %v8208 = vshrl.u32 %v8207, 7
        %v8209 = vsub.s32 %v8206, %v8208
        %v8210 = vrot.slane %v8196, %v8209
        %v8211 = vcombine.low %v8203, %v8210
        %v8213 = vsel %vm642, %v8211, 0.0
        %8214 = vadd.xlane.f32.xlu0 %v8213
        %v8215 = vpop.xlane.xlu0 %8214
        %v8216 = vmul.f32 %v8215, %v4082
        %v8217 = vadd.f32 %v8216, 1e-05
        %v8218 = vrsqrt.pop %v8217
        %v8221 = vunpack.c.l.s4 269488144
        %v8222 = vunpack.c.0.s8 %v8221
        %v8223 = vlaneseq
        %v8224 = vshrl.u32 %v8223, 7
        %v8225 = vsub.s32 %v8222, %v8224
        %v8226 = vrot.slane %v8218, %v8225
        %v8228 = vunpack.c.l.s4 842150450
        %v8229 = vunpack.c.0.s8 %v8228
        %v8230 = vlaneseq
        %v8231 = vshrl.u32 %v8230, 7
        %v8232 = vsub.s32 %v8229, %v8231
        %v8233 = vrot.slane %v8218, %v8232
        %v8235 = vunpack.c.l.s4 1414812756
        %v8236 = vunpack.c.0.s8 %v8235
        %v8237 = vlaneseq
        %v8238 = vshrl.u32 %v8237, 7
        %v8239 = vsub.s32 %v8236, %v8238
        %v8240 = vrot.slane %v8218, %v8239
        %v8242 = vunpack.c.l.s4 1987475062
        %v8243 = vunpack.c.0.s8 %v8242
        %v8244 = vlaneseq
        %v8245 = vshrl.u32 %v8244, 7
        %v8246 = vsub.s32 %v8243, %v8245
        %v8247 = vrot.slane %v8218, %v8246
        %v8252 = vmul.f32 %v8183, %v8226
        %v8253 = vmul.f32 %v8184, %v8233
        %v8254 = vmul.f32 %v8185, %v8240
        %v8255 = vmul.f32 %v8186, %v8247
        %v8257 = vlaneseq
        %v8258 = vshrl.u32 %v8257, 7
        %v8259 = vsub.s32 0, %v8258
        %v8260 = vrot.slane %v8121, %v8259
        %v8261 = vcombine.high %v8260, %v8260
        %v8263 = vunpack.c.l.s4 1983009808
        %v8264 = vunpack.c.0.s8 %v8263
        %v8265 = vlaneseq
        %v8266 = vshrl.u32 %v8265, 7
        %v8267 = vsub.s32 %v8264, %v8266
        %v8268 = vrot.slane %v8260, %v8267
        %v8270 = vunpack.c.l.s4 1983009808
        %v8271 = vunpack.c.0.s8 %v8270
        %v8272 = vlaneseq
        %v8273 = vshrl.u32 %v8272, 7
        %v8274 = vsub.s32 %v8271, %v8273
        %v8275 = vrot.slane %v8261, %v8274
        %v8276 = vcombine.high %v8268, %v8268
        %v8277 = vcombine.high %v8275, %v8275
        %v8282 = vmul.f32 %v8252, %v8268
        %v8283 = vmul.f32 %v8253, %v8276
        %v8284 = vmul.f32 %v8254, %v8275
        %v8285 = vmul.f32 %v8255, %v8277
        %v8287 = vlaneseq
        %v8288 = vshrl.u32 %v8287, 7
        %v8289 = vsub.s32 0, %v8288
        %v8290 = vrot.slane %v8123, %v8289
        %v8291 = vcombine.high %v8290, %v8290
        %v8293 = vunpack.c.l.s4 1983009808
        %v8294 = vunpack.c.0.s8 %v8293
        %v8295 = vlaneseq
        %v8296 = vshrl.u32 %v8295, 7
        %v8297 = vsub.s32 %v8294, %v8296
        %v8298 = vrot.slane %v8290, %v8297
        %v8300 = vunpack.c.l.s4 1983009808
        %v8301 = vunpack.c.0.s8 %v8300
        %v8302 = vlaneseq
        %v8303 = vshrl.u32 %v8302, 7
        %v8304 = vsub.s32 %v8301, %v8303
        %v8305 = vrot.slane %v8291, %v8304
        %v8306 = vcombine.high %v8298, %v8298
        %v8307 = vcombine.high %v8305, %v8305
        %v8312 = vadd.f32 %v8282, %v8298
        %v8313 = vadd.f32 %v8283, %v8306
        %v8314 = vadd.f32 %v8284, %v8305
        %v8315 = vadd.f32 %v8285, %v8307
        %s8316 = scalar_lea.vmem [#allocation7], 32
        %v8317 = vld [vmem:[%s8316] sm:$0xff]
        %v8318 = vld [vmem:[%s8316 + $0x8] sm:$0xff]
        %v8319 = vld [vmem:[%s8316 + $0x10] sm:$0xff]
        %v8320 = vld [vmem:[%s8316 + $0x18] sm:$0xff]
        %s8321 = scalar_lea.vmem %s13, 64
        %v8322 = vld [vmem:[%s8321] sm:$0xff]
        %v8323 = vld [vmem:[%s8321 + $0x8] sm:$0xff]
        %v8324 = vld [vmem:[%s8321 + $0x10] sm:$0xff]
        %v8325 = vld [vmem:[%s8321 + $0x18] sm:$0xff]
        %v8326 = vld [vmem:[%s8321 + $0x20] sm:$0xff]
        %v8327 = vld [vmem:[%s8321 + $0x28] sm:$0xff]
        %v8328 = vld [vmem:[%s8321 + $0x30] sm:$0xff]
        %v8329 = vld [vmem:[%s8321 + $0x38] sm:$0xff]
        %s8330 = scalar_lea.vmem %s12, 1
        %v8331 = vld [vmem:[%s8330] sm:$0x1]
        %v8333 = vlaneseq
        %v8334 = vshrl.u32 %v8333, 7
        %v8335 = vsub.s32 0, %v8334
        %v8336 = vrot.slane %v8331, %v8335
        %v8342 = vcombine.low %v8312, %v8313
        %v8343 = vcombine.low %v8314, %v8315
        %v8345 = vunpack.c.l.s4 1983009808
        %v8346 = vunpack.c.0.s8 %v8345
        %v8347 = vlaneseq
        %v8348 = vshrl.u32 %v8347, 7
        %v8349 = vsub.s32 %v8346, %v8348
        %v8350 = vrot.slane %v8342, %v8349
        %v8352 = vunpack.c.l.s4 1983009808
        %v8353 = vunpack.c.0.s8 %v8352
        %v8354 = vlaneseq
        %v8355 = vshrl.u32 %v8354, 7
        %v8356 = vsub.s32 %v8353, %v8355
        %v8357 = vrot.slane %v8343, %v8356
        %v8358 = vcombine.low %v8350, %v8357
        %v8359 = vsel %vm642, %v8358, 0
        %8361 = vmatprep.subr.mxu0 0.0
        %8362 = vmatpush1.msra.mxu0 %v8317
        %8363 = vmatprep.subr.mxu0 0.0
        %8364 = vmatpush1.msra.mxu0 %v8318
        %8365 = vmatprep.subr.mxu0 0.0
        %8366 = vmatpush1.msra.mxu0 %v8319
        %8367 = vmatprep.subr.mxu0 0.0
        %8368 = vmatpush1.msra.mxu0 %v8320
        %8369 = vmatprep.subr.mxu0 0.0
        %8370 = vmatpush1.msra.mxu0 0.0
        %8371 = vmatprep.subr.mxu0 0.0
        %8372 = vmatpush1.msra.mxu0 0.0
        %8373 = vmatprep.subr.mxu0 0.0
        %8374 = vmatpush1.msra.mxu0 0.0
        %8375 = vmatprep.subr.mxu0 0.0
        %8376 = vmatpush1.msra.mxu0 0.0
        %8377 = vmatprep.subr.mxu0 0.0
        %8378 = vmatpush1.msra.mxu0 0.0
        %8379 = vmatprep.subr.mxu0 0.0
        %8380 = vmatpush1.msra.mxu0 0.0
        %8381 = vmatprep.subr.mxu0 0.0
        %8382 = vmatpush1.msra.mxu0 0.0
        %8383 = vmatprep.subr.mxu0 0.0
        %8384 = vmatpush1.msra.mxu0 0.0
        %8385 = vmatprep.subr.mxu0 0.0
        %8386 = vmatpush1.msra.mxu0 0.0
        %8387 = vmatprep.subr.mxu0 0.0
        %8388 = vmatpush1.msra.mxu0 0.0
        %8389 = vmatprep.subr.mxu0 0.0
        %8390 = vmatpush1.msra.mxu0 0.0
        %8391 = vmatprep.subr.mxu0 0.0
        %8392 = vmatpush1.msra.mxu0 0.0
        %8393 = vmatprep.subr.mxu0 0.0
        %8394 = vmatpush1.msra.mxu0 0.0
        %8395 = vmatprep.subr.mxu0 0.0
        %8396 = vmatpush1.msra.mxu0 0.0
        %8397 = vmatprep.subr.mxu0 0.0
        %8398 = vmatpush1.msra.mxu0 0.0
        %8399 = vmatprep.subr.mxu0 0.0
        %8400 = vmatpush1.msra.mxu0 0.0
        %8401 = vmatprep.subr.mxu0 0.0
        %8402 = vmatpush1.msra.mxu0 0.0
        %8403 = vmatprep.subr.mxu0 0.0
        %8404 = vmatpush1.msra.mxu0 0.0
        %8405 = vmatprep.subr.mxu0 0.0
        %8406 = vmatpush1.msra.mxu0 0.0
        %8407 = vmatprep.subr.mxu0 0.0
        %8408 = vmatpush1.msra.mxu0 0.0
        %8409 = vmatprep.subr.mxu0 0.0
        %8410 = vmatpush1.msra.mxu0 0.0
        %8411 = vmatprep.subr.mxu0 0.0
        %8412 = vmatpush1.msra.mxu0 0.0
        %8413 = vmatprep.subr.mxu0 0.0
        %8414 = vmatpush1.msra.mxu0 0.0
        %8415 = vmatprep.subr.mxu0 0.0
        %8416 = vmatpush1.msra.mxu0 0.0
        %8417 = vmatprep.subr.mxu0 0.0
        %8418 = vmatpush1.msra.mxu0 0.0
        %8419 = vmatprep.subr.mxu0 0.0
        %8420 = vmatpush1.msra.mxu0 0.0
        %8421 = vmatprep.subr.mxu0 0.0
        %8422 = vmatpush1.msra.mxu0 0.0
        %8423 = vmatprep.subr.mxu0 0.0
        %8424 = vmatpush1.msra.mxu0 0.0
        %8425 = vmatprep.mubr.f32.mxu0 0.0
        %8426 = vmatmul.mubr.f32.gmra.mrb[0].mxu0 %v8359
        %v8427 = vpop.f32.mrb[0].mxu0
        %v8428 = vadd.f32 %v8336, %v8427
        %v8429 = vpop.f32.mrb[0].mxu0
        %8430 = vdwg.mxu0
        %v8431 = vmax.f32 %v8428, 0.0
        %s8432 = scalar_lea.vmem %s14, 1
        %v8433 = vld [vmem:[%s8432] sm:$0x1]
        %v8435 = vlaneseq
        %v8436 = vshrl.u32 %v8435, 7
        %v8437 = vsub.s32 0, %v8436
        %v8438 = vrot.slane %v8433, %v8437
        %v8441 = vsel %vm4370, %v8431, 0
        %8443 = vmatprep.subr.mxu0 0.0
        %8444 = vmatpush1.msra.mxu0 %v8322
        %8445 = vmatprep.subr.mxu0 0.0
        %8446 = vmatpush1.msra.mxu0 %v8323
        %8447 = vmatprep.subr.mxu0 0.0
        %8448 = vmatpush1.msra.mxu0 %v8324
        %8449 = vmatprep.subr.mxu0 0.0
        %8450 = vmatpush1.msra.mxu0 %v8325
        %8451 = vmatprep.subr.mxu0 0.0
        %8452 = vmatpush1.msra.mxu0 %v8326
        %8453 = vmatprep.subr.mxu0 0.0
        %8454 = vmatpush1.msra.mxu0 %v8327
        %8455 = vmatprep.subr.mxu0 0.0
        %8456 = vmatpush1.msra.mxu0 %v8328
        %8457 = vmatprep.subr.mxu0 0.0
        %8458 = vmatpush1.msra.mxu0 %v8329
        %8459 = vmatprep.subr.mxu0 0.0
        %8460 = vmatpush1.msra.mxu0 0.0
        %8461 = vmatprep.subr.mxu0 0.0
        %8462 = vmatpush1.msra.mxu0 0.0
        %8463 = vmatprep.subr.mxu0 0.0
        %8464 = vmatpush1.msra.mxu0 0.0
        %8465 = vmatprep.subr.mxu0 0.0
        %8466 = vmatpush1.msra.mxu0 0.0
        %8467 = vmatprep.subr.mxu0 0.0
        %8468 = vmatpush1.msra.mxu0 0.0
        %8469 = vmatprep.subr.mxu0 0.0
        %8470 = vmatpush1.msra.mxu0 0.0
        %8471 = vmatprep.subr.mxu0 0.0
        %8472 = vmatpush1.msra.mxu0 0.0
        %8473 = vmatprep.subr.mxu0 0.0
        %8474 = vmatpush1.msra.mxu0 0.0
        %8475 = vmatprep.subr.mxu0 0.0
        %8476 = vmatpush1.msra.mxu0 0.0
        %8477 = vmatprep.subr.mxu0 0.0
        %8478 = vmatpush1.msra.mxu0 0.0
        %8479 = vmatprep.subr.mxu0 0.0
        %8480 = vmatpush1.msra.mxu0 0.0
        %8481 = vmatprep.subr.mxu0 0.0
        %8482 = vmatpush1.msra.mxu0 0.0
        %8483 = vmatprep.subr.mxu0 0.0
        %8484 = vmatpush1.msra.mxu0 0.0
        %8485 = vmatprep.subr.mxu0 0.0
        %8486 = vmatpush1.msra.mxu0 0.0
        %8487 = vmatprep.subr.mxu0 0.0
        %8488 = vmatpush1.msra.mxu0 0.0
        %8489 = vmatprep.subr.mxu0 0.0
        %8490 = vmatpush1.msra.mxu0 0.0
        %8491 = vmatprep.subr.mxu0 0.0
        %8492 = vmatpush1.msra.mxu0 0.0
        %8493 = vmatprep.subr.mxu0 0.0
        %8494 = vmatpush1.msra.mxu0 0.0
        %8495 = vmatprep.subr.mxu0 0.0
        %8496 = vmatpush1.msra.mxu0 0.0
        %8497 = vmatprep.subr.mxu0 0.0
        %8498 = vmatpush1.msra.mxu0 0.0
        %8499 = vmatprep.subr.mxu0 0.0
        %8500 = vmatpush1.msra.mxu0 0.0
        %8501 = vmatprep.subr.mxu0 0.0
        %8502 = vmatpush1.msra.mxu0 0.0
        %8503 = vmatprep.subr.mxu0 0.0
        %8504 = vmatpush1.msra.mxu0 0.0
        %8505 = vmatprep.subr.mxu0 0.0
        %8506 = vmatpush1.msra.mxu0 0.0
        %8507 = vmatprep.mubr.f32.mxu0 0.0
        %8508 = vmatmul.mubr.f32.gmra.mrb[0].mxu0 %v8441
        %v8509 = vpop.f32.mrb[0].mxu0
        %v8510 = vadd.f32 %v8438, %v8509
        %v8511 = vpop.f32.mrb[0].mxu0
        %8512 = vdwg.mxu0
        %v8514 = vcombine.high %v8510, %v8510
        %v8516 = vunpack.c.l.s4 1983009808
        %v8517 = vunpack.c.0.s8 %v8516
        %v8518 = vlaneseq
        %v8519 = vshrl.u32 %v8518, 7
        %v8520 = vsub.s32 %v8517, %v8519
        %v8521 = vrot.slane %v8510, %v8520
        %v8523 = vunpack.c.l.s4 1983009808
        %v8524 = vunpack.c.0.s8 %v8523
        %v8525 = vlaneseq
        %v8526 = vshrl.u32 %v8525, 7
        %v8527 = vsub.s32 %v8524, %v8526
        %v8528 = vrot.slane %v8514, %v8527
        %v8529 = vcombine.high %v8521, %v8521
        %v8530 = vcombine.high %v8528, %v8528
        %v8535 = vadd.f32 %v8312, %v8521
        %v8536 = vadd.f32 %v8313, %v8529
        %v8537 = vadd.f32 %v8314, %v8528
        %v8538 = vadd.f32 %v8315, %v8530
        %s8539 = scalar_lea.vmem %s15, 1
        %v8540 = vld [vmem:[%s8539] sm:$0x1]
        %s8541 = scalar_lea.vmem %s16, 1
        %v8542 = vld [vmem:[%s8541] sm:$0x1]
        %v8547 = vcombine.low %v8535, %v8536
        %v8548 = vcombine.low %v8537, %v8538
        %v8550 = vunpack.c.l.s4 1983009808
        %v8551 = vunpack.c.0.s8 %v8550
        %v8552 = vlaneseq
        %v8553 = vshrl.u32 %v8552, 7
        %v8554 = vsub.s32 %v8551, %v8553
        %v8555 = vrot.slane %v8547, %v8554
        %v8557 = vunpack.c.l.s4 1983009808
        %v8558 = vunpack.c.0.s8 %v8557
        %v8559 = vlaneseq
        %v8560 = vshrl.u32 %v8559, 7
        %v8561 = vsub.s32 %v8558, %v8560
        %v8562 = vrot.slane %v8548, %v8561
        %v8563 = vcombine.low %v8555, %v8562
        %v8565 = vsel %vm642, %v8563, 0.0
        %8566 = vadd.xlane.f32.xlu0 %v8565
        %v8567 = vpop.xlane.xlu0 %8566
        %v8568 = vmul.f32 %v8567, %v4082
        %v8571 = vunpack.c.l.s4 269488144
        %v8572 = vunpack.c.0.s8 %v8571
        %v8573 = vlaneseq
        %v8574 = vshrl.u32 %v8573, 7
        %v8575 = vsub.s32 %v8572, %v8574
        %v8576 = vrot.slane %v8568, %v8575
        %v8578 = vunpack.c.l.s4 842150450
        %v8579 = vunpack.c.0.s8 %v8578
        %v8580 = vlaneseq
        %v8581 = vshrl.u32 %v8580, 7
        %v8582 = vsub.s32 %v8579, %v8581
        %v8583 = vrot.slane %v8568, %v8582
        %v8585 = vunpack.c.l.s4 1414812756
        %v8586 = vunpack.c.0.s8 %v8585
        %v8587 = vlaneseq
        %v8588 = vshrl.u32 %v8587, 7
        %v8589 = vsub.s32 %v8586, %v8588
        %v8590 = vrot.slane %v8568, %v8589
        %v8592 = vunpack.c.l.s4 1987475062
        %v8593 = vunpack.c.0.s8 %v8592
        %v8594 = vlaneseq
        %v8595 = vshrl.u32 %v8594, 7
        %v8596 = vsub.s32 %v8593, %v8595
        %v8597 = vrot.slane %v8568, %v8596
        %v8602 = vsub.f32 %v8535, %v8576
        %v8603 = vsub.f32 %v8536, %v8583
        %v8604 = vsub.f32 %v8537, %v8590
        %v8605 = vsub.f32 %v8538, %v8597
        %v8606 = vmul.f32 %v8602, %v8602
        %v8607 = vmul.f32 %v8603, %v8603
        %v8608 = vmul.f32 %v8604, %v8604
        %v8609 = vmul.f32 %v8605, %v8605
        %v8614 = vcombine.low %v8606, %v8607
        %v8615 = vcombine.low %v8608, %v8609
        %v8617 = vunpack.c.l.s4 1983009808
        %v8618 = vunpack.c.0.s8 %v8617
        %v8619 = vlaneseq
        %v8620 = vshrl.u32 %v8619, 7
        %v8621 = vsub.s32 %v8618, %v8620
        %v8622 = vrot.slane %v8614, %v8621
        %v8624 = vunpack.c.l.s4 1983009808
        %v8625 = vunpack.c.0.s8 %v8624
        %v8626 = vlaneseq
        %v8627 = vshrl.u32 %v8626, 7
        %v8628 = vsub.s32 %v8625, %v8627
        %v8629 = vrot.slane %v8615, %v8628
        %v8630 = vcombine.low %v8622, %v8629
        %v8632 = vsel %vm642, %v8630, 0.0
        %8633 = vadd.xlane.f32.xlu0 %v8632
        %v8634 = vpop.xlane.xlu0 %8633
        %v8635 = vmul.f32 %v8634, %v4082
        %v8636 = vadd.f32 %v8635, 1e-05
        %v8637 = vrsqrt.pop %v8636
        %v8640 = vunpack.c.l.s4 269488144
        %v8641 = vunpack.c.0.s8 %v8640
        %v8642 = vlaneseq
        %v8643 = vshrl.u32 %v8642, 7
        %v8644 = vsub.s32 %v8641, %v8643
        %v8645 = vrot.slane %v8637, %v8644
        %v8647 = vunpack.c.l.s4 842150450
        %v8648 = vunpack.c.0.s8 %v8647
        %v8649 = vlaneseq
        %v8650 = vshrl.u32 %v8649, 7
        %v8651 = vsub.s32 %v8648, %v8650
        %v8652 = vrot.slane %v8637, %v8651
        %v8654 = vunpack.c.l.s4 1414812756
        %v8655 = vunpack.c.0.s8 %v8654
        %v8656 = vlaneseq
        %v8657 = vshrl.u32 %v8656, 7
        %v8658 = vsub.s32 %v8655, %v8657
        %v8659 = vrot.slane %v8637, %v8658
        %v8661 = vunpack.c.l.s4 1987475062
        %v8662 = vunpack.c.0.s8 %v8661
        %v8663 = vlaneseq
        %v8664 = vshrl.u32 %v8663, 7
        %v8665 = vsub.s32 %v8662, %v8664
        %v8666 = vrot.slane %v8637, %v8665
        %v8671 = vmul.f32 %v8602, %v8645
        %v8672 = vmul.f32 %v8603, %v8652
        %v8673 = vmul.f32 %v8604, %v8659
        %v8674 = vmul.f32 %v8605, %v8666
        %v8676 = vlaneseq
        %v8677 = vshrl.u32 %v8676, 7
        %v8678 = vsub.s32 0, %v8677
        %v8679 = vrot.slane %v8540, %v8678
        %v8680 = vcombine.high %v8679, %v8679
        %v8682 = vunpack.c.l.s4 1983009808
        %v8683 = vunpack.c.0.s8 %v8682
        %v8684 = vlaneseq
        %v8685 = vshrl.u32 %v8684, 7
        %v8686 = vsub.s32 %v8683, %v8685
        %v8687 = vrot.slane %v8679, %v8686
        %v8689 = vunpack.c.l.s4 1983009808
        %v8690 = vunpack.c.0.s8 %v8689
        %v8691 = vlaneseq
        %v8692 = vshrl.u32 %v8691, 7
        %v8693 = vsub.s32 %v8690, %v8692
        %v8694 = vrot.slane %v8680, %v8693
        %v8695 = vcombine.high %v8687, %v8687
        %v8696 = vcombine.high %v8694, %v8694
        %v8701 = vmul.f32 %v8671, %v8687
        %v8702 = vmul.f32 %v8672, %v8695
        %v8703 = vmul.f32 %v8673, %v8694
        %v8704 = vmul.f32 %v8674, %v8696
        %v8706 = vlaneseq
        %v8707 = vshrl.u32 %v8706, 7
        %v8708 = vsub.s32 0, %v8707
        %v8709 = vrot.slane %v8542, %v8708
        %v8710 = vcombine.high %v8709, %v8709
        %v8712 = vunpack.c.l.s4 1983009808
        %v8713 = vunpack.c.0.s8 %v8712
        %v8714 = vlaneseq
        %v8715 = vshrl.u32 %v8714, 7
        %v8716 = vsub.s32 %v8713, %v8715
        %v8717 = vrot.slane %v8709, %v8716
        %v8719 = vunpack.c.l.s4 1983009808
        %v8720 = vunpack.c.0.s8 %v8719
        %v8721 = vlaneseq
        %v8722 = vshrl.u32 %v8721, 7
        %v8723 = vsub.s32 %v8720, %v8722
        %v8724 = vrot.slane %v8710, %v8723
        %v8725 = vcombine.high %v8717, %v8717
        %v8726 = vcombine.high %v8724, %v8724
        %v8731 = vadd.f32 %v8701, %v8717
        %v8732 = vadd.f32 %v8702, %v8725
        %v8733 = vadd.f32 %v8703, %v8724
        %v8734 = vadd.f32 %v8704, %v8726
        %vm8735 = vcmask 254976
        %8736 = vst.msk [vmem:[%s595] sm:$0x3] %vm8735, %v8731
        %8737 = vst.msk [vmem:[%s595 + $0x2] sm:$0x3] %vm8735, %v8732
        %8738 = vst.msk [vmem:[%s595 + $0x4] sm:$0x3] %vm8735, %v8733
        %8739 = vst.msk [vmem:[%s595 + $0x6] sm:$0x3] %vm8735, %v8734
        %s8740 = sand.u32 %s405, 1
        %s8741 = scalar_lea.sflag [#allocation4], %s8740
        %s8742 = sand.u32 %s405, 1
        %s8743 = smul.addr %s8742, 8
        %s8744 = scalar_lea.vmem [#allocation8], %s8743
        // Predicated region
        $region101: #{tpu_custom_call.1} parent=87 // pred_check
          %p8745 = pneg %p415
        $region102: #{tpu_custom_call.1} parent=87 // pred_check_branch
          %8747 = sbr.rel (%p8745) target = $region104
        $region103: #{tpu_custom_call.1} parent=87 // pred_region
          %s8748 = smul.u32 4, %s35
          %s8750 = ssub.s32 128, 128
          %8751 = vsyncadd %s8741, %s8750
          %s8752 = smul.addr %s8748, 32
          %s8753 = scalar_lea.hbm %s17, %s8752
          %s8754 = sshll.u32 %s8744, 4
          %s8755 = int_to_ptr.vmem [resolvable:$true] %s8754
          %8760 = dma.vmem_to_hbm [thread:$0]  %s8755, 128, %s8753, %s8741, 32, 32, 2
        $region104: #{tpu_custom_call.1} parent=87 // pred_fallthru
          _
      $region88: #{tpu_custom_call.1} parent=5 // pred_fallthru
        _
      %p8761 = scmp.le.s32.totalorder 2, %s30
      // Predicated region
      $region105: #{tpu_custom_call.1} parent=5 // pred_check
        %p8762 = pneg %p8761
      $region106: #{tpu_custom_call.1} parent=5 // pred_check_branch
        %8764 = sbr.rel (%p8762) target = $region108
      $region107: #{tpu_custom_call.1} parent=5 // pred_region
        %s8765 = ssub.s32 %s30, 2
        // Predicated region
        $region109: #{tpu_custom_call.1} parent=107 // pred_check
          %p8766 = pneg %p421
        $region110: #{tpu_custom_call.1} parent=107 // pred_check_branch
          %8768 = sbr.rel (%p8766) target = $region112
        $region111: #{tpu_custom_call.1} parent=107 // pred_region
          %s8769 = sand.u32 %s406, 1
          %s8770 = scalar_lea.sflag [#allocation4], %s8769
          %s8771 = sand.u32 %s406, 1
          %s8772 = smul.addr %s8771, 8
          %s8773 = scalar_lea.vmem [#allocation8], %s8772
          %8774 = dma.done %s8770, 128
        $region112: #{tpu_custom_call.1} parent=107 // pred_fallthru
          _
      $region108: #{tpu_custom_call.1} parent=5 // pred_fallthru
        _
    $region6: #{tpu_custom_call.1} parent=1 // loop_footer
      %s34 = sadd.s32 1, %s30
    $region7: #{tpu_custom_call.1} parent=1 // loop_footer_branch
      %29 = sbr.rel target = $region3
    $region8: #{tpu_custom_call.1} parent=1 // loop_exit
      _
    %8775 = vsyncpa [#allocation3], 1
    %s8776 = scalar_lea.sflag [#allocation3], 1
    %8777 = vsyncpa %s8776, 1
    %8778 = vsyncpa [#allocation6], 1
    %8779 = vsyncpa [#allocation4], 1
    %s8780 = scalar_lea.sflag [#allocation4], 1
    %8781 = vsyncpa %s8780, 1

</llo_original>
